<compile_context>
chip_gen: v6e
topology: v6e:2x2x1
jax: 0.10.0
libtpu: 0.0.40
codegen_flags: <defaults>
</compile_context>

<pallas_src>
import math

import jax
import jax.numpy as jnp
from jax.experimental import pallas as pl
from jax.experimental.pallas import tpu as pltpu

# ----------------------------- model dimensions ------------------------------
B = 2            # batch
S_SRC = 16       # source length  (power of two: masks use shifts, not div/rem)
S_TGT = 16       # target length
D = 128          # d_model
H = 4            # attention heads
HD = D // H      # head dim
FFN = 256        # feed-forward dim
ADP = D // 16    # bottleneck adapter dim (reduction_factor = 16)
V = 384          # vocab size
PAD_ID = 1       # BART pad_token_id
DEC_START_ID = 2 # BART decoder_start_token_id (eos)
N_ENC_LAYERS = 1 # kernel body below inlines exactly one layer each
N_DEC_LAYERS = 1
NEG_INF = -1e9
LN_EPS = 1e-5
BF = jnp.bfloat16

RS = B * S_SRC   # merged encoder rows
RT = B * S_TGT   # merged decoder rows


# ----------------------------- weight slab layouts ----------------------------
def _layout(entries, align):
    """Assign aligned offsets along the packing axis for (name, size) entries."""
    table, off = {}, 0
    for name, size in entries:
        table[name] = (off, size)
        off += -(-size // align) * align
    return table, off


# Slab 1: all matrices whose contraction dim is D=128, packed along LANES
# (128-lane aligned so every in-kernel slice is layout friendly).  bf16.
_WD_ENTRIES = [
    ("enc_wqkv", 3 * D), ("enc_wo", D), ("enc_w1", FFN),
    ("dec_wqkv", 3 * D), ("dec_wo", D),
    ("dec_cwq", D), ("dec_cwkv", 2 * D), ("dec_cwo", D), ("dec_w1", FFN),
    ("emb_T", V),
    ("enc_a1_wd", ADP), ("enc_a2_wd", ADP), ("dec_a1_wd", ADP), ("dec_a2_wd", ADP),
]
WD_OFF, WD_COLS = _layout(_WD_ENTRIES, 128)

# Slab 2: matrices whose output dim is D=128 (FFN.w2 and adapter up-projections),
# packed along SUBLANES (16-row aligned for the bf16 (16,128) tile).  bf16.
_WUP_ENTRIES = [
    ("enc_w2", FFN), ("dec_w2", FFN),
    ("enc_a1_wu", ADP), ("enc_a2_wu", ADP), ("dec_a1_wu", ADP), ("dec_a2_wu", ADP),
]
WUP_OFF, WUP_ROWS = _layout(_WUP_ENTRIES, 16)

# Slab 3: every bias / LayerNorm gamma / beta as one row of an f32 slab.
_VEC_ENTRIES = [
    ("enc_emb_ln_g", D), ("enc_emb_ln_b", D),
    ("enc_bqkv", 3 * D), ("enc_bo", D),
    ("enc_a1_bd", ADP), ("enc_a1_bu", D), ("enc_a1_ln_g", D), ("enc_a1_ln_b", D),
    ("enc_b1", FFN), ("enc_b2", D),
    ("enc_a2_bd", ADP), ("enc_a2_bu", D), ("enc_a2_ln_g", D), ("enc_a2_ln_b", D),
    ("dec_emb_ln_g", D), ("dec_emb_ln_b", D),
    ("dec_bqkv", 3 * D), ("dec_bo", D),
    ("dec_a1_bd", ADP), ("dec_a1_bu", D), ("dec_a1_ln_g", D), ("dec_a1_ln_b", D),
    ("dec_cbq", D), ("dec_cbkv", 2 * D), ("dec_cbo", D),
    ("dec_lnc_g", D), ("dec_lnc_b", D),
    ("dec_b1", FFN), ("dec_b2", D),
    ("dec_a2_bd", ADP), ("dec_a2_bu", D), ("dec_a2_ln_g", D), ("dec_a2_ln_b", D),
    ("final_bias", V),
]
VEC_ROW = {name: i for i, (name, _) in enumerate(_VEC_ENTRIES)}
VEC_WIDTH = {name: w for name, w in _VEC_ENTRIES}
VEC_W = max(w for _, w in _VEC_ENTRIES)


# ------------------------------- fused kernel ---------------------------------
def _model_kernel(x_ref, y_ref, amask_ref, labels_ref,
                  wd_ref, wup_ref, vec_ref,
                  logits_ref, loss_ref):
    f32 = jnp.float32

    # ----- static-offset slab slicing (no per-weight DMA descriptors) --------
    def wD(name):
        o, w = WD_OFF[name]
        return wd_ref[:, o:o + w]

    def wU(name):
        o, r = WUP_OFF[name]
        return wup_ref[o:o + r, :]

    def vec(name):
        r = VEC_ROW[name]
        return vec_ref[r:r + 1, 0:VEC_WIDTH[name]]

    def mm(a, w):  # bf16 MXU matmul, f32 accumulation
        return jnp.dot(a.astype(BF), w.astype(BF), preferred_element_type=f32)

    def layer_norm(x, gname, bname):
        mu = jnp.mean(x, axis=-1, keepdims=True)
        xc = x - mu
        var = jnp.mean(xc * xc, axis=-1, keepdims=True)
        return xc * jax.lax.rsqrt(var + LN_EPS) * vec(gname) + vec(bname)

    def adapter_res_ln(h, res, p):
        # bottleneck adapter (down -> relu -> up, internal residual), then the
        # BART sub-layer residual + post-LayerNorm.
        a = jnp.maximum(mm(h, wD(p + "_wd")) + vec(p + "_bd"), 0.0)
        h = h + mm(a, wU(p + "_wu")) + vec(p + "_bu")
        return layer_norm(h + res, p + "_ln_g", p + "_ln_b")

    def mha(q, k, v, add_mask, wo, bo):
        # Per-head scores on the batch-merged rows; the per-head contexts are
        # concatenated into one (rows, D) slab so Wo is a single MXU matmul
        # with full contraction depth (no lane-masked partial stores).
        ctxs = []
        for hh in range(H):
            lo = hh * HD
            s = jax.lax.dot_general(
                q[:, lo:lo + HD].astype(BF), k[:, lo:lo + HD].astype(BF),
                (((1,), (1,)), ((), ())), preferred_element_type=f32)
            s = s + add_mask
            s = s - jnp.max(s, axis=-1, keepdims=True)
            p = jnp.exp(s)
            p = p / jnp.sum(p, axis=-1, keepdims=True)
            ctxs.append(mm(p, v[:, lo:lo + HD]))
        ctx = jnp.concatenate(ctxs, axis=-1)                     # (rows, D)
        return mm(ctx, wo) + bo

    def ffn(x, w1n, b1n, w2n, b2n):
        h = mm(x, wD(w1n)) + vec(b1n)
        # TODO(synk): HF BART uses exact (erf) GELU; tanh approximation here.
        c = math.sqrt(2.0 / math.pi)
        h = 0.5 * h * (1.0 + jnp.tanh(c * (h + 0.044715 * h * h * h)))
        return mm(h, wU(w2n)) + vec(b2n)

    # ----- additive masks built in-kernel (block-diagonal over the batch) ----
    LS = S_SRC.bit_length() - 1          # log2(S_SRC)
    LT = S_TGT.bit_length() - 1          # log2(S_TGT)
    src_ok = amask_ref[...] > 0.5                                  # (1, RS)

    rs0 = jax.lax.broadcasted_iota(jnp.int32, (RS, RS), 0)
    cs0 = jax.lax.broadcasted_iota(jnp.int32, (RS, RS), 1)
    enc_mask = jnp.where(((rs0 >> LS) == (cs0 >> LS)) & src_ok, 0.0, NEG_INF)

    rt0 = jax.lax.broadcasted_iota(jnp.int32, (RT, RT), 0)
    ct0 = jax.lax.broadcasted_iota(jnp.int32, (RT, RT), 1)
    dec_mask = jnp.where(((rt0 >> LT) == (ct0 >> LT)) &
                         ((ct0 & (S_TGT - 1)) <= (rt0 & (S_TGT - 1))),
                         0.0, NEG_INF)

    rx0 = jax.lax.broadcasted_iota(jnp.int32, (RT, RS), 0)
    cx0 = jax.lax.broadcasted_iota(jnp.int32, (RT, RS), 1)
    xattn_mask = jnp.where(((rx0 >> LT) == (cx0 >> LS)) & src_ok, 0.0, NEG_INF)

    # --------------------------------- encoder -------------------------------
    x = layer_norm(x_ref[...], "enc_emb_ln_g", "enc_emb_ln_b")    # (RS, D)
    res = x
    qkv = mm(x, wD("enc_wqkv")) + vec("enc_bqkv")
    h = mha(qkv[:, :D], qkv[:, D:2 * D], qkv[:, 2 * D:], enc_mask,
            wD("enc_wo"), vec("enc_bo"))
    x = adapter_res_ln(h, res, "enc_a1")
    res = x
    h = ffn(x, "enc_w1", "enc_b1", "enc_w2", "enc_b2")
    mem = adapter_res_ln(h, res, "enc_a2")     # encoder output stays in VMEM

    # --------------------------------- decoder -------------------------------
    y = layer_norm(y_ref[...], "dec_emb_ln_g", "dec_emb_ln_b")    # (RT, D)
    res = y
    qkv = mm(y, wD("dec_wqkv")) + vec("dec_bqkv")
    h = mha(qkv[:, :D], qkv[:, D:2 * D], qkv[:, 2 * D:], dec_mask,
            wD("dec_wo"), vec("dec_bo"))
    y = adapter_res_ln(h, res, "dec_a1")
    res = y
    q = mm(y, wD("dec_cwq")) + vec("dec_cbq")
    kv = mm(mem, wD("dec_cwkv")) + vec("dec_cbkv")
    h = mha(q, kv[:, :D], kv[:, D:], xattn_mask, wD("dec_cwo"), vec("dec_cbo"))
    y = layer_norm(h + res, "dec_lnc_g", "dec_lnc_b")   # no cross-attn adapter
    res = y
    h = ffn(y, "dec_w1", "dec_b1", "dec_w2", "dec_b2")
    y = adapter_res_ln(h, res, "dec_a2")

    # ------------- LM head (tied embeddings) + mean token cross-entropy -------
    logits = mm(y, wD("emb_T")) + vec("final_bias")               # (RT, V) f32
    logits_ref[...] = logits

    # labels arrive lane-dense (1, RT); rebuild the (RT, 1) column with an
    # iota compare + lane reduction (no 1-lane-wide VMEM loads).
    labels_f = labels_ref[...].astype(f32)                         # (1, RT)
    labels_col = jnp.sum(jnp.where(rt0 == ct0, labels_f, 0.0),
                         axis=-1, keepdims=True)                   # (RT, 1)
    valid_col = (labels_col != -100.0).astype(f32)
    vlane = jax.lax.broadcasted_iota(jnp.int32, (RT, V), 1).astype(f32)
    onehot = (vlane == labels_col).astype(f32)                     # (RT, V)

    m = jnp.max(logits, axis=-1, keepdims=True)
    lse = m + jnp.log(jnp.sum(jnp.exp(logits - m), axis=-1, keepdims=True))
    picked = jnp.sum(onehot * logits, axis=-1, keepdims=True)
    nll = (lse - picked) * valid_col                               # (RT, 1)

    n_valid = jnp.maximum(jnp.sum(valid_col, axis=0, keepdims=True), 1.0)
    loss = jnp.sum(nll, axis=0, keepdims=True) / n_valid           # (1, 1)
    loss_ref[0] = loss[0, 0]                                       # SMEM scalar


# ------------------------------ kernel wrapper ---------------------------------
def _fused_forward(x, y, amask, labels_lane, wd_slab, wup_slab, vec_slab):
    return pl.pallas_call(
        _model_kernel,
        out_shape=(jax.ShapeDtypeStruct((RT, V), jnp.float32),     # logits
                   jax.ShapeDtypeStruct((1,), jnp.float32)),       # mean loss
        in_specs=[pl.BlockSpec(memory_space=pltpu.MemorySpace.VMEM)] * 7,
        out_specs=(pl.BlockSpec(memory_space=pltpu.MemorySpace.VMEM),
                   pl.BlockSpec(memory_space=pltpu.MemorySpace.SMEM)),
    )(x, y, amask, labels_lane, wd_slab, wup_slab, vec_slab)


# --------------------------------- glue (JAX) ----------------------------------
def shift_tokens_right(labels, pad_id, start_id):
    shifted = jnp.zeros_like(labels)
    shifted = shifted.at[:, 1:].set(labels[:, :-1])
    shifted = shifted.at[:, 0].set(start_id)
    return jnp.where(shifted == -100, pad_id, shifted)


def forward(params, input_ids, attention_mask, labels):
    decoder_input_ids = shift_tokens_right(labels, PAD_ID, DEC_START_ID)

    tok, pos = params["tok_emb"], params["pos_emb"]
    inputs_embeds = tok[input_ids]                                  # (B, S_SRC, D)
    x = (inputs_embeds + pos[2:2 + S_SRC][None]).reshape(RS, D)     # enc input
    y = (tok[decoder_input_ids] + pos[2:2 + S_TGT][None]).reshape(RT, D)
    amask = attention_mask.astype(jnp.float32).reshape(1, RS)       # lane-dense
    labels_lane = labels.astype(jnp.int32).reshape(1, RT)           # lane-dense

    logits_flat, loss = _fused_forward(
        x, y, amask, labels_lane,
        params["wd_slab"], params["wup_slab"], params["vec_slab"])

    return {"loss": loss[0],
            "logits": logits_flat.reshape(B, S_TGT, V),
            "inputs_embeds": inputs_embeds}


def init_params(key):
    keys = iter(jax.random.split(key, 64))

    def nrm(shape, s=0.02):
        return s * jax.random.normal(next(keys), shape, dtype=jnp.float32)

    att_scale = 1.0 / math.sqrt(HD)   # folded into the Q projection weights

    def qkv_w():
        return jnp.concatenate(
            [nrm((D, D)) * att_scale, nrm((D, D)), nrm((D, D))], axis=1)

    tok_emb = nrm((V, D))

    wd_parts = {
        "enc_wqkv": qkv_w(), "enc_wo": nrm((D, D)), "enc_w1": nrm((D, FFN)),
        "dec_wqkv": qkv_w(), "dec_wo": nrm((D, D)),
        "dec_cwq": nrm((D, D)) * att_scale,
        "dec_cwkv": jnp.concatenate([nrm((D, D)), nrm((D, D))], axis=1),
        "dec_cwo": nrm((D, D)), "dec_w1": nrm((D, FFN)),
        "emb_T": tok_emb.T,                     # tied LM head
        "enc_a1_wd": nrm((D, ADP)), "enc_a2_wd": nrm((D, ADP)),
        "dec_a1_wd": nrm((D, ADP)), "dec_a2_wd": nrm((D, ADP)),
    }
    wup_parts = {
        "enc_w2": nrm((FFN, D)), "dec_w2": nrm((FFN, D)),
        "enc_a1_wu": nrm((ADP, D)), "enc_a2_wu": nrm((ADP, D)),
        "dec_a1_wu": nrm((ADP, D)), "dec_a2_wu": nrm((ADP, D)),
    }

    wd_slab = jnp.zeros((D, WD_COLS), jnp.float32)
    for name, w in _WD_ENTRIES:
        o, _ = WD_OFF[name]
        wd_slab = wd_slab.at[:, o:o + w].set(wd_parts[name])
    wd_slab = wd_slab.astype(BF)

    wup_slab = jnp.zeros((WUP_ROWS, D), jnp.float32)
    for name, r in _WUP_ENTRIES:
        o, _ = WUP_OFF[name]
        wup_slab = wup_slab.at[o:o + r, :].set(wup_parts[name])
    wup_slab = wup_slab.astype(BF)

    vec_slab = jnp.zeros((len(_VEC_ENTRIES), VEC_W), jnp.float32)
    for i, (name, w) in enumerate(_VEC_ENTRIES):
        if name.endswith("_g"):               # LayerNorm gammas = 1
            vec_slab = vec_slab.at[i, :w].set(jnp.ones((w,), jnp.float32))
        # Linear biases / LN betas / final_logits_bias stay zero.

    return {
        "tok_emb": tok_emb,                                  # f32 gather table
        "pos_emb": nrm((max(S_SRC, S_TGT) + 2, D)),          # learned, offset 2
        "wd_slab": wd_slab, "wup_slab": wup_slab, "vec_slab": vec_slab,
    }


# ------------------------------------ main -------------------------------------
if __name__ == "__main__":
    key = jax.random.PRNGKey(0)
    k1, k2, k3 = jax.random.split(key, 3)

    input_ids = jax.random.randint(k1, (B, S_SRC), 3, V, dtype=jnp.int32)
    attention_mask = jnp.ones((B, S_SRC), jnp.int32).at[1, 12:].set(0)
    input_ids = jnp.where(attention_mask == 1, input_ids, PAD_ID)
    labels = jax.random.randint(k2, (B, S_TGT), 3, V, dtype=jnp.int32)
    labels = labels.at[1, 14:].set(-100)       # exercise ignore_index masking

    params = init_params(k3)

    fwd = jax.jit(forward)
    out = fwd(params, input_ids, attention_mask, labels)
    jax.block_until_ready((out["loss"], out["logits"], out["inputs_embeds"]))

    assert out["logits"].shape == (B, S_TGT, V)
    assert out["inputs_embeds"].shape == (B, S_SRC, D)
    assert jnp.isfinite(out["loss"])
    print("KERNEL_OK")
</pallas_src>

<mosaic_0001>
module attributes {stable_mosaic.version = 11 : i64} {
  func.func @_model_kernel(%arg0: memref<32x128xf32, #tpu.memory_space<vmem>>, %arg1: memref<32x128xf32, #tpu.memory_space<vmem>>, %arg2: memref<1x32xf32, #tpu.memory_space<vmem>>, %arg3: memref<1x32xi32, #tpu.memory_space<vmem>>, %arg4: memref<128x2944xbf16, #tpu.memory_space<vmem>>, %arg5: memref<576x128xbf16, #tpu.memory_space<vmem>>, %arg6: memref<34x384xf32, #tpu.memory_space<vmem>>, %arg7: memref<32x384xf32, #tpu.memory_space<vmem>>, %arg8: memref<1xf32, #tpu.memory_space<smem>>) attributes {dimension_semantics = [], scalar_prefetch = 0 : i64, scratch_operands = 0 : i64, tpu.core_type = #tpu.core_type<tc>} {
    %c0 = arith.constant 0 : index
    %c0_0 = arith.constant 0 : index
    %0 = vector.load %arg2[%c0, %c0_0] : memref<1x32xf32, #tpu.memory_space<vmem>>, vector<1x32xf32>
    %cst = arith.constant 5.000000e-01 : f32
    %1 = vector.broadcast %cst : f32 to vector<1x32xf32>
    %2 = arith.cmpf ogt, %0, %1 : vector<1x32xf32>
    %3 = tpu.iota {dimensions = array<i32: 0>} : vector<32x32xi32>
    %4 = tpu.iota {dimensions = array<i32: 1>} : vector<32x32xi32>
    %c4_i32 = arith.constant 4 : i32
    %5 = vector.broadcast %c4_i32 : i32 to vector<32x32xi32>
    %6 = arith.shrsi %3, %5 : vector<32x32xi32>
    %c4_i32_1 = arith.constant 4 : i32
    %7 = vector.broadcast %c4_i32_1 : i32 to vector<32x32xi32>
    %8 = arith.shrsi %4, %7 : vector<32x32xi32>
    %9 = arith.cmpi eq, %6, %8 : vector<32x32xi32>
    %10 = vector.broadcast %2 : vector<1x32xi1> to vector<32x32xi1>
    %11 = arith.andi %9, %10 : vector<32x32xi1>
    %cst_2 = arith.constant 0.000000e+00 : f32
    %cst_3 = arith.constant -1.000000e+09 : f32
    %12 = vector.broadcast %cst_2 : f32 to vector<32x32xf32>
    %13 = vector.broadcast %cst_3 : f32 to vector<32x32xf32>
    %14 = arith.select %11, %12, %13 : vector<32x32xi1>, vector<32x32xf32>
    %15 = tpu.iota {dimensions = array<i32: 0>} : vector<32x32xi32>
    %16 = tpu.iota {dimensions = array<i32: 1>} : vector<32x32xi32>
    %c4_i32_4 = arith.constant 4 : i32
    %17 = vector.broadcast %c4_i32_4 : i32 to vector<32x32xi32>
    %18 = arith.shrsi %15, %17 : vector<32x32xi32>
    %c4_i32_5 = arith.constant 4 : i32
    %19 = vector.broadcast %c4_i32_5 : i32 to vector<32x32xi32>
    %20 = arith.shrsi %16, %19 : vector<32x32xi32>
    %21 = arith.cmpi eq, %18, %20 : vector<32x32xi32>
    %c15_i32 = arith.constant 15 : i32
    %22 = vector.broadcast %c15_i32 : i32 to vector<32x32xi32>
    %23 = arith.andi %16, %22 : vector<32x32xi32>
    %c15_i32_6 = arith.constant 15 : i32
    %24 = vector.broadcast %c15_i32_6 : i32 to vector<32x32xi32>
    %25 = arith.andi %15, %24 : vector<32x32xi32>
    %26 = arith.cmpi sle, %23, %25 : vector<32x32xi32>
    %27 = arith.andi %21, %26 : vector<32x32xi1>
    %cst_7 = arith.constant 0.000000e+00 : f32
    %cst_8 = arith.constant -1.000000e+09 : f32
    %28 = vector.broadcast %cst_7 : f32 to vector<32x32xf32>
    %29 = vector.broadcast %cst_8 : f32 to vector<32x32xf32>
    %30 = arith.select %27, %28, %29 : vector<32x32xi1>, vector<32x32xf32>
    %31 = tpu.iota {dimensions = array<i32: 0>} : vector<32x32xi32>
    %32 = tpu.iota {dimensions = array<i32: 1>} : vector<32x32xi32>
    %c4_i32_9 = arith.constant 4 : i32
    %33 = vector.broadcast %c4_i32_9 : i32 to vector<32x32xi32>
    %34 = arith.shrsi %31, %33 : vector<32x32xi32>
    %c4_i32_10 = arith.constant 4 : i32
    %35 = vector.broadcast %c4_i32_10 : i32 to vector<32x32xi32>
    %36 = arith.shrsi %32, %35 : vector<32x32xi32>
    %37 = arith.cmpi eq, %34, %36 : vector<32x32xi32>
    %38 = vector.broadcast %2 : vector<1x32xi1> to vector<32x32xi1>
    %39 = arith.andi %37, %38 : vector<32x32xi1>
    %cst_11 = arith.constant 0.000000e+00 : f32
    %cst_12 = arith.constant -1.000000e+09 : f32
    %40 = vector.broadcast %cst_11 : f32 to vector<32x32xf32>
    %41 = vector.broadcast %cst_12 : f32 to vector<32x32xf32>
    %42 = arith.select %39, %40, %41 : vector<32x32xi1>, vector<32x32xf32>
    %c0_13 = arith.constant 0 : index
    %c0_14 = arith.constant 0 : index
    %43 = vector.load %arg0[%c0_13, %c0_14] : memref<32x128xf32, #tpu.memory_space<vmem>>, vector<32x128xf32>
    %cst_15 = arith.constant dense<0.000000e+00> : vector<32xf32>
    %44 = vector.multi_reduction <add>, %43, %cst_15 [1] : vector<32x128xf32> to vector<32xf32>
    %45 = vector.shape_cast %44 : vector<32xf32> to vector<32x1xf32>
    %cst_16 = arith.constant 1.280000e+02 : f32
    %46 = vector.broadcast %cst_16 : f32 to vector<32x1xf32>
    %47 = arith.divf %45, %46 : vector<32x1xf32>
    %48 = vector.broadcast %47 : vector<32x1xf32> to vector<32x128xf32>
    %49 = arith.subf %43, %48 : vector<32x128xf32>
    %50 = arith.mulf %49, %49 : vector<32x128xf32>
    %cst_17 = arith.constant dense<0.000000e+00> : vector<32xf32>
    %51 = vector.multi_reduction <add>, %50, %cst_17 [1] : vector<32x128xf32> to vector<32xf32>
    %52 = vector.shape_cast %51 : vector<32xf32> to vector<32x1xf32>
    %cst_18 = arith.constant 1.280000e+02 : f32
    %53 = vector.broadcast %cst_18 : f32 to vector<32x1xf32>
    %54 = arith.divf %52, %53 : vector<32x1xf32>
    %cst_19 = arith.constant 9.99999974E-6 : f32
    %55 = vector.broadcast %cst_19 : f32 to vector<32x1xf32>
    %56 = arith.addf %54, %55 : vector<32x1xf32>
    %57 = math.rsqrt %56 : vector<32x1xf32>
    %58 = vector.broadcast %57 : vector<32x1xf32> to vector<32x128xf32>
    %59 = arith.mulf %49, %58 : vector<32x128xf32>
    %c0_20 = arith.constant 0 : index
    %c0_21 = arith.constant 0 : index
    %60 = vector.load %arg6[%c0_20, %c0_21] : memref<34x384xf32, #tpu.memory_space<vmem>>, vector<1x128xf32>
    %61 = vector.broadcast %60 : vector<1x128xf32> to vector<32x128xf32>
    %62 = arith.mulf %59, %61 : vector<32x128xf32>
    %c1 = arith.constant 1 : index
    %c0_22 = arith.constant 0 : index
    %63 = vector.load %arg6[%c1, %c0_22] : memref<34x384xf32, #tpu.memory_space<vmem>>, vector<1x128xf32>
    %64 = vector.broadcast %63 : vector<1x128xf32> to vector<32x128xf32>
    %65 = arith.addf %62, %64 : vector<32x128xf32>
    %c0_23 = arith.constant 0 : index
    %c0_24 = arith.constant 0 : index
    %66 = vector.load %arg4[%c0_23, %c0_24] : memref<128x2944xbf16, #tpu.memory_space<vmem>>, vector<128x384xbf16>
    %67 = arith.truncf %65 : vector<32x128xf32> to vector<32x128xbf16>
    %cst_25 = arith.constant dense<0.000000e+00> : vector<32x384xf32>
    %68 = tpu.matmul %67, %66, %cst_25 {dimension_numbers = #tpu.dot_dimension_numbers<[1], [0], [0], [1], [0, 0, 1, 1], [], []>} : vector<32x128xbf16>, vector<128x384xbf16>, vector<32x384xf32> -> vector<32x384xf32>
    %c2 = arith.constant 2 : index
    %c0_26 = arith.constant 0 : index
    %69 = vector.load %arg6[%c2, %c0_26] : memref<34x384xf32, #tpu.memory_space<vmem>>, vector<1x384xf32>
    %70 = vector.broadcast %69 : vector<1x384xf32> to vector<32x384xf32>
    %71 = arith.addf %68, %70 : vector<32x384xf32>
    %72 = vector.extract_strided_slice %71 {offsets = [0, 0], sizes = [32, 128], strides = [1, 1]} : vector<32x384xf32> to vector<32x128xf32>
    %73 = vector.extract_strided_slice %71 {offsets = [0, 128], sizes = [32, 128], strides = [1, 1]} : vector<32x384xf32> to vector<32x128xf32>
    %74 = vector.extract_strided_slice %71 {offsets = [0, 256], sizes = [32, 128], strides = [1, 1]} : vector<32x384xf32> to vector<32x128xf32>
    %c0_27 = arith.constant 0 : index
    %c384 = arith.constant 384 : index
    %75 = vector.load %arg4[%c0_27, %c384] : memref<128x2944xbf16, #tpu.memory_space<vmem>>, vector<128x128xbf16>
    %c3 = arith.constant 3 : index
    %c0_28 = arith.constant 0 : index
    %76 = vector.load %arg6[%c3, %c0_28] : memref<34x384xf32, #tpu.memory_space<vmem>>, vector<1x128xf32>
    %77 = vector.extract_strided_slice %72 {offsets = [0, 0], sizes = [32, 32], strides = [1, 1]} : vector<32x128xf32> to vector<32x32xf32>
    %78 = arith.truncf %77 : vector<32x32xf32> to vector<32x32xbf16>
    %79 = vector.extract_strided_slice %73 {offsets = [0, 0], sizes = [32, 32], strides = [1, 1]} : vector<32x128xf32> to vector<32x32xf32>
    %80 = arith.truncf %79 : vector<32x32xf32> to vector<32x32xbf16>
    %cst_29 = arith.constant dense<0.000000e+00> : vector<32x32xf32>
    %81 = tpu.matmul %78, %80, %cst_29 {dimension_numbers = #tpu.dot_dimension_numbers<[1], [1], [0], [0], [0, 0, 1, 0], [], []>} : vector<32x32xbf16>, vector<32x32xbf16>, vector<32x32xf32> -> vector<32x32xf32>
    %82 = arith.addf %81, %14 : vector<32x32xf32>
    %cst_30 = arith.constant dense<0xFF800000> : vector<32xf32>
    %83 = vector.multi_reduction <maximumf>, %82, %cst_30 [1] : vector<32x32xf32> to vector<32xf32>
    %84 = vector.shape_cast %83 : vector<32xf32> to vector<32x1xf32>
    %85 = vector.broadcast %84 : vector<32x1xf32> to vector<32x32xf32>
    %86 = arith.subf %82, %85 : vector<32x32xf32>
    %87 = math.exp %86 : vector<32x32xf32>
    %cst_31 = arith.constant dense<0.000000e+00> : vector<32xf32>
    %88 = vector.multi_reduction <add>, %87, %cst_31 [1] : vector<32x32xf32> to vector<32xf32>
    %89 = vector.shape_cast %88 : vector<32xf32> to vector<32x1xf32>
    %90 = vector.broadcast %89 : vector<32x1xf32> to vector<32x32xf32>
    %91 = arith.divf %87, %90 : vector<32x32xf32>
    %92 = vector.extract_strided_slice %74 {offsets = [0, 0], sizes = [32, 32], strides = [1, 1]} : vector<32x128xf32> to vector<32x32xf32>
    %93 = arith.truncf %91 : vector<32x32xf32> to vector<32x32xbf16>
    %94 = arith.truncf %92 : vector<32x32xf32> to vector<32x32xbf16>
    %cst_32 = arith.constant dense<0.000000e+00> : vector<32x32xf32>
    %95 = tpu.matmul %93, %94, %cst_32 {dimension_numbers = #tpu.dot_dimension_numbers<[1], [0], [0], [1], [0, 0, 1, 1], [], []>} : vector<32x32xbf16>, vector<32x32xbf16>, vector<32x32xf32> -> vector<32x32xf32>
    %96 = vector.extract_strided_slice %72 {offsets = [0, 32], sizes = [32, 32], strides = [1, 1]} : vector<32x128xf32> to vector<32x32xf32>
    %97 = arith.truncf %96 : vector<32x32xf32> to vector<32x32xbf16>
    %98 = vector.extract_strided_slice %73 {offsets = [0, 32], sizes = [32, 32], strides = [1, 1]} : vector<32x128xf32> to vector<32x32xf32>
    %99 = arith.truncf %98 : vector<32x32xf32> to vector<32x32xbf16>
    %cst_33 = arith.constant dense<0.000000e+00> : vector<32x32xf32>
    %100 = tpu.matmul %97, %99, %cst_33 {dimension_numbers = #tpu.dot_dimension_numbers<[1], [1], [0], [0], [0, 0, 1, 0], [], []>} : vector<32x32xbf16>, vector<32x32xbf16>, vector<32x32xf32> -> vector<32x32xf32>
    %101 = arith.addf %100, %14 : vector<32x32xf32>
    %cst_34 = arith.constant dense<0xFF800000> : vector<32xf32>
    %102 = vector.multi_reduction <maximumf>, %101, %cst_34 [1] : vector<32x32xf32> to vector<32xf32>
    %103 = vector.shape_cast %102 : vector<32xf32> to vector<32x1xf32>
    %104 = vector.broadcast %103 : vector<32x1xf32> to vector<32x32xf32>
    %105 = arith.subf %101, %104 : vector<32x32xf32>
    %106 = math.exp %105 : vector<32x32xf32>
    %cst_35 = arith.constant dense<0.000000e+00> : vector<32xf32>
    %107 = vector.multi_reduction <add>, %106, %cst_35 [1] : vector<32x32xf32> to vector<32xf32>
    %108 = vector.shape_cast %107 : vector<32xf32> to vector<32x1xf32>
    %109 = vector.broadcast %108 : vector<32x1xf32> to vector<32x32xf32>
    %110 = arith.divf %106, %109 : vector<32x32xf32>
    %111 = vector.extract_strided_slice %74 {offsets = [0, 32], sizes = [32, 32], strides = [1, 1]} : vector<32x128xf32> to vector<32x32xf32>
    %112 = arith.truncf %110 : vector<32x32xf32> to vector<32x32xbf16>
    %113 = arith.truncf %111 : vector<32x32xf32> to vector<32x32xbf16>
    %cst_36 = arith.constant dense<0.000000e+00> : vector<32x32xf32>
    %114 = tpu.matmul %112, %113, %cst_36 {dimension_numbers = #tpu.dot_dimension_numbers<[1], [0], [0], [1], [0, 0, 1, 1], [], []>} : vector<32x32xbf16>, vector<32x32xbf16>, vector<32x32xf32> -> vector<32x32xf32>
    %115 = vector.extract_strided_slice %72 {offsets = [0, 64], sizes = [32, 32], strides = [1, 1]} : vector<32x128xf32> to vector<32x32xf32>
    %116 = arith.truncf %115 : vector<32x32xf32> to vector<32x32xbf16>
    %117 = vector.extract_strided_slice %73 {offsets = [0, 64], sizes = [32, 32], strides = [1, 1]} : vector<32x128xf32> to vector<32x32xf32>
    %118 = arith.truncf %117 : vector<32x32xf32> to vector<32x32xbf16>
    %cst_37 = arith.constant dense<0.000000e+00> : vector<32x32xf32>
    %119 = tpu.matmul %116, %118, %cst_37 {dimension_numbers = #tpu.dot_dimension_numbers<[1], [1], [0], [0], [0, 0, 1, 0], [], []>} : vector<32x32xbf16>, vector<32x32xbf16>, vector<32x32xf32> -> vector<32x32xf32>
    %120 = arith.addf %119, %14 : vector<32x32xf32>
    %cst_38 = arith.constant dense<0xFF800000> : vector<32xf32>
    %121 = vector.multi_reduction <maximumf>, %120, %cst_38 [1] : vector<32x32xf32> to vector<32xf32>
    %122 = vector.shape_cast %121 : vector<32xf32> to vector<32x1xf32>
    %123 = vector.broadcast %122 : vector<32x1xf32> to vector<32x32xf32>
    %124 = arith.subf %120, %123 : vector<32x32xf32>
    %125 = math.exp %124 : vector<32x32xf32>
    %cst_39 = arith.constant dense<0.000000e+00> : vector<32xf32>
    %126 = vector.multi_reduction <add>, %125, %cst_39 [1] : vector<32x32xf32> to vector<32xf32>
    %127 = vector.shape_cast %126 : vector<32xf32> to vector<32x1xf32>
    %128 = vector.broadcast %127 : vector<32x1xf32> to vector<32x32xf32>
    %129 = arith.divf %125, %128 : vector<32x32xf32>
    %130 = vector.extract_strided_slice %74 {offsets = [0, 64], sizes = [32, 32], strides = [1, 1]} : vector<32x128xf32> to vector<32x32xf32>
    %131 = arith.truncf %129 : vector<32x32xf32> to vector<32x32xbf16>
    %132 = arith.truncf %130 : vector<32x32xf32> to vector<32x32xbf16>
    %cst_40 = arith.constant dense<0.000000e+00> : vector<32x32xf32>
    %133 = tpu.matmul %131, %132, %cst_40 {dimension_numbers = #tpu.dot_dimension_numbers<[1], [0], [0], [1], [0, 0, 1, 1], [], []>} : vector<32x32xbf16>, vector<32x32xbf16>, vector<32x32xf32> -> vector<32x32xf32>
    %134 = vector.extract_strided_slice %72 {offsets = [0, 96], sizes = [32, 32], strides = [1, 1]} : vector<32x128xf32> to vector<32x32xf32>
    %135 = arith.truncf %134 : vector<32x32xf32> to vector<32x32xbf16>
    %136 = vector.extract_strided_slice %73 {offsets = [0, 96], sizes = [32, 32], strides = [1, 1]} : vector<32x128xf32> to vector<32x32xf32>
    %137 = arith.truncf %136 : vector<32x32xf32> to vector<32x32xbf16>
    %cst_41 = arith.constant dense<0.000000e+00> : vector<32x32xf32>
    %138 = tpu.matmul %135, %137, %cst_41 {dimension_numbers = #tpu.dot_dimension_numbers<[1], [1], [0], [0], [0, 0, 1, 0], [], []>} : vector<32x32xbf16>, vector<32x32xbf16>, vector<32x32xf32> -> vector<32x32xf32>
    %139 = arith.addf %138, %14 : vector<32x32xf32>
    %cst_42 = arith.constant dense<0xFF800000> : vector<32xf32>
    %140 = vector.multi_reduction <maximumf>, %139, %cst_42 [1] : vector<32x32xf32> to vector<32xf32>
    %141 = vector.shape_cast %140 : vector<32xf32> to vector<32x1xf32>
    %142 = vector.broadcast %141 : vector<32x1xf32> to vector<32x32xf32>
    %143 = arith.subf %139, %142 : vector<32x32xf32>
    %144 = math.exp %143 : vector<32x32xf32>
    %cst_43 = arith.constant dense<0.000000e+00> : vector<32xf32>
    %145 = vector.multi_reduction <add>, %144, %cst_43 [1] : vector<32x32xf32> to vector<32xf32>
    %146 = vector.shape_cast %145 : vector<32xf32> to vector<32x1xf32>
    %147 = vector.broadcast %146 : vector<32x1xf32> to vector<32x32xf32>
    %148 = arith.divf %144, %147 : vector<32x32xf32>
    %149 = vector.extract_strided_slice %74 {offsets = [0, 96], sizes = [32, 32], strides = [1, 1]} : vector<32x128xf32> to vector<32x32xf32>
    %150 = arith.truncf %148 : vector<32x32xf32> to vector<32x32xbf16>
    %151 = arith.truncf %149 : vector<32x32xf32> to vector<32x32xbf16>
    %cst_44 = arith.constant dense<0.000000e+00> : vector<32x32xf32>
    %152 = tpu.matmul %150, %151, %cst_44 {dimension_numbers = #tpu.dot_dimension_numbers<[1], [0], [0], [1], [0, 0, 1, 1], [], []>} : vector<32x32xbf16>, vector<32x32xbf16>, vector<32x32xf32> -> vector<32x32xf32>
    %153 = tpu.concatenate %95, %114, %133, %152 in 1 : vector<32x32xf32>, vector<32x32xf32>, vector<32x32xf32>, vector<32x32xf32> -> vector<32x128xf32>
    %154 = arith.truncf %153 : vector<32x128xf32> to vector<32x128xbf16>
    %cst_45 = arith.constant dense<0.000000e+00> : vector<32x128xf32>
    %155 = tpu.matmul %154, %75, %cst_45 {dimension_numbers = #tpu.dot_dimension_numbers<[1], [0], [0], [1], [0, 0, 1, 1], [], []>} : vector<32x128xbf16>, vector<128x128xbf16>, vector<32x128xf32> -> vector<32x128xf32>
    %156 = vector.broadcast %76 : vector<1x128xf32> to vector<32x128xf32>
    %157 = arith.addf %155, %156 : vector<32x128xf32>
    %c0_46 = arith.constant 0 : index
    %c2432 = arith.constant 2432 : index
    %158 = vector.load %arg4[%c0_46, %c2432] : memref<128x2944xbf16, #tpu.memory_space<vmem>>, vector<128x8xbf16>
    %159 = arith.truncf %157 : vector<32x128xf32> to vector<32x128xbf16>
    %cst_47 = arith.constant dense<0.000000e+00> : vector<32x8xf32>
    %160 = tpu.matmul %159, %158, %cst_47 {dimension_numbers = #tpu.dot_dimension_numbers<[1], [0], [0], [1], [0, 0, 1, 1], [], []>} : vector<32x128xbf16>, vector<128x8xbf16>, vector<32x8xf32> -> vector<32x8xf32>
    %c4 = arith.constant 4 : index
    %c0_48 = arith.constant 0 : index
    %161 = vector.load %arg6[%c4, %c0_48] : memref<34x384xf32, #tpu.memory_space<vmem>>, vector<1x8xf32>
    %162 = vector.broadcast %161 : vector<1x8xf32> to vector<32x8xf32>
    %163 = arith.addf %160, %162 : vector<32x8xf32>
    %cst_49 = arith.constant 0.000000e+00 : f32
    %164 = vector.broadcast %cst_49 : f32 to vector<32x8xf32>
    %165 = arith.maximumf %163, %164 : vector<32x8xf32>
    %c512 = arith.constant 512 : index
    %c0_50 = arith.constant 0 : index
    %166 = vector.load %arg5[%c512, %c0_50] : memref<576x128xbf16, #tpu.memory_space<vmem>>, vector<8x128xbf16>
    %167 = arith.truncf %165 : vector<32x8xf32> to vector<32x8xbf16>
    %cst_51 = arith.constant dense<0.000000e+00> : vector<32x128xf32>
    %168 = tpu.matmul %167, %166, %cst_51 {dimension_numbers = #tpu.dot_dimension_numbers<[1], [0], [0], [1], [0, 0, 1, 1], [], []>} : vector<32x8xbf16>, vector<8x128xbf16>, vector<32x128xf32> -> vector<32x128xf32>
    %169 = arith.addf %157, %168 : vector<32x128xf32>
    %c5 = arith.constant 5 : index
    %c0_52 = arith.constant 0 : index
    %170 = vector.load %arg6[%c5, %c0_52] : memref<34x384xf32, #tpu.memory_space<vmem>>, vector<1x128xf32>
    %171 = vector.broadcast %170 : vector<1x128xf32> to vector<32x128xf32>
    %172 = arith.addf %169, %171 : vector<32x128xf32>
    %173 = arith.addf %172, %65 : vector<32x128xf32>
    %cst_53 = arith.constant dense<0.000000e+00> : vector<32xf32>
    %174 = vector.multi_reduction <add>, %173, %cst_53 [1] : vector<32x128xf32> to vector<32xf32>
    %175 = vector.shape_cast %174 : vector<32xf32> to vector<32x1xf32>
    %cst_54 = arith.constant 1.280000e+02 : f32
    %176 = vector.broadcast %cst_54 : f32 to vector<32x1xf32>
    %177 = arith.divf %175, %176 : vector<32x1xf32>
    %178 = vector.broadcast %177 : vector<32x1xf32> to vector<32x128xf32>
    %179 = arith.subf %173, %178 : vector<32x128xf32>
    %180 = arith.mulf %179, %179 : vector<32x128xf32>
    %cst_55 = arith.constant dense<0.000000e+00> : vector<32xf32>
    %181 = vector.multi_reduction <add>, %180, %cst_55 [1] : vector<32x128xf32> to vector<32xf32>
    %182 = vector.shape_cast %181 : vector<32xf32> to vector<32x1xf32>
    %cst_56 = arith.constant 1.280000e+02 : f32
    %183 = vector.broadcast %cst_56 : f32 to vector<32x1xf32>
    %184 = arith.divf %182, %183 : vector<32x1xf32>
    %cst_57 = arith.constant 9.99999974E-6 : f32
    %185 = vector.broadcast %cst_57 : f32 to vector<32x1xf32>
    %186 = arith.addf %184, %185 : vector<32x1xf32>
    %187 = math.rsqrt %186 : vector<32x1xf32>
    %188 = vector.broadcast %187 : vector<32x1xf32> to vector<32x128xf32>
    %189 = arith.mulf %179, %188 : vector<32x128xf32>
    %c6 = arith.constant 6 : index
    %c0_58 = arith.constant 0 : index
    %190 = vector.load %arg6[%c6, %c0_58] : memref<34x384xf32, #tpu.memory_space<vmem>>, vector<1x128xf32>
    %191 = vector.broadcast %190 : vector<1x128xf32> to vector<32x128xf32>
    %192 = arith.mulf %189, %191 : vector<32x128xf32>
    %c7 = arith.constant 7 : index
    %c0_59 = arith.constant 0 : index
    %193 = vector.load %arg6[%c7, %c0_59] : memref<34x384xf32, #tpu.memory_space<vmem>>, vector<1x128xf32>
    %194 = vector.broadcast %193 : vector<1x128xf32> to vector<32x128xf32>
    %195 = arith.addf %192, %194 : vector<32x128xf32>
    %c0_60 = arith.constant 0 : index
    %c512_61 = arith.constant 512 : index
    %196 = vector.load %arg4[%c0_60, %c512_61] : memref<128x2944xbf16, #tpu.memory_space<vmem>>, vector<128x256xbf16>
    %197 = arith.truncf %195 : vector<32x128xf32> to vector<32x128xbf16>
    %cst_62 = arith.constant dense<0.000000e+00> : vector<32x256xf32>
    %198 = tpu.matmul %197, %196, %cst_62 {dimension_numbers = #tpu.dot_dimension_numbers<[1], [0], [0], [1], [0, 0, 1, 1], [], []>} : vector<32x128xbf16>, vector<128x256xbf16>, vector<32x256xf32> -> vector<32x256xf32>
    %c8 = arith.constant 8 : index
    %c0_63 = arith.constant 0 : index
    %199 = vector.load %arg6[%c8, %c0_63] : memref<34x384xf32, #tpu.memory_space<vmem>>, vector<1x256xf32>
    %200 = vector.broadcast %199 : vector<1x256xf32> to vector<32x256xf32>
    %201 = arith.addf %198, %200 : vector<32x256xf32>
    %cst_64 = arith.constant 5.000000e-01 : f32
    %202 = vector.broadcast %cst_64 : f32 to vector<32x256xf32>
    %203 = arith.mulf %202, %201 : vector<32x256xf32>
    %cst_65 = arith.constant 4.471500e-02 : f32
    %204 = vector.broadcast %cst_65 : f32 to vector<32x256xf32>
    %205 = arith.mulf %204, %201 : vector<32x256xf32>
    %206 = arith.mulf %205, %201 : vector<32x256xf32>
    %207 = arith.mulf %206, %201 : vector<32x256xf32>
    %208 = arith.addf %201, %207 : vector<32x256xf32>
    %cst_66 = arith.constant 0.797884583 : f32
    %209 = vector.broadcast %cst_66 : f32 to vector<32x256xf32>
    %210 = arith.mulf %209, %208 : vector<32x256xf32>
    %211 = math.tanh %210 : vector<32x256xf32>
    %cst_67 = arith.constant 1.000000e+00 : f32
    %212 = vector.broadcast %cst_67 : f32 to vector<32x256xf32>
    %213 = arith.addf %212, %211 : vector<32x256xf32>
    %214 = arith.mulf %203, %213 : vector<32x256xf32>
    %c0_68 = arith.constant 0 : index
    %c0_69 = arith.constant 0 : index
    %215 = vector.load %arg5[%c0_68, %c0_69] : memref<576x128xbf16, #tpu.memory_space<vmem>>, vector<256x128xbf16>
    %216 = arith.truncf %214 : vector<32x256xf32> to vector<32x256xbf16>
    %cst_70 = arith.constant dense<0.000000e+00> : vector<32x128xf32>
    %217 = tpu.matmul %216, %215, %cst_70 {dimension_numbers = #tpu.dot_dimension_numbers<[1], [0], [0], [1], [0, 0, 1, 1], [], []>} : vector<32x256xbf16>, vector<256x128xbf16>, vector<32x128xf32> -> vector<32x128xf32>
    %c9 = arith.constant 9 : index
    %c0_71 = arith.constant 0 : index
    %218 = vector.load %arg6[%c9, %c0_71] : memref<34x384xf32, #tpu.memory_space<vmem>>, vector<1x128xf32>
    %219 = vector.broadcast %218 : vector<1x128xf32> to vector<32x128xf32>
    %220 = arith.addf %217, %219 : vector<32x128xf32>
    %c0_72 = arith.constant 0 : index
    %c2560 = arith.constant 2560 : index
    %221 = vector.load %arg4[%c0_72, %c2560] : memref<128x2944xbf16, #tpu.memory_space<vmem>>, vector<128x8xbf16>
    %222 = arith.truncf %220 : vector<32x128xf32> to vector<32x128xbf16>
    %cst_73 = arith.constant dense<0.000000e+00> : vector<32x8xf32>
    %223 = tpu.matmul %222, %221, %cst_73 {dimension_numbers = #tpu.dot_dimension_numbers<[1], [0], [0], [1], [0, 0, 1, 1], [], []>} : vector<32x128xbf16>, vector<128x8xbf16>, vector<32x8xf32> -> vector<32x8xf32>
    %c10 = arith.constant 10 : index
    %c0_74 = arith.constant 0 : index
    %224 = vector.load %arg6[%c10, %c0_74] : memref<34x384xf32, #tpu.memory_space<vmem>>, vector<1x8xf32>
    %225 = vector.broadcast %224 : vector<1x8xf32> to vector<32x8xf32>
    %226 = arith.addf %223, %225 : vector<32x8xf32>
    %cst_75 = arith.constant 0.000000e+00 : f32
    %227 = vector.broadcast %cst_75 : f32 to vector<32x8xf32>
    %228 = arith.maximumf %226, %227 : vector<32x8xf32>
    %c528 = arith.constant 528 : index
    %c0_76 = arith.constant 0 : index
    %229 = vector.load %arg5[%c528, %c0_76] : memref<576x128xbf16, #tpu.memory_space<vmem>>, vector<8x128xbf16>
    %230 = arith.truncf %228 : vector<32x8xf32> to vector<32x8xbf16>
    %cst_77 = arith.constant dense<0.000000e+00> : vector<32x128xf32>
    %231 = tpu.matmul %230, %229, %cst_77 {dimension_numbers = #tpu.dot_dimension_numbers<[1], [0], [0], [1], [0, 0, 1, 1], [], []>} : vector<32x8xbf16>, vector<8x128xbf16>, vector<32x128xf32> -> vector<32x128xf32>
    %232 = arith.addf %220, %231 : vector<32x128xf32>
    %c11 = arith.constant 11 : index
    %c0_78 = arith.constant 0 : index
    %233 = vector.load %arg6[%c11, %c0_78] : memref<34x384xf32, #tpu.memory_space<vmem>>, vector<1x128xf32>
    %234 = vector.broadcast %233 : vector<1x128xf32> to vector<32x128xf32>
    %235 = arith.addf %232, %234 : vector<32x128xf32>
    %236 = arith.addf %235, %195 : vector<32x128xf32>
    %cst_79 = arith.constant dense<0.000000e+00> : vector<32xf32>
    %237 = vector.multi_reduction <add>, %236, %cst_79 [1] : vector<32x128xf32> to vector<32xf32>
    %238 = vector.shape_cast %237 : vector<32xf32> to vector<32x1xf32>
    %cst_80 = arith.constant 1.280000e+02 : f32
    %239 = vector.broadcast %cst_80 : f32 to vector<32x1xf32>
    %240 = arith.divf %238, %239 : vector<32x1xf32>
    %241 = vector.broadcast %240 : vector<32x1xf32> to vector<32x128xf32>
    %242 = arith.subf %236, %241 : vector<32x128xf32>
    %243 = arith.mulf %242, %242 : vector<32x128xf32>
    %cst_81 = arith.constant dense<0.000000e+00> : vector<32xf32>
    %244 = vector.multi_reduction <add>, %243, %cst_81 [1] : vector<32x128xf32> to vector<32xf32>
    %245 = vector.shape_cast %244 : vector<32xf32> to vector<32x1xf32>
    %cst_82 = arith.constant 1.280000e+02 : f32
    %246 = vector.broadcast %cst_82 : f32 to vector<32x1xf32>
    %247 = arith.divf %245, %246 : vector<32x1xf32>
    %cst_83 = arith.constant 9.99999974E-6 : f32
    %248 = vector.broadcast %cst_83 : f32 to vector<32x1xf32>
    %249 = arith.addf %247, %248 : vector<32x1xf32>
    %250 = math.rsqrt %249 : vector<32x1xf32>
    %251 = vector.broadcast %250 : vector<32x1xf32> to vector<32x128xf32>
    %252 = arith.mulf %242, %251 : vector<32x128xf32>
    %c12 = arith.constant 12 : index
    %c0_84 = arith.constant 0 : index
    %253 = vector.load %arg6[%c12, %c0_84] : memref<34x384xf32, #tpu.memory_space<vmem>>, vector<1x128xf32>
    %254 = vector.broadcast %253 : vector<1x128xf32> to vector<32x128xf32>
    %255 = arith.mulf %252, %254 : vector<32x128xf32>
    %c13 = arith.constant 13 : index
    %c0_85 = arith.constant 0 : index
    %256 = vector.load %arg6[%c13, %c0_85] : memref<34x384xf32, #tpu.memory_space<vmem>>, vector<1x128xf32>
    %257 = vector.broadcast %256 : vector<1x128xf32> to vector<32x128xf32>
    %258 = arith.addf %255, %257 : vector<32x128xf32>
    %c0_86 = arith.constant 0 : index
    %c0_87 = arith.constant 0 : index
    %259 = vector.load %arg1[%c0_86, %c0_87] : memref<32x128xf32, #tpu.memory_space<vmem>>, vector<32x128xf32>
    %cst_88 = arith.constant dense<0.000000e+00> : vector<32xf32>
    %260 = vector.multi_reduction <add>, %259, %cst_88 [1] : vector<32x128xf32> to vector<32xf32>
    %261 = vector.shape_cast %260 : vector<32xf32> to vector<32x1xf32>
    %cst_89 = arith.constant 1.280000e+02 : f32
    %262 = vector.broadcast %cst_89 : f32 to vector<32x1xf32>
    %263 = arith.divf %261, %262 : vector<32x1xf32>
    %264 = vector.broadcast %263 : vector<32x1xf32> to vector<32x128xf32>
    %265 = arith.subf %259, %264 : vector<32x128xf32>
    %266 = arith.mulf %265, %265 : vector<32x128xf32>
    %cst_90 = arith.constant dense<0.000000e+00> : vector<32xf32>
    %267 = vector.multi_reduction <add>, %266, %cst_90 [1] : vector<32x128xf32> to vector<32xf32>
    %268 = vector.shape_cast %267 : vector<32xf32> to vector<32x1xf32>
    %cst_91 = arith.constant 1.280000e+02 : f32
    %269 = vector.broadcast %cst_91 : f32 to vector<32x1xf32>
    %270 = arith.divf %268, %269 : vector<32x1xf32>
    %cst_92 = arith.constant 9.99999974E-6 : f32
    %271 = vector.broadcast %cst_92 : f32 to vector<32x1xf32>
    %272 = arith.addf %270, %271 : vector<32x1xf32>
    %273 = math.rsqrt %272 : vector<32x1xf32>
    %274 = vector.broadcast %273 : vector<32x1xf32> to vector<32x128xf32>
    %275 = arith.mulf %265, %274 : vector<32x128xf32>
    %c14 = arith.constant 14 : index
    %c0_93 = arith.constant 0 : index
    %276 = vector.load %arg6[%c14, %c0_93] : memref<34x384xf32, #tpu.memory_space<vmem>>, vector<1x128xf32>
    %277 = vector.broadcast %276 : vector<1x128xf32> to vector<32x128xf32>
    %278 = arith.mulf %275, %277 : vector<32x128xf32>
    %c15 = arith.constant 15 : index
    %c0_94 = arith.constant 0 : index
    %279 = vector.load %arg6[%c15, %c0_94] : memref<34x384xf32, #tpu.memory_space<vmem>>, vector<1x128xf32>
    %280 = vector.broadcast %279 : vector<1x128xf32> to vector<32x128xf32>
    %281 = arith.addf %278, %280 : vector<32x128xf32>
    %c0_95 = arith.constant 0 : index
    %c768 = arith.constant 768 : index
    %282 = vector.load %arg4[%c0_95, %c768] : memref<128x2944xbf16, #tpu.memory_space<vmem>>, vector<128x384xbf16>
    %283 = arith.truncf %281 : vector<32x128xf32> to vector<32x128xbf16>
    %cst_96 = arith.constant dense<0.000000e+00> : vector<32x384xf32>
    %284 = tpu.matmul %283, %282, %cst_96 {dimension_numbers = #tpu.dot_dimension_numbers<[1], [0], [0], [1], [0, 0, 1, 1], [], []>} : vector<32x128xbf16>, vector<128x384xbf16>, vector<32x384xf32> -> vector<32x384xf32>
    %c16 = arith.constant 16 : index
    %c0_97 = arith.constant 0 : index
    %285 = vector.load %arg6[%c16, %c0_97] : memref<34x384xf32, #tpu.memory_space<vmem>>, vector<1x384xf32>
    %286 = vector.broadcast %285 : vector<1x384xf32> to vector<32x384xf32>
    %287 = arith.addf %284, %286 : vector<32x384xf32>
    %288 = vector.extract_strided_slice %287 {offsets = [0, 0], sizes = [32, 128], strides = [1, 1]} : vector<32x384xf32> to vector<32x128xf32>
    %289 = vector.extract_strided_slice %287 {offsets = [0, 128], sizes = [32, 128], strides = [1, 1]} : vector<32x384xf32> to vector<32x128xf32>
    %290 = vector.extract_strided_slice %287 {offsets = [0, 256], sizes = [32, 128], strides = [1, 1]} : vector<32x384xf32> to vector<32x128xf32>
    %c0_98 = arith.constant 0 : index
    %c1152 = arith.constant 1152 : index
    %291 = vector.load %arg4[%c0_98, %c1152] : memref<128x2944xbf16, #tpu.memory_space<vmem>>, vector<128x128xbf16>
    %c17 = arith.constant 17 : index
    %c0_99 = arith.constant 0 : index
    %292 = vector.load %arg6[%c17, %c0_99] : memref<34x384xf32, #tpu.memory_space<vmem>>, vector<1x128xf32>
    %293 = vector.extract_strided_slice %288 {offsets = [0, 0], sizes = [32, 32], strides = [1, 1]} : vector<32x128xf32> to vector<32x32xf32>
    %294 = arith.truncf %293 : vector<32x32xf32> to vector<32x32xbf16>
    %295 = vector.extract_strided_slice %289 {offsets = [0, 0], sizes = [32, 32], strides = [1, 1]} : vector<32x128xf32> to vector<32x32xf32>
    %296 = arith.truncf %295 : vector<32x32xf32> to vector<32x32xbf16>
    %cst_100 = arith.constant dense<0.000000e+00> : vector<32x32xf32>
    %297 = tpu.matmul %294, %296, %cst_100 {dimension_numbers = #tpu.dot_dimension_numbers<[1], [1], [0], [0], [0, 0, 1, 0], [], []>} : vector<32x32xbf16>, vector<32x32xbf16>, vector<32x32xf32> -> vector<32x32xf32>
    %298 = arith.addf %297, %30 : vector<32x32xf32>
    %cst_101 = arith.constant dense<0xFF800000> : vector<32xf32>
    %299 = vector.multi_reduction <maximumf>, %298, %cst_101 [1] : vector<32x32xf32> to vector<32xf32>
    %300 = vector.shape_cast %299 : vector<32xf32> to vector<32x1xf32>
    %301 = vector.broadcast %300 : vector<32x1xf32> to vector<32x32xf32>
    %302 = arith.subf %298, %301 : vector<32x32xf32>
    %303 = math.exp %302 : vector<32x32xf32>
    %cst_102 = arith.constant dense<0.000000e+00> : vector<32xf32>
    %304 = vector.multi_reduction <add>, %303, %cst_102 [1] : vector<32x32xf32> to vector<32xf32>
    %305 = vector.shape_cast %304 : vector<32xf32> to vector<32x1xf32>
    %306 = vector.broadcast %305 : vector<32x1xf32> to vector<32x32xf32>
    %307 = arith.divf %303, %306 : vector<32x32xf32>
    %308 = vector.extract_strided_slice %290 {offsets = [0, 0], sizes = [32, 32], strides = [1, 1]} : vector<32x128xf32> to vector<32x32xf32>
    %309 = arith.truncf %307 : vector<32x32xf32> to vector<32x32xbf16>
    %310 = arith.truncf %308 : vector<32x32xf32> to vector<32x32xbf16>
    %cst_103 = arith.constant dense<0.000000e+00> : vector<32x32xf32>
    %311 = tpu.matmul %309, %310, %cst_103 {dimension_numbers = #tpu.dot_dimension_numbers<[1], [0], [0], [1], [0, 0, 1, 1], [], []>} : vector<32x32xbf16>, vector<32x32xbf16>, vector<32x32xf32> -> vector<32x32xf32>
    %312 = vector.extract_strided_slice %288 {offsets = [0, 32], sizes = [32, 32], strides = [1, 1]} : vector<32x128xf32> to vector<32x32xf32>
    %313 = arith.truncf %312 : vector<32x32xf32> to vector<32x32xbf16>
    %314 = vector.extract_strided_slice %289 {offsets = [0, 32], sizes = [32, 32], strides = [1, 1]} : vector<32x128xf32> to vector<32x32xf32>
    %315 = arith.truncf %314 : vector<32x32xf32> to vector<32x32xbf16>
    %cst_104 = arith.constant dense<0.000000e+00> : vector<32x32xf32>
    %316 = tpu.matmul %313, %315, %cst_104 {dimension_numbers = #tpu.dot_dimension_numbers<[1], [1], [0], [0], [0, 0, 1, 0], [], []>} : vector<32x32xbf16>, vector<32x32xbf16>, vector<32x32xf32> -> vector<32x32xf32>
    %317 = arith.addf %316, %30 : vector<32x32xf32>
    %cst_105 = arith.constant dense<0xFF800000> : vector<32xf32>
    %318 = vector.multi_reduction <maximumf>, %317, %cst_105 [1] : vector<32x32xf32> to vector<32xf32>
    %319 = vector.shape_cast %318 : vector<32xf32> to vector<32x1xf32>
    %320 = vector.broadcast %319 : vector<32x1xf32> to vector<32x32xf32>
    %321 = arith.subf %317, %320 : vector<32x32xf32>
    %322 = math.exp %321 : vector<32x32xf32>
    %cst_106 = arith.constant dense<0.000000e+00> : vector<32xf32>
    %323 = vector.multi_reduction <add>, %322, %cst_106 [1] : vector<32x32xf32> to vector<32xf32>
    %324 = vector.shape_cast %323 : vector<32xf32> to vector<32x1xf32>
    %325 = vector.broadcast %324 : vector<32x1xf32> to vector<32x32xf32>
    %326 = arith.divf %322, %325 : vector<32x32xf32>
    %327 = vector.extract_strided_slice %290 {offsets = [0, 32], sizes = [32, 32], strides = [1, 1]} : vector<32x128xf32> to vector<32x32xf32>
    %328 = arith.truncf %326 : vector<32x32xf32> to vector<32x32xbf16>
    %329 = arith.truncf %327 : vector<32x32xf32> to vector<32x32xbf16>
    %cst_107 = arith.constant dense<0.000000e+00> : vector<32x32xf32>
    %330 = tpu.matmul %328, %329, %cst_107 {dimension_numbers = #tpu.dot_dimension_numbers<[1], [0], [0], [1], [0, 0, 1, 1], [], []>} : vector<32x32xbf16>, vector<32x32xbf16>, vector<32x32xf32> -> vector<32x32xf32>
    %331 = vector.extract_strided_slice %288 {offsets = [0, 64], sizes = [32, 32], strides = [1, 1]} : vector<32x128xf32> to vector<32x32xf32>
    %332 = arith.truncf %331 : vector<32x32xf32> to vector<32x32xbf16>
    %333 = vector.extract_strided_slice %289 {offsets = [0, 64], sizes = [32, 32], strides = [1, 1]} : vector<32x128xf32> to vector<32x32xf32>
    %334 = arith.truncf %333 : vector<32x32xf32> to vector<32x32xbf16>
    %cst_108 = arith.constant dense<0.000000e+00> : vector<32x32xf32>
    %335 = tpu.matmul %332, %334, %cst_108 {dimension_numbers = #tpu.dot_dimension_numbers<[1], [1], [0], [0], [0, 0, 1, 0], [], []>} : vector<32x32xbf16>, vector<32x32xbf16>, vector<32x32xf32> -> vector<32x32xf32>
    %336 = arith.addf %335, %30 : vector<32x32xf32>
    %cst_109 = arith.constant dense<0xFF800000> : vector<32xf32>
    %337 = vector.multi_reduction <maximumf>, %336, %cst_109 [1] : vector<32x32xf32> to vector<32xf32>
    %338 = vector.shape_cast %337 : vector<32xf32> to vector<32x1xf32>
    %339 = vector.broadcast %338 : vector<32x1xf32> to vector<32x32xf32>
    %340 = arith.subf %336, %339 : vector<32x32xf32>
    %341 = math.exp %340 : vector<32x32xf32>
    %cst_110 = arith.constant dense<0.000000e+00> : vector<32xf32>
    %342 = vector.multi_reduction <add>, %341, %cst_110 [1] : vector<32x32xf32> to vector<32xf32>
    %343 = vector.shape_cast %342 : vector<32xf32> to vector<32x1xf32>
    %344 = vector.broadcast %343 : vector<32x1xf32> to vector<32x32xf32>
    %345 = arith.divf %341, %344 : vector<32x32xf32>
    %346 = vector.extract_strided_slice %290 {offsets = [0, 64], sizes = [32, 32], strides = [1, 1]} : vector<32x128xf32> to vector<32x32xf32>
    %347 = arith.truncf %345 : vector<32x32xf32> to vector<32x32xbf16>
    %348 = arith.truncf %346 : vector<32x32xf32> to vector<32x32xbf16>
    %cst_111 = arith.constant dense<0.000000e+00> : vector<32x32xf32>
    %349 = tpu.matmul %347, %348, %cst_111 {dimension_numbers = #tpu.dot_dimension_numbers<[1], [0], [0], [1], [0, 0, 1, 1], [], []>} : vector<32x32xbf16>, vector<32x32xbf16>, vector<32x32xf32> -> vector<32x32xf32>
    %350 = vector.extract_strided_slice %288 {offsets = [0, 96], sizes = [32, 32], strides = [1, 1]} : vector<32x128xf32> to vector<32x32xf32>
    %351 = arith.truncf %350 : vector<32x32xf32> to vector<32x32xbf16>
    %352 = vector.extract_strided_slice %289 {offsets = [0, 96], sizes = [32, 32], strides = [1, 1]} : vector<32x128xf32> to vector<32x32xf32>
    %353 = arith.truncf %352 : vector<32x32xf32> to vector<32x32xbf16>
    %cst_112 = arith.constant dense<0.000000e+00> : vector<32x32xf32>
    %354 = tpu.matmul %351, %353, %cst_112 {dimension_numbers = #tpu.dot_dimension_numbers<[1], [1], [0], [0], [0, 0, 1, 0], [], []>} : vector<32x32xbf16>, vector<32x32xbf16>, vector<32x32xf32> -> vector<32x32xf32>
    %355 = arith.addf %354, %30 : vector<32x32xf32>
    %cst_113 = arith.constant dense<0xFF800000> : vector<32xf32>
    %356 = vector.multi_reduction <maximumf>, %355, %cst_113 [1] : vector<32x32xf32> to vector<32xf32>
    %357 = vector.shape_cast %356 : vector<32xf32> to vector<32x1xf32>
    %358 = vector.broadcast %357 : vector<32x1xf32> to vector<32x32xf32>
    %359 = arith.subf %355, %358 : vector<32x32xf32>
    %360 = math.exp %359 : vector<32x32xf32>
    %cst_114 = arith.constant dense<0.000000e+00> : vector<32xf32>
    %361 = vector.multi_reduction <add>, %360, %cst_114 [1] : vector<32x32xf32> to vector<32xf32>
    %362 = vector.shape_cast %361 : vector<32xf32> to vector<32x1xf32>
    %363 = vector.broadcast %362 : vector<32x1xf32> to vector<32x32xf32>
    %364 = arith.divf %360, %363 : vector<32x32xf32>
    %365 = vector.extract_strided_slice %290 {offsets = [0, 96], sizes = [32, 32], strides = [1, 1]} : vector<32x128xf32> to vector<32x32xf32>
    %366 = arith.truncf %364 : vector<32x32xf32> to vector<32x32xbf16>
    %367 = arith.truncf %365 : vector<32x32xf32> to vector<32x32xbf16>
    %cst_115 = arith.constant dense<0.000000e+00> : vector<32x32xf32>
    %368 = tpu.matmul %366, %367, %cst_115 {dimension_numbers = #tpu.dot_dimension_numbers<[1], [0], [0], [1], [0, 0, 1, 1], [], []>} : vector<32x32xbf16>, vector<32x32xbf16>, vector<32x32xf32> -> vector<32x32xf32>
    %369 = tpu.concatenate %311, %330, %349, %368 in 1 : vector<32x32xf32>, vector<32x32xf32>, vector<32x32xf32>, vector<32x32xf32> -> vector<32x128xf32>
    %370 = arith.truncf %369 : vector<32x128xf32> to vector<32x128xbf16>
    %cst_116 = arith.constant dense<0.000000e+00> : vector<32x128xf32>
    %371 = tpu.matmul %370, %291, %cst_116 {dimension_numbers = #tpu.dot_dimension_numbers<[1], [0], [0], [1], [0, 0, 1, 1], [], []>} : vector<32x128xbf16>, vector<128x128xbf16>, vector<32x128xf32> -> vector<32x128xf32>
    %372 = vector.broadcast %292 : vector<1x128xf32> to vector<32x128xf32>
    %373 = arith.addf %371, %372 : vector<32x128xf32>
    %c0_117 = arith.constant 0 : index
    %c2688 = arith.constant 2688 : index
    %374 = vector.load %arg4[%c0_117, %c2688] : memref<128x2944xbf16, #tpu.memory_space<vmem>>, vector<128x8xbf16>
    %375 = arith.truncf %373 : vector<32x128xf32> to vector<32x128xbf16>
    %cst_118 = arith.constant dense<0.000000e+00> : vector<32x8xf32>
    %376 = tpu.matmul %375, %374, %cst_118 {dimension_numbers = #tpu.dot_dimension_numbers<[1], [0], [0], [1], [0, 0, 1, 1], [], []>} : vector<32x128xbf16>, vector<128x8xbf16>, vector<32x8xf32> -> vector<32x8xf32>
    %c18 = arith.constant 18 : index
    %c0_119 = arith.constant 0 : index
    %377 = vector.load %arg6[%c18, %c0_119] : memref<34x384xf32, #tpu.memory_space<vmem>>, vector<1x8xf32>
    %378 = vector.broadcast %377 : vector<1x8xf32> to vector<32x8xf32>
    %379 = arith.addf %376, %378 : vector<32x8xf32>
    %cst_120 = arith.constant 0.000000e+00 : f32
    %380 = vector.broadcast %cst_120 : f32 to vector<32x8xf32>
    %381 = arith.maximumf %379, %380 : vector<32x8xf32>
    %c544 = arith.constant 544 : index
    %c0_121 = arith.constant 0 : index
    %382 = vector.load %arg5[%c544, %c0_121] : memref<576x128xbf16, #tpu.memory_space<vmem>>, vector<8x128xbf16>
    %383 = arith.truncf %381 : vector<32x8xf32> to vector<32x8xbf16>
    %cst_122 = arith.constant dense<0.000000e+00> : vector<32x128xf32>
    %384 = tpu.matmul %383, %382, %cst_122 {dimension_numbers = #tpu.dot_dimension_numbers<[1], [0], [0], [1], [0, 0, 1, 1], [], []>} : vector<32x8xbf16>, vector<8x128xbf16>, vector<32x128xf32> -> vector<32x128xf32>
    %385 = arith.addf %373, %384 : vector<32x128xf32>
    %c19 = arith.constant 19 : index
    %c0_123 = arith.constant 0 : index
    %386 = vector.load %arg6[%c19, %c0_123] : memref<34x384xf32, #tpu.memory_space<vmem>>, vector<1x128xf32>
    %387 = vector.broadcast %386 : vector<1x128xf32> to vector<32x128xf32>
    %388 = arith.addf %385, %387 : vector<32x128xf32>
    %389 = arith.addf %388, %281 : vector<32x128xf32>
    %cst_124 = arith.constant dense<0.000000e+00> : vector<32xf32>
    %390 = vector.multi_reduction <add>, %389, %cst_124 [1] : vector<32x128xf32> to vector<32xf32>
    %391 = vector.shape_cast %390 : vector<32xf32> to vector<32x1xf32>
    %cst_125 = arith.constant 1.280000e+02 : f32
    %392 = vector.broadcast %cst_125 : f32 to vector<32x1xf32>
    %393 = arith.divf %391, %392 : vector<32x1xf32>
    %394 = vector.broadcast %393 : vector<32x1xf32> to vector<32x128xf32>
    %395 = arith.subf %389, %394 : vector<32x128xf32>
    %396 = arith.mulf %395, %395 : vector<32x128xf32>
    %cst_126 = arith.constant dense<0.000000e+00> : vector<32xf32>
    %397 = vector.multi_reduction <add>, %396, %cst_126 [1] : vector<32x128xf32> to vector<32xf32>
    %398 = vector.shape_cast %397 : vector<32xf32> to vector<32x1xf32>
    %cst_127 = arith.constant 1.280000e+02 : f32
    %399 = vector.broadcast %cst_127 : f32 to vector<32x1xf32>
    %400 = arith.divf %398, %399 : vector<32x1xf32>
    %cst_128 = arith.constant 9.99999974E-6 : f32
    %401 = vector.broadcast %cst_128 : f32 to vector<32x1xf32>
    %402 = arith.addf %400, %401 : vector<32x1xf32>
    %403 = math.rsqrt %402 : vector<32x1xf32>
    %404 = vector.broadcast %403 : vector<32x1xf32> to vector<32x128xf32>
    %405 = arith.mulf %395, %404 : vector<32x128xf32>
    %c20 = arith.constant 20 : index
    %c0_129 = arith.constant 0 : index
    %406 = vector.load %arg6[%c20, %c0_129] : memref<34x384xf32, #tpu.memory_space<vmem>>, vector<1x128xf32>
    %407 = vector.broadcast %406 : vector<1x128xf32> to vector<32x128xf32>
    %408 = arith.mulf %405, %407 : vector<32x128xf32>
    %c21 = arith.constant 21 : index
    %c0_130 = arith.constant 0 : index
    %409 = vector.load %arg6[%c21, %c0_130] : memref<34x384xf32, #tpu.memory_space<vmem>>, vector<1x128xf32>
    %410 = vector.broadcast %409 : vector<1x128xf32> to vector<32x128xf32>
    %411 = arith.addf %408, %410 : vector<32x128xf32>
    %c0_131 = arith.constant 0 : index
    %c1280 = arith.constant 1280 : index
    %412 = vector.load %arg4[%c0_131, %c1280] : memref<128x2944xbf16, #tpu.memory_space<vmem>>, vector<128x128xbf16>
    %413 = arith.truncf %411 : vector<32x128xf32> to vector<32x128xbf16>
    %cst_132 = arith.constant dense<0.000000e+00> : vector<32x128xf32>
    %414 = tpu.matmul %413, %412, %cst_132 {dimension_numbers = #tpu.dot_dimension_numbers<[1], [0], [0], [1], [0, 0, 1, 1], [], []>} : vector<32x128xbf16>, vector<128x128xbf16>, vector<32x128xf32> -> vector<32x128xf32>
    %c22 = arith.constant 22 : index
    %c0_133 = arith.constant 0 : index
    %415 = vector.load %arg6[%c22, %c0_133] : memref<34x384xf32, #tpu.memory_space<vmem>>, vector<1x128xf32>
    %416 = vector.broadcast %415 : vector<1x128xf32> to vector<32x128xf32>
    %417 = arith.addf %414, %416 : vector<32x128xf32>
    %c0_134 = arith.constant 0 : index
    %c1408 = arith.constant 1408 : index
    %418 = vector.load %arg4[%c0_134, %c1408] : memref<128x2944xbf16, #tpu.memory_space<vmem>>, vector<128x256xbf16>
    %419 = arith.truncf %258 : vector<32x128xf32> to vector<32x128xbf16>
    %cst_135 = arith.constant dense<0.000000e+00> : vector<32x256xf32>
    %420 = tpu.matmul %419, %418, %cst_135 {dimension_numbers = #tpu.dot_dimension_numbers<[1], [0], [0], [1], [0, 0, 1, 1], [], []>} : vector<32x128xbf16>, vector<128x256xbf16>, vector<32x256xf32> -> vector<32x256xf32>
    %c23 = arith.constant 23 : index
    %c0_136 = arith.constant 0 : index
    %421 = vector.load %arg6[%c23, %c0_136] : memref<34x384xf32, #tpu.memory_space<vmem>>, vector<1x256xf32>
    %422 = vector.broadcast %421 : vector<1x256xf32> to vector<32x256xf32>
    %423 = arith.addf %420, %422 : vector<32x256xf32>
    %424 = vector.extract_strided_slice %423 {offsets = [0, 0], sizes = [32, 128], strides = [1, 1]} : vector<32x256xf32> to vector<32x128xf32>
    %425 = vector.extract_strided_slice %423 {offsets = [0, 128], sizes = [32, 128], strides = [1, 1]} : vector<32x256xf32> to vector<32x128xf32>
    %c0_137 = arith.constant 0 : index
    %c1664 = arith.constant 1664 : index
    %426 = vector.load %arg4[%c0_137, %c1664] : memref<128x2944xbf16, #tpu.memory_space<vmem>>, vector<128x128xbf16>
    %c24 = arith.constant 24 : index
    %c0_138 = arith.constant 0 : index
    %427 = vector.load %arg6[%c24, %c0_138] : memref<34x384xf32, #tpu.memory_space<vmem>>, vector<1x128xf32>
    %428 = vector.extract_strided_slice %417 {offsets = [0, 0], sizes = [32, 32], strides = [1, 1]} : vector<32x128xf32> to vector<32x32xf32>
    %429 = arith.truncf %428 : vector<32x32xf32> to vector<32x32xbf16>
    %430 = vector.extract_strided_slice %424 {offsets = [0, 0], sizes = [32, 32], strides = [1, 1]} : vector<32x128xf32> to vector<32x32xf32>
    %431 = arith.truncf %430 : vector<32x32xf32> to vector<32x32xbf16>
    %cst_139 = arith.constant dense<0.000000e+00> : vector<32x32xf32>
    %432 = tpu.matmul %429, %431, %cst_139 {dimension_numbers = #tpu.dot_dimension_numbers<[1], [1], [0], [0], [0, 0, 1, 0], [], []>} : vector<32x32xbf16>, vector<32x32xbf16>, vector<32x32xf32> -> vector<32x32xf32>
    %433 = arith.addf %432, %42 : vector<32x32xf32>
    %cst_140 = arith.constant dense<0xFF800000> : vector<32xf32>
    %434 = vector.multi_reduction <maximumf>, %433, %cst_140 [1] : vector<32x32xf32> to vector<32xf32>
    %435 = vector.shape_cast %434 : vector<32xf32> to vector<32x1xf32>
    %436 = vector.broadcast %435 : vector<32x1xf32> to vector<32x32xf32>
    %437 = arith.subf %433, %436 : vector<32x32xf32>
    %438 = math.exp %437 : vector<32x32xf32>
    %cst_141 = arith.constant dense<0.000000e+00> : vector<32xf32>
    %439 = vector.multi_reduction <add>, %438, %cst_141 [1] : vector<32x32xf32> to vector<32xf32>
    %440 = vector.shape_cast %439 : vector<32xf32> to vector<32x1xf32>
    %441 = vector.broadcast %440 : vector<32x1xf32> to vector<32x32xf32>
    %442 = arith.divf %438, %441 : vector<32x32xf32>
    %443 = vector.extract_strided_slice %425 {offsets = [0, 0], sizes = [32, 32], strides = [1, 1]} : vector<32x128xf32> to vector<32x32xf32>
    %444 = arith.truncf %442 : vector<32x32xf32> to vector<32x32xbf16>
    %445 = arith.truncf %443 : vector<32x32xf32> to vector<32x32xbf16>
    %cst_142 = arith.constant dense<0.000000e+00> : vector<32x32xf32>
    %446 = tpu.matmul %444, %445, %cst_142 {dimension_numbers = #tpu.dot_dimension_numbers<[1], [0], [0], [1], [0, 0, 1, 1], [], []>} : vector<32x32xbf16>, vector<32x32xbf16>, vector<32x32xf32> -> vector<32x32xf32>
    %447 = vector.extract_strided_slice %417 {offsets = [0, 32], sizes = [32, 32], strides = [1, 1]} : vector<32x128xf32> to vector<32x32xf32>
    %448 = arith.truncf %447 : vector<32x32xf32> to vector<32x32xbf16>
    %449 = vector.extract_strided_slice %424 {offsets = [0, 32], sizes = [32, 32], strides = [1, 1]} : vector<32x128xf32> to vector<32x32xf32>
    %450 = arith.truncf %449 : vector<32x32xf32> to vector<32x32xbf16>
    %cst_143 = arith.constant dense<0.000000e+00> : vector<32x32xf32>
    %451 = tpu.matmul %448, %450, %cst_143 {dimension_numbers = #tpu.dot_dimension_numbers<[1], [1], [0], [0], [0, 0, 1, 0], [], []>} : vector<32x32xbf16>, vector<32x32xbf16>, vector<32x32xf32> -> vector<32x32xf32>
    %452 = arith.addf %451, %42 : vector<32x32xf32>
    %cst_144 = arith.constant dense<0xFF800000> : vector<32xf32>
    %453 = vector.multi_reduction <maximumf>, %452, %cst_144 [1] : vector<32x32xf32> to vector<32xf32>
    %454 = vector.shape_cast %453 : vector<32xf32> to vector<32x1xf32>
    %455 = vector.broadcast %454 : vector<32x1xf32> to vector<32x32xf32>
    %456 = arith.subf %452, %455 : vector<32x32xf32>
    %457 = math.exp %456 : vector<32x32xf32>
    %cst_145 = arith.constant dense<0.000000e+00> : vector<32xf32>
    %458 = vector.multi_reduction <add>, %457, %cst_145 [1] : vector<32x32xf32> to vector<32xf32>
    %459 = vector.shape_cast %458 : vector<32xf32> to vector<32x1xf32>
    %460 = vector.broadcast %459 : vector<32x1xf32> to vector<32x32xf32>
    %461 = arith.divf %457, %460 : vector<32x32xf32>
    %462 = vector.extract_strided_slice %425 {offsets = [0, 32], sizes = [32, 32], strides = [1, 1]} : vector<32x128xf32> to vector<32x32xf32>
    %463 = arith.truncf %461 : vector<32x32xf32> to vector<32x32xbf16>
    %464 = arith.truncf %462 : vector<32x32xf32> to vector<32x32xbf16>
    %cst_146 = arith.constant dense<0.000000e+00> : vector<32x32xf32>
    %465 = tpu.matmul %463, %464, %cst_146 {dimension_numbers = #tpu.dot_dimension_numbers<[1], [0], [0], [1], [0, 0, 1, 1], [], []>} : vector<32x32xbf16>, vector<32x32xbf16>, vector<32x32xf32> -> vector<32x32xf32>
    %466 = vector.extract_strided_slice %417 {offsets = [0, 64], sizes = [32, 32], strides = [1, 1]} : vector<32x128xf32> to vector<32x32xf32>
    %467 = arith.truncf %466 : vector<32x32xf32> to vector<32x32xbf16>
    %468 = vector.extract_strided_slice %424 {offsets = [0, 64], sizes = [32, 32], strides = [1, 1]} : vector<32x128xf32> to vector<32x32xf32>
    %469 = arith.truncf %468 : vector<32x32xf32> to vector<32x32xbf16>
    %cst_147 = arith.constant dense<0.000000e+00> : vector<32x32xf32>
    %470 = tpu.matmul %467, %469, %cst_147 {dimension_numbers = #tpu.dot_dimension_numbers<[1], [1], [0], [0], [0, 0, 1, 0], [], []>} : vector<32x32xbf16>, vector<32x32xbf16>, vector<32x32xf32> -> vector<32x32xf32>
    %471 = arith.addf %470, %42 : vector<32x32xf32>
    %cst_148 = arith.constant dense<0xFF800000> : vector<32xf32>
    %472 = vector.multi_reduction <maximumf>, %471, %cst_148 [1] : vector<32x32xf32> to vector<32xf32>
    %473 = vector.shape_cast %472 : vector<32xf32> to vector<32x1xf32>
    %474 = vector.broadcast %473 : vector<32x1xf32> to vector<32x32xf32>
    %475 = arith.subf %471, %474 : vector<32x32xf32>
    %476 = math.exp %475 : vector<32x32xf32>
    %cst_149 = arith.constant dense<0.000000e+00> : vector<32xf32>
    %477 = vector.multi_reduction <add>, %476, %cst_149 [1] : vector<32x32xf32> to vector<32xf32>
    %478 = vector.shape_cast %477 : vector<32xf32> to vector<32x1xf32>
    %479 = vector.broadcast %478 : vector<32x1xf32> to vector<32x32xf32>
    %480 = arith.divf %476, %479 : vector<32x32xf32>
    %481 = vector.extract_strided_slice %425 {offsets = [0, 64], sizes = [32, 32], strides = [1, 1]} : vector<32x128xf32> to vector<32x32xf32>
    %482 = arith.truncf %480 : vector<32x32xf32> to vector<32x32xbf16>
    %483 = arith.truncf %481 : vector<32x32xf32> to vector<32x32xbf16>
    %cst_150 = arith.constant dense<0.000000e+00> : vector<32x32xf32>
    %484 = tpu.matmul %482, %483, %cst_150 {dimension_numbers = #tpu.dot_dimension_numbers<[1], [0], [0], [1], [0, 0, 1, 1], [], []>} : vector<32x32xbf16>, vector<32x32xbf16>, vector<32x32xf32> -> vector<32x32xf32>
    %485 = vector.extract_strided_slice %417 {offsets = [0, 96], sizes = [32, 32], strides = [1, 1]} : vector<32x128xf32> to vector<32x32xf32>
    %486 = arith.truncf %485 : vector<32x32xf32> to vector<32x32xbf16>
    %487 = vector.extract_strided_slice %424 {offsets = [0, 96], sizes = [32, 32], strides = [1, 1]} : vector<32x128xf32> to vector<32x32xf32>
    %488 = arith.truncf %487 : vector<32x32xf32> to vector<32x32xbf16>
    %cst_151 = arith.constant dense<0.000000e+00> : vector<32x32xf32>
    %489 = tpu.matmul %486, %488, %cst_151 {dimension_numbers = #tpu.dot_dimension_numbers<[1], [1], [0], [0], [0, 0, 1, 0], [], []>} : vector<32x32xbf16>, vector<32x32xbf16>, vector<32x32xf32> -> vector<32x32xf32>
    %490 = arith.addf %489, %42 : vector<32x32xf32>
    %cst_152 = arith.constant dense<0xFF800000> : vector<32xf32>
    %491 = vector.multi_reduction <maximumf>, %490, %cst_152 [1] : vector<32x32xf32> to vector<32xf32>
    %492 = vector.shape_cast %491 : vector<32xf32> to vector<32x1xf32>
    %493 = vector.broadcast %492 : vector<32x1xf32> to vector<32x32xf32>
    %494 = arith.subf %490, %493 : vector<32x32xf32>
    %495 = math.exp %494 : vector<32x32xf32>
    %cst_153 = arith.constant dense<0.000000e+00> : vector<32xf32>
    %496 = vector.multi_reduction <add>, %495, %cst_153 [1] : vector<32x32xf32> to vector<32xf32>
    %497 = vector.shape_cast %496 : vector<32xf32> to vector<32x1xf32>
    %498 = vector.broadcast %497 : vector<32x1xf32> to vector<32x32xf32>
    %499 = arith.divf %495, %498 : vector<32x32xf32>
    %500 = vector.extract_strided_slice %425 {offsets = [0, 96], sizes = [32, 32], strides = [1, 1]} : vector<32x128xf32> to vector<32x32xf32>
    %501 = arith.truncf %499 : vector<32x32xf32> to vector<32x32xbf16>
    %502 = arith.truncf %500 : vector<32x32xf32> to vector<32x32xbf16>
    %cst_154 = arith.constant dense<0.000000e+00> : vector<32x32xf32>
    %503 = tpu.matmul %501, %502, %cst_154 {dimension_numbers = #tpu.dot_dimension_numbers<[1], [0], [0], [1], [0, 0, 1, 1], [], []>} : vector<32x32xbf16>, vector<32x32xbf16>, vector<32x32xf32> -> vector<32x32xf32>
    %504 = tpu.concatenate %446, %465, %484, %503 in 1 : vector<32x32xf32>, vector<32x32xf32>, vector<32x32xf32>, vector<32x32xf32> -> vector<32x128xf32>
    %505 = arith.truncf %504 : vector<32x128xf32> to vector<32x128xbf16>
    %cst_155 = arith.constant dense<0.000000e+00> : vector<32x128xf32>
    %506 = tpu.matmul %505, %426, %cst_155 {dimension_numbers = #tpu.dot_dimension_numbers<[1], [0], [0], [1], [0, 0, 1, 1], [], []>} : vector<32x128xbf16>, vector<128x128xbf16>, vector<32x128xf32> -> vector<32x128xf32>
    %507 = vector.broadcast %427 : vector<1x128xf32> to vector<32x128xf32>
    %508 = arith.addf %506, %507 : vector<32x128xf32>
    %509 = arith.addf %508, %411 : vector<32x128xf32>
    %cst_156 = arith.constant dense<0.000000e+00> : vector<32xf32>
    %510 = vector.multi_reduction <add>, %509, %cst_156 [1] : vector<32x128xf32> to vector<32xf32>
    %511 = vector.shape_cast %510 : vector<32xf32> to vector<32x1xf32>
    %cst_157 = arith.constant 1.280000e+02 : f32
    %512 = vector.broadcast %cst_157 : f32 to vector<32x1xf32>
    %513 = arith.divf %511, %512 : vector<32x1xf32>
    %514 = vector.broadcast %513 : vector<32x1xf32> to vector<32x128xf32>
    %515 = arith.subf %509, %514 : vector<32x128xf32>
    %516 = arith.mulf %515, %515 : vector<32x128xf32>
    %cst_158 = arith.constant dense<0.000000e+00> : vector<32xf32>
    %517 = vector.multi_reduction <add>, %516, %cst_158 [1] : vector<32x128xf32> to vector<32xf32>
    %518 = vector.shape_cast %517 : vector<32xf32> to vector<32x1xf32>
    %cst_159 = arith.constant 1.280000e+02 : f32
    %519 = vector.broadcast %cst_159 : f32 to vector<32x1xf32>
    %520 = arith.divf %518, %519 : vector<32x1xf32>
    %cst_160 = arith.constant 9.99999974E-6 : f32
    %521 = vector.broadcast %cst_160 : f32 to vector<32x1xf32>
    %522 = arith.addf %520, %521 : vector<32x1xf32>
    %523 = math.rsqrt %522 : vector<32x1xf32>
    %524 = vector.broadcast %523 : vector<32x1xf32> to vector<32x128xf32>
    %525 = arith.mulf %515, %524 : vector<32x128xf32>
    %c25 = arith.constant 25 : index
    %c0_161 = arith.constant 0 : index
    %526 = vector.load %arg6[%c25, %c0_161] : memref<34x384xf32, #tpu.memory_space<vmem>>, vector<1x128xf32>
    %527 = vector.broadcast %526 : vector<1x128xf32> to vector<32x128xf32>
    %528 = arith.mulf %525, %527 : vector<32x128xf32>
    %c26 = arith.constant 26 : index
    %c0_162 = arith.constant 0 : index
    %529 = vector.load %arg6[%c26, %c0_162] : memref<34x384xf32, #tpu.memory_space<vmem>>, vector<1x128xf32>
    %530 = vector.broadcast %529 : vector<1x128xf32> to vector<32x128xf32>
    %531 = arith.addf %528, %530 : vector<32x128xf32>
    %c0_163 = arith.constant 0 : index
    %c1792 = arith.constant 1792 : index
    %532 = vector.load %arg4[%c0_163, %c1792] : memref<128x2944xbf16, #tpu.memory_space<vmem>>, vector<128x256xbf16>
    %533 = arith.truncf %531 : vector<32x128xf32> to vector<32x128xbf16>
    %cst_164 = arith.constant dense<0.000000e+00> : vector<32x256xf32>
    %534 = tpu.matmul %533, %532, %cst_164 {dimension_numbers = #tpu.dot_dimension_numbers<[1], [0], [0], [1], [0, 0, 1, 1], [], []>} : vector<32x128xbf16>, vector<128x256xbf16>, vector<32x256xf32> -> vector<32x256xf32>
    %c27 = arith.constant 27 : index
    %c0_165 = arith.constant 0 : index
    %535 = vector.load %arg6[%c27, %c0_165] : memref<34x384xf32, #tpu.memory_space<vmem>>, vector<1x256xf32>
    %536 = vector.broadcast %535 : vector<1x256xf32> to vector<32x256xf32>
    %537 = arith.addf %534, %536 : vector<32x256xf32>
    %cst_166 = arith.constant 5.000000e-01 : f32
    %538 = vector.broadcast %cst_166 : f32 to vector<32x256xf32>
    %539 = arith.mulf %538, %537 : vector<32x256xf32>
    %cst_167 = arith.constant 4.471500e-02 : f32
    %540 = vector.broadcast %cst_167 : f32 to vector<32x256xf32>
    %541 = arith.mulf %540, %537 : vector<32x256xf32>
    %542 = arith.mulf %541, %537 : vector<32x256xf32>
    %543 = arith.mulf %542, %537 : vector<32x256xf32>
    %544 = arith.addf %537, %543 : vector<32x256xf32>
    %cst_168 = arith.constant 0.797884583 : f32
    %545 = vector.broadcast %cst_168 : f32 to vector<32x256xf32>
    %546 = arith.mulf %545, %544 : vector<32x256xf32>
    %547 = math.tanh %546 : vector<32x256xf32>
    %cst_169 = arith.constant 1.000000e+00 : f32
    %548 = vector.broadcast %cst_169 : f32 to vector<32x256xf32>
    %549 = arith.addf %548, %547 : vector<32x256xf32>
    %550 = arith.mulf %539, %549 : vector<32x256xf32>
    %c256 = arith.constant 256 : index
    %c0_170 = arith.constant 0 : index
    %551 = vector.load %arg5[%c256, %c0_170] : memref<576x128xbf16, #tpu.memory_space<vmem>>, vector<256x128xbf16>
    %552 = arith.truncf %550 : vector<32x256xf32> to vector<32x256xbf16>
    %cst_171 = arith.constant dense<0.000000e+00> : vector<32x128xf32>
    %553 = tpu.matmul %552, %551, %cst_171 {dimension_numbers = #tpu.dot_dimension_numbers<[1], [0], [0], [1], [0, 0, 1, 1], [], []>} : vector<32x256xbf16>, vector<256x128xbf16>, vector<32x128xf32> -> vector<32x128xf32>
    %c28 = arith.constant 28 : index
    %c0_172 = arith.constant 0 : index
    %554 = vector.load %arg6[%c28, %c0_172] : memref<34x384xf32, #tpu.memory_space<vmem>>, vector<1x128xf32>
    %555 = vector.broadcast %554 : vector<1x128xf32> to vector<32x128xf32>
    %556 = arith.addf %553, %555 : vector<32x128xf32>
    %c0_173 = arith.constant 0 : index
    %c2816 = arith.constant 2816 : index
    %557 = vector.load %arg4[%c0_173, %c2816] : memref<128x2944xbf16, #tpu.memory_space<vmem>>, vector<128x8xbf16>
    %558 = arith.truncf %556 : vector<32x128xf32> to vector<32x128xbf16>
    %cst_174 = arith.constant dense<0.000000e+00> : vector<32x8xf32>
    %559 = tpu.matmul %558, %557, %cst_174 {dimension_numbers = #tpu.dot_dimension_numbers<[1], [0], [0], [1], [0, 0, 1, 1], [], []>} : vector<32x128xbf16>, vector<128x8xbf16>, vector<32x8xf32> -> vector<32x8xf32>
    %c29 = arith.constant 29 : index
    %c0_175 = arith.constant 0 : index
    %560 = vector.load %arg6[%c29, %c0_175] : memref<34x384xf32, #tpu.memory_space<vmem>>, vector<1x8xf32>
    %561 = vector.broadcast %560 : vector<1x8xf32> to vector<32x8xf32>
    %562 = arith.addf %559, %561 : vector<32x8xf32>
    %cst_176 = arith.constant 0.000000e+00 : f32
    %563 = vector.broadcast %cst_176 : f32 to vector<32x8xf32>
    %564 = arith.maximumf %562, %563 : vector<32x8xf32>
    %c560 = arith.constant 560 : index
    %c0_177 = arith.constant 0 : index
    %565 = vector.load %arg5[%c560, %c0_177] : memref<576x128xbf16, #tpu.memory_space<vmem>>, vector<8x128xbf16>
    %566 = arith.truncf %564 : vector<32x8xf32> to vector<32x8xbf16>
    %cst_178 = arith.constant dense<0.000000e+00> : vector<32x128xf32>
    %567 = tpu.matmul %566, %565, %cst_178 {dimension_numbers = #tpu.dot_dimension_numbers<[1], [0], [0], [1], [0, 0, 1, 1], [], []>} : vector<32x8xbf16>, vector<8x128xbf16>, vector<32x128xf32> -> vector<32x128xf32>
    %568 = arith.addf %556, %567 : vector<32x128xf32>
    %c30 = arith.constant 30 : index
    %c0_179 = arith.constant 0 : index
    %569 = vector.load %arg6[%c30, %c0_179] : memref<34x384xf32, #tpu.memory_space<vmem>>, vector<1x128xf32>
    %570 = vector.broadcast %569 : vector<1x128xf32> to vector<32x128xf32>
    %571 = arith.addf %568, %570 : vector<32x128xf32>
    %572 = arith.addf %571, %531 : vector<32x128xf32>
    %cst_180 = arith.constant dense<0.000000e+00> : vector<32xf32>
    %573 = vector.multi_reduction <add>, %572, %cst_180 [1] : vector<32x128xf32> to vector<32xf32>
    %574 = vector.shape_cast %573 : vector<32xf32> to vector<32x1xf32>
    %cst_181 = arith.constant 1.280000e+02 : f32
    %575 = vector.broadcast %cst_181 : f32 to vector<32x1xf32>
    %576 = arith.divf %574, %575 : vector<32x1xf32>
    %577 = vector.broadcast %576 : vector<32x1xf32> to vector<32x128xf32>
    %578 = arith.subf %572, %577 : vector<32x128xf32>
    %579 = arith.mulf %578, %578 : vector<32x128xf32>
    %cst_182 = arith.constant dense<0.000000e+00> : vector<32xf32>
    %580 = vector.multi_reduction <add>, %579, %cst_182 [1] : vector<32x128xf32> to vector<32xf32>
    %581 = vector.shape_cast %580 : vector<32xf32> to vector<32x1xf32>
    %cst_183 = arith.constant 1.280000e+02 : f32
    %582 = vector.broadcast %cst_183 : f32 to vector<32x1xf32>
    %583 = arith.divf %581, %582 : vector<32x1xf32>
    %cst_184 = arith.constant 9.99999974E-6 : f32
    %584 = vector.broadcast %cst_184 : f32 to vector<32x1xf32>
    %585 = arith.addf %583, %584 : vector<32x1xf32>
    %586 = math.rsqrt %585 : vector<32x1xf32>
    %587 = vector.broadcast %586 : vector<32x1xf32> to vector<32x128xf32>
    %588 = arith.mulf %578, %587 : vector<32x128xf32>
    %c31 = arith.constant 31 : index
    %c0_185 = arith.constant 0 : index
    %589 = vector.load %arg6[%c31, %c0_185] : memref<34x384xf32, #tpu.memory_space<vmem>>, vector<1x128xf32>
    %590 = vector.broadcast %589 : vector<1x128xf32> to vector<32x128xf32>
    %591 = arith.mulf %588, %590 : vector<32x128xf32>
    %c32 = arith.constant 32 : index
    %c0_186 = arith.constant 0 : index
    %592 = vector.load %arg6[%c32, %c0_186] : memref<34x384xf32, #tpu.memory_space<vmem>>, vector<1x128xf32>
    %593 = vector.broadcast %592 : vector<1x128xf32> to vector<32x128xf32>
    %594 = arith.addf %591, %593 : vector<32x128xf32>
    %c0_187 = arith.constant 0 : index
    %c2048 = arith.constant 2048 : index
    %595 = vector.load %arg4[%c0_187, %c2048] : memref<128x2944xbf16, #tpu.memory_space<vmem>>, vector<128x384xbf16>
    %596 = arith.truncf %594 : vector<32x128xf32> to vector<32x128xbf16>
    %cst_188 = arith.constant dense<0.000000e+00> : vector<32x384xf32>
    %597 = tpu.matmul %596, %595, %cst_188 {dimension_numbers = #tpu.dot_dimension_numbers<[1], [0], [0], [1], [0, 0, 1, 1], [], []>} : vector<32x128xbf16>, vector<128x384xbf16>, vector<32x384xf32> -> vector<32x384xf32>
    %c33 = arith.constant 33 : index
    %c0_189 = arith.constant 0 : index
    %598 = vector.load %arg6[%c33, %c0_189] : memref<34x384xf32, #tpu.memory_space<vmem>>, vector<1x384xf32>
    %599 = vector.broadcast %598 : vector<1x384xf32> to vector<32x384xf32>
    %600 = arith.addf %597, %599 : vector<32x384xf32>
    %c0_190 = arith.constant 0 : index
    %c0_191 = arith.constant 0 : index
    %601 = vector.load %arg7[%c0_190, %c0_191] : memref<32x384xf32, #tpu.memory_space<vmem>>, vector<32x384xf32>
    tpu.vector_store %arg7[%c0_190, %c0_191], %600 {strides = array<i32>} : memref<32x384xf32, #tpu.memory_space<vmem>>, vector<32x384xf32>,
    %c0_192 = arith.constant 0 : index
    %c0_193 = arith.constant 0 : index
    %602 = vector.load %arg3[%c0_192, %c0_193] : memref<1x32xi32, #tpu.memory_space<vmem>>, vector<1x32xi32>
    %603 = arith.sitofp %602 : vector<1x32xi32> to vector<1x32xf32>
    %604 = arith.cmpi eq, %15, %16 : vector<32x32xi32>
    %cst_194 = arith.constant 0.000000e+00 : f32
    %605 = vector.shape_cast %603 : vector<1x32xf32> to vector<1x32xf32>
    %606 = vector.broadcast %605 : vector<1x32xf32> to vector<32x32xf32>
    %607 = vector.broadcast %cst_194 : f32 to vector<32x32xf32>
    %608 = arith.select %604, %606, %607 : vector<32x32xi1>, vector<32x32xf32>
    %cst_195 = arith.constant dense<0.000000e+00> : vector<32xf32>
    %609 = vector.multi_reduction <add>, %608, %cst_195 [1] : vector<32x32xf32> to vector<32xf32>
    %610 = vector.shape_cast %609 : vector<32xf32> to vector<32x1xf32>
    %cst_196 = arith.constant -1.000000e+02 : f32
    %611 = vector.broadcast %cst_196 : f32 to vector<32x1xf32>
    %612 = arith.cmpf one, %610, %611 : vector<32x1xf32>
    %613 = arith.extui %612 : vector<32x1xi1> to vector<32x1xi32>
    %614 = arith.sitofp %613 : vector<32x1xi32> to vector<32x1xf32>
    %615 = tpu.iota {dimensions = array<i32: 1>} : vector<32x384xi32>
    %616 = arith.sitofp %615 : vector<32x384xi32> to vector<32x384xf32>
    %617 = vector.broadcast %610 : vector<32x1xf32> to vector<32x384xf32>
    %618 = arith.cmpf oeq, %616, %617 : vector<32x384xf32>
    %619 = arith.extui %618 : vector<32x384xi1> to vector<32x384xi32>
    %620 = arith.sitofp %619 : vector<32x384xi32> to vector<32x384xf32>
    %cst_197 = arith.constant dense<0xFF800000> : vector<32xf32>
    %621 = vector.multi_reduction <maximumf>, %600, %cst_197 [1] : vector<32x384xf32> to vector<32xf32>
    %622 = vector.shape_cast %621 : vector<32xf32> to vector<32x1xf32>
    %623 = vector.broadcast %622 : vector<32x1xf32> to vector<32x384xf32>
    %624 = arith.subf %600, %623 : vector<32x384xf32>
    %625 = math.exp %624 : vector<32x384xf32>
    %cst_198 = arith.constant dense<0.000000e+00> : vector<32xf32>
    %626 = vector.multi_reduction <add>, %625, %cst_198 [1] : vector<32x384xf32> to vector<32xf32>
    %627 = vector.shape_cast %626 : vector<32xf32> to vector<32x1xf32>
    %628 = math.log %627 : vector<32x1xf32>
    %629 = arith.addf %622, %628 : vector<32x1xf32>
    %630 = arith.mulf %620, %600 : vector<32x384xf32>
    %cst_199 = arith.constant dense<0.000000e+00> : vector<32xf32>
    %631 = vector.multi_reduction <add>, %630, %cst_199 [1] : vector<32x384xf32> to vector<32xf32>
    %632 = vector.shape_cast %631 : vector<32xf32> to vector<32x1xf32>
    %633 = arith.subf %629, %632 : vector<32x1xf32>
    %634 = arith.mulf %633, %614 : vector<32x1xf32>
    %cst_200 = arith.constant dense<0.000000e+00> : vector<1xf32>
    %635 = vector.multi_reduction <add>, %614, %cst_200 [0] : vector<32x1xf32> to vector<1xf32>
    %636 = vector.shape_cast %635 : vector<1xf32> to vector<1x1xf32>
    %cst_201 = arith.constant 1.000000e+00 : f32
    %637 = vector.broadcast %cst_201 : f32 to vector<1x1xf32>
    %638 = arith.maximumf %636, %637 : vector<1x1xf32>
    %cst_202 = arith.constant dense<0.000000e+00> : vector<1xf32>
    %639 = vector.multi_reduction <add>, %634, %cst_202 [0] : vector<32x1xf32> to vector<1xf32>
    %640 = vector.shape_cast %639 : vector<1xf32> to vector<1x1xf32>
    %641 = arith.divf %640, %638 : vector<1x1xf32>
    %642 = vector.extract %641[0, 0] : f32 from vector<1x1xf32>
    %c0_203 = arith.constant 0 : index
    %643 = memref.load %arg8[%c0_203] : memref<1xf32, #tpu.memory_space<smem>>
    memref.store %642, %arg8[%c0_203] : memref<1xf32, #tpu.memory_space<smem>>
    return
  }
}

</mosaic_0001>

<llo_original>
// kernel: forward.1
$region0: #{forward.1}
  #allocation0 [shape = 'u32[]', space=smem, size = 0x4, offset = 0x4, fixed_abs, tag = 'smem constant byte address 0x4 - core index']
  #allocation1 [shape = 'u32[144,128]{1,0:T(1,128)}', space=vmem, size = 0x12000, scoped, tag = 'internal scratch']
  %s0 = inlined_call_operand.vmem [shape: f32[32,128], index: 0, kind: input, shape index: {}]
  %s1 = inlined_call_operand.vmem [shape: f32[32,128], index: 1, kind: input, shape index: {}]
  %s2 = inlined_call_operand.vmem [shape: f32[1,32], index: 2, kind: input, shape index: {}]
  %s3 = inlined_call_operand.vmem [shape: s32[1,32], index: 3, kind: input, shape index: {}]
  %s4 = inlined_call_operand.hbm [shape: bf16[128,2944], index: 4, kind: input, shape index: {}]
  %s5 = inlined_call_operand.vmem [shape: bf16[576,128], index: 5, kind: input, shape index: {}]
  %s6 = inlined_call_operand.vmem [shape: f32[34,384], index: 6, kind: input, shape index: {}]
  %s7 = inlined_call_operand.hbm [shape: f32[32,384], index: 7, kind: output, shape index: {0}]
  %s8 = inlined_call_operand.hbm [shape: f32[1], index: 8, kind: output, shape index: {1}]
  %9 = xla_tuple %s7, %s8
  %s10 = sld [smem:[#allocation0]]
  $region50: #{forward.1} parent=0
    _
  %s12 = ssub.s32 1, %s10
  %s13 = scalar_select 0, %s12, %s10
  $region1: #{forward.1} parent=0
    #allocation2 [shape = 'u8[753664]{0}', space=vmem, size = 0xb8000, scoped, tag = 'input window, operand 4, single buffered']
    #allocation3 [shape = 's32[1]{0}', space=sflag, size = 0x4, scoped, tag = 'scoped memory for forward.1']
    #allocation4 [shape = 's32[1]{0}', space=sflag, size = 0x4, scoped, tag = 'scoped memory for forward.1']
    #allocation5 [shape = 's32[1]{0}', space=sflag, size = 0x4, scoped, tag = 'scoped memory for forward.1']
    #allocation6 [shape = 'u8[49152]{0}', space=vmem, size = 0xc000, scoped, tag = 'output window, operand 0, single buffered']
    #allocation7 [shape = 'u8[512]{0}', space=smem, size = 0x200, scoped, tag = 'output window, operand 1, single buffered']
    %14 = vsyncpa [#allocation3], 0
    %15 = vsyncpa [#allocation4], 0
    %16 = vsyncpa [#allocation5], 0
    // Predicated region
    $region2: #{forward.1} parent=1 // pred_check
      _
    $region3: #{forward.1} parent=1 // pred_check_branch
      %18 = sbr.rel (0) target = $region5
    $region4: #{forward.1} parent=1 // pred_region
      _
    $region5: #{forward.1} parent=1 // pred_fallthru
      _
    // Predicated region
    $region6: #{forward.1} parent=1 // pred_check
      _
    $region7: #{forward.1} parent=1 // pred_check_branch
      %20 = sbr.rel (0) target = $region9
    $region8: #{forward.1} parent=1 // pred_region
      _
    $region9: #{forward.1} parent=1 // pred_fallthru
      _
    // Predicated region
    $region10: #{forward.1} parent=1 // pred_check
      _
    $region11: #{forward.1} parent=1 // pred_check_branch
      %22 = sbr.rel (0) target = $region13
    $region12: #{forward.1} parent=1 // pred_region
      _
    $region13: #{forward.1} parent=1 // pred_fallthru
      _
    // Predicated region
    $region14: #{forward.1} parent=1 // pred_check
      _
    $region15: #{forward.1} parent=1 // pred_check_branch
      %24 = sbr.rel (0) target = $region17
    $region16: #{forward.1} parent=1 // pred_region
      _
    $region17: #{forward.1} parent=1 // pred_fallthru
      _
    // Predicated region
    $region18: #{forward.1} parent=1 // pred_check
      _
    $region19: #{forward.1} parent=1 // pred_check_branch
      %26 = sbr.rel (0) target = $region21
    $region20: #{forward.1} parent=1 // pred_region
      %s28 = ssub.s32 23552, 23552
      %29 = vsyncadd [#allocation3], %s28
      %s30 = sshll.u32 [#allocation2], 4
      %s31 = int_to_ptr.vmem [resolvable:$true] %s30
      %36 = dma.hbm_to_vmem [thread:$0]  %s4, 23552, %s31, [#allocation3], 1472, 1472, 92
    $region21: #{forward.1} parent=1 // pred_fallthru
      _
    // Predicated region
    $region22: #{forward.1} parent=1 // pred_check
      _
    $region23: #{forward.1} parent=1 // pred_check_branch
      %38 = sbr.rel (0) target = $region25
    $region24: #{forward.1} parent=1 // pred_region
      _
    $region25: #{forward.1} parent=1 // pred_fallthru
      _
    // Predicated region
    $region26: #{forward.1} parent=1 // pred_check
      _
    $region27: #{forward.1} parent=1 // pred_check_branch
      %40 = sbr.rel (0) target = $region29
    $region28: #{forward.1} parent=1 // pred_region
      _
    $region29: #{forward.1} parent=1 // pred_fallthru
      _
    // Predicated region
    $region30: #{forward.1} parent=1 // pred_check
      _
    $region31: #{forward.1} parent=1 // pred_check_branch
      %42 = sbr.rel (0) target = $region33
    $region32: #{forward.1} parent=1 // pred_region
      %43 = dma.done [#allocation3], 23552
    $region33: #{forward.1} parent=1 // pred_fallthru
      _
    %v45 = vld [vmem:[%s2] sm:$0x1]
    %vm46 = vcmp.gt.f32.partialorder %v45, 0.5
    %v47 = vlaneseq
    %v48 = vshrl.u32 %v47, 7
    %v49 = vadd.s32 %v48, 8
    %v50 = vadd.s32 %v48, 16
    %v51 = vadd.s32 %v48, 24
    %v52 = vlaneseq
    %v53 = vand.u32 %v52, 127
    %v54 = vshra.s32 %v48, 4
    %v55 = vshra.s32 %v49, 4
    %v56 = vshra.s32 %v50, 4
    %v57 = vshra.s32 %v51, 4
    %v58 = vshra.s32 %v53, 4
    %vm59 = vcmp.eq.s32.totalorder %v54, %v58
    %vm60 = vcmp.eq.s32.totalorder %v55, %v58
    %vm61 = vcmp.eq.s32.totalorder %v56, %v58
    %vm62 = vcmp.eq.s32.totalorder %v57, %v58
    %v63 = vsel %vm46, 1, 0
    %v64 = vlaneseq
    %v65 = vshrl.u32 %v64, 7
    %v66 = vsub.s32 0, %v65
    %v67 = vrot.slane %v63, %v66
    %vm68 = vcmp.eq.s32.totalorder %v67, 1
    %vm69 = vmand %vm59, %vm68
    %vm70 = vmand %vm60, %vm68
    %vm71 = vmand %vm61, %vm68
    %vm72 = vmand %vm62, %vm68
    %v73 = vsel %vm69, 0.0, -1e+09
    %v74 = vsel %vm70, 0.0, -1e+09
    %v75 = vsel %vm71, 0.0, -1e+09
    %v76 = vsel %vm72, 0.0, -1e+09
    %v77 = vand.u32 %v53, 15
    %v78 = vand.u32 %v48, 15
    %v79 = vand.u32 %v49, 15
    %v80 = vand.u32 %v50, 15
    %v81 = vand.u32 %v51, 15
    %vm82 = vcmp.le.s32.totalorder %v77, %v78
    %vm83 = vcmp.le.s32.totalorder %v77, %v79
    %vm84 = vcmp.le.s32.totalorder %v77, %v80
    %vm85 = vcmp.le.s32.totalorder %v77, %v81
    %vm86 = vmand %vm59, %vm82
    %vm87 = vmand %vm60, %vm83
    %vm88 = vmand %vm61, %vm84
    %vm89 = vmand %vm62, %vm85
    %v90 = vsel %vm86, 0.0, -1e+09
    %v91 = vsel %vm87, 0.0, -1e+09
    %v92 = vsel %vm88, 0.0, -1e+09
    %v93 = vsel %vm89, 0.0, -1e+09
    %v94 = vld [vmem:[%s0] sm:$0xff]
    %v95 = vld [vmem:[%s0 + $0x8] sm:$0xff]
    %v96 = vld [vmem:[%s0 + $0x10] sm:$0xff]
    %v97 = vld [vmem:[%s0 + $0x18] sm:$0xff]
    %98 = vadd.xlane.f32.xlu0 %v94
    %v99 = vpop.xlane.xlu0 %98
    %100 = vadd.xlane.f32.xlu0 %v95
    %v101 = vpop.xlane.xlu0 %100
    %102 = vadd.xlane.f32.xlu0 %v96
    %v103 = vpop.xlane.xlu0 %102
    %104 = vadd.xlane.f32.xlu0 %v97
    %v105 = vpop.xlane.xlu0 %104
    %v106 = vrcp.pop 128.0
    %v107 = vmul.f32 %v99, %v106
    %v108 = vmul.f32 %v101, %v106
    %v109 = vmul.f32 %v103, %v106
    %v110 = vmul.f32 %v105, %v106
    %v111 = vsub.f32 %v94, %v107
    %v112 = vsub.f32 %v95, %v108
    %v113 = vsub.f32 %v96, %v109
    %v114 = vsub.f32 %v97, %v110
    %v115 = vmul.f32 %v111, %v111
    %v116 = vmul.f32 %v112, %v112
    %v117 = vmul.f32 %v113, %v113
    %v118 = vmul.f32 %v114, %v114
    %119 = vadd.xlane.f32.xlu0 %v115
    %v120 = vpop.xlane.xlu0 %119
    %121 = vadd.xlane.f32.xlu0 %v116
    %v122 = vpop.xlane.xlu0 %121
    %123 = vadd.xlane.f32.xlu0 %v117
    %v124 = vpop.xlane.xlu0 %123
    %125 = vadd.xlane.f32.xlu0 %v118
    %v126 = vpop.xlane.xlu0 %125
    %v127 = vmul.f32 %v120, %v106
    %v128 = vmul.f32 %v122, %v106
    %v129 = vmul.f32 %v124, %v106
    %v130 = vmul.f32 %v126, %v106
    %v131 = vadd.f32 %v127, 1e-05
    %v132 = vadd.f32 %v128, 1e-05
    %v133 = vadd.f32 %v129, 1e-05
    %v134 = vadd.f32 %v130, 1e-05
    %v135 = vrsqrt.pop %v131
    %v136 = vrsqrt.pop %v132
    %v137 = vrsqrt.pop %v133
    %v138 = vrsqrt.pop %v134
    %v139 = vmul.f32 %v111, %v135
    %v140 = vmul.f32 %v112, %v136
    %v141 = vmul.f32 %v113, %v137
    %v142 = vmul.f32 %v114, %v138
    %v143 = vld [vmem:[%s6] ss:$0 sm:$0xff]
    %v144 = vmul.f32 %v139, %v143
    %v145 = vmul.f32 %v140, %v143
    %v146 = vmul.f32 %v141, %v143
    %v147 = vmul.f32 %v142, %v143
    %v148 = vld [vmem:[%s6 + $0x1] ss:$0 sm:$0xff]
    %v149 = vadd.f32 %v144, %v148
    %v150 = vadd.f32 %v145, %v148
    %v151 = vadd.f32 %v146, %v148
    %v152 = vadd.f32 %v147, %v148
    %v153 = vld [vmem:[#allocation2] sm:$0xff]
    %v154 = vld [vmem:[#allocation2 + $0x8] sm:$0xf]
    %v155 = vld [vmem:[#allocation2 + $0x5c] sm:$0xff]
    %v156 = vld [vmem:[#allocation2 + $0x64] sm:$0xf]
    %v157 = vld [vmem:[#allocation2 + $0xb8] sm:$0xff]
    %v158 = vld [vmem:[#allocation2 + $0xc0] sm:$0xf]
    %v159 = vld [vmem:[#allocation2 + $0x114] sm:$0xff]
    %v160 = vld [vmem:[#allocation2 + $0x11c] sm:$0xf]
    %v161 = vld [vmem:[#allocation2 + $0x170] sm:$0xff]
    %v162 = vld [vmem:[#allocation2 + $0x178] sm:$0xf]
    %v163 = vld [vmem:[#allocation2 + $0x1cc] sm:$0xff]
    %v164 = vld [vmem:[#allocation2 + $0x1d4] sm:$0xf]
    %v165 = vld [vmem:[#allocation2 + $0x228] sm:$0xff]
    %v166 = vld [vmem:[#allocation2 + $0x230] sm:$0xf]
    %v167 = vld [vmem:[#allocation2 + $0x284] sm:$0xff]
    %v168 = vld [vmem:[#allocation2 + $0x28c] sm:$0xf]
    %v169 = vld [vmem:[#allocation2 + $0x2e0] sm:$0xff]
    %v170 = vld [vmem:[#allocation2 + $0x2e8] sm:$0xf]
    %v171 = vld [vmem:[#allocation2 + $0x33c] sm:$0xff]
    %v172 = vld [vmem:[#allocation2 + $0x344] sm:$0xf]
    %v173 = vld [vmem:[#allocation2 + $0x398] sm:$0xff]
    %v174 = vld [vmem:[#allocation2 + $0x3a0] sm:$0xf]
    %v175 = vld [vmem:[#allocation2 + $0x3f4] sm:$0xff]
    %v176 = vld [vmem:[#allocation2 + $0x3fc] sm:$0xf]
    %v177 = vld [vmem:[#allocation2 + $0x450] sm:$0xff]
    %v178 = vld [vmem:[#allocation2 + $0x458] sm:$0xf]
    %v179 = vld [vmem:[#allocation2 + $0x4ac] sm:$0xff]
    %v180 = vld [vmem:[#allocation2 + $0x4b4] sm:$0xf]
    %v181 = vld [vmem:[#allocation2 + $0x508] sm:$0xff]
    %v182 = vld [vmem:[#allocation2 + $0x510] sm:$0xf]
    %v183 = vld [vmem:[#allocation2 + $0x564] sm:$0xff]
    %v184 = vld [vmem:[#allocation2 + $0x56c] sm:$0xf]
    %v185 = vpack.c.bf16 %v150, %v149
    %v186 = vpack.c.bf16 %v152, %v151
    %s187 = scalar_lea.vmem %s6, 2
    %v188 = vld [vmem:[%s187] ss:$8 sm:$0x7]
    %v190 = vlaneseq
    %v191 = vshrl.u32 %v190, 7
    %v192 = vsub.s32 0, %v191
    %v193 = vrot.slane %v188, %v192
    %v194 = vlaneseq
    %v195 = vshrl.u32 %v194, 7
    %v196 = vsub.s32 1, %v195
    %v197 = vrot.slane %v188, %v196
    %v198 = vlaneseq
    %v199 = vshrl.u32 %v198, 7
    %v200 = vsub.s32 2, %v199
    %v201 = vrot.slane %v188, %v200
    %v237 = vunpack.c.l.b16 %v153
    %v238 = vunpack.c.h.b16 %v153
    %v239 = vunpack.c.l.b16 %v154
    %v240 = vunpack.c.l.b16 %v155
    %v241 = vunpack.c.h.b16 %v155
    %v242 = vunpack.c.l.b16 %v156
    %v243 = vunpack.c.l.b16 %v157
    %v244 = vunpack.c.h.b16 %v157
    %v245 = vunpack.c.l.b16 %v158
    %v246 = vunpack.c.l.b16 %v159
    %v247 = vunpack.c.h.b16 %v159
    %v248 = vunpack.c.l.b16 %v160
    %v249 = vunpack.c.l.b16 %v161
    %v250 = vunpack.c.h.b16 %v161
    %v251 = vunpack.c.l.b16 %v162
    %v252 = vunpack.c.l.b16 %v163
    %v253 = vunpack.c.h.b16 %v163
    %v254 = vunpack.c.l.b16 %v164
    %v255 = vunpack.c.l.b16 %v165
    %v256 = vunpack.c.h.b16 %v165
    %v257 = vunpack.c.l.b16 %v166
    %v258 = vunpack.c.l.b16 %v167
    %v259 = vunpack.c.h.b16 %v167
    %v260 = vunpack.c.l.b16 %v168
    %v261 = vunpack.c.l.b16 %v169
    %v262 = vunpack.c.h.b16 %v169
    %v263 = vunpack.c.l.b16 %v170
    %v264 = vunpack.c.l.b16 %v171
    %v265 = vunpack.c.h.b16 %v171
    %v266 = vunpack.c.l.b16 %v172
    %v267 = vunpack.c.l.b16 %v173
    %v268 = vunpack.c.h.b16 %v173
    %v269 = vunpack.c.l.b16 %v174
    %v270 = vunpack.c.l.b16 %v175
    %v271 = vunpack.c.h.b16 %v175
    %v272 = vunpack.c.l.b16 %v176
    %v273 = vunpack.c.l.b16 %v177
    %v274 = vunpack.c.h.b16 %v177
    %v275 = vunpack.c.l.b16 %v178
    %v276 = vunpack.c.l.b16 %v179
    %v277 = vunpack.c.h.b16 %v179
    %v278 = vunpack.c.l.b16 %v180
    %v279 = vunpack.c.l.b16 %v181
    %v280 = vunpack.c.h.b16 %v181
    %v281 = vunpack.c.l.b16 %v182
    %v282 = vunpack.c.l.b16 %v183
    %v283 = vunpack.c.h.b16 %v183
    %v284 = vunpack.c.l.b16 %v184
    %v285 = vpack.c.b16 %v240, %v237
    %v286 = vpack.c.b16 %v241, %v238
    %v287 = vpack.c.b16 %v242, %v239
    %v288 = vpack.c.b16 %v246, %v243
    %v289 = vpack.c.b16 %v247, %v244
    %v290 = vpack.c.b16 %v248, %v245
    %v291 = vpack.c.b16 %v252, %v249
    %v292 = vpack.c.b16 %v253, %v250
    %v293 = vpack.c.b16 %v254, %v251
    %v294 = vpack.c.b16 %v258, %v255
    %v295 = vpack.c.b16 %v259, %v256
    %v296 = vpack.c.b16 %v260, %v257
    %v297 = vpack.c.b16 %v264, %v261
    %v298 = vpack.c.b16 %v265, %v262
    %v299 = vpack.c.b16 %v266, %v263
    %v300 = vpack.c.b16 %v270, %v267
    %v301 = vpack.c.b16 %v271, %v268
    %v302 = vpack.c.b16 %v272, %v269
    %v303 = vpack.c.b16 %v276, %v273
    %v304 = vpack.c.b16 %v277, %v274
    %v305 = vpack.c.b16 %v278, %v275
    %v306 = vpack.c.b16 %v282, %v279
    %v307 = vpack.c.b16 %v283, %v280
    %v308 = vpack.c.b16 %v284, %v281
    %333 = vmatprep.subr.bf16.mxu0 %v307
    %334 = vmatpush1.bf16.msra.mxu0 %v306
    %335 = vmatprep.subr.bf16.mxu0 %v304
    %336 = vmatpush1.bf16.msra.mxu0 %v303
    %337 = vmatprep.subr.bf16.mxu0 %v301
    %338 = vmatpush1.bf16.msra.mxu0 %v300
    %339 = vmatprep.subr.bf16.mxu0 %v298
    %340 = vmatpush1.bf16.msra.mxu0 %v297
    %341 = vmatprep.subr.bf16.mxu0 %v295
    %342 = vmatpush1.bf16.msra.mxu0 %v294
    %343 = vmatprep.subr.bf16.mxu0 %v292
    %344 = vmatpush1.bf16.msra.mxu0 %v291
    %345 = vmatprep.subr.bf16.mxu0 %v289
    %346 = vmatpush1.bf16.msra.mxu0 %v288
    %347 = vmatprep.subr.bf16.mxu0 %v286
    %348 = vmatpush1.bf16.msra.mxu0 %v285
    %349 = vmatprep.subr.bf16.mxu0 0
    %350 = vmatpush2.bf16.msra.mxu0 0
    %351 = vmatprep.subr.bf16.mxu0 0
    %352 = vmatpush2.bf16.msra.mxu0 0
    %353 = vmatprep.subr.bf16.mxu0 0
    %354 = vmatpush2.bf16.msra.mxu0 0
    %355 = vmatprep.subr.bf16.mxu0 0
    %356 = vmatpush2.bf16.msra.mxu0 0
    %357 = vmatprep.subr.bf16.mxu0 0
    %358 = vmatpush2.bf16.msra.mxu0 0
    %359 = vmatprep.subr.bf16.mxu0 0
    %360 = vmatpush2.bf16.msra.mxu0 0
    %361 = vmatprep.subr.bf16.mxu0 0
    %362 = vmatpush2.bf16.msra.mxu0 0
    %363 = vmatprep.subr.bf16.mxu0 0
    %364 = vmatpush2.bf16.msra.mxu0 0
    %365 = vmatprep.mubr.bf16.mxu0 0
    %366 = vmatmul.mubr.bf16.gmra.mxu0 %v185
    %v367 = vpop.f32.mrf.mxu0
    %v368 = vadd.f32 %v193, %v367
    %v369 = vpop.f32.mrf.mxu0
    %v370 = vadd.f32 %v197, %v369
    %v371 = vpop.f32.mrf.mxu0
    %v372 = vadd.f32 %v193, %v371
    %v373 = vpop.f32.mrf.mxu0
    %v374 = vadd.f32 %v197, %v373
    %375 = vmatprep.mubr.bf16.mxu0 0
    %376 = vmatmul.mubr.bf16.gmra.mxu0 %v186
    %v377 = vpop.f32.mrf.mxu0
    %v378 = vadd.f32 %v193, %v377
    %v379 = vpop.f32.mrf.mxu0
    %v380 = vadd.f32 %v197, %v379
    %v381 = vpop.f32.mrf.mxu0
    %v382 = vadd.f32 %v193, %v381
    %v383 = vpop.f32.mrf.mxu0
    %v384 = vadd.f32 %v197, %v383
    %385 = vdwg.mxu0
    %386 = vmatprep.subr.bf16.mxu0 0
    %387 = vmatpush1.bf16.msra.mxu0 %v308
    %388 = vmatprep.subr.bf16.mxu0 0
    %389 = vmatpush1.bf16.msra.mxu0 %v305
    %390 = vmatprep.subr.bf16.mxu0 0
    %391 = vmatpush1.bf16.msra.mxu0 %v302
    %392 = vmatprep.subr.bf16.mxu0 0
    %393 = vmatpush1.bf16.msra.mxu0 %v299
    %394 = vmatprep.subr.bf16.mxu0 0
    %395 = vmatpush1.bf16.msra.mxu0 %v296
    %396 = vmatprep.subr.bf16.mxu0 0
    %397 = vmatpush1.bf16.msra.mxu0 %v293
    %398 = vmatprep.subr.bf16.mxu0 0
    %399 = vmatpush1.bf16.msra.mxu0 %v290
    %400 = vmatprep.subr.bf16.mxu0 0
    %401 = vmatpush1.bf16.msra.mxu0 %v287
    %402 = vmatprep.subr.bf16.mxu0 0
    %403 = vmatpush2.bf16.msra.mxu0 0
    %404 = vmatprep.subr.bf16.mxu0 0
    %405 = vmatpush2.bf16.msra.mxu0 0
    %406 = vmatprep.subr.bf16.mxu0 0
    %407 = vmatpush2.bf16.msra.mxu0 0
    %408 = vmatprep.subr.bf16.mxu0 0
    %409 = vmatpush2.bf16.msra.mxu0 0
    %410 = vmatprep.subr.bf16.mxu0 0
    %411 = vmatpush2.bf16.msra.mxu0 0
    %412 = vmatprep.subr.bf16.mxu0 0
    %413 = vmatpush2.bf16.msra.mxu0 0
    %414 = vmatprep.subr.bf16.mxu0 0
    %415 = vmatpush2.bf16.msra.mxu0 0
    %416 = vmatprep.subr.bf16.mxu0 0
    %417 = vmatpush2.bf16.msra.mxu0 0
    %418 = vmatprep.mubr.bf16.mxu0 0
    %419 = vmatmul.mubr.bf16.gmra.mxu0 %v185
    %v420 = vpop.f32.mrf.mxu0
    %v421 = vadd.f32 %v201, %v420
    %v422 = vpop.f32.mrf.mxu0
    %v423 = vpop.f32.mrf.mxu0
    %v424 = vadd.f32 %v201, %v423
    %v425 = vpop.f32.mrf.mxu0
    %426 = vmatprep.mubr.bf16.mxu0 0
    %427 = vmatmul.mubr.bf16.gmra.mxu0 %v186
    %v428 = vpop.f32.mrf.mxu0
    %v429 = vadd.f32 %v201, %v428
    %v430 = vpop.f32.mrf.mxu0
    %v431 = vpop.f32.mrf.mxu0
    %v432 = vadd.f32 %v201, %v431
    %v433 = vpop.f32.mrf.mxu0
    %434 = vdwg.mxu0
    %v435 = vld [vmem:[#allocation2 + $0xc] sm:$0xf]
    %v436 = vld [vmem:[#allocation2 + $0x68] sm:$0xf]
    %v437 = vld [vmem:[#allocation2 + $0xc4] sm:$0xf]
    %v438 = vld [vmem:[#allocation2 + $0x120] sm:$0xf]
    %v439 = vld [vmem:[#allocation2 + $0x17c] sm:$0xf]
    %v440 = vld [vmem:[#allocation2 + $0x1d8] sm:$0xf]
    %v441 = vld [vmem:[#allocation2 + $0x234] sm:$0xf]
    %v442 = vld [vmem:[#allocation2 + $0x290] sm:$0xf]
    %v443 = vld [vmem:[#allocation2 + $0x2ec] sm:$0xf]
    %v444 = vld [vmem:[#allocation2 + $0x348] sm:$0xf]
    %v445 = vld [vmem:[#allocation2 + $0x3a4] sm:$0xf]
    %v446 = vld [vmem:[#allocation2 + $0x400] sm:$0xf]
    %v447 = vld [vmem:[#allocation2 + $0x45c] sm:$0xf]
    %v448 = vld [vmem:[#allocation2 + $0x4b8] sm:$0xf]
    %v449 = vld [vmem:[#allocation2 + $0x514] sm:$0xf]
    %v450 = vld [vmem:[#allocation2 + $0x570] sm:$0xf]
    %v451 = vld [vmem:[%s6 + $0x3] ss:$0 sm:$0xff]
    %v452 = vpack.c.bf16 %v372, %v368
    %v453 = vpack.c.bf16 %v382, %v378
    %v454 = vpack.c.bf16 %v374, %v370
    %v455 = vpack.c.bf16 %v384, %v380
    %vm456 = vcmask 261120
    %v458 = vsel %vm456, %v452, 0
    %v461 = vsel %vm456, %v453, 0
    %v464 = vsel %vm456, %v454, 0
    %v467 = vsel %vm456, %v455, 0
    %469 = vmatprep.subr.bf16.mxu0 0
    %470 = vmatpush1.bf16.xpose.msra.mxu0 0
    %471 = vmatprep.subr.bf16.mxu0 0
    %472 = vmatpush1.bf16.xpose.msra.mxu0 0
    %473 = vmatprep.subr.bf16.mxu0 0
    %474 = vmatpush1.bf16.xpose.msra.mxu0 0
    %475 = vmatprep.subr.bf16.mxu0 0
    %476 = vmatpush1.bf16.xpose.msra.mxu0 0
    %477 = vmatprep.subr.bf16.mxu0 0
    %478 = vmatpush1.bf16.xpose.msra.mxu0 0
    %479 = vmatprep.subr.bf16.mxu0 0
    %480 = vmatpush1.bf16.xpose.msra.mxu0 0
    %481 = vmatprep.subr.bf16.mxu0 0
    %482 = vmatpush1.bf16.xpose.msra.mxu0 %v467
    %483 = vmatprep.subr.bf16.mxu0 0
    %484 = vmatpush1.bf16.xpose.msra.mxu0 %v464
    %485 = vmatprep.subr.bf16.mxu0 0
    %486 = vmatpush2.bf16.xpose.msra.mxu0 0
    %487 = vmatprep.subr.bf16.mxu0 0
    %488 = vmatpush2.bf16.xpose.msra.mxu0 0
    %489 = vmatprep.subr.bf16.mxu0 0
    %490 = vmatpush2.bf16.xpose.msra.mxu0 0
    %491 = vmatprep.subr.bf16.mxu0 0
    %492 = vmatpush2.bf16.xpose.msra.mxu0 0
    %493 = vmatprep.subr.bf16.mxu0 0
    %494 = vmatpush2.bf16.xpose.msra.mxu0 0
    %495 = vmatprep.subr.bf16.mxu0 0
    %496 = vmatpush2.bf16.xpose.msra.mxu0 0
    %497 = vmatprep.subr.bf16.mxu0 0
    %498 = vmatpush2.bf16.xpose.msra.mxu0 0
    %499 = vmatprep.subr.bf16.mxu0 0
    %500 = vmatpush2.bf16.xpose.msra.mxu0 0
    %501 = vmatprep.mubr.bf16.mxu0 0
    %502 = vmatmul.mubr.bf16.gmra.mxu0 %v458
    %v503 = vpop.f32.mrf.mxu0
    %v504 = vadd.f32 %v73, %v503
    %v505 = vpop.f32.mrf.mxu0
    %v506 = vpop.f32.mrf.mxu0
    %v507 = vadd.f32 %v74, %v506
    %v508 = vpop.f32.mrf.mxu0
    %509 = vmatprep.mubr.bf16.mxu0 0
    %510 = vmatmul.mubr.bf16.gmra.mxu0 %v461
    %v511 = vpop.f32.mrf.mxu0
    %v512 = vadd.f32 %v75, %v511
    %v513 = vpop.f32.mrf.mxu0
    %v514 = vpop.f32.mrf.mxu0
    %v515 = vadd.f32 %v76, %v514
    %v516 = vpop.f32.mrf.mxu0
    %517 = vdwg.mxu0
    %v518 = vsel %vm456, %v504, -inf
    %519 = vmax.xlane.f32.xlu0 %v518
    %v520 = vpop.xlane.xlu0 %519
    %v521 = vsel %vm456, %v507, -inf
    %522 = vmax.xlane.f32.xlu0 %v521
    %v523 = vpop.xlane.xlu0 %522
    %v524 = vsel %vm456, %v512, -inf
    %525 = vmax.xlane.f32.xlu0 %v524
    %v526 = vpop.xlane.xlu0 %525
    %v527 = vsel %vm456, %v515, -inf
    %528 = vmax.xlane.f32.xlu0 %v527
    %v529 = vpop.xlane.xlu0 %528
    %v530 = vsub.f32 %v504, %v520
    %v531 = vsub.f32 %v507, %v523
    %v532 = vsub.f32 %v512, %v526
    %v533 = vsub.f32 %v515, %v529
    %v534 = vmul.f32 %v530, 1.442695
    %v535 = vpow.pop %v534
    %v536 = vmul.f32 %v531, 1.442695
    %v537 = vpow.pop %v536
    %v538 = vmul.f32 %v532, 1.442695
    %v539 = vpow.pop %v538
    %v540 = vmul.f32 %v533, 1.442695
    %v541 = vpow.pop %v540
    %v542 = vsel %vm456, %v535, 0.0
    %543 = vadd.xlane.f32.xlu0 %v542
    %v544 = vpop.xlane.xlu0 %543
    %v545 = vsel %vm456, %v537, 0.0
    %546 = vadd.xlane.f32.xlu0 %v545
    %v547 = vpop.xlane.xlu0 %546
    %v548 = vsel %vm456, %v539, 0.0
    %549 = vadd.xlane.f32.xlu0 %v548
    %v550 = vpop.xlane.xlu0 %549
    %v551 = vsel %vm456, %v541, 0.0
    %552 = vadd.xlane.f32.xlu0 %v551
    %v553 = vpop.xlane.xlu0 %552
    %v554 = vrcp.pop %v544
    %v555 = vmul.f32 %v535, %v554
    %v556 = vrcp.pop %v547
    %v557 = vmul.f32 %v537, %v556
    %v558 = vrcp.pop %v550
    %v559 = vmul.f32 %v539, %v558
    %v560 = vrcp.pop %v553
    %v561 = vmul.f32 %v541, %v560
    %v562 = vpack.c.bf16 %v557, %v555
    %v563 = vpack.c.bf16 %v561, %v559
    %v564 = vpack.c.bf16 %v424, %v421
    %v565 = vpack.c.bf16 %v432, %v429
    %v567 = vsel %vm456, %v562, 0
    %v570 = vsel %vm456, %v563, 0
    %572 = vmatprep.subr.bf16.mxu0 0
    %573 = vmatpush1.bf16.msra.mxu0 0
    %574 = vmatprep.subr.bf16.mxu0 0
    %575 = vmatpush1.bf16.msra.mxu0 0
    %576 = vmatprep.subr.bf16.mxu0 0
    %577 = vmatpush1.bf16.msra.mxu0 0
    %578 = vmatprep.subr.bf16.mxu0 0
    %579 = vmatpush1.bf16.msra.mxu0 0
    %580 = vmatprep.subr.bf16.mxu0 0
    %581 = vmatpush1.bf16.msra.mxu0 0
    %582 = vmatprep.subr.bf16.mxu0 0
    %583 = vmatpush1.bf16.msra.mxu0 0
    %584 = vmatprep.subr.bf16.mxu0 0
    %585 = vmatpush1.bf16.msra.mxu0 %v565
    %586 = vmatprep.subr.bf16.mxu0 0
    %587 = vmatpush1.bf16.msra.mxu0 %v564
    %588 = vmatprep.subr.bf16.mxu0 0
    %589 = vmatpush2.bf16.msra.mxu0 0
    %590 = vmatprep.subr.bf16.mxu0 0
    %591 = vmatpush2.bf16.msra.mxu0 0
    %592 = vmatprep.subr.bf16.mxu0 0
    %593 = vmatpush2.bf16.msra.mxu0 0
    %594 = vmatprep.subr.bf16.mxu0 0
    %595 = vmatpush2.bf16.msra.mxu0 0
    %596 = vmatprep.subr.bf16.mxu0 0
    %597 = vmatpush2.bf16.msra.mxu0 0
    %598 = vmatprep.subr.bf16.mxu0 0
    %599 = vmatpush2.bf16.msra.mxu0 0
    %600 = vmatprep.subr.bf16.mxu0 0
    %601 = vmatpush2.bf16.msra.mxu0 0
    %602 = vmatprep.subr.bf16.mxu0 0
    %603 = vmatpush2.bf16.msra.mxu0 0
    %604 = vmatprep.mubr.bf16.mxu0 0
    %605 = vmatmul.mubr.bf16.gmra.mxu0 %v567
    %v606 = vpop.f32.mrf.mxu0
    %v607 = vadd.f32 0.0, %v606
    %v608 = vpop.f32.mrf.mxu0
    %v609 = vpop.f32.mrf.mxu0
    %v610 = vadd.f32 0.0, %v609
    %v611 = vpop.f32.mrf.mxu0
    %612 = vmatprep.mubr.bf16.mxu0 0
    %613 = vmatmul.mubr.bf16.gmra.mxu0 %v570
    %v614 = vpop.f32.mrf.mxu0
    %v615 = vadd.f32 0.0, %v614
    %v616 = vpop.f32.mrf.mxu0
    %v617 = vpop.f32.mrf.mxu0
    %v618 = vadd.f32 0.0, %v617
    %v619 = vpop.f32.mrf.mxu0
    %620 = vdwg.mxu0
    %623 = vrot.lane.b32.xlu0 %v452, 96
    %v624 = vpop.permute.xlu0 %623
    %625 = vrot.lane.b32.xlu0 %v453, 96
    %v626 = vpop.permute.xlu0 %625
    %629 = vrot.lane.b32.xlu0 %v454, 96
    %v630 = vpop.permute.xlu0 %629
    %631 = vrot.lane.b32.xlu0 %v455, 96
    %v632 = vpop.permute.xlu0 %631
    %v634 = vsel %vm456, %v624, 0
    %v637 = vsel %vm456, %v626, 0
    %v640 = vsel %vm456, %v630, 0
    %v643 = vsel %vm456, %v632, 0
    %645 = vmatprep.subr.bf16.mxu0 0
    %646 = vmatpush1.bf16.xpose.msra.mxu0 0
    %647 = vmatprep.subr.bf16.mxu0 0
    %648 = vmatpush1.bf16.xpose.msra.mxu0 0
    %649 = vmatprep.subr.bf16.mxu0 0
    %650 = vmatpush1.bf16.xpose.msra.mxu0 0
    %651 = vmatprep.subr.bf16.mxu0 0
    %652 = vmatpush1.bf16.xpose.msra.mxu0 0
    %653 = vmatprep.subr.bf16.mxu0 0
    %654 = vmatpush1.bf16.xpose.msra.mxu0 0
    %655 = vmatprep.subr.bf16.mxu0 0
    %656 = vmatpush1.bf16.xpose.msra.mxu0 0
    %657 = vmatprep.subr.bf16.mxu0 0
    %658 = vmatpush1.bf16.xpose.msra.mxu0 %v643
    %659 = vmatprep.subr.bf16.mxu0 0
    %660 = vmatpush1.bf16.xpose.msra.mxu0 %v640
    %661 = vmatprep.subr.bf16.mxu0 0
    %662 = vmatpush2.bf16.xpose.msra.mxu0 0
    %663 = vmatprep.subr.bf16.mxu0 0
    %664 = vmatpush2.bf16.xpose.msra.mxu0 0
    %665 = vmatprep.subr.bf16.mxu0 0
    %666 = vmatpush2.bf16.xpose.msra.mxu0 0
    %667 = vmatprep.subr.bf16.mxu0 0
    %668 = vmatpush2.bf16.xpose.msra.mxu0 0
    %669 = vmatprep.subr.bf16.mxu0 0
    %670 = vmatpush2.bf16.xpose.msra.mxu0 0
    %671 = vmatprep.subr.bf16.mxu0 0
    %672 = vmatpush2.bf16.xpose.msra.mxu0 0
    %673 = vmatprep.subr.bf16.mxu0 0
    %674 = vmatpush2.bf16.xpose.msra.mxu0 0
    %675 = vmatprep.subr.bf16.mxu0 0
    %676 = vmatpush2.bf16.xpose.msra.mxu0 0
    %677 = vmatprep.mubr.bf16.mxu0 0
    %678 = vmatmul.mubr.bf16.gmra.mxu0 %v634
    %v679 = vpop.f32.mrf.mxu0
    %v680 = vadd.f32 %v73, %v679
    %v681 = vpop.f32.mrf.mxu0
    %v682 = vpop.f32.mrf.mxu0
    %v683 = vadd.f32 %v74, %v682
    %v684 = vpop.f32.mrf.mxu0
    %685 = vmatprep.mubr.bf16.mxu0 0
    %686 = vmatmul.mubr.bf16.gmra.mxu0 %v637
    %v687 = vpop.f32.mrf.mxu0
    %v688 = vadd.f32 %v75, %v687
    %v689 = vpop.f32.mrf.mxu0
    %v690 = vpop.f32.mrf.mxu0
    %v691 = vadd.f32 %v76, %v690
    %v692 = vpop.f32.mrf.mxu0
    %693 = vdwg.mxu0
    %v694 = vsel %vm456, %v680, -inf
    %695 = vmax.xlane.f32.xlu0 %v694
    %v696 = vpop.xlane.xlu0 %695
    %v697 = vsel %vm456, %v683, -inf
    %698 = vmax.xlane.f32.xlu0 %v697
    %v699 = vpop.xlane.xlu0 %698
    %v700 = vsel %vm456, %v688, -inf
    %701 = vmax.xlane.f32.xlu0 %v700
    %v702 = vpop.xlane.xlu0 %701
    %v703 = vsel %vm456, %v691, -inf
    %704 = vmax.xlane.f32.xlu0 %v703
    %v705 = vpop.xlane.xlu0 %704
    %v706 = vsub.f32 %v680, %v696
    %v707 = vsub.f32 %v683, %v699
    %v708 = vsub.f32 %v688, %v702
    %v709 = vsub.f32 %v691, %v705
    %v710 = vmul.f32 %v706, 1.442695
    %v711 = vpow.pop %v710
    %v712 = vmul.f32 %v707, 1.442695
    %v713 = vpow.pop %v712
    %v714 = vmul.f32 %v708, 1.442695
    %v715 = vpow.pop %v714
    %v716 = vmul.f32 %v709, 1.442695
    %v717 = vpow.pop %v716
    %v718 = vsel %vm456, %v711, 0.0
    %719 = vadd.xlane.f32.xlu0 %v718
    %v720 = vpop.xlane.xlu0 %719
    %v721 = vsel %vm456, %v713, 0.0
    %722 = vadd.xlane.f32.xlu0 %v721
    %v723 = vpop.xlane.xlu0 %722
    %v724 = vsel %vm456, %v715, 0.0
    %725 = vadd.xlane.f32.xlu0 %v724
    %v726 = vpop.xlane.xlu0 %725
    %v727 = vsel %vm456, %v717, 0.0
    %728 = vadd.xlane.f32.xlu0 %v727
    %v729 = vpop.xlane.xlu0 %728
    %v730 = vrcp.pop %v720
    %v731 = vmul.f32 %v711, %v730
    %v732 = vrcp.pop %v723
    %v733 = vmul.f32 %v713, %v732
    %v734 = vrcp.pop %v726
    %v735 = vmul.f32 %v715, %v734
    %v736 = vrcp.pop %v729
    %v737 = vmul.f32 %v717, %v736
    %v738 = vpack.c.bf16 %v733, %v731
    %v739 = vpack.c.bf16 %v737, %v735
    %742 = vrot.lane.b32.xlu0 %v564, 96
    %v743 = vpop.permute.xlu0 %742
    %744 = vrot.lane.b32.xlu0 %v565, 96
    %v745 = vpop.permute.xlu0 %744
    %v749 = vsel %vm456, %v738, 0
    %v752 = vsel %vm456, %v739, 0
    %754 = vmatprep.subr.bf16.mxu0 0
    %755 = vmatpush1.bf16.msra.mxu0 0
    %756 = vmatprep.subr.bf16.mxu0 0
    %757 = vmatpush1.bf16.msra.mxu0 0
    %758 = vmatprep.subr.bf16.mxu0 0
    %759 = vmatpush1.bf16.msra.mxu0 0
    %760 = vmatprep.subr.bf16.mxu0 0
    %761 = vmatpush1.bf16.msra.mxu0 0
    %762 = vmatprep.subr.bf16.mxu0 0
    %763 = vmatpush1.bf16.msra.mxu0 0
    %764 = vmatprep.subr.bf16.mxu0 0
    %765 = vmatpush1.bf16.msra.mxu0 0
    %766 = vmatprep.subr.bf16.mxu0 0
    %767 = vmatpush1.bf16.msra.mxu0 %v745
    %768 = vmatprep.subr.bf16.mxu0 0
    %769 = vmatpush1.bf16.msra.mxu0 %v743
    %770 = vmatprep.subr.bf16.mxu0 0
    %771 = vmatpush2.bf16.msra.mxu0 0
    %772 = vmatprep.subr.bf16.mxu0 0
    %773 = vmatpush2.bf16.msra.mxu0 0
    %774 = vmatprep.subr.bf16.mxu0 0
    %775 = vmatpush2.bf16.msra.mxu0 0
    %776 = vmatprep.subr.bf16.mxu0 0
    %777 = vmatpush2.bf16.msra.mxu0 0
    %778 = vmatprep.subr.bf16.mxu0 0
    %779 = vmatpush2.bf16.msra.mxu0 0
    %780 = vmatprep.subr.bf16.mxu0 0
    %781 = vmatpush2.bf16.msra.mxu0 0
    %782 = vmatprep.subr.bf16.mxu0 0
    %783 = vmatpush2.bf16.msra.mxu0 0
    %784 = vmatprep.subr.bf16.mxu0 0
    %785 = vmatpush2.bf16.msra.mxu0 0
    %786 = vmatprep.mubr.bf16.mxu0 0
    %787 = vmatmul.mubr.bf16.gmra.mxu0 %v749
    %v788 = vpop.f32.mrf.mxu0
    %v789 = vadd.f32 0.0, %v788
    %v790 = vpop.f32.mrf.mxu0
    %v791 = vpop.f32.mrf.mxu0
    %v792 = vadd.f32 0.0, %v791
    %v793 = vpop.f32.mrf.mxu0
    %794 = vmatprep.mubr.bf16.mxu0 0
    %795 = vmatmul.mubr.bf16.gmra.mxu0 %v752
    %v796 = vpop.f32.mrf.mxu0
    %v797 = vadd.f32 0.0, %v796
    %v798 = vpop.f32.mrf.mxu0
    %v799 = vpop.f32.mrf.mxu0
    %v800 = vadd.f32 0.0, %v799
    %v801 = vpop.f32.mrf.mxu0
    %802 = vdwg.mxu0
    %803 = vrot.lane.b32.xlu0 %v452, 64
    %v804 = vpop.permute.xlu0 %803
    %805 = vrot.lane.b32.xlu0 %v453, 64
    %v806 = vpop.permute.xlu0 %805
    %807 = vrot.lane.b32.xlu0 %v454, 64
    %v808 = vpop.permute.xlu0 %807
    %809 = vrot.lane.b32.xlu0 %v455, 64
    %v810 = vpop.permute.xlu0 %809
    %v812 = vsel %vm456, %v804, 0
    %v815 = vsel %vm456, %v806, 0
    %v818 = vsel %vm456, %v808, 0
    %v821 = vsel %vm456, %v810, 0
    %823 = vmatprep.subr.bf16.mxu0 0
    %824 = vmatpush1.bf16.xpose.msra.mxu0 0
    %825 = vmatprep.subr.bf16.mxu0 0
    %826 = vmatpush1.bf16.xpose.msra.mxu0 0
    %827 = vmatprep.subr.bf16.mxu0 0
    %828 = vmatpush1.bf16.xpose.msra.mxu0 0
    %829 = vmatprep.subr.bf16.mxu0 0
    %830 = vmatpush1.bf16.xpose.msra.mxu0 0
    %831 = vmatprep.subr.bf16.mxu0 0
    %832 = vmatpush1.bf16.xpose.msra.mxu0 0
    %833 = vmatprep.subr.bf16.mxu0 0
    %834 = vmatpush1.bf16.xpose.msra.mxu0 0
    %835 = vmatprep.subr.bf16.mxu0 0
    %836 = vmatpush1.bf16.xpose.msra.mxu0 %v821
    %837 = vmatprep.subr.bf16.mxu0 0
    %838 = vmatpush1.bf16.xpose.msra.mxu0 %v818
    %839 = vmatprep.subr.bf16.mxu0 0
    %840 = vmatpush2.bf16.xpose.msra.mxu0 0
    %841 = vmatprep.subr.bf16.mxu0 0
    %842 = vmatpush2.bf16.xpose.msra.mxu0 0
    %843 = vmatprep.subr.bf16.mxu0 0
    %844 = vmatpush2.bf16.xpose.msra.mxu0 0
    %845 = vmatprep.subr.bf16.mxu0 0
    %846 = vmatpush2.bf16.xpose.msra.mxu0 0
    %847 = vmatprep.subr.bf16.mxu0 0
    %848 = vmatpush2.bf16.xpose.msra.mxu0 0
    %849 = vmatprep.subr.bf16.mxu0 0
    %850 = vmatpush2.bf16.xpose.msra.mxu0 0
    %851 = vmatprep.subr.bf16.mxu0 0
    %852 = vmatpush2.bf16.xpose.msra.mxu0 0
    %853 = vmatprep.subr.bf16.mxu0 0
    %854 = vmatpush2.bf16.xpose.msra.mxu0 0
    %855 = vmatprep.mubr.bf16.mxu0 0
    %856 = vmatmul.mubr.bf16.gmra.mxu0 %v812
    %v857 = vpop.f32.mrf.mxu0
    %v858 = vadd.f32 %v73, %v857
    %v859 = vpop.f32.mrf.mxu0
    %v860 = vpop.f32.mrf.mxu0
    %v861 = vadd.f32 %v74, %v860
    %v862 = vpop.f32.mrf.mxu0
    %863 = vmatprep.mubr.bf16.mxu0 0
    %864 = vmatmul.mubr.bf16.gmra.mxu0 %v815
    %v865 = vpop.f32.mrf.mxu0
    %v866 = vadd.f32 %v75, %v865
    %v867 = vpop.f32.mrf.mxu0
    %v868 = vpop.f32.mrf.mxu0
    %v869 = vadd.f32 %v76, %v868
    %v870 = vpop.f32.mrf.mxu0
    %871 = vdwg.mxu0
    %v872 = vsel %vm456, %v858, -inf
    %873 = vmax.xlane.f32.xlu0 %v872
    %v874 = vpop.xlane.xlu0 %873
    %v875 = vsel %vm456, %v861, -inf
    %876 = vmax.xlane.f32.xlu0 %v875
    %v877 = vpop.xlane.xlu0 %876
    %v878 = vsel %vm456, %v866, -inf
    %879 = vmax.xlane.f32.xlu0 %v878
    %v880 = vpop.xlane.xlu0 %879
    %v881 = vsel %vm456, %v869, -inf
    %882 = vmax.xlane.f32.xlu0 %v881
    %v883 = vpop.xlane.xlu0 %882
    %v884 = vsub.f32 %v858, %v874
    %v885 = vsub.f32 %v861, %v877
    %v886 = vsub.f32 %v866, %v880
    %v887 = vsub.f32 %v869, %v883
    %v888 = vmul.f32 %v884, 1.442695
    %v889 = vpow.pop %v888
    %v890 = vmul.f32 %v885, 1.442695
    %v891 = vpow.pop %v890
    %v892 = vmul.f32 %v886, 1.442695
    %v893 = vpow.pop %v892
    %v894 = vmul.f32 %v887, 1.442695
    %v895 = vpow.pop %v894
    %v896 = vsel %vm456, %v889, 0.0
    %897 = vadd.xlane.f32.xlu0 %v896
    %v898 = vpop.xlane.xlu0 %897
    %v899 = vsel %vm456, %v891, 0.0
    %900 = vadd.xlane.f32.xlu0 %v899
    %v901 = vpop.xlane.xlu0 %900
    %v902 = vsel %vm456, %v893, 0.0
    %903 = vadd.xlane.f32.xlu0 %v902
    %v904 = vpop.xlane.xlu0 %903
    %v905 = vsel %vm456, %v895, 0.0
    %906 = vadd.xlane.f32.xlu0 %v905
    %v907 = vpop.xlane.xlu0 %906
    %v908 = vrcp.pop %v898
    %v909 = vmul.f32 %v889, %v908
    %v910 = vrcp.pop %v901
    %v911 = vmul.f32 %v891, %v910
    %v912 = vrcp.pop %v904
    %v913 = vmul.f32 %v893, %v912
    %v914 = vrcp.pop %v907
    %v915 = vmul.f32 %v895, %v914
    %v916 = vpack.c.bf16 %v911, %v909
    %v917 = vpack.c.bf16 %v915, %v913
    %918 = vrot.lane.b32.xlu0 %v564, 64
    %v919 = vpop.permute.xlu0 %918
    %920 = vrot.lane.b32.xlu0 %v565, 64
    %v921 = vpop.permute.xlu0 %920
    %v925 = vsel %vm456, %v916, 0
    %v928 = vsel %vm456, %v917, 0
    %930 = vmatprep.subr.bf16.mxu0 0
    %931 = vmatpush1.bf16.msra.mxu0 0
    %932 = vmatprep.subr.bf16.mxu0 0
    %933 = vmatpush1.bf16.msra.mxu0 0
    %934 = vmatprep.subr.bf16.mxu0 0
    %935 = vmatpush1.bf16.msra.mxu0 0
    %936 = vmatprep.subr.bf16.mxu0 0
    %937 = vmatpush1.bf16.msra.mxu0 0
    %938 = vmatprep.subr.bf16.mxu0 0
    %939 = vmatpush1.bf16.msra.mxu0 0
    %940 = vmatprep.subr.bf16.mxu0 0
    %941 = vmatpush1.bf16.msra.mxu0 0
    %942 = vmatprep.subr.bf16.mxu0 0
    %943 = vmatpush1.bf16.msra.mxu0 %v921
    %944 = vmatprep.subr.bf16.mxu0 0
    %945 = vmatpush1.bf16.msra.mxu0 %v919
    %946 = vmatprep.subr.bf16.mxu0 0
    %947 = vmatpush2.bf16.msra.mxu0 0
    %948 = vmatprep.subr.bf16.mxu0 0
    %949 = vmatpush2.bf16.msra.mxu0 0
    %950 = vmatprep.subr.bf16.mxu0 0
    %951 = vmatpush2.bf16.msra.mxu0 0
    %952 = vmatprep.subr.bf16.mxu0 0
    %953 = vmatpush2.bf16.msra.mxu0 0
    %954 = vmatprep.subr.bf16.mxu0 0
    %955 = vmatpush2.bf16.msra.mxu0 0
    %956 = vmatprep.subr.bf16.mxu0 0
    %957 = vmatpush2.bf16.msra.mxu0 0
    %958 = vmatprep.subr.bf16.mxu0 0
    %959 = vmatpush2.bf16.msra.mxu0 0
    %960 = vmatprep.subr.bf16.mxu0 0
    %961 = vmatpush2.bf16.msra.mxu0 0
    %962 = vmatprep.mubr.bf16.mxu0 0
    %963 = vmatmul.mubr.bf16.gmra.mxu0 %v925
    %v964 = vpop.f32.mrf.mxu0
    %v965 = vadd.f32 0.0, %v964
    %v966 = vpop.f32.mrf.mxu0
    %v967 = vpop.f32.mrf.mxu0
    %v968 = vadd.f32 0.0, %v967
    %v969 = vpop.f32.mrf.mxu0
    %970 = vmatprep.mubr.bf16.mxu0 0
    %971 = vmatmul.mubr.bf16.gmra.mxu0 %v928
    %v972 = vpop.f32.mrf.mxu0
    %v973 = vadd.f32 0.0, %v972
    %v974 = vpop.f32.mrf.mxu0
    %v975 = vpop.f32.mrf.mxu0
    %v976 = vadd.f32 0.0, %v975
    %v977 = vpop.f32.mrf.mxu0
    %978 = vdwg.mxu0
    %979 = vrot.lane.b32.xlu0 %v452, 32
    %v980 = vpop.permute.xlu0 %979
    %981 = vrot.lane.b32.xlu0 %v453, 32
    %v982 = vpop.permute.xlu0 %981
    %983 = vrot.lane.b32.xlu0 %v454, 32
    %v984 = vpop.permute.xlu0 %983
    %985 = vrot.lane.b32.xlu0 %v455, 32
    %v986 = vpop.permute.xlu0 %985
    %v988 = vsel %vm456, %v980, 0
    %v991 = vsel %vm456, %v982, 0
    %v994 = vsel %vm456, %v984, 0
    %v997 = vsel %vm456, %v986, 0
    %999 = vmatprep.subr.bf16.mxu0 0
    %1000 = vmatpush1.bf16.xpose.msra.mxu0 0
    %1001 = vmatprep.subr.bf16.mxu0 0
    %1002 = vmatpush1.bf16.xpose.msra.mxu0 0
    %1003 = vmatprep.subr.bf16.mxu0 0
    %1004 = vmatpush1.bf16.xpose.msra.mxu0 0
    %1005 = vmatprep.subr.bf16.mxu0 0
    %1006 = vmatpush1.bf16.xpose.msra.mxu0 0
    %1007 = vmatprep.subr.bf16.mxu0 0
    %1008 = vmatpush1.bf16.xpose.msra.mxu0 0
    %1009 = vmatprep.subr.bf16.mxu0 0
    %1010 = vmatpush1.bf16.xpose.msra.mxu0 0
    %1011 = vmatprep.subr.bf16.mxu0 0
    %1012 = vmatpush1.bf16.xpose.msra.mxu0 %v997
    %1013 = vmatprep.subr.bf16.mxu0 0
    %1014 = vmatpush1.bf16.xpose.msra.mxu0 %v994
    %1015 = vmatprep.subr.bf16.mxu0 0
    %1016 = vmatpush2.bf16.xpose.msra.mxu0 0
    %1017 = vmatprep.subr.bf16.mxu0 0
    %1018 = vmatpush2.bf16.xpose.msra.mxu0 0
    %1019 = vmatprep.subr.bf16.mxu0 0
    %1020 = vmatpush2.bf16.xpose.msra.mxu0 0
    %1021 = vmatprep.subr.bf16.mxu0 0
    %1022 = vmatpush2.bf16.xpose.msra.mxu0 0
    %1023 = vmatprep.subr.bf16.mxu0 0
    %1024 = vmatpush2.bf16.xpose.msra.mxu0 0
    %1025 = vmatprep.subr.bf16.mxu0 0
    %1026 = vmatpush2.bf16.xpose.msra.mxu0 0
    %1027 = vmatprep.subr.bf16.mxu0 0
    %1028 = vmatpush2.bf16.xpose.msra.mxu0 0
    %1029 = vmatprep.subr.bf16.mxu0 0
    %1030 = vmatpush2.bf16.xpose.msra.mxu0 0
    %1031 = vmatprep.mubr.bf16.mxu0 0
    %1032 = vmatmul.mubr.bf16.gmra.mxu0 %v988
    %v1033 = vpop.f32.mrf.mxu0
    %v1034 = vadd.f32 %v73, %v1033
    %v1035 = vpop.f32.mrf.mxu0
    %v1036 = vpop.f32.mrf.mxu0
    %v1037 = vadd.f32 %v74, %v1036
    %v1038 = vpop.f32.mrf.mxu0
    %1039 = vmatprep.mubr.bf16.mxu0 0
    %1040 = vmatmul.mubr.bf16.gmra.mxu0 %v991
    %v1041 = vpop.f32.mrf.mxu0
    %v1042 = vadd.f32 %v75, %v1041
    %v1043 = vpop.f32.mrf.mxu0
    %v1044 = vpop.f32.mrf.mxu0
    %v1045 = vadd.f32 %v76, %v1044
    %v1046 = vpop.f32.mrf.mxu0
    %1047 = vdwg.mxu0
    %v1048 = vsel %vm456, %v1034, -inf
    %1049 = vmax.xlane.f32.xlu0 %v1048
    %v1050 = vpop.xlane.xlu0 %1049
    %v1051 = vsel %vm456, %v1037, -inf
    %1052 = vmax.xlane.f32.xlu0 %v1051
    %v1053 = vpop.xlane.xlu0 %1052
    %v1054 = vsel %vm456, %v1042, -inf
    %1055 = vmax.xlane.f32.xlu0 %v1054
    %v1056 = vpop.xlane.xlu0 %1055
    %v1057 = vsel %vm456, %v1045, -inf
    %1058 = vmax.xlane.f32.xlu0 %v1057
    %v1059 = vpop.xlane.xlu0 %1058
    %v1060 = vsub.f32 %v1034, %v1050
    %v1061 = vsub.f32 %v1037, %v1053
    %v1062 = vsub.f32 %v1042, %v1056
    %v1063 = vsub.f32 %v1045, %v1059
    %v1064 = vmul.f32 %v1060, 1.442695
    %v1065 = vpow.pop %v1064
    %v1066 = vmul.f32 %v1061, 1.442695
    %v1067 = vpow.pop %v1066
    %v1068 = vmul.f32 %v1062, 1.442695
    %v1069 = vpow.pop %v1068
    %v1070 = vmul.f32 %v1063, 1.442695
    %v1071 = vpow.pop %v1070
    %v1072 = vsel %vm456, %v1065, 0.0
    %1073 = vadd.xlane.f32.xlu0 %v1072
    %v1074 = vpop.xlane.xlu0 %1073
    %v1075 = vsel %vm456, %v1067, 0.0
    %1076 = vadd.xlane.f32.xlu0 %v1075
    %v1077 = vpop.xlane.xlu0 %1076
    %v1078 = vsel %vm456, %v1069, 0.0
    %1079 = vadd.xlane.f32.xlu0 %v1078
    %v1080 = vpop.xlane.xlu0 %1079
    %v1081 = vsel %vm456, %v1071, 0.0
    %1082 = vadd.xlane.f32.xlu0 %v1081
    %v1083 = vpop.xlane.xlu0 %1082
    %v1084 = vrcp.pop %v1074
    %v1085 = vmul.f32 %v1065, %v1084
    %v1086 = vrcp.pop %v1077
    %v1087 = vmul.f32 %v1067, %v1086
    %v1088 = vrcp.pop %v1080
    %v1089 = vmul.f32 %v1069, %v1088
    %v1090 = vrcp.pop %v1083
    %v1091 = vmul.f32 %v1071, %v1090
    %v1092 = vpack.c.bf16 %v1087, %v1085
    %v1093 = vpack.c.bf16 %v1091, %v1089
    %1094 = vrot.lane.b32.xlu0 %v564, 32
    %v1095 = vpop.permute.xlu0 %1094
    %1096 = vrot.lane.b32.xlu0 %v565, 32
    %v1097 = vpop.permute.xlu0 %1096
    %v1101 = vsel %vm456, %v1092, 0
    %v1104 = vsel %vm456, %v1093, 0
    %1106 = vmatprep.subr.bf16.mxu0 0
    %1107 = vmatpush1.bf16.msra.mxu0 0
    %1108 = vmatprep.subr.bf16.mxu0 0
    %1109 = vmatpush1.bf16.msra.mxu0 0
    %1110 = vmatprep.subr.bf16.mxu0 0
    %1111 = vmatpush1.bf16.msra.mxu0 0
    %1112 = vmatprep.subr.bf16.mxu0 0
    %1113 = vmatpush1.bf16.msra.mxu0 0
    %1114 = vmatprep.subr.bf16.mxu0 0
    %1115 = vmatpush1.bf16.msra.mxu0 0
    %1116 = vmatprep.subr.bf16.mxu0 0
    %1117 = vmatpush1.bf16.msra.mxu0 0
    %1118 = vmatprep.subr.bf16.mxu0 0
    %1119 = vmatpush1.bf16.msra.mxu0 %v1097
    %1120 = vmatprep.subr.bf16.mxu0 0
    %1121 = vmatpush1.bf16.msra.mxu0 %v1095
    %1122 = vmatprep.subr.bf16.mxu0 0
    %1123 = vmatpush2.bf16.msra.mxu0 0
    %1124 = vmatprep.subr.bf16.mxu0 0
    %1125 = vmatpush2.bf16.msra.mxu0 0
    %1126 = vmatprep.subr.bf16.mxu0 0
    %1127 = vmatpush2.bf16.msra.mxu0 0
    %1128 = vmatprep.subr.bf16.mxu0 0
    %1129 = vmatpush2.bf16.msra.mxu0 0
    %1130 = vmatprep.subr.bf16.mxu0 0
    %1131 = vmatpush2.bf16.msra.mxu0 0
    %1132 = vmatprep.subr.bf16.mxu0 0
    %1133 = vmatpush2.bf16.msra.mxu0 0
    %1134 = vmatprep.subr.bf16.mxu0 0
    %1135 = vmatpush2.bf16.msra.mxu0 0
    %1136 = vmatprep.subr.bf16.mxu0 0
    %1137 = vmatpush2.bf16.msra.mxu0 0
    %1138 = vmatprep.mubr.bf16.mxu0 0
    %1139 = vmatmul.mubr.bf16.gmra.mxu0 %v1101
    %v1140 = vpop.f32.mrf.mxu0
    %v1141 = vadd.f32 0.0, %v1140
    %v1142 = vpop.f32.mrf.mxu0
    %v1143 = vpop.f32.mrf.mxu0
    %v1144 = vadd.f32 0.0, %v1143
    %v1145 = vpop.f32.mrf.mxu0
    %1146 = vmatprep.mubr.bf16.mxu0 0
    %1147 = vmatmul.mubr.bf16.gmra.mxu0 %v1104
    %v1148 = vpop.f32.mrf.mxu0
    %v1149 = vadd.f32 0.0, %v1148
    %v1150 = vpop.f32.mrf.mxu0
    %v1151 = vpop.f32.mrf.mxu0
    %v1152 = vadd.f32 0.0, %v1151
    %v1153 = vpop.f32.mrf.mxu0
    %1154 = vdwg.mxu0
    %1159 = vrot.lane.b32.xlu0 %v789, 32
    %v1160 = vpop.permute.xlu0 %1159
    %1161 = vrot.lane.b32.xlu0 %v792, 32
    %v1162 = vpop.permute.xlu0 %1161
    %1163 = vrot.lane.b32.xlu0 %v797, 32
    %v1164 = vpop.permute.xlu0 %1163
    %1165 = vrot.lane.b32.xlu0 %v800, 32
    %v1166 = vpop.permute.xlu0 %1165
    %1175 = vrot.lane.b32.xlu0 %v965, 64
    %v1176 = vpop.permute.xlu0 %1175
    %1177 = vrot.lane.b32.xlu0 %v968, 64
    %v1178 = vpop.permute.xlu0 %1177
    %1179 = vrot.lane.b32.xlu0 %v973, 64
    %v1180 = vpop.permute.xlu0 %1179
    %1181 = vrot.lane.b32.xlu0 %v976, 64
    %v1182 = vpop.permute.xlu0 %1181
    %1191 = vrot.lane.b32.xlu0 %v1141, 96
    %v1192 = vpop.permute.xlu0 %1191
    %1193 = vrot.lane.b32.xlu0 %v1144, 96
    %v1194 = vpop.permute.xlu0 %1193
    %1195 = vrot.lane.b32.xlu0 %v1149, 96
    %v1196 = vpop.permute.xlu0 %1195
    %1197 = vrot.lane.b32.xlu0 %v1152, 96
    %v1198 = vpop.permute.xlu0 %1197
    %v1203 = vsel %vm456, %v607, %v1160
    %v1204 = vsel %vm456, %v610, %v1162
    %v1205 = vsel %vm456, %v615, %v1164
    %v1206 = vsel %vm456, %v618, %v1166
    %vm1207 = vcmask 523264
    %v1208 = vsel %vm1207, %v1203, %v1176
    %v1209 = vsel %vm1207, %v1204, %v1178
    %v1210 = vsel %vm1207, %v1205, %v1180
    %v1211 = vsel %vm1207, %v1206, %v1182
    %vm1212 = vcmask 785408
    %v1213 = vsel %vm1212, %v1208, %v1192
    %v1214 = vsel %vm1212, %v1209, %v1194
    %v1215 = vsel %vm1212, %v1210, %v1196
    %v1216 = vsel %vm1212, %v1211, %v1198
    %v1217 = vpack.c.bf16 %v1214, %v1213
    %v1218 = vpack.c.bf16 %v1216, %v1215
    %v1235 = vunpack.c.l.b16 %v435
    %v1236 = vunpack.c.l.b16 %v436
    %v1237 = vunpack.c.l.b16 %v437
    %v1238 = vunpack.c.l.b16 %v438
    %v1239 = vunpack.c.l.b16 %v439
    %v1240 = vunpack.c.l.b16 %v440
    %v1241 = vunpack.c.l.b16 %v441
    %v1242 = vunpack.c.l.b16 %v442
    %v1243 = vunpack.c.l.b16 %v443
    %v1244 = vunpack.c.l.b16 %v444
    %v1245 = vunpack.c.l.b16 %v445
    %v1246 = vunpack.c.l.b16 %v446
    %v1247 = vunpack.c.l.b16 %v447
    %v1248 = vunpack.c.l.b16 %v448
    %v1249 = vunpack.c.l.b16 %v449
    %v1250 = vunpack.c.l.b16 %v450
    %v1251 = vpack.c.b16 %v1236, %v1235
    %v1252 = vpack.c.b16 %v1238, %v1237
    %v1253 = vpack.c.b16 %v1240, %v1239
    %v1254 = vpack.c.b16 %v1242, %v1241
    %v1255 = vpack.c.b16 %v1244, %v1243
    %v1256 = vpack.c.b16 %v1246, %v1245
    %v1257 = vpack.c.b16 %v1248, %v1247
    %v1258 = vpack.c.b16 %v1250, %v1249
    %1267 = vmatprep.subr.bf16.mxu0 0
    %1268 = vmatpush1.bf16.msra.mxu0 %v1258
    %1269 = vmatprep.subr.bf16.mxu0 0
    %1270 = vmatpush1.bf16.msra.mxu0 %v1257
    %1271 = vmatprep.subr.bf16.mxu0 0
    %1272 = vmatpush1.bf16.msra.mxu0 %v1256
    %1273 = vmatprep.subr.bf16.mxu0 0
    %1274 = vmatpush1.bf16.msra.mxu0 %v1255
    %1275 = vmatprep.subr.bf16.mxu0 0
    %1276 = vmatpush1.bf16.msra.mxu0 %v1254
    %1277 = vmatprep.subr.bf16.mxu0 0
    %1278 = vmatpush1.bf16.msra.mxu0 %v1253
    %1279 = vmatprep.subr.bf16.mxu0 0
    %1280 = vmatpush1.bf16.msra.mxu0 %v1252
    %1281 = vmatprep.subr.bf16.mxu0 0
    %1282 = vmatpush1.bf16.msra.mxu0 %v1251
    %1283 = vmatprep.subr.bf16.mxu0 0
    %1284 = vmatpush2.bf16.msra.mxu0 0
    %1285 = vmatprep.subr.bf16.mxu0 0
    %1286 = vmatpush2.bf16.msra.mxu0 0
    %1287 = vmatprep.subr.bf16.mxu0 0
    %1288 = vmatpush2.bf16.msra.mxu0 0
    %1289 = vmatprep.subr.bf16.mxu0 0
    %1290 = vmatpush2.bf16.msra.mxu0 0
    %1291 = vmatprep.subr.bf16.mxu0 0
    %1292 = vmatpush2.bf16.msra.mxu0 0
    %1293 = vmatprep.subr.bf16.mxu0 0
    %1294 = vmatpush2.bf16.msra.mxu0 0
    %1295 = vmatprep.subr.bf16.mxu0 0
    %1296 = vmatpush2.bf16.msra.mxu0 0
    %1297 = vmatprep.subr.bf16.mxu0 0
    %1298 = vmatpush2.bf16.msra.mxu0 0
    %1299 = vmatprep.mubr.bf16.mxu0 0
    %1300 = vmatmul.mubr.bf16.gmra.mxu0 %v1217
    %v1301 = vpop.f32.mrf.mxu0
    %v1302 = vadd.f32 %v451, %v1301
    %v1303 = vpop.f32.mrf.mxu0
    %v1304 = vpop.f32.mrf.mxu0
    %v1305 = vadd.f32 %v451, %v1304
    %v1306 = vpop.f32.mrf.mxu0
    %1307 = vmatprep.mubr.bf16.mxu0 0
    %1308 = vmatmul.mubr.bf16.gmra.mxu0 %v1218
    %v1309 = vpop.f32.mrf.mxu0
    %v1310 = vadd.f32 %v451, %v1309
    %v1311 = vpop.f32.mrf.mxu0
    %v1312 = vpop.f32.mrf.mxu0
    %v1313 = vadd.f32 %v451, %v1312
    %v1314 = vpop.f32.mrf.mxu0
    %1315 = vdwg.mxu0
    %v1316 = vld [vmem:[#allocation2 + $0x4c] sm:$0xf]
    %v1317 = vld [vmem:[#allocation2 + $0xa8] sm:$0xf]
    %v1318 = vld [vmem:[#allocation2 + $0x104] sm:$0xf]
    %v1319 = vld [vmem:[#allocation2 + $0x160] sm:$0xf]
    %v1320 = vld [vmem:[#allocation2 + $0x1bc] sm:$0xf]
    %v1321 = vld [vmem:[#allocation2 + $0x218] sm:$0xf]
    %v1322 = vld [vmem:[#allocation2 + $0x274] sm:$0xf]
    %v1323 = vld [vmem:[#allocation2 + $0x2d0] sm:$0xf]
    %v1324 = vld [vmem:[#allocation2 + $0x32c] sm:$0xf]
    %v1325 = vld [vmem:[#allocation2 + $0x388] sm:$0xf]
    %v1326 = vld [vmem:[#allocation2 + $0x3e4] sm:$0xf]
    %v1327 = vld [vmem:[#allocation2 + $0x440] sm:$0xf]
    %v1328 = vld [vmem:[#allocation2 + $0x49c] sm:$0xf]
    %v1329 = vld [vmem:[#allocation2 + $0x4f8] sm:$0xf]
    %v1330 = vld [vmem:[#allocation2 + $0x554] sm:$0xf]
    %v1331 = vld [vmem:[#allocation2 + $0x5b0] sm:$0xf]
    %v1332 = vpack.c.bf16 %v1305, %v1302
    %v1333 = vpack.c.bf16 %v1313, %v1310
    %v1334 = vld [vmem:[%s6 + $0x4] ss:$0 sm:$0xff]
    %v1351 = vunpack.c.l.b16 %v1316
    %v1352 = vunpack.c.l.b16 %v1317
    %v1353 = vunpack.c.l.b16 %v1318
    %v1354 = vunpack.c.l.b16 %v1319
    %v1355 = vunpack.c.l.b16 %v1320
    %v1356 = vunpack.c.l.b16 %v1321
    %v1357 = vunpack.c.l.b16 %v1322
    %v1358 = vunpack.c.l.b16 %v1323
    %v1359 = vunpack.c.l.b16 %v1324
    %v1360 = vunpack.c.l.b16 %v1325
    %v1361 = vunpack.c.l.b16 %v1326
    %v1362 = vunpack.c.l.b16 %v1327
    %v1363 = vunpack.c.l.b16 %v1328
    %v1364 = vunpack.c.l.b16 %v1329
    %v1365 = vunpack.c.l.b16 %v1330
    %v1366 = vunpack.c.l.b16 %v1331
    %v1367 = vpack.c.b16 %v1352, %v1351
    %v1368 = vpack.c.b16 %v1354, %v1353
    %v1369 = vpack.c.b16 %v1356, %v1355
    %v1370 = vpack.c.b16 %v1358, %v1357
    %v1371 = vpack.c.b16 %v1360, %v1359
    %v1372 = vpack.c.b16 %v1362, %v1361
    %v1373 = vpack.c.b16 %v1364, %v1363
    %v1374 = vpack.c.b16 %v1366, %v1365
    %1383 = vmatprep.subr.bf16.mxu0 0
    %1384 = vmatpush1.bf16.msra.mxu0 %v1374
    %1385 = vmatprep.subr.bf16.mxu0 0
    %1386 = vmatpush1.bf16.msra.mxu0 %v1373
    %1387 = vmatprep.subr.bf16.mxu0 0
    %1388 = vmatpush1.bf16.msra.mxu0 %v1372
    %1389 = vmatprep.subr.bf16.mxu0 0
    %1390 = vmatpush1.bf16.msra.mxu0 %v1371
    %1391 = vmatprep.subr.bf16.mxu0 0
    %1392 = vmatpush1.bf16.msra.mxu0 %v1370
    %1393 = vmatprep.subr.bf16.mxu0 0
    %1394 = vmatpush1.bf16.msra.mxu0 %v1369
    %1395 = vmatprep.subr.bf16.mxu0 0
    %1396 = vmatpush1.bf16.msra.mxu0 %v1368
    %1397 = vmatprep.subr.bf16.mxu0 0
    %1398 = vmatpush1.bf16.msra.mxu0 %v1367
    %1399 = vmatprep.subr.bf16.mxu0 0
    %1400 = vmatpush2.bf16.msra.mxu0 0
    %1401 = vmatprep.subr.bf16.mxu0 0
    %1402 = vmatpush2.bf16.msra.mxu0 0
    %1403 = vmatprep.subr.bf16.mxu0 0
    %1404 = vmatpush2.bf16.msra.mxu0 0
    %1405 = vmatprep.subr.bf16.mxu0 0
    %1406 = vmatpush2.bf16.msra.mxu0 0
    %1407 = vmatprep.subr.bf16.mxu0 0
    %1408 = vmatpush2.bf16.msra.mxu0 0
    %1409 = vmatprep.subr.bf16.mxu0 0
    %1410 = vmatpush2.bf16.msra.mxu0 0
    %1411 = vmatprep.subr.bf16.mxu0 0
    %1412 = vmatpush2.bf16.msra.mxu0 0
    %1413 = vmatprep.subr.bf16.mxu0 0
    %1414 = vmatpush2.bf16.msra.mxu0 0
    %1415 = vmatprep.mubr.bf16.mxu0 0
    %1416 = vmatmul.mubr.bf16.gmra.mxu0 %v1332
    %v1417 = vpop.f32.mrf.mxu0
    %v1418 = vadd.f32 %v1334, %v1417
    %v1419 = vpop.f32.mrf.mxu0
    %v1420 = vpop.f32.mrf.mxu0
    %v1421 = vadd.f32 %v1334, %v1420
    %v1422 = vpop.f32.mrf.mxu0
    %1423 = vmatprep.mubr.bf16.mxu0 0
    %1424 = vmatmul.mubr.bf16.gmra.mxu0 %v1333
    %v1425 = vpop.f32.mrf.mxu0
    %v1426 = vadd.f32 %v1334, %v1425
    %v1427 = vpop.f32.mrf.mxu0
    %v1428 = vpop.f32.mrf.mxu0
    %v1429 = vadd.f32 %v1334, %v1428
    %v1430 = vpop.f32.mrf.mxu0
    %1431 = vdwg.mxu0
    %v1432 = vmax.f32 %v1418, 0.0
    %v1433 = vmax.f32 %v1421, 0.0
    %v1434 = vmax.f32 %v1426, 0.0
    %v1435 = vmax.f32 %v1429, 0.0
    %v1436 = vld [vmem:[%s5 + $0x100] sm:$0xf]
    %v1437 = vpack.c.bf16 %v1433, %v1432
    %v1438 = vpack.c.bf16 %v1435, %v1434
    %vm1439 = vcmask 64512
    %v1441 = vsel %vm1439, %v1437, 0
    %v1444 = vsel %vm1439, %v1438, 0
    %vm1446 = vcmask 1043456
    %v1448 = vsel %vm1446, %v1436, 0
    %1450 = vmatprep.subr.bf16.mxu0 0
    %1451 = vmatpush1.bf16.msra.mxu0 0
    %1452 = vmatprep.subr.bf16.mxu0 0
    %1453 = vmatpush1.bf16.msra.mxu0 0
    %1454 = vmatprep.subr.bf16.mxu0 0
    %1455 = vmatpush1.bf16.msra.mxu0 0
    %1456 = vmatprep.subr.bf16.mxu0 0
    %1457 = vmatpush1.bf16.msra.mxu0 0
    %1458 = vmatprep.subr.bf16.mxu0 0
    %1459 = vmatpush1.bf16.msra.mxu0 0
    %1460 = vmatprep.subr.bf16.mxu0 0
    %1461 = vmatpush1.bf16.msra.mxu0 0
    %1462 = vmatprep.subr.bf16.mxu0 0
    %1463 = vmatpush1.bf16.msra.mxu0 0
    %1464 = vmatprep.subr.bf16.mxu0 0
    %1465 = vmatpush1.bf16.msra.mxu0 %v1448
    %1466 = vmatprep.subr.bf16.mxu0 0
    %1467 = vmatpush2.bf16.msra.mxu0 0
    %1468 = vmatprep.subr.bf16.mxu0 0
    %1469 = vmatpush2.bf16.msra.mxu0 0
    %1470 = vmatprep.subr.bf16.mxu0 0
    %1471 = vmatpush2.bf16.msra.mxu0 0
    %1472 = vmatprep.subr.bf16.mxu0 0
    %1473 = vmatpush2.bf16.msra.mxu0 0
    %1474 = vmatprep.subr.bf16.mxu0 0
    %1475 = vmatpush2.bf16.msra.mxu0 0
    %1476 = vmatprep.subr.bf16.mxu0 0
    %1477 = vmatpush2.bf16.msra.mxu0 0
    %1478 = vmatprep.subr.bf16.mxu0 0
    %1479 = vmatpush2.bf16.msra.mxu0 0
    %1480 = vmatprep.subr.bf16.mxu0 0
    %1481 = vmatpush2.bf16.msra.mxu0 0
    %1482 = vmatprep.mubr.bf16.mxu0 0
    %1483 = vmatmul.mubr.bf16.gmra.mxu0 %v1441
    %v1484 = vpop.f32.mrf.mxu0
    %v1485 = vadd.f32 0.0, %v1484
    %v1486 = vpop.f32.mrf.mxu0
    %v1487 = vpop.f32.mrf.mxu0
    %v1488 = vadd.f32 0.0, %v1487
    %v1489 = vpop.f32.mrf.mxu0
    %1490 = vmatprep.mubr.bf16.mxu0 0
    %1491 = vmatmul.mubr.bf16.gmra.mxu0 %v1444
    %v1492 = vpop.f32.mrf.mxu0
    %v1493 = vadd.f32 0.0, %v1492
    %v1494 = vpop.f32.mrf.mxu0
    %v1495 = vpop.f32.mrf.mxu0
    %v1496 = vadd.f32 0.0, %v1495
    %v1497 = vpop.f32.mrf.mxu0
    %1498 = vdwg.mxu0
    %v1499 = vadd.f32 %v1302, %v1485
    %v1500 = vadd.f32 %v1305, %v1488
    %v1501 = vadd.f32 %v1310, %v1493
    %v1502 = vadd.f32 %v1313, %v1496
    %v1503 = vld [vmem:[%s6 + $0x5] ss:$0 sm:$0xff]
    %v1504 = vadd.f32 %v1499, %v1503
    %v1505 = vadd.f32 %v1500, %v1503
    %v1506 = vadd.f32 %v1501, %v1503
    %v1507 = vadd.f32 %v1502, %v1503
    %v1508 = vadd.f32 %v1504, %v149
    %v1509 = vadd.f32 %v1505, %v150
    %v1510 = vadd.f32 %v1506, %v151
    %v1511 = vadd.f32 %v1507, %v152
    %1512 = vadd.xlane.f32.xlu0 %v1508
    %v1513 = vpop.xlane.xlu0 %1512
    %1514 = vadd.xlane.f32.xlu0 %v1509
    %v1515 = vpop.xlane.xlu0 %1514
    %1516 = vadd.xlane.f32.xlu0 %v1510
    %v1517 = vpop.xlane.xlu0 %1516
    %1518 = vadd.xlane.f32.xlu0 %v1511
    %v1519 = vpop.xlane.xlu0 %1518
    %v1520 = vmul.f32 %v1513, %v106
    %v1521 = vmul.f32 %v1515, %v106
    %v1522 = vmul.f32 %v1517, %v106
    %v1523 = vmul.f32 %v1519, %v106
    %v1524 = vsub.f32 %v1508, %v1520
    %v1525 = vsub.f32 %v1509, %v1521
    %v1526 = vsub.f32 %v1510, %v1522
    %v1527 = vsub.f32 %v1511, %v1523
    %v1528 = vmul.f32 %v1524, %v1524
    %v1529 = vmul.f32 %v1525, %v1525
    %v1530 = vmul.f32 %v1526, %v1526
    %v1531 = vmul.f32 %v1527, %v1527
    %1532 = vadd.xlane.f32.xlu0 %v1528
    %v1533 = vpop.xlane.xlu0 %1532
    %1534 = vadd.xlane.f32.xlu0 %v1529
    %v1535 = vpop.xlane.xlu0 %1534
    %1536 = vadd.xlane.f32.xlu0 %v1530
    %v1537 = vpop.xlane.xlu0 %1536
    %1538 = vadd.xlane.f32.xlu0 %v1531
    %v1539 = vpop.xlane.xlu0 %1538
    %v1540 = vmul.f32 %v1533, %v106
    %v1541 = vmul.f32 %v1535, %v106
    %v1542 = vmul.f32 %v1537, %v106
    %v1543 = vmul.f32 %v1539, %v106
    %v1544 = vadd.f32 %v1540, 1e-05
    %v1545 = vadd.f32 %v1541, 1e-05
    %v1546 = vadd.f32 %v1542, 1e-05
    %v1547 = vadd.f32 %v1543, 1e-05
    %v1548 = vrsqrt.pop %v1544
    %v1549 = vrsqrt.pop %v1545
    %v1550 = vrsqrt.pop %v1546
    %v1551 = vrsqrt.pop %v1547
    %v1552 = vmul.f32 %v1524, %v1548
    %v1553 = vmul.f32 %v1525, %v1549
    %v1554 = vmul.f32 %v1526, %v1550
    %v1555 = vmul.f32 %v1527, %v1551
    %v1556 = vld [vmem:[%s6 + $0x6] ss:$0 sm:$0xff]
    %v1557 = vmul.f32 %v1552, %v1556
    %v1558 = vmul.f32 %v1553, %v1556
    %v1559 = vmul.f32 %v1554, %v1556
    %v1560 = vmul.f32 %v1555, %v1556
    %v1561 = vld [vmem:[%s6 + $0x7] ss:$0 sm:$0xff]
    %v1562 = vadd.f32 %v1557, %v1561
    %v1563 = vadd.f32 %v1558, %v1561
    %v1564 = vadd.f32 %v1559, %v1561
    %v1565 = vadd.f32 %v1560, %v1561
    %v1566 = vld [vmem:[#allocation2 + $0x10] sm:$0xff]
    %v1567 = vld [vmem:[#allocation2 + $0x6c] sm:$0xff]
    %v1568 = vld [vmem:[#allocation2 + $0xc8] sm:$0xff]
    %v1569 = vld [vmem:[#allocation2 + $0x124] sm:$0xff]
    %v1570 = vld [vmem:[#allocation2 + $0x180] sm:$0xff]
    %v1571 = vld [vmem:[#allocation2 + $0x1dc] sm:$0xff]
    %v1572 = vld [vmem:[#allocation2 + $0x238] sm:$0xff]
    %v1573 = vld [vmem:[#allocation2 + $0x294] sm:$0xff]
    %v1574 = vld [vmem:[#allocation2 + $0x2f0] sm:$0xff]
    %v1575 = vld [vmem:[#allocation2 + $0x34c] sm:$0xff]
    %v1576 = vld [vmem:[#allocation2 + $0x3a8] sm:$0xff]
    %v1577 = vld [vmem:[#allocation2 + $0x404] sm:$0xff]
    %v1578 = vld [vmem:[#allocation2 + $0x460] sm:$0xff]
    %v1579 = vld [vmem:[#allocation2 + $0x4bc] sm:$0xff]
    %v1580 = vld [vmem:[#allocation2 + $0x518] sm:$0xff]
    %v1581 = vld [vmem:[#allocation2 + $0x574] sm:$0xff]
    %v1582 = vpack.c.bf16 %v1563, %v1562
    %v1583 = vpack.c.bf16 %v1565, %v1564
    %s1584 = scalar_lea.vmem %s6, 24
    %v1585 = vld [vmem:[%s1584] ss:$8 sm:$0x3]
    %v1587 = vlaneseq
    %v1588 = vshrl.u32 %v1587, 7
    %v1589 = vsub.s32 0, %v1588
    %v1590 = vrot.slane %v1585, %v1589
    %v1591 = vlaneseq
    %v1592 = vshrl.u32 %v1591, 7
    %v1593 = vsub.s32 1, %v1592
    %v1594 = vrot.slane %v1585, %v1593
    %v1613 = vunpack.c.l.b16 %v1566
    %v1614 = vunpack.c.h.b16 %v1566
    %v1615 = vunpack.c.l.b16 %v1567
    %v1616 = vunpack.c.h.b16 %v1567
    %v1617 = vunpack.c.l.b16 %v1568
    %v1618 = vunpack.c.h.b16 %v1568
    %v1619 = vunpack.c.l.b16 %v1569
    %v1620 = vunpack.c.h.b16 %v1569
    %v1621 = vunpack.c.l.b16 %v1570
    %v1622 = vunpack.c.h.b16 %v1570
    %v1623 = vunpack.c.l.b16 %v1571
    %v1624 = vunpack.c.h.b16 %v1571
    %v1625 = vunpack.c.l.b16 %v1572
    %v1626 = vunpack.c.h.b16 %v1572
    %v1627 = vunpack.c.l.b16 %v1573
    %v1628 = vunpack.c.h.b16 %v1573
    %v1629 = vunpack.c.l.b16 %v1574
    %v1630 = vunpack.c.h.b16 %v1574
    %v1631 = vunpack.c.l.b16 %v1575
    %v1632 = vunpack.c.h.b16 %v1575
    %v1633 = vunpack.c.l.b16 %v1576
    %v1634 = vunpack.c.h.b16 %v1576
    %v1635 = vunpack.c.l.b16 %v1577
    %v1636 = vunpack.c.h.b16 %v1577
    %v1637 = vunpack.c.l.b16 %v1578
    %v1638 = vunpack.c.h.b16 %v1578
    %v1639 = vunpack.c.l.b16 %v1579
    %v1640 = vunpack.c.h.b16 %v1579
    %v1641 = vunpack.c.l.b16 %v1580
    %v1642 = vunpack.c.h.b16 %v1580
    %v1643 = vunpack.c.l.b16 %v1581
    %v1644 = vunpack.c.h.b16 %v1581
    %v1645 = vpack.c.b16 %v1615, %v1613
    %v1646 = vpack.c.b16 %v1616, %v1614
    %v1647 = vpack.c.b16 %v1619, %v1617
    %v1648 = vpack.c.b16 %v1620, %v1618
    %v1649 = vpack.c.b16 %v1623, %v1621
    %v1650 = vpack.c.b16 %v1624, %v1622
    %v1651 = vpack.c.b16 %v1627, %v1625
    %v1652 = vpack.c.b16 %v1628, %v1626
    %v1653 = vpack.c.b16 %v1631, %v1629
    %v1654 = vpack.c.b16 %v1632, %v1630
    %v1655 = vpack.c.b16 %v1635, %v1633
    %v1656 = vpack.c.b16 %v1636, %v1634
    %v1657 = vpack.c.b16 %v1639, %v1637
    %v1658 = vpack.c.b16 %v1640, %v1638
    %v1659 = vpack.c.b16 %v1643, %v1641
    %v1660 = vpack.c.b16 %v1644, %v1642
    %1677 = vmatprep.subr.bf16.mxu0 %v1660
    %1678 = vmatpush1.bf16.msra.mxu0 %v1659
    %1679 = vmatprep.subr.bf16.mxu0 %v1658
    %1680 = vmatpush1.bf16.msra.mxu0 %v1657
    %1681 = vmatprep.subr.bf16.mxu0 %v1656
    %1682 = vmatpush1.bf16.msra.mxu0 %v1655
    %1683 = vmatprep.subr.bf16.mxu0 %v1654
    %1684 = vmatpush1.bf16.msra.mxu0 %v1653
    %1685 = vmatprep.subr.bf16.mxu0 %v1652
    %1686 = vmatpush1.bf16.msra.mxu0 %v1651
    %1687 = vmatprep.subr.bf16.mxu0 %v1650
    %1688 = vmatpush1.bf16.msra.mxu0 %v1649
    %1689 = vmatprep.subr.bf16.mxu0 %v1648
    %1690 = vmatpush1.bf16.msra.mxu0 %v1647
    %1691 = vmatprep.subr.bf16.mxu0 %v1646
    %1692 = vmatpush1.bf16.msra.mxu0 %v1645
    %1693 = vmatprep.subr.bf16.mxu0 0
    %1694 = vmatpush2.bf16.msra.mxu0 0
    %1695 = vmatprep.subr.bf16.mxu0 0
    %1696 = vmatpush2.bf16.msra.mxu0 0
    %1697 = vmatprep.subr.bf16.mxu0 0
    %1698 = vmatpush2.bf16.msra.mxu0 0
    %1699 = vmatprep.subr.bf16.mxu0 0
    %1700 = vmatpush2.bf16.msra.mxu0 0
    %1701 = vmatprep.subr.bf16.mxu0 0
    %1702 = vmatpush2.bf16.msra.mxu0 0
    %1703 = vmatprep.subr.bf16.mxu0 0
    %1704 = vmatpush2.bf16.msra.mxu0 0
    %1705 = vmatprep.subr.bf16.mxu0 0
    %1706 = vmatpush2.bf16.msra.mxu0 0
    %1707 = vmatprep.subr.bf16.mxu0 0
    %1708 = vmatpush2.bf16.msra.mxu0 0
    %1709 = vmatprep.mubr.bf16.mxu0 0
    %1710 = vmatmul.mubr.bf16.gmra.mxu0 %v1582
    %v1711 = vpop.f32.mrf.mxu0
    %v1712 = vadd.f32 %v1590, %v1711
    %v1713 = vpop.f32.mrf.mxu0
    %v1714 = vadd.f32 %v1594, %v1713
    %v1715 = vpop.f32.mrf.mxu0
    %v1716 = vadd.f32 %v1590, %v1715
    %v1717 = vpop.f32.mrf.mxu0
    %v1718 = vadd.f32 %v1594, %v1717
    %1719 = vmatprep.mubr.bf16.mxu0 0
    %1720 = vmatmul.mubr.bf16.gmra.mxu0 %v1583
    %v1721 = vpop.f32.mrf.mxu0
    %v1722 = vadd.f32 %v1590, %v1721
    %v1723 = vpop.f32.mrf.mxu0
    %v1724 = vadd.f32 %v1594, %v1723
    %v1725 = vpop.f32.mrf.mxu0
    %v1726 = vadd.f32 %v1590, %v1725
    %v1727 = vpop.f32.mrf.mxu0
    %v1728 = vadd.f32 %v1594, %v1727
    %1729 = vdwg.mxu0
    %v1730 = vmul.f32 %v1712, 0.5
    %v1731 = vmul.f32 %v1714, 0.5
    %v1732 = vmul.f32 %v1716, 0.5
    %v1733 = vmul.f32 %v1718, 0.5
    %v1734 = vmul.f32 %v1722, 0.5
    %v1735 = vmul.f32 %v1724, 0.5
    %v1736 = vmul.f32 %v1726, 0.5
    %v1737 = vmul.f32 %v1728, 0.5
    %v1738 = vmul.f32 %v1712, 0.044715
    %v1739 = vmul.f32 %v1714, 0.044715
    %v1740 = vmul.f32 %v1716, 0.044715
    %v1741 = vmul.f32 %v1718, 0.044715
    %v1742 = vmul.f32 %v1722, 0.044715
    %v1743 = vmul.f32 %v1724, 0.044715
    %v1744 = vmul.f32 %v1726, 0.044715
    %v1745 = vmul.f32 %v1728, 0.044715
    %v1746 = vmul.f32 %v1738, %v1712
    %v1747 = vmul.f32 %v1739, %v1714
    %v1748 = vmul.f32 %v1740, %v1716
    %v1749 = vmul.f32 %v1741, %v1718
    %v1750 = vmul.f32 %v1742, %v1722
    %v1751 = vmul.f32 %v1743, %v1724
    %v1752 = vmul.f32 %v1744, %v1726
    %v1753 = vmul.f32 %v1745, %v1728
    %v1754 = vmul.f32 %v1746, %v1712
    %v1755 = vmul.f32 %v1747, %v1714
    %v1756 = vmul.f32 %v1748, %v1716
    %v1757 = vmul.f32 %v1749, %v1718
    %v1758 = vmul.f32 %v1750, %v1722
    %v1759 = vmul.f32 %v1751, %v1724
    %v1760 = vmul.f32 %v1752, %v1726
    %v1761 = vmul.f32 %v1753, %v1728
    %v1762 = vadd.f32 %v1712, %v1754
    %v1763 = vadd.f32 %v1714, %v1755
    %v1764 = vadd.f32 %v1716, %v1756
    %v1765 = vadd.f32 %v1718, %v1757
    %v1766 = vadd.f32 %v1722, %v1758
    %v1767 = vadd.f32 %v1724, %v1759
    %v1768 = vadd.f32 %v1726, %v1760
    %v1769 = vadd.f32 %v1728, %v1761
    %v1770 = vmul.f32 %v1762, 0.7978846
    %v1771 = vmul.f32 %v1763, 0.7978846
    %v1772 = vmul.f32 %v1764, 0.7978846
    %v1773 = vmul.f32 %v1765, 0.7978846
    %v1774 = vmul.f32 %v1766, 0.7978846
    %v1775 = vmul.f32 %v1767, 0.7978846
    %v1776 = vmul.f32 %v1768, 0.7978846
    %v1777 = vmul.f32 %v1769, 0.7978846
    %v1778 = vtanh.pop %v1770
    %v1779 = vtanh.pop %v1771
    %v1780 = vtanh.pop %v1772
    %v1781 = vtanh.pop %v1773
    %v1782 = vtanh.pop %v1774
    %v1783 = vtanh.pop %v1775
    %v1784 = vtanh.pop %v1776
    %v1785 = vtanh.pop %v1777
    %v1786 = vadd.f32 %v1778, 1.0
    %v1787 = vadd.f32 %v1779, 1.0
    %v1788 = vadd.f32 %v1780, 1.0
    %v1789 = vadd.f32 %v1781, 1.0
    %v1790 = vadd.f32 %v1782, 1.0
    %v1791 = vadd.f32 %v1783, 1.0
    %v1792 = vadd.f32 %v1784, 1.0
    %v1793 = vadd.f32 %v1785, 1.0
    %v1794 = vmul.f32 %v1730, %v1786
    %v1795 = vmul.f32 %v1731, %v1787
    %v1796 = vmul.f32 %v1732, %v1788
    %v1797 = vmul.f32 %v1733, %v1789
    %v1798 = vmul.f32 %v1734, %v1790
    %v1799 = vmul.f32 %v1735, %v1791
    %v1800 = vmul.f32 %v1736, %v1792
    %v1801 = vmul.f32 %v1737, %v1793
    %v1802 = vld [vmem:[%s5] sm:$0xf]
    %v1803 = vld [vmem:[%s5 + $0x4] sm:$0xf]
    %v1804 = vld [vmem:[%s5 + $0x8] sm:$0xf]
    %v1805 = vld [vmem:[%s5 + $0xc] sm:$0xf]
    %v1806 = vld [vmem:[%s5 + $0x10] sm:$0xf]
    %v1807 = vld [vmem:[%s5 + $0x14] sm:$0xf]
    %v1808 = vld [vmem:[%s5 + $0x18] sm:$0xf]
    %v1809 = vld [vmem:[%s5 + $0x1c] sm:$0xf]
    %v1810 = vld [vmem:[%s5 + $0x20] sm:$0xf]
    %v1811 = vld [vmem:[%s5 + $0x24] sm:$0xf]
    %v1812 = vld [vmem:[%s5 + $0x28] sm:$0xf]
    %v1813 = vld [vmem:[%s5 + $0x2c] sm:$0xf]
    %v1814 = vld [vmem:[%s5 + $0x30] sm:$0xf]
    %v1815 = vld [vmem:[%s5 + $0x34] sm:$0xf]
    %v1816 = vld [vmem:[%s5 + $0x38] sm:$0xf]
    %v1817 = vld [vmem:[%s5 + $0x3c] sm:$0xf]
    %v1818 = vld [vmem:[%s5 + $0x40] sm:$0xf]
    %v1819 = vld [vmem:[%s5 + $0x44] sm:$0xf]
    %v1820 = vld [vmem:[%s5 + $0x48] sm:$0xf]
    %v1821 = vld [vmem:[%s5 + $0x4c] sm:$0xf]
    %v1822 = vld [vmem:[%s5 + $0x50] sm:$0xf]
    %v1823 = vld [vmem:[%s5 + $0x54] sm:$0xf]
    %v1824 = vld [vmem:[%s5 + $0x58] sm:$0xf]
    %v1825 = vld [vmem:[%s5 + $0x5c] sm:$0xf]
    %v1826 = vld [vmem:[%s5 + $0x60] sm:$0xf]
    %v1827 = vld [vmem:[%s5 + $0x64] sm:$0xf]
    %v1828 = vld [vmem:[%s5 + $0x68] sm:$0xf]
    %v1829 = vld [vmem:[%s5 + $0x6c] sm:$0xf]
    %v1830 = vld [vmem:[%s5 + $0x70] sm:$0xf]
    %v1831 = vld [vmem:[%s5 + $0x74] sm:$0xf]
    %v1832 = vld [vmem:[%s5 + $0x78] sm:$0xf]
    %v1833 = vld [vmem:[%s5 + $0x7c] sm:$0xf]
    %v1834 = vpack.c.bf16 %v1796, %v1794
    %v1835 = vpack.c.bf16 %v1797, %v1795
    %v1836 = vpack.c.bf16 %v1800, %v1798
    %v1837 = vpack.c.bf16 %v1801, %v1799
    %v1838 = vld [vmem:[%s6 + $0x19] ss:$0 sm:$0xff]
    %v1871 = vunpack.c.l.b16 %v1802
    %v1872 = vunpack.c.l.b16 %v1803
    %v1873 = vunpack.c.l.b16 %v1804
    %v1874 = vunpack.c.l.b16 %v1805
    %v1875 = vunpack.c.l.b16 %v1806
    %v1876 = vunpack.c.l.b16 %v1807
    %v1877 = vunpack.c.l.b16 %v1808
    %v1878 = vunpack.c.l.b16 %v1809
    %v1879 = vunpack.c.l.b16 %v1810
    %v1880 = vunpack.c.l.b16 %v1811
    %v1881 = vunpack.c.l.b16 %v1812
    %v1882 = vunpack.c.l.b16 %v1813
    %v1883 = vunpack.c.l.b16 %v1814
    %v1884 = vunpack.c.l.b16 %v1815
    %v1885 = vunpack.c.l.b16 %v1816
    %v1886 = vunpack.c.l.b16 %v1817
    %v1887 = vunpack.c.l.b16 %v1818
    %v1888 = vunpack.c.l.b16 %v1819
    %v1889 = vunpack.c.l.b16 %v1820
    %v1890 = vunpack.c.l.b16 %v1821
    %v1891 = vunpack.c.l.b16 %v1822
    %v1892 = vunpack.c.l.b16 %v1823
    %v1893 = vunpack.c.l.b16 %v1824
    %v1894 = vunpack.c.l.b16 %v1825
    %v1895 = vunpack.c.l.b16 %v1826
    %v1896 = vunpack.c.l.b16 %v1827
    %v1897 = vunpack.c.l.b16 %v1828
    %v1898 = vunpack.c.l.b16 %v1829
    %v1899 = vunpack.c.l.b16 %v1830
    %v1900 = vunpack.c.l.b16 %v1831
    %v1901 = vunpack.c.l.b16 %v1832
    %v1902 = vunpack.c.l.b16 %v1833
    %v1903 = vpack.c.b16 %v1872, %v1871
    %v1904 = vpack.c.b16 %v1874, %v1873
    %v1905 = vpack.c.b16 %v1876, %v1875
    %v1906 = vpack.c.b16 %v1878, %v1877
    %v1907 = vpack.c.b16 %v1880, %v1879
    %v1908 = vpack.c.b16 %v1882, %v1881
    %v1909 = vpack.c.b16 %v1884, %v1883
    %v1910 = vpack.c.b16 %v1886, %v1885
    %v1911 = vpack.c.b16 %v1888, %v1887
    %v1912 = vpack.c.b16 %v1890, %v1889
    %v1913 = vpack.c.b16 %v1892, %v1891
    %v1914 = vpack.c.b16 %v1894, %v1893
    %v1915 = vpack.c.b16 %v1896, %v1895
    %v1916 = vpack.c.b16 %v1898, %v1897
    %v1917 = vpack.c.b16 %v1900, %v1899
    %v1918 = vpack.c.b16 %v1902, %v1901
    %1935 = vmatprep.subr.bf16.mxu0 0
    %1936 = vmatpush1.bf16.msra.mxu0 %v1910
    %1937 = vmatprep.subr.bf16.mxu0 0
    %1938 = vmatpush1.bf16.msra.mxu0 %v1909
    %1939 = vmatprep.subr.bf16.mxu0 0
    %1940 = vmatpush1.bf16.msra.mxu0 %v1908
    %1941 = vmatprep.subr.bf16.mxu0 0
    %1942 = vmatpush1.bf16.msra.mxu0 %v1907
    %1943 = vmatprep.subr.bf16.mxu0 0
    %1944 = vmatpush1.bf16.msra.mxu0 %v1906
    %1945 = vmatprep.subr.bf16.mxu0 0
    %1946 = vmatpush1.bf16.msra.mxu0 %v1905
    %1947 = vmatprep.subr.bf16.mxu0 0
    %1948 = vmatpush1.bf16.msra.mxu0 %v1904
    %1949 = vmatprep.subr.bf16.mxu0 0
    %1950 = vmatpush1.bf16.msra.mxu0 %v1903
    %1951 = vmatprep.subr.bf16.mxu0 0
    %1952 = vmatpush2.bf16.msra.mxu0 %v1918
    %1953 = vmatprep.subr.bf16.mxu0 0
    %1954 = vmatpush2.bf16.msra.mxu0 %v1917
    %1955 = vmatprep.subr.bf16.mxu0 0
    %1956 = vmatpush2.bf16.msra.mxu0 %v1916
    %1957 = vmatprep.subr.bf16.mxu0 0
    %1958 = vmatpush2.bf16.msra.mxu0 %v1915
    %1959 = vmatprep.subr.bf16.mxu0 0
    %1960 = vmatpush2.bf16.msra.mxu0 %v1914
    %1961 = vmatprep.subr.bf16.mxu0 0
    %1962 = vmatpush2.bf16.msra.mxu0 %v1913
    %1963 = vmatprep.subr.bf16.mxu0 0
    %1964 = vmatpush2.bf16.msra.mxu0 %v1912
    %1965 = vmatprep.subr.bf16.mxu0 0
    %1966 = vmatpush2.bf16.msra.mxu0 %v1911
    %1967 = vmatprep.mubr.bf16.mxu0 %v1835
    %1968 = vmatmul.mubr.bf16.gmra.mxu0 %v1834
    %v1969 = vpop.f32.mrf.mxu0
    %v1970 = vadd.f32 %v1838, %v1969
    %v1971 = vpop.f32.mrf.mxu0
    %v1972 = vpop.f32.mrf.mxu0
    %v1973 = vadd.f32 %v1838, %v1972
    %v1974 = vpop.f32.mrf.mxu0
    %1975 = vmatprep.mubr.bf16.mxu0 %v1837
    %1976 = vmatmul.mubr.bf16.gmra.mxu0 %v1836
    %v1977 = vpop.f32.mrf.mxu0
    %v1978 = vadd.f32 %v1838, %v1977
    %v1979 = vpop.f32.mrf.mxu0
    %v1980 = vpop.f32.mrf.mxu0
    %v1981 = vadd.f32 %v1838, %v1980
    %v1982 = vpop.f32.mrf.mxu0
    %1983 = vdwg.mxu0
    %v1984 = vld [vmem:[#allocation2 + $0x50] sm:$0xf]
    %v1985 = vld [vmem:[#allocation2 + $0xac] sm:$0xf]
    %v1986 = vld [vmem:[#allocation2 + $0x108] sm:$0xf]
    %v1987 = vld [vmem:[#allocation2 + $0x164] sm:$0xf]
    %v1988 = vld [vmem:[#allocation2 + $0x1c0] sm:$0xf]
    %v1989 = vld [vmem:[#allocation2 + $0x21c] sm:$0xf]
    %v1990 = vld [vmem:[#allocation2 + $0x278] sm:$0xf]
    %v1991 = vld [vmem:[#allocation2 + $0x2d4] sm:$0xf]
    %v1992 = vld [vmem:[#allocation2 + $0x330] sm:$0xf]
    %v1993 = vld [vmem:[#allocation2 + $0x38c] sm:$0xf]
    %v1994 = vld [vmem:[#allocation2 + $0x3e8] sm:$0xf]
    %v1995 = vld [vmem:[#allocation2 + $0x444] sm:$0xf]
    %v1996 = vld [vmem:[#allocation2 + $0x4a0] sm:$0xf]
    %v1997 = vld [vmem:[#allocation2 + $0x4fc] sm:$0xf]
    %v1998 = vld [vmem:[#allocation2 + $0x558] sm:$0xf]
    %v1999 = vld [vmem:[#allocation2 + $0x5b4] sm:$0xf]
    %v2000 = vpack.c.bf16 %v1973, %v1970
    %v2001 = vpack.c.bf16 %v1981, %v1978
    %v2002 = vld [vmem:[%s6 + $0x1a] ss:$0 sm:$0xff]
    %v2019 = vunpack.c.l.b16 %v1984
    %v2020 = vunpack.c.l.b16 %v1985
    %v2021 = vunpack.c.l.b16 %v1986
    %v2022 = vunpack.c.l.b16 %v1987
    %v2023 = vunpack.c.l.b16 %v1988
    %v2024 = vunpack.c.l.b16 %v1989
    %v2025 = vunpack.c.l.b16 %v1990
    %v2026 = vunpack.c.l.b16 %v1991
    %v2027 = vunpack.c.l.b16 %v1992
    %v2028 = vunpack.c.l.b16 %v1993
    %v2029 = vunpack.c.l.b16 %v1994
    %v2030 = vunpack.c.l.b16 %v1995
    %v2031 = vunpack.c.l.b16 %v1996
    %v2032 = vunpack.c.l.b16 %v1997
    %v2033 = vunpack.c.l.b16 %v1998
    %v2034 = vunpack.c.l.b16 %v1999
    %v2035 = vpack.c.b16 %v2020, %v2019
    %v2036 = vpack.c.b16 %v2022, %v2021
    %v2037 = vpack.c.b16 %v2024, %v2023
    %v2038 = vpack.c.b16 %v2026, %v2025
    %v2039 = vpack.c.b16 %v2028, %v2027
    %v2040 = vpack.c.b16 %v2030, %v2029
    %v2041 = vpack.c.b16 %v2032, %v2031
    %v2042 = vpack.c.b16 %v2034, %v2033
    %2051 = vmatprep.subr.bf16.mxu0 0
    %2052 = vmatpush1.bf16.msra.mxu0 %v2042
    %2053 = vmatprep.subr.bf16.mxu0 0
    %2054 = vmatpush1.bf16.msra.mxu0 %v2041
    %2055 = vmatprep.subr.bf16.mxu0 0
    %2056 = vmatpush1.bf16.msra.mxu0 %v2040
    %2057 = vmatprep.subr.bf16.mxu0 0
    %2058 = vmatpush1.bf16.msra.mxu0 %v2039
    %2059 = vmatprep.subr.bf16.mxu0 0
    %2060 = vmatpush1.bf16.msra.mxu0 %v2038
    %2061 = vmatprep.subr.bf16.mxu0 0
    %2062 = vmatpush1.bf16.msra.mxu0 %v2037
    %2063 = vmatprep.subr.bf16.mxu0 0
    %2064 = vmatpush1.bf16.msra.mxu0 %v2036
    %2065 = vmatprep.subr.bf16.mxu0 0
    %2066 = vmatpush1.bf16.msra.mxu0 %v2035
    %2067 = vmatprep.subr.bf16.mxu0 0
    %2068 = vmatpush2.bf16.msra.mxu0 0
    %2069 = vmatprep.subr.bf16.mxu0 0
    %2070 = vmatpush2.bf16.msra.mxu0 0
    %2071 = vmatprep.subr.bf16.mxu0 0
    %2072 = vmatpush2.bf16.msra.mxu0 0
    %2073 = vmatprep.subr.bf16.mxu0 0
    %2074 = vmatpush2.bf16.msra.mxu0 0
    %2075 = vmatprep.subr.bf16.mxu0 0
    %2076 = vmatpush2.bf16.msra.mxu0 0
    %2077 = vmatprep.subr.bf16.mxu0 0
    %2078 = vmatpush2.bf16.msra.mxu0 0
    %2079 = vmatprep.subr.bf16.mxu0 0
    %2080 = vmatpush2.bf16.msra.mxu0 0
    %2081 = vmatprep.subr.bf16.mxu0 0
    %2082 = vmatpush2.bf16.msra.mxu0 0
    %2083 = vmatprep.mubr.bf16.mxu0 0
    %2084 = vmatmul.mubr.bf16.gmra.mxu0 %v2000
    %v2085 = vpop.f32.mrf.mxu0
    %v2086 = vadd.f32 %v2002, %v2085
    %v2087 = vpop.f32.mrf.mxu0
    %v2088 = vpop.f32.mrf.mxu0
    %v2089 = vadd.f32 %v2002, %v2088
    %v2090 = vpop.f32.mrf.mxu0
    %2091 = vmatprep.mubr.bf16.mxu0 0
    %2092 = vmatmul.mubr.bf16.gmra.mxu0 %v2001
    %v2093 = vpop.f32.mrf.mxu0
    %v2094 = vadd.f32 %v2002, %v2093
    %v2095 = vpop.f32.mrf.mxu0
    %v2096 = vpop.f32.mrf.mxu0
    %v2097 = vadd.f32 %v2002, %v2096
    %v2098 = vpop.f32.mrf.mxu0
    %2099 = vdwg.mxu0
    %v2100 = vmax.f32 %v2086, 0.0
    %v2101 = vmax.f32 %v2089, 0.0
    %v2102 = vmax.f32 %v2094, 0.0
    %v2103 = vmax.f32 %v2097, 0.0
    %v2104 = vld [vmem:[%s5 + $0x108] sm:$0xf]
    %v2105 = vpack.c.bf16 %v2101, %v2100
    %v2106 = vpack.c.bf16 %v2103, %v2102
    %v2108 = vsel %vm1439, %v2105, 0
    %v2111 = vsel %vm1439, %v2106, 0
    %v2114 = vsel %vm1446, %v2104, 0
    %2116 = vmatprep.subr.bf16.mxu0 0
    %2117 = vmatpush1.bf16.msra.mxu0 0
    %2118 = vmatprep.subr.bf16.mxu0 0
    %2119 = vmatpush1.bf16.msra.mxu0 0
    %2120 = vmatprep.subr.bf16.mxu0 0
    %2121 = vmatpush1.bf16.msra.mxu0 0
    %2122 = vmatprep.subr.bf16.mxu0 0
    %2123 = vmatpush1.bf16.msra.mxu0 0
    %2124 = vmatprep.subr.bf16.mxu0 0
    %2125 = vmatpush1.bf16.msra.mxu0 0
    %2126 = vmatprep.subr.bf16.mxu0 0
    %2127 = vmatpush1.bf16.msra.mxu0 0
    %2128 = vmatprep.subr.bf16.mxu0 0
    %2129 = vmatpush1.bf16.msra.mxu0 0
    %2130 = vmatprep.subr.bf16.mxu0 0
    %2131 = vmatpush1.bf16.msra.mxu0 %v2114
    %2132 = vmatprep.subr.bf16.mxu0 0
    %2133 = vmatpush2.bf16.msra.mxu0 0
    %2134 = vmatprep.subr.bf16.mxu0 0
    %2135 = vmatpush2.bf16.msra.mxu0 0
    %2136 = vmatprep.subr.bf16.mxu0 0
    %2137 = vmatpush2.bf16.msra.mxu0 0
    %2138 = vmatprep.subr.bf16.mxu0 0
    %2139 = vmatpush2.bf16.msra.mxu0 0
    %2140 = vmatprep.subr.bf16.mxu0 0
    %2141 = vmatpush2.bf16.msra.mxu0 0
    %2142 = vmatprep.subr.bf16.mxu0 0
    %2143 = vmatpush2.bf16.msra.mxu0 0
    %2144 = vmatprep.subr.bf16.mxu0 0
    %2145 = vmatpush2.bf16.msra.mxu0 0
    %2146 = vmatprep.subr.bf16.mxu0 0
    %2147 = vmatpush2.bf16.msra.mxu0 0
    %2148 = vmatprep.mubr.bf16.mxu0 0
    %2149 = vmatmul.mubr.bf16.gmra.mxu0 %v2108
    %v2150 = vpop.f32.mrf.mxu0
    %v2151 = vadd.f32 0.0, %v2150
    %v2152 = vpop.f32.mrf.mxu0
    %v2153 = vpop.f32.mrf.mxu0
    %v2154 = vadd.f32 0.0, %v2153
    %v2155 = vpop.f32.mrf.mxu0
    %2156 = vmatprep.mubr.bf16.mxu0 0
    %2157 = vmatmul.mubr.bf16.gmra.mxu0 %v2111
    %v2158 = vpop.f32.mrf.mxu0
    %v2159 = vadd.f32 0.0, %v2158
    %v2160 = vpop.f32.mrf.mxu0
    %v2161 = vpop.f32.mrf.mxu0
    %v2162 = vadd.f32 0.0, %v2161
    %v2163 = vpop.f32.mrf.mxu0
    %2164 = vdwg.mxu0
    %v2165 = vadd.f32 %v1970, %v2151
    %v2166 = vadd.f32 %v1973, %v2154
    %v2167 = vadd.f32 %v1978, %v2159
    %v2168 = vadd.f32 %v1981, %v2162
    %v2169 = vld [vmem:[%s6 + $0x1b] ss:$0 sm:$0xff]
    %v2170 = vadd.f32 %v2165, %v2169
    %v2171 = vadd.f32 %v2166, %v2169
    %v2172 = vadd.f32 %v2167, %v2169
    %v2173 = vadd.f32 %v2168, %v2169
    %v2174 = vadd.f32 %v2170, %v1562
    %v2175 = vadd.f32 %v2171, %v1563
    %v2176 = vadd.f32 %v2172, %v1564
    %v2177 = vadd.f32 %v2173, %v1565
    %2178 = vadd.xlane.f32.xlu0 %v2174
    %v2179 = vpop.xlane.xlu0 %2178
    %2180 = vadd.xlane.f32.xlu0 %v2175
    %v2181 = vpop.xlane.xlu0 %2180
    %2182 = vadd.xlane.f32.xlu0 %v2176
    %v2183 = vpop.xlane.xlu0 %2182
    %2184 = vadd.xlane.f32.xlu0 %v2177
    %v2185 = vpop.xlane.xlu0 %2184
    %v2186 = vmul.f32 %v2179, %v106
    %v2187 = vmul.f32 %v2181, %v106
    %v2188 = vmul.f32 %v2183, %v106
    %v2189 = vmul.f32 %v2185, %v106
    %v2190 = vsub.f32 %v2174, %v2186
    %v2191 = vsub.f32 %v2175, %v2187
    %v2192 = vsub.f32 %v2176, %v2188
    %v2193 = vsub.f32 %v2177, %v2189
    %v2194 = vmul.f32 %v2190, %v2190
    %v2195 = vmul.f32 %v2191, %v2191
    %v2196 = vmul.f32 %v2192, %v2192
    %v2197 = vmul.f32 %v2193, %v2193
    %2198 = vadd.xlane.f32.xlu0 %v2194
    %v2199 = vpop.xlane.xlu0 %2198
    %2200 = vadd.xlane.f32.xlu0 %v2195
    %v2201 = vpop.xlane.xlu0 %2200
    %2202 = vadd.xlane.f32.xlu0 %v2196
    %v2203 = vpop.xlane.xlu0 %2202
    %2204 = vadd.xlane.f32.xlu0 %v2197
    %v2205 = vpop.xlane.xlu0 %2204
    %v2206 = vmul.f32 %v2199, %v106
    %v2207 = vmul.f32 %v2201, %v106
    %v2208 = vmul.f32 %v2203, %v106
    %v2209 = vmul.f32 %v2205, %v106
    %v2210 = vadd.f32 %v2206, 1e-05
    %v2211 = vadd.f32 %v2207, 1e-05
    %v2212 = vadd.f32 %v2208, 1e-05
    %v2213 = vadd.f32 %v2209, 1e-05
    %v2214 = vrsqrt.pop %v2210
    %v2215 = vrsqrt.pop %v2211
    %v2216 = vrsqrt.pop %v2212
    %v2217 = vrsqrt.pop %v2213
    %v2218 = vmul.f32 %v2190, %v2214
    %v2219 = vmul.f32 %v2191, %v2215
    %v2220 = vmul.f32 %v2192, %v2216
    %v2221 = vmul.f32 %v2193, %v2217
    %v2222 = vld [vmem:[%s6 + $0x1c] ss:$0 sm:$0xff]
    %v2223 = vmul.f32 %v2218, %v2222
    %v2224 = vmul.f32 %v2219, %v2222
    %v2225 = vmul.f32 %v2220, %v2222
    %v2226 = vmul.f32 %v2221, %v2222
    %v2227 = vld [vmem:[%s6 + $0x1d] ss:$0 sm:$0xff]
    %v2228 = vadd.f32 %v2223, %v2227
    %v2229 = vadd.f32 %v2224, %v2227
    %v2230 = vadd.f32 %v2225, %v2227
    %v2231 = vadd.f32 %v2226, %v2227
    %v2232 = vld [vmem:[%s1] sm:$0xff]
    %v2233 = vld [vmem:[%s1 + $0x8] sm:$0xff]
    %v2234 = vld [vmem:[%s1 + $0x10] sm:$0xff]
    %v2235 = vld [vmem:[%s1 + $0x18] sm:$0xff]
    %2236 = vadd.xlane.f32.xlu0 %v2232
    %v2237 = vpop.xlane.xlu0 %2236
    %2238 = vadd.xlane.f32.xlu0 %v2233
    %v2239 = vpop.xlane.xlu0 %2238
    %2240 = vadd.xlane.f32.xlu0 %v2234
    %v2241 = vpop.xlane.xlu0 %2240
    %2242 = vadd.xlane.f32.xlu0 %v2235
    %v2243 = vpop.xlane.xlu0 %2242
    %v2244 = vmul.f32 %v2237, %v106
    %v2245 = vmul.f32 %v2239, %v106
    %v2246 = vmul.f32 %v2241, %v106
    %v2247 = vmul.f32 %v2243, %v106
    %v2248 = vsub.f32 %v2232, %v2244
    %v2249 = vsub.f32 %v2233, %v2245
    %v2250 = vsub.f32 %v2234, %v2246
    %v2251 = vsub.f32 %v2235, %v2247
    %v2252 = vmul.f32 %v2248, %v2248
    %v2253 = vmul.f32 %v2249, %v2249
    %v2254 = vmul.f32 %v2250, %v2250
    %v2255 = vmul.f32 %v2251, %v2251
    %2256 = vadd.xlane.f32.xlu0 %v2252
    %v2257 = vpop.xlane.xlu0 %2256
    %2258 = vadd.xlane.f32.xlu0 %v2253
    %v2259 = vpop.xlane.xlu0 %2258
    %2260 = vadd.xlane.f32.xlu0 %v2254
    %v2261 = vpop.xlane.xlu0 %2260
    %2262 = vadd.xlane.f32.xlu0 %v2255
    %v2263 = vpop.xlane.xlu0 %2262
    %v2264 = vmul.f32 %v2257, %v106
    %v2265 = vmul.f32 %v2259, %v106
    %v2266 = vmul.f32 %v2261, %v106
    %v2267 = vmul.f32 %v2263, %v106
    %v2268 = vadd.f32 %v2264, 1e-05
    %v2269 = vadd.f32 %v2265, 1e-05
    %v2270 = vadd.f32 %v2266, 1e-05
    %v2271 = vadd.f32 %v2267, 1e-05
    %v2272 = vrsqrt.pop %v2268
    %v2273 = vrsqrt.pop %v2269
    %v2274 = vrsqrt.pop %v2270
    %v2275 = vrsqrt.pop %v2271
    %v2276 = vmul.f32 %v2248, %v2272
    %v2277 = vmul.f32 %v2249, %v2273
    %v2278 = vmul.f32 %v2250, %v2274
    %v2279 = vmul.f32 %v2251, %v2275
    %v2280 = vld [vmem:[%s6 + $0x1e] ss:$0 sm:$0xff]
    %v2281 = vmul.f32 %v2276, %v2280
    %v2282 = vmul.f32 %v2277, %v2280
    %v2283 = vmul.f32 %v2278, %v2280
    %v2284 = vmul.f32 %v2279, %v2280
    %v2285 = vld [vmem:[%s6 + $0x1f] ss:$0 sm:$0xff]
    %v2286 = vadd.f32 %v2281, %v2285
    %v2287 = vadd.f32 %v2282, %v2285
    %v2288 = vadd.f32 %v2283, %v2285
    %v2289 = vadd.f32 %v2284, %v2285
    %v2290 = vld [vmem:[#allocation2 + $0x18] sm:$0xff]
    %v2291 = vld [vmem:[#allocation2 + $0x20] sm:$0xf]
    %v2292 = vld [vmem:[#allocation2 + $0x74] sm:$0xff]
    %v2293 = vld [vmem:[#allocation2 + $0x7c] sm:$0xf]
    %v2294 = vld [vmem:[#allocation2 + $0xd0] sm:$0xff]
    %v2295 = vld [vmem:[#allocation2 + $0xd8] sm:$0xf]
    %v2296 = vld [vmem:[#allocation2 + $0x12c] sm:$0xff]
    %v2297 = vld [vmem:[#allocation2 + $0x134] sm:$0xf]
    %v2298 = vld [vmem:[#allocation2 + $0x188] sm:$0xff]
    %v2299 = vld [vmem:[#allocation2 + $0x190] sm:$0xf]
    %v2300 = vld [vmem:[#allocation2 + $0x1e4] sm:$0xff]
    %v2301 = vld [vmem:[#allocation2 + $0x1ec] sm:$0xf]
    %v2302 = vld [vmem:[#allocation2 + $0x240] sm:$0xff]
    %v2303 = vld [vmem:[#allocation2 + $0x248] sm:$0xf]
    %v2304 = vld [vmem:[#allocation2 + $0x29c] sm:$0xff]
    %v2305 = vld [vmem:[#allocation2 + $0x2a4] sm:$0xf]
    %v2306 = vld [vmem:[#allocation2 + $0x2f8] sm:$0xff]
    %v2307 = vld [vmem:[#allocation2 + $0x300] sm:$0xf]
    %v2308 = vld [vmem:[#allocation2 + $0x354] sm:$0xff]
    %v2309 = vld [vmem:[#allocation2 + $0x35c] sm:$0xf]
    %v2310 = vld [vmem:[#allocation2 + $0x3b0] sm:$0xff]
    %v2311 = vld [vmem:[#allocation2 + $0x3b8] sm:$0xf]
    %v2312 = vld [vmem:[#allocation2 + $0x40c] sm:$0xff]
    %v2313 = vld [vmem:[#allocation2 + $0x414] sm:$0xf]
    %v2314 = vld [vmem:[#allocation2 + $0x468] sm:$0xff]
    %v2315 = vld [vmem:[#allocation2 + $0x470] sm:$0xf]
    %v2316 = vld [vmem:[#allocation2 + $0x4c4] sm:$0xff]
    %v2317 = vld [vmem:[#allocation2 + $0x4cc] sm:$0xf]
    %v2318 = vld [vmem:[#allocation2 + $0x520] sm:$0xff]
    %v2319 = vld [vmem:[#allocation2 + $0x528] sm:$0xf]
    %v2320 = vld [vmem:[#allocation2 + $0x57c] sm:$0xff]
    %v2321 = vld [vmem:[#allocation2 + $0x584] sm:$0xf]
    %v2322 = vpack.c.bf16 %v2287, %v2286
    %v2323 = vpack.c.bf16 %v2289, %v2288
    %s2324 = scalar_lea.vmem %s6, 48
    %v2325 = vld [vmem:[%s2324] ss:$8 sm:$0x7]
    %v2327 = vlaneseq
    %v2328 = vshrl.u32 %v2327, 7
    %v2329 = vsub.s32 0, %v2328
    %v2330 = vrot.slane %v2325, %v2329
    %v2331 = vlaneseq
    %v2332 = vshrl.u32 %v2331, 7
    %v2333 = vsub.s32 1, %v2332
    %v2334 = vrot.slane %v2325, %v2333
    %v2335 = vlaneseq
    %v2336 = vshrl.u32 %v2335, 7
    %v2337 = vsub.s32 2, %v2336
    %v2338 = vrot.slane %v2325, %v2337
    %v2374 = vunpack.c.l.b16 %v2290
    %v2375 = vunpack.c.h.b16 %v2290
    %v2376 = vunpack.c.l.b16 %v2291
    %v2377 = vunpack.c.l.b16 %v2292
    %v2378 = vunpack.c.h.b16 %v2292
    %v2379 = vunpack.c.l.b16 %v2293
    %v2380 = vunpack.c.l.b16 %v2294
    %v2381 = vunpack.c.h.b16 %v2294
    %v2382 = vunpack.c.l.b16 %v2295
    %v2383 = vunpack.c.l.b16 %v2296
    %v2384 = vunpack.c.h.b16 %v2296
    %v2385 = vunpack.c.l.b16 %v2297
    %v2386 = vunpack.c.l.b16 %v2298
    %v2387 = vunpack.c.h.b16 %v2298
    %v2388 = vunpack.c.l.b16 %v2299
    %v2389 = vunpack.c.l.b16 %v2300
    %v2390 = vunpack.c.h.b16 %v2300
    %v2391 = vunpack.c.l.b16 %v2301
    %v2392 = vunpack.c.l.b16 %v2302
    %v2393 = vunpack.c.h.b16 %v2302
    %v2394 = vunpack.c.l.b16 %v2303
    %v2395 = vunpack.c.l.b16 %v2304
    %v2396 = vunpack.c.h.b16 %v2304
    %v2397 = vunpack.c.l.b16 %v2305
    %v2398 = vunpack.c.l.b16 %v2306
    %v2399 = vunpack.c.h.b16 %v2306
    %v2400 = vunpack.c.l.b16 %v2307
    %v2401 = vunpack.c.l.b16 %v2308
    %v2402 = vunpack.c.h.b16 %v2308
    %v2403 = vunpack.c.l.b16 %v2309
    %v2404 = vunpack.c.l.b16 %v2310
    %v2405 = vunpack.c.h.b16 %v2310
    %v2406 = vunpack.c.l.b16 %v2311
    %v2407 = vunpack.c.l.b16 %v2312
    %v2408 = vunpack.c.h.b16 %v2312
    %v2409 = vunpack.c.l.b16 %v2313
    %v2410 = vunpack.c.l.b16 %v2314
    %v2411 = vunpack.c.h.b16 %v2314
    %v2412 = vunpack.c.l.b16 %v2315
    %v2413 = vunpack.c.l.b16 %v2316
    %v2414 = vunpack.c.h.b16 %v2316
    %v2415 = vunpack.c.l.b16 %v2317
    %v2416 = vunpack.c.l.b16 %v2318
    %v2417 = vunpack.c.h.b16 %v2318
    %v2418 = vunpack.c.l.b16 %v2319
    %v2419 = vunpack.c.l.b16 %v2320
    %v2420 = vunpack.c.h.b16 %v2320
    %v2421 = vunpack.c.l.b16 %v2321
    %v2422 = vpack.c.b16 %v2377, %v2374
    %v2423 = vpack.c.b16 %v2378, %v2375
    %v2424 = vpack.c.b16 %v2379, %v2376
    %v2425 = vpack.c.b16 %v2383, %v2380
    %v2426 = vpack.c.b16 %v2384, %v2381
    %v2427 = vpack.c.b16 %v2385, %v2382
    %v2428 = vpack.c.b16 %v2389, %v2386
    %v2429 = vpack.c.b16 %v2390, %v2387
    %v2430 = vpack.c.b16 %v2391, %v2388
    %v2431 = vpack.c.b16 %v2395, %v2392
    %v2432 = vpack.c.b16 %v2396, %v2393
    %v2433 = vpack.c.b16 %v2397, %v2394
    %v2434 = vpack.c.b16 %v2401, %v2398
    %v2435 = vpack.c.b16 %v2402, %v2399
    %v2436 = vpack.c.b16 %v2403, %v2400
    %v2437 = vpack.c.b16 %v2407, %v2404
    %v2438 = vpack.c.b16 %v2408, %v2405
    %v2439 = vpack.c.b16 %v2409, %v2406
    %v2440 = vpack.c.b16 %v2413, %v2410
    %v2441 = vpack.c.b16 %v2414, %v2411
    %v2442 = vpack.c.b16 %v2415, %v2412
    %v2443 = vpack.c.b16 %v2419, %v2416
    %v2444 = vpack.c.b16 %v2420, %v2417
    %v2445 = vpack.c.b16 %v2421, %v2418
    %2470 = vmatprep.subr.bf16.mxu0 %v2444
    %2471 = vmatpush1.bf16.msra.mxu0 %v2443
    %2472 = vmatprep.subr.bf16.mxu0 %v2441
    %2473 = vmatpush1.bf16.msra.mxu0 %v2440
    %2474 = vmatprep.subr.bf16.mxu0 %v2438
    %2475 = vmatpush1.bf16.msra.mxu0 %v2437
    %2476 = vmatprep.subr.bf16.mxu0 %v2435
    %2477 = vmatpush1.bf16.msra.mxu0 %v2434
    %2478 = vmatprep.subr.bf16.mxu0 %v2432
    %2479 = vmatpush1.bf16.msra.mxu0 %v2431
    %2480 = vmatprep.subr.bf16.mxu0 %v2429
    %2481 = vmatpush1.bf16.msra.mxu0 %v2428
    %2482 = vmatprep.subr.bf16.mxu0 %v2426
    %2483 = vmatpush1.bf16.msra.mxu0 %v2425
    %2484 = vmatprep.subr.bf16.mxu0 %v2423
    %2485 = vmatpush1.bf16.msra.mxu0 %v2422
    %2486 = vmatprep.subr.bf16.mxu0 0
    %2487 = vmatpush2.bf16.msra.mxu0 0
    %2488 = vmatprep.subr.bf16.mxu0 0
    %2489 = vmatpush2.bf16.msra.mxu0 0
    %2490 = vmatprep.subr.bf16.mxu0 0
    %2491 = vmatpush2.bf16.msra.mxu0 0
    %2492 = vmatprep.subr.bf16.mxu0 0
    %2493 = vmatpush2.bf16.msra.mxu0 0
    %2494 = vmatprep.subr.bf16.mxu0 0
    %2495 = vmatpush2.bf16.msra.mxu0 0
    %2496 = vmatprep.subr.bf16.mxu0 0
    %2497 = vmatpush2.bf16.msra.mxu0 0
    %2498 = vmatprep.subr.bf16.mxu0 0
    %2499 = vmatpush2.bf16.msra.mxu0 0
    %2500 = vmatprep.subr.bf16.mxu0 0
    %2501 = vmatpush2.bf16.msra.mxu0 0
    %2502 = vmatprep.mubr.bf16.mxu0 0
    %2503 = vmatmul.mubr.bf16.gmra.mxu0 %v2322
    %v2504 = vpop.f32.mrf.mxu0
    %v2505 = vadd.f32 %v2330, %v2504
    %v2506 = vpop.f32.mrf.mxu0
    %v2507 = vadd.f32 %v2334, %v2506
    %v2508 = vpop.f32.mrf.mxu0
    %v2509 = vadd.f32 %v2330, %v2508
    %v2510 = vpop.f32.mrf.mxu0
    %v2511 = vadd.f32 %v2334, %v2510
    %2512 = vmatprep.mubr.bf16.mxu0 0
    %2513 = vmatmul.mubr.bf16.gmra.mxu0 %v2323
    %v2514 = vpop.f32.mrf.mxu0
    %v2515 = vadd.f32 %v2330, %v2514
    %v2516 = vpop.f32.mrf.mxu0
    %v2517 = vadd.f32 %v2334, %v2516
    %v2518 = vpop.f32.mrf.mxu0
    %v2519 = vadd.f32 %v2330, %v2518
    %v2520 = vpop.f32.mrf.mxu0
    %v2521 = vadd.f32 %v2334, %v2520
    %2522 = vdwg.mxu0
    %2523 = vmatprep.subr.bf16.mxu0 0
    %2524 = vmatpush1.bf16.msra.mxu0 %v2445
    %2525 = vmatprep.subr.bf16.mxu0 0
    %2526 = vmatpush1.bf16.msra.mxu0 %v2442
    %2527 = vmatprep.subr.bf16.mxu0 0
    %2528 = vmatpush1.bf16.msra.mxu0 %v2439
    %2529 = vmatprep.subr.bf16.mxu0 0
    %2530 = vmatpush1.bf16.msra.mxu0 %v2436
    %2531 = vmatprep.subr.bf16.mxu0 0
    %2532 = vmatpush1.bf16.msra.mxu0 %v2433
    %2533 = vmatprep.subr.bf16.mxu0 0
    %2534 = vmatpush1.bf16.msra.mxu0 %v2430
    %2535 = vmatprep.subr.bf16.mxu0 0
    %2536 = vmatpush1.bf16.msra.mxu0 %v2427
    %2537 = vmatprep.subr.bf16.mxu0 0
    %2538 = vmatpush1.bf16.msra.mxu0 %v2424
    %2539 = vmatprep.subr.bf16.mxu0 0
    %2540 = vmatpush2.bf16.msra.mxu0 0
    %2541 = vmatprep.subr.bf16.mxu0 0
    %2542 = vmatpush2.bf16.msra.mxu0 0
    %2543 = vmatprep.subr.bf16.mxu0 0
    %2544 = vmatpush2.bf16.msra.mxu0 0
    %2545 = vmatprep.subr.bf16.mxu0 0
    %2546 = vmatpush2.bf16.msra.mxu0 0
    %2547 = vmatprep.subr.bf16.mxu0 0
    %2548 = vmatpush2.bf16.msra.mxu0 0
    %2549 = vmatprep.subr.bf16.mxu0 0
    %2550 = vmatpush2.bf16.msra.mxu0 0
    %2551 = vmatprep.subr.bf16.mxu0 0
    %2552 = vmatpush2.bf16.msra.mxu0 0
    %2553 = vmatprep.subr.bf16.mxu0 0
    %2554 = vmatpush2.bf16.msra.mxu0 0
    %2555 = vmatprep.mubr.bf16.mxu0 0
    %2556 = vmatmul.mubr.bf16.gmra.mxu0 %v2322
    %v2557 = vpop.f32.mrf.mxu0
    %v2558 = vadd.f32 %v2338, %v2557
    %v2559 = vpop.f32.mrf.mxu0
    %v2560 = vpop.f32.mrf.mxu0
    %v2561 = vadd.f32 %v2338, %v2560
    %v2562 = vpop.f32.mrf.mxu0
    %2563 = vmatprep.mubr.bf16.mxu0 0
    %2564 = vmatmul.mubr.bf16.gmra.mxu0 %v2323
    %v2565 = vpop.f32.mrf.mxu0
    %v2566 = vadd.f32 %v2338, %v2565
    %v2567 = vpop.f32.mrf.mxu0
    %v2568 = vpop.f32.mrf.mxu0
    %v2569 = vadd.f32 %v2338, %v2568
    %v2570 = vpop.f32.mrf.mxu0
    %2571 = vdwg.mxu0
    %v2572 = vld [vmem:[#allocation2 + $0x24] sm:$0xf]
    %v2573 = vld [vmem:[#allocation2 + $0x80] sm:$0xf]
    %v2574 = vld [vmem:[#allocation2 + $0xdc] sm:$0xf]
    %v2575 = vld [vmem:[#allocation2 + $0x138] sm:$0xf]
    %v2576 = vld [vmem:[#allocation2 + $0x194] sm:$0xf]
    %v2577 = vld [vmem:[#allocation2 + $0x1f0] sm:$0xf]
    %v2578 = vld [vmem:[#allocation2 + $0x24c] sm:$0xf]
    %v2579 = vld [vmem:[#allocation2 + $0x2a8] sm:$0xf]
    %v2580 = vld [vmem:[#allocation2 + $0x304] sm:$0xf]
    %v2581 = vld [vmem:[#allocation2 + $0x360] sm:$0xf]
    %v2582 = vld [vmem:[#allocation2 + $0x3bc] sm:$0xf]
    %v2583 = vld [vmem:[#allocation2 + $0x418] sm:$0xf]
    %v2584 = vld [vmem:[#allocation2 + $0x474] sm:$0xf]
    %v2585 = vld [vmem:[#allocation2 + $0x4d0] sm:$0xf]
    %v2586 = vld [vmem:[#allocation2 + $0x52c] sm:$0xf]
    %v2587 = vld [vmem:[#allocation2 + $0x588] sm:$0xf]
    %v2588 = vld [vmem:[%s6 + $0x31] ss:$0 sm:$0xff]
    %v2589 = vpack.c.bf16 %v2509, %v2505
    %v2590 = vpack.c.bf16 %v2519, %v2515
    %v2591 = vpack.c.bf16 %v2511, %v2507
    %v2592 = vpack.c.bf16 %v2521, %v2517
    %v2594 = vsel %vm456, %v2589, 0
    %v2597 = vsel %vm456, %v2590, 0
    %v2600 = vsel %vm456, %v2591, 0
    %v2603 = vsel %vm456, %v2592, 0
    %2605 = vmatprep.subr.bf16.mxu0 0
    %2606 = vmatpush1.bf16.xpose.msra.mxu0 0
    %2607 = vmatprep.subr.bf16.mxu0 0
    %2608 = vmatpush1.bf16.xpose.msra.mxu0 0
    %2609 = vmatprep.subr.bf16.mxu0 0
    %2610 = vmatpush1.bf16.xpose.msra.mxu0 0
    %2611 = vmatprep.subr.bf16.mxu0 0
    %2612 = vmatpush1.bf16.xpose.msra.mxu0 0
    %2613 = vmatprep.subr.bf16.mxu0 0
    %2614 = vmatpush1.bf16.xpose.msra.mxu0 0
    %2615 = vmatprep.subr.bf16.mxu0 0
    %2616 = vmatpush1.bf16.xpose.msra.mxu0 0
    %2617 = vmatprep.subr.bf16.mxu0 0
    %2618 = vmatpush1.bf16.xpose.msra.mxu0 %v2603
    %2619 = vmatprep.subr.bf16.mxu0 0
    %2620 = vmatpush1.bf16.xpose.msra.mxu0 %v2600
    %2621 = vmatprep.subr.bf16.mxu0 0
    %2622 = vmatpush2.bf16.xpose.msra.mxu0 0
    %2623 = vmatprep.subr.bf16.mxu0 0
    %2624 = vmatpush2.bf16.xpose.msra.mxu0 0
    %2625 = vmatprep.subr.bf16.mxu0 0
    %2626 = vmatpush2.bf16.xpose.msra.mxu0 0
    %2627 = vmatprep.subr.bf16.mxu0 0
    %2628 = vmatpush2.bf16.xpose.msra.mxu0 0
    %2629 = vmatprep.subr.bf16.mxu0 0
    %2630 = vmatpush2.bf16.xpose.msra.mxu0 0
    %2631 = vmatprep.subr.bf16.mxu0 0
    %2632 = vmatpush2.bf16.xpose.msra.mxu0 0
    %2633 = vmatprep.subr.bf16.mxu0 0
    %2634 = vmatpush2.bf16.xpose.msra.mxu0 0
    %2635 = vmatprep.subr.bf16.mxu0 0
    %2636 = vmatpush2.bf16.xpose.msra.mxu0 0
    %2637 = vmatprep.mubr.bf16.mxu0 0
    %2638 = vmatmul.mubr.bf16.gmra.mxu0 %v2594
    %v2639 = vpop.f32.mrf.mxu0
    %v2640 = vadd.f32 %v90, %v2639
    %v2641 = vpop.f32.mrf.mxu0
    %v2642 = vpop.f32.mrf.mxu0
    %v2643 = vadd.f32 %v91, %v2642
    %v2644 = vpop.f32.mrf.mxu0
    %2645 = vmatprep.mubr.bf16.mxu0 0
    %2646 = vmatmul.mubr.bf16.gmra.mxu0 %v2597
    %v2647 = vpop.f32.mrf.mxu0
    %v2648 = vadd.f32 %v92, %v2647
    %v2649 = vpop.f32.mrf.mxu0
    %v2650 = vpop.f32.mrf.mxu0
    %v2651 = vadd.f32 %v93, %v2650
    %v2652 = vpop.f32.mrf.mxu0
    %2653 = vdwg.mxu0
    %v2654 = vsel %vm456, %v2640, -inf
    %2655 = vmax.xlane.f32.xlu0 %v2654
    %v2656 = vpop.xlane.xlu0 %2655
    %v2657 = vsel %vm456, %v2643, -inf
    %2658 = vmax.xlane.f32.xlu0 %v2657
    %v2659 = vpop.xlane.xlu0 %2658
    %v2660 = vsel %vm456, %v2648, -inf
    %2661 = vmax.xlane.f32.xlu0 %v2660
    %v2662 = vpop.xlane.xlu0 %2661
    %v2663 = vsel %vm456, %v2651, -inf
    %2664 = vmax.xlane.f32.xlu0 %v2663
    %v2665 = vpop.xlane.xlu0 %2664
    %v2666 = vsub.f32 %v2640, %v2656
    %v2667 = vsub.f32 %v2643, %v2659
    %v2668 = vsub.f32 %v2648, %v2662
    %v2669 = vsub.f32 %v2651, %v2665
    %v2670 = vmul.f32 %v2666, 1.442695
    %v2671 = vpow.pop %v2670
    %v2672 = vmul.f32 %v2667, 1.442695
    %v2673 = vpow.pop %v2672
    %v2674 = vmul.f32 %v2668, 1.442695
    %v2675 = vpow.pop %v2674
    %v2676 = vmul.f32 %v2669, 1.442695
    %v2677 = vpow.pop %v2676
    %v2678 = vsel %vm456, %v2671, 0.0
    %2679 = vadd.xlane.f32.xlu0 %v2678
    %v2680 = vpop.xlane.xlu0 %2679
    %v2681 = vsel %vm456, %v2673, 0.0
    %2682 = vadd.xlane.f32.xlu0 %v2681
    %v2683 = vpop.xlane.xlu0 %2682
    %v2684 = vsel %vm456, %v2675, 0.0
    %2685 = vadd.xlane.f32.xlu0 %v2684
    %v2686 = vpop.xlane.xlu0 %2685
    %v2687 = vsel %vm456, %v2677, 0.0
    %2688 = vadd.xlane.f32.xlu0 %v2687
    %v2689 = vpop.xlane.xlu0 %2688
    %v2690 = vrcp.pop %v2680
    %v2691 = vmul.f32 %v2671, %v2690
    %v2692 = vrcp.pop %v2683
    %v2693 = vmul.f32 %v2673, %v2692
    %v2694 = vrcp.pop %v2686
    %v2695 = vmul.f32 %v2675, %v2694
    %v2696 = vrcp.pop %v2689
    %v2697 = vmul.f32 %v2677, %v2696
    %v2698 = vpack.c.bf16 %v2693, %v2691
    %v2699 = vpack.c.bf16 %v2697, %v2695
    %v2700 = vpack.c.bf16 %v2561, %v2558
    %v2701 = vpack.c.bf16 %v2569, %v2566
    %v2703 = vsel %vm456, %v2698, 0
    %v2706 = vsel %vm456, %v2699, 0
    %2708 = vmatprep.subr.bf16.mxu0 0
    %2709 = vmatpush1.bf16.msra.mxu0 0
    %2710 = vmatprep.subr.bf16.mxu0 0
    %2711 = vmatpush1.bf16.msra.mxu0 0
    %2712 = vmatprep.subr.bf16.mxu0 0
    %2713 = vmatpush1.bf16.msra.mxu0 0
    %2714 = vmatprep.subr.bf16.mxu0 0
    %2715 = vmatpush1.bf16.msra.mxu0 0
    %2716 = vmatprep.subr.bf16.mxu0 0
    %2717 = vmatpush1.bf16.msra.mxu0 0
    %2718 = vmatprep.subr.bf16.mxu0 0
    %2719 = vmatpush1.bf16.msra.mxu0 0
    %2720 = vmatprep.subr.bf16.mxu0 0
    %2721 = vmatpush1.bf16.msra.mxu0 %v2701
    %2722 = vmatprep.subr.bf16.mxu0 0
    %2723 = vmatpush1.bf16.msra.mxu0 %v2700
    %2724 = vmatprep.subr.bf16.mxu0 0
    %2725 = vmatpush2.bf16.msra.mxu0 0
    %2726 = vmatprep.subr.bf16.mxu0 0
    %2727 = vmatpush2.bf16.msra.mxu0 0
    %2728 = vmatprep.subr.bf16.mxu0 0
    %2729 = vmatpush2.bf16.msra.mxu0 0
    %2730 = vmatprep.subr.bf16.mxu0 0
    %2731 = vmatpush2.bf16.msra.mxu0 0
    %2732 = vmatprep.subr.bf16.mxu0 0
    %2733 = vmatpush2.bf16.msra.mxu0 0
    %2734 = vmatprep.subr.bf16.mxu0 0
    %2735 = vmatpush2.bf16.msra.mxu0 0
    %2736 = vmatprep.subr.bf16.mxu0 0
    %2737 = vmatpush2.bf16.msra.mxu0 0
    %2738 = vmatprep.subr.bf16.mxu0 0
    %2739 = vmatpush2.bf16.msra.mxu0 0
    %2740 = vmatprep.mubr.bf16.mxu0 0
    %2741 = vmatmul.mubr.bf16.gmra.mxu0 %v2703
    %v2742 = vpop.f32.mrf.mxu0
    %v2743 = vadd.f32 0.0, %v2742
    %v2744 = vpop.f32.mrf.mxu0
    %v2745 = vpop.f32.mrf.mxu0
    %v2746 = vadd.f32 0.0, %v2745
    %v2747 = vpop.f32.mrf.mxu0
    %2748 = vmatprep.mubr.bf16.mxu0 0
    %2749 = vmatmul.mubr.bf16.gmra.mxu0 %v2706
    %v2750 = vpop.f32.mrf.mxu0
    %v2751 = vadd.f32 0.0, %v2750
    %v2752 = vpop.f32.mrf.mxu0
    %v2753 = vpop.f32.mrf.mxu0
    %v2754 = vadd.f32 0.0, %v2753
    %v2755 = vpop.f32.mrf.mxu0
    %2756 = vdwg.mxu0
    %2759 = vrot.lane.b32.xlu0 %v2589, 96
    %v2760 = vpop.permute.xlu0 %2759
    %2761 = vrot.lane.b32.xlu0 %v2590, 96
    %v2762 = vpop.permute.xlu0 %2761
    %2765 = vrot.lane.b32.xlu0 %v2591, 96
    %v2766 = vpop.permute.xlu0 %2765
    %2767 = vrot.lane.b32.xlu0 %v2592, 96
    %v2768 = vpop.permute.xlu0 %2767
    %v2770 = vsel %vm456, %v2760, 0
    %v2773 = vsel %vm456, %v2762, 0
    %v2776 = vsel %vm456, %v2766, 0
    %v2779 = vsel %vm456, %v2768, 0
    %2781 = vmatprep.subr.bf16.mxu0 0
    %2782 = vmatpush1.bf16.xpose.msra.mxu0 0
    %2783 = vmatprep.subr.bf16.mxu0 0
    %2784 = vmatpush1.bf16.xpose.msra.mxu0 0
    %2785 = vmatprep.subr.bf16.mxu0 0
    %2786 = vmatpush1.bf16.xpose.msra.mxu0 0
    %2787 = vmatprep.subr.bf16.mxu0 0
    %2788 = vmatpush1.bf16.xpose.msra.mxu0 0
    %2789 = vmatprep.subr.bf16.mxu0 0
    %2790 = vmatpush1.bf16.xpose.msra.mxu0 0
    %2791 = vmatprep.subr.bf16.mxu0 0
    %2792 = vmatpush1.bf16.xpose.msra.mxu0 0
    %2793 = vmatprep.subr.bf16.mxu0 0
    %2794 = vmatpush1.bf16.xpose.msra.mxu0 %v2779
    %2795 = vmatprep.subr.bf16.mxu0 0
    %2796 = vmatpush1.bf16.xpose.msra.mxu0 %v2776
    %2797 = vmatprep.subr.bf16.mxu0 0
    %2798 = vmatpush2.bf16.xpose.msra.mxu0 0
    %2799 = vmatprep.subr.bf16.mxu0 0
    %2800 = vmatpush2.bf16.xpose.msra.mxu0 0
    %2801 = vmatprep.subr.bf16.mxu0 0
    %2802 = vmatpush2.bf16.xpose.msra.mxu0 0
    %2803 = vmatprep.subr.bf16.mxu0 0
    %2804 = vmatpush2.bf16.xpose.msra.mxu0 0
    %2805 = vmatprep.subr.bf16.mxu0 0
    %2806 = vmatpush2.bf16.xpose.msra.mxu0 0
    %2807 = vmatprep.subr.bf16.mxu0 0
    %2808 = vmatpush2.bf16.xpose.msra.mxu0 0
    %2809 = vmatprep.subr.bf16.mxu0 0
    %2810 = vmatpush2.bf16.xpose.msra.mxu0 0
    %2811 = vmatprep.subr.bf16.mxu0 0
    %2812 = vmatpush2.bf16.xpose.msra.mxu0 0
    %2813 = vmatprep.mubr.bf16.mxu0 0
    %2814 = vmatmul.mubr.bf16.gmra.mxu0 %v2770
    %v2815 = vpop.f32.mrf.mxu0
    %v2816 = vadd.f32 %v90, %v2815
    %v2817 = vpop.f32.mrf.mxu0
    %v2818 = vpop.f32.mrf.mxu0
    %v2819 = vadd.f32 %v91, %v2818
    %v2820 = vpop.f32.mrf.mxu0
    %2821 = vmatprep.mubr.bf16.mxu0 0
    %2822 = vmatmul.mubr.bf16.gmra.mxu0 %v2773
    %v2823 = vpop.f32.mrf.mxu0
    %v2824 = vadd.f32 %v92, %v2823
    %v2825 = vpop.f32.mrf.mxu0
    %v2826 = vpop.f32.mrf.mxu0
    %v2827 = vadd.f32 %v93, %v2826
    %v2828 = vpop.f32.mrf.mxu0
    %2829 = vdwg.mxu0
    %v2830 = vsel %vm456, %v2816, -inf
    %2831 = vmax.xlane.f32.xlu0 %v2830
    %v2832 = vpop.xlane.xlu0 %2831
    %v2833 = vsel %vm456, %v2819, -inf
    %2834 = vmax.xlane.f32.xlu0 %v2833
    %v2835 = vpop.xlane.xlu0 %2834
    %v2836 = vsel %vm456, %v2824, -inf
    %2837 = vmax.xlane.f32.xlu0 %v2836
    %v2838 = vpop.xlane.xlu0 %2837
    %v2839 = vsel %vm456, %v2827, -inf
    %2840 = vmax.xlane.f32.xlu0 %v2839
    %v2841 = vpop.xlane.xlu0 %2840
    %v2842 = vsub.f32 %v2816, %v2832
    %v2843 = vsub.f32 %v2819, %v2835
    %v2844 = vsub.f32 %v2824, %v2838
    %v2845 = vsub.f32 %v2827, %v2841
    %v2846 = vmul.f32 %v2842, 1.442695
    %v2847 = vpow.pop %v2846
    %v2848 = vmul.f32 %v2843, 1.442695
    %v2849 = vpow.pop %v2848
    %v2850 = vmul.f32 %v2844, 1.442695
    %v2851 = vpow.pop %v2850
    %v2852 = vmul.f32 %v2845, 1.442695
    %v2853 = vpow.pop %v2852
    %v2854 = vsel %vm456, %v2847, 0.0
    %2855 = vadd.xlane.f32.xlu0 %v2854
    %v2856 = vpop.xlane.xlu0 %2855
    %v2857 = vsel %vm456, %v2849, 0.0
    %2858 = vadd.xlane.f32.xlu0 %v2857
    %v2859 = vpop.xlane.xlu0 %2858
    %v2860 = vsel %vm456, %v2851, 0.0
    %2861 = vadd.xlane.f32.xlu0 %v2860
    %v2862 = vpop.xlane.xlu0 %2861
    %v2863 = vsel %vm456, %v2853, 0.0
    %2864 = vadd.xlane.f32.xlu0 %v2863
    %v2865 = vpop.xlane.xlu0 %2864
    %v2866 = vrcp.pop %v2856
    %v2867 = vmul.f32 %v2847, %v2866
    %v2868 = vrcp.pop %v2859
    %v2869 = vmul.f32 %v2849, %v2868
    %v2870 = vrcp.pop %v2862
    %v2871 = vmul.f32 %v2851, %v2870
    %v2872 = vrcp.pop %v2865
    %v2873 = vmul.f32 %v2853, %v2872
    %v2874 = vpack.c.bf16 %v2869, %v2867
    %v2875 = vpack.c.bf16 %v2873, %v2871
    %2878 = vrot.lane.b32.xlu0 %v2700, 96
    %v2879 = vpop.permute.xlu0 %2878
    %2880 = vrot.lane.b32.xlu0 %v2701, 96
    %v2881 = vpop.permute.xlu0 %2880
    %v2885 = vsel %vm456, %v2874, 0
    %v2888 = vsel %vm456, %v2875, 0
    %2890 = vmatprep.subr.bf16.mxu0 0
    %2891 = vmatpush1.bf16.msra.mxu0 0
    %2892 = vmatprep.subr.bf16.mxu0 0
    %2893 = vmatpush1.bf16.msra.mxu0 0
    %2894 = vmatprep.subr.bf16.mxu0 0
    %2895 = vmatpush1.bf16.msra.mxu0 0
    %2896 = vmatprep.subr.bf16.mxu0 0
    %2897 = vmatpush1.bf16.msra.mxu0 0
    %2898 = vmatprep.subr.bf16.mxu0 0
    %2899 = vmatpush1.bf16.msra.mxu0 0
    %2900 = vmatprep.subr.bf16.mxu0 0
    %2901 = vmatpush1.bf16.msra.mxu0 0
    %2902 = vmatprep.subr.bf16.mxu0 0
    %2903 = vmatpush1.bf16.msra.mxu0 %v2881
    %2904 = vmatprep.subr.bf16.mxu0 0
    %2905 = vmatpush1.bf16.msra.mxu0 %v2879
    %2906 = vmatprep.subr.bf16.mxu0 0
    %2907 = vmatpush2.bf16.msra.mxu0 0
    %2908 = vmatprep.subr.bf16.mxu0 0
    %2909 = vmatpush2.bf16.msra.mxu0 0
    %2910 = vmatprep.subr.bf16.mxu0 0
    %2911 = vmatpush2.bf16.msra.mxu0 0
    %2912 = vmatprep.subr.bf16.mxu0 0
    %2913 = vmatpush2.bf16.msra.mxu0 0
    %2914 = vmatprep.subr.bf16.mxu0 0
    %2915 = vmatpush2.bf16.msra.mxu0 0
    %2916 = vmatprep.subr.bf16.mxu0 0
    %2917 = vmatpush2.bf16.msra.mxu0 0
    %2918 = vmatprep.subr.bf16.mxu0 0
    %2919 = vmatpush2.bf16.msra.mxu0 0
    %2920 = vmatprep.subr.bf16.mxu0 0
    %2921 = vmatpush2.bf16.msra.mxu0 0
    %2922 = vmatprep.mubr.bf16.mxu0 0
    %2923 = vmatmul.mubr.bf16.gmra.mxu0 %v2885
    %v2924 = vpop.f32.mrf.mxu0
    %v2925 = vadd.f32 0.0, %v2924
    %v2926 = vpop.f32.mrf.mxu0
    %v2927 = vpop.f32.mrf.mxu0
    %v2928 = vadd.f32 0.0, %v2927
    %v2929 = vpop.f32.mrf.mxu0
    %2930 = vmatprep.mubr.bf16.mxu0 0
    %2931 = vmatmul.mubr.bf16.gmra.mxu0 %v2888
    %v2932 = vpop.f32.mrf.mxu0
    %v2933 = vadd.f32 0.0, %v2932
    %v2934 = vpop.f32.mrf.mxu0
    %v2935 = vpop.f32.mrf.mxu0
    %v2936 = vadd.f32 0.0, %v2935
    %v2937 = vpop.f32.mrf.mxu0
    %2938 = vdwg.mxu0
    %2939 = vrot.lane.b32.xlu0 %v2589, 64
    %v2940 = vpop.permute.xlu0 %2939
    %2941 = vrot.lane.b32.xlu0 %v2590, 64
    %v2942 = vpop.permute.xlu0 %2941
    %2943 = vrot.lane.b32.xlu0 %v2591, 64
    %v2944 = vpop.permute.xlu0 %2943
    %2945 = vrot.lane.b32.xlu0 %v2592, 64
    %v2946 = vpop.permute.xlu0 %2945
    %v2948 = vsel %vm456, %v2940, 0
    %v2951 = vsel %vm456, %v2942, 0
    %v2954 = vsel %vm456, %v2944, 0
    %v2957 = vsel %vm456, %v2946, 0
    %2959 = vmatprep.subr.bf16.mxu0 0
    %2960 = vmatpush1.bf16.xpose.msra.mxu0 0
    %2961 = vmatprep.subr.bf16.mxu0 0
    %2962 = vmatpush1.bf16.xpose.msra.mxu0 0
    %2963 = vmatprep.subr.bf16.mxu0 0
    %2964 = vmatpush1.bf16.xpose.msra.mxu0 0
    %2965 = vmatprep.subr.bf16.mxu0 0
    %2966 = vmatpush1.bf16.xpose.msra.mxu0 0
    %2967 = vmatprep.subr.bf16.mxu0 0
    %2968 = vmatpush1.bf16.xpose.msra.mxu0 0
    %2969 = vmatprep.subr.bf16.mxu0 0
    %2970 = vmatpush1.bf16.xpose.msra.mxu0 0
    %2971 = vmatprep.subr.bf16.mxu0 0
    %2972 = vmatpush1.bf16.xpose.msra.mxu0 %v2957
    %2973 = vmatprep.subr.bf16.mxu0 0
    %2974 = vmatpush1.bf16.xpose.msra.mxu0 %v2954
    %2975 = vmatprep.subr.bf16.mxu0 0
    %2976 = vmatpush2.bf16.xpose.msra.mxu0 0
    %2977 = vmatprep.subr.bf16.mxu0 0
    %2978 = vmatpush2.bf16.xpose.msra.mxu0 0
    %2979 = vmatprep.subr.bf16.mxu0 0
    %2980 = vmatpush2.bf16.xpose.msra.mxu0 0
    %2981 = vmatprep.subr.bf16.mxu0 0
    %2982 = vmatpush2.bf16.xpose.msra.mxu0 0
    %2983 = vmatprep.subr.bf16.mxu0 0
    %2984 = vmatpush2.bf16.xpose.msra.mxu0 0
    %2985 = vmatprep.subr.bf16.mxu0 0
    %2986 = vmatpush2.bf16.xpose.msra.mxu0 0
    %2987 = vmatprep.subr.bf16.mxu0 0
    %2988 = vmatpush2.bf16.xpose.msra.mxu0 0
    %2989 = vmatprep.subr.bf16.mxu0 0
    %2990 = vmatpush2.bf16.xpose.msra.mxu0 0
    %2991 = vmatprep.mubr.bf16.mxu0 0
    %2992 = vmatmul.mubr.bf16.gmra.mxu0 %v2948
    %v2993 = vpop.f32.mrf.mxu0
    %v2994 = vadd.f32 %v90, %v2993
    %v2995 = vpop.f32.mrf.mxu0
    %v2996 = vpop.f32.mrf.mxu0
    %v2997 = vadd.f32 %v91, %v2996
    %v2998 = vpop.f32.mrf.mxu0
    %2999 = vmatprep.mubr.bf16.mxu0 0
    %3000 = vmatmul.mubr.bf16.gmra.mxu0 %v2951
    %v3001 = vpop.f32.mrf.mxu0
    %v3002 = vadd.f32 %v92, %v3001
    %v3003 = vpop.f32.mrf.mxu0
    %v3004 = vpop.f32.mrf.mxu0
    %v3005 = vadd.f32 %v93, %v3004
    %v3006 = vpop.f32.mrf.mxu0
    %3007 = vdwg.mxu0
    %v3008 = vsel %vm456, %v2994, -inf
    %3009 = vmax.xlane.f32.xlu0 %v3008
    %v3010 = vpop.xlane.xlu0 %3009
    %v3011 = vsel %vm456, %v2997, -inf
    %3012 = vmax.xlane.f32.xlu0 %v3011
    %v3013 = vpop.xlane.xlu0 %3012
    %v3014 = vsel %vm456, %v3002, -inf
    %3015 = vmax.xlane.f32.xlu0 %v3014
    %v3016 = vpop.xlane.xlu0 %3015
    %v3017 = vsel %vm456, %v3005, -inf
    %3018 = vmax.xlane.f32.xlu0 %v3017
    %v3019 = vpop.xlane.xlu0 %3018
    %v3020 = vsub.f32 %v2994, %v3010
    %v3021 = vsub.f32 %v2997, %v3013
    %v3022 = vsub.f32 %v3002, %v3016
    %v3023 = vsub.f32 %v3005, %v3019
    %v3024 = vmul.f32 %v3020, 1.442695
    %v3025 = vpow.pop %v3024
    %v3026 = vmul.f32 %v3021, 1.442695
    %v3027 = vpow.pop %v3026
    %v3028 = vmul.f32 %v3022, 1.442695
    %v3029 = vpow.pop %v3028
    %v3030 = vmul.f32 %v3023, 1.442695
    %v3031 = vpow.pop %v3030
    %v3032 = vsel %vm456, %v3025, 0.0
    %3033 = vadd.xlane.f32.xlu0 %v3032
    %v3034 = vpop.xlane.xlu0 %3033
    %v3035 = vsel %vm456, %v3027, 0.0
    %3036 = vadd.xlane.f32.xlu0 %v3035
    %v3037 = vpop.xlane.xlu0 %3036
    %v3038 = vsel %vm456, %v3029, 0.0
    %3039 = vadd.xlane.f32.xlu0 %v3038
    %v3040 = vpop.xlane.xlu0 %3039
    %v3041 = vsel %vm456, %v3031, 0.0
    %3042 = vadd.xlane.f32.xlu0 %v3041
    %v3043 = vpop.xlane.xlu0 %3042
    %v3044 = vrcp.pop %v3034
    %v3045 = vmul.f32 %v3025, %v3044
    %v3046 = vrcp.pop %v3037
    %v3047 = vmul.f32 %v3027, %v3046
    %v3048 = vrcp.pop %v3040
    %v3049 = vmul.f32 %v3029, %v3048
    %v3050 = vrcp.pop %v3043
    %v3051 = vmul.f32 %v3031, %v3050
    %v3052 = vpack.c.bf16 %v3047, %v3045
    %v3053 = vpack.c.bf16 %v3051, %v3049
    %3054 = vrot.lane.b32.xlu0 %v2700, 64
    %v3055 = vpop.permute.xlu0 %3054
    %3056 = vrot.lane.b32.xlu0 %v2701, 64
    %v3057 = vpop.permute.xlu0 %3056
    %v3061 = vsel %vm456, %v3052, 0
    %v3064 = vsel %vm456, %v3053, 0
    %3066 = vmatprep.subr.bf16.mxu0 0
    %3067 = vmatpush1.bf16.msra.mxu0 0
    %3068 = vmatprep.subr.bf16.mxu0 0
    %3069 = vmatpush1.bf16.msra.mxu0 0
    %3070 = vmatprep.subr.bf16.mxu0 0
    %3071 = vmatpush1.bf16.msra.mxu0 0
    %3072 = vmatprep.subr.bf16.mxu0 0
    %3073 = vmatpush1.bf16.msra.mxu0 0
    %3074 = vmatprep.subr.bf16.mxu0 0
    %3075 = vmatpush1.bf16.msra.mxu0 0
    %3076 = vmatprep.subr.bf16.mxu0 0
    %3077 = vmatpush1.bf16.msra.mxu0 0
    %3078 = vmatprep.subr.bf16.mxu0 0
    %3079 = vmatpush1.bf16.msra.mxu0 %v3057
    %3080 = vmatprep.subr.bf16.mxu0 0
    %3081 = vmatpush1.bf16.msra.mxu0 %v3055
    %3082 = vmatprep.subr.bf16.mxu0 0
    %3083 = vmatpush2.bf16.msra.mxu0 0
    %3084 = vmatprep.subr.bf16.mxu0 0
    %3085 = vmatpush2.bf16.msra.mxu0 0
    %3086 = vmatprep.subr.bf16.mxu0 0
    %3087 = vmatpush2.bf16.msra.mxu0 0
    %3088 = vmatprep.subr.bf16.mxu0 0
    %3089 = vmatpush2.bf16.msra.mxu0 0
    %3090 = vmatprep.subr.bf16.mxu0 0
    %3091 = vmatpush2.bf16.msra.mxu0 0
    %3092 = vmatprep.subr.bf16.mxu0 0
    %3093 = vmatpush2.bf16.msra.mxu0 0
    %3094 = vmatprep.subr.bf16.mxu0 0
    %3095 = vmatpush2.bf16.msra.mxu0 0
    %3096 = vmatprep.subr.bf16.mxu0 0
    %3097 = vmatpush2.bf16.msra.mxu0 0
    %3098 = vmatprep.mubr.bf16.mxu0 0
    %3099 = vmatmul.mubr.bf16.gmra.mxu0 %v3061
    %v3100 = vpop.f32.mrf.mxu0
    %v3101 = vadd.f32 0.0, %v3100
    %v3102 = vpop.f32.mrf.mxu0
    %v3103 = vpop.f32.mrf.mxu0
    %v3104 = vadd.f32 0.0, %v3103
    %v3105 = vpop.f32.mrf.mxu0
    %3106 = vmatprep.mubr.bf16.mxu0 0
    %3107 = vmatmul.mubr.bf16.gmra.mxu0 %v3064
    %v3108 = vpop.f32.mrf.mxu0
    %v3109 = vadd.f32 0.0, %v3108
    %v3110 = vpop.f32.mrf.mxu0
    %v3111 = vpop.f32.mrf.mxu0
    %v3112 = vadd.f32 0.0, %v3111
    %v3113 = vpop.f32.mrf.mxu0
    %3114 = vdwg.mxu0
    %3115 = vrot.lane.b32.xlu0 %v2589, 32
    %v3116 = vpop.permute.xlu0 %3115
    %3117 = vrot.lane.b32.xlu0 %v2590, 32
    %v3118 = vpop.permute.xlu0 %3117
    %3119 = vrot.lane.b32.xlu0 %v2591, 32
    %v3120 = vpop.permute.xlu0 %3119
    %3121 = vrot.lane.b32.xlu0 %v2592, 32
    %v3122 = vpop.permute.xlu0 %3121
    %v3124 = vsel %vm456, %v3116, 0
    %v3127 = vsel %vm456, %v3118, 0
    %v3130 = vsel %vm456, %v3120, 0
    %v3133 = vsel %vm456, %v3122, 0
    %3135 = vmatprep.subr.bf16.mxu0 0
    %3136 = vmatpush1.bf16.xpose.msra.mxu0 0
    %3137 = vmatprep.subr.bf16.mxu0 0
    %3138 = vmatpush1.bf16.xpose.msra.mxu0 0
    %3139 = vmatprep.subr.bf16.mxu0 0
    %3140 = vmatpush1.bf16.xpose.msra.mxu0 0
    %3141 = vmatprep.subr.bf16.mxu0 0
    %3142 = vmatpush1.bf16.xpose.msra.mxu0 0
    %3143 = vmatprep.subr.bf16.mxu0 0
    %3144 = vmatpush1.bf16.xpose.msra.mxu0 0
    %3145 = vmatprep.subr.bf16.mxu0 0
    %3146 = vmatpush1.bf16.xpose.msra.mxu0 0
    %3147 = vmatprep.subr.bf16.mxu0 0
    %3148 = vmatpush1.bf16.xpose.msra.mxu0 %v3133
    %3149 = vmatprep.subr.bf16.mxu0 0
    %3150 = vmatpush1.bf16.xpose.msra.mxu0 %v3130
    %3151 = vmatprep.subr.bf16.mxu0 0
    %3152 = vmatpush2.bf16.xpose.msra.mxu0 0
    %3153 = vmatprep.subr.bf16.mxu0 0
    %3154 = vmatpush2.bf16.xpose.msra.mxu0 0
    %3155 = vmatprep.subr.bf16.mxu0 0
    %3156 = vmatpush2.bf16.xpose.msra.mxu0 0
    %3157 = vmatprep.subr.bf16.mxu0 0
    %3158 = vmatpush2.bf16.xpose.msra.mxu0 0
    %3159 = vmatprep.subr.bf16.mxu0 0
    %3160 = vmatpush2.bf16.xpose.msra.mxu0 0
    %3161 = vmatprep.subr.bf16.mxu0 0
    %3162 = vmatpush2.bf16.xpose.msra.mxu0 0
    %3163 = vmatprep.subr.bf16.mxu0 0
    %3164 = vmatpush2.bf16.xpose.msra.mxu0 0
    %3165 = vmatprep.subr.bf16.mxu0 0
    %3166 = vmatpush2.bf16.xpose.msra.mxu0 0
    %3167 = vmatprep.mubr.bf16.mxu0 0
    %3168 = vmatmul.mubr.bf16.gmra.mxu0 %v3124
    %v3169 = vpop.f32.mrf.mxu0
    %v3170 = vadd.f32 %v90, %v3169
    %v3171 = vpop.f32.mrf.mxu0
    %v3172 = vpop.f32.mrf.mxu0
    %v3173 = vadd.f32 %v91, %v3172
    %v3174 = vpop.f32.mrf.mxu0
    %3175 = vmatprep.mubr.bf16.mxu0 0
    %3176 = vmatmul.mubr.bf16.gmra.mxu0 %v3127
    %v3177 = vpop.f32.mrf.mxu0
    %v3178 = vadd.f32 %v92, %v3177
    %v3179 = vpop.f32.mrf.mxu0
    %v3180 = vpop.f32.mrf.mxu0
    %v3181 = vadd.f32 %v93, %v3180
    %v3182 = vpop.f32.mrf.mxu0
    %3183 = vdwg.mxu0
    %v3184 = vsel %vm456, %v3170, -inf
    %3185 = vmax.xlane.f32.xlu0 %v3184
    %v3186 = vpop.xlane.xlu0 %3185
    %v3187 = vsel %vm456, %v3173, -inf
    %3188 = vmax.xlane.f32.xlu0 %v3187
    %v3189 = vpop.xlane.xlu0 %3188
    %v3190 = vsel %vm456, %v3178, -inf
    %3191 = vmax.xlane.f32.xlu0 %v3190
    %v3192 = vpop.xlane.xlu0 %3191
    %v3193 = vsel %vm456, %v3181, -inf
    %3194 = vmax.xlane.f32.xlu0 %v3193
    %v3195 = vpop.xlane.xlu0 %3194
    %v3196 = vsub.f32 %v3170, %v3186
    %v3197 = vsub.f32 %v3173, %v3189
    %v3198 = vsub.f32 %v3178, %v3192
    %v3199 = vsub.f32 %v3181, %v3195
    %v3200 = vmul.f32 %v3196, 1.442695
    %v3201 = vpow.pop %v3200
    %v3202 = vmul.f32 %v3197, 1.442695
    %v3203 = vpow.pop %v3202
    %v3204 = vmul.f32 %v3198, 1.442695
    %v3205 = vpow.pop %v3204
    %v3206 = vmul.f32 %v3199, 1.442695
    %v3207 = vpow.pop %v3206
    %v3208 = vsel %vm456, %v3201, 0.0
    %3209 = vadd.xlane.f32.xlu0 %v3208
    %v3210 = vpop.xlane.xlu0 %3209
    %v3211 = vsel %vm456, %v3203, 0.0
    %3212 = vadd.xlane.f32.xlu0 %v3211
    %v3213 = vpop.xlane.xlu0 %3212
    %v3214 = vsel %vm456, %v3205, 0.0
    %3215 = vadd.xlane.f32.xlu0 %v3214
    %v3216 = vpop.xlane.xlu0 %3215
    %v3217 = vsel %vm456, %v3207, 0.0
    %3218 = vadd.xlane.f32.xlu0 %v3217
    %v3219 = vpop.xlane.xlu0 %3218
    %v3220 = vrcp.pop %v3210
    %v3221 = vmul.f32 %v3201, %v3220
    %v3222 = vrcp.pop %v3213
    %v3223 = vmul.f32 %v3203, %v3222
    %v3224 = vrcp.pop %v3216
    %v3225 = vmul.f32 %v3205, %v3224
    %v3226 = vrcp.pop %v3219
    %v3227 = vmul.f32 %v3207, %v3226
    %v3228 = vpack.c.bf16 %v3223, %v3221
    %v3229 = vpack.c.bf16 %v3227, %v3225
    %3230 = vrot.lane.b32.xlu0 %v2700, 32
    %v3231 = vpop.permute.xlu0 %3230
    %3232 = vrot.lane.b32.xlu0 %v2701, 32
    %v3233 = vpop.permute.xlu0 %3232
    %v3237 = vsel %vm456, %v3228, 0
    %v3240 = vsel %vm456, %v3229, 0
    %3242 = vmatprep.subr.bf16.mxu0 0
    %3243 = vmatpush1.bf16.msra.mxu0 0
    %3244 = vmatprep.subr.bf16.mxu0 0
    %3245 = vmatpush1.bf16.msra.mxu0 0
    %3246 = vmatprep.subr.bf16.mxu0 0
    %3247 = vmatpush1.bf16.msra.mxu0 0
    %3248 = vmatprep.subr.bf16.mxu0 0
    %3249 = vmatpush1.bf16.msra.mxu0 0
    %3250 = vmatprep.subr.bf16.mxu0 0
    %3251 = vmatpush1.bf16.msra.mxu0 0
    %3252 = vmatprep.subr.bf16.mxu0 0
    %3253 = vmatpush1.bf16.msra.mxu0 0
    %3254 = vmatprep.subr.bf16.mxu0 0
    %3255 = vmatpush1.bf16.msra.mxu0 %v3233
    %3256 = vmatprep.subr.bf16.mxu0 0
    %3257 = vmatpush1.bf16.msra.mxu0 %v3231
    %3258 = vmatprep.subr.bf16.mxu0 0
    %3259 = vmatpush2.bf16.msra.mxu0 0
    %3260 = vmatprep.subr.bf16.mxu0 0
    %3261 = vmatpush2.bf16.msra.mxu0 0
    %3262 = vmatprep.subr.bf16.mxu0 0
    %3263 = vmatpush2.bf16.msra.mxu0 0
    %3264 = vmatprep.subr.bf16.mxu0 0
    %3265 = vmatpush2.bf16.msra.mxu0 0
    %3266 = vmatprep.subr.bf16.mxu0 0
    %3267 = vmatpush2.bf16.msra.mxu0 0
    %3268 = vmatprep.subr.bf16.mxu0 0
    %3269 = vmatpush2.bf16.msra.mxu0 0
    %3270 = vmatprep.subr.bf16.mxu0 0
    %3271 = vmatpush2.bf16.msra.mxu0 0
    %3272 = vmatprep.subr.bf16.mxu0 0
    %3273 = vmatpush2.bf16.msra.mxu0 0
    %3274 = vmatprep.mubr.bf16.mxu0 0
    %3275 = vmatmul.mubr.bf16.gmra.mxu0 %v3237
    %v3276 = vpop.f32.mrf.mxu0
    %v3277 = vadd.f32 0.0, %v3276
    %v3278 = vpop.f32.mrf.mxu0
    %v3279 = vpop.f32.mrf.mxu0
    %v3280 = vadd.f32 0.0, %v3279
    %v3281 = vpop.f32.mrf.mxu0
    %3282 = vmatprep.mubr.bf16.mxu0 0
    %3283 = vmatmul.mubr.bf16.gmra.mxu0 %v3240
    %v3284 = vpop.f32.mrf.mxu0
    %v3285 = vadd.f32 0.0, %v3284
    %v3286 = vpop.f32.mrf.mxu0
    %v3287 = vpop.f32.mrf.mxu0
    %v3288 = vadd.f32 0.0, %v3287
    %v3289 = vpop.f32.mrf.mxu0
    %3290 = vdwg.mxu0
    %3295 = vrot.lane.b32.xlu0 %v2925, 32
    %v3296 = vpop.permute.xlu0 %3295
    %3297 = vrot.lane.b32.xlu0 %v2928, 32
    %v3298 = vpop.permute.xlu0 %3297
    %3299 = vrot.lane.b32.xlu0 %v2933, 32
    %v3300 = vpop.permute.xlu0 %3299
    %3301 = vrot.lane.b32.xlu0 %v2936, 32
    %v3302 = vpop.permute.xlu0 %3301
    %3311 = vrot.lane.b32.xlu0 %v3101, 64
    %v3312 = vpop.permute.xlu0 %3311
    %3313 = vrot.lane.b32.xlu0 %v3104, 64
    %v3314 = vpop.permute.xlu0 %3313
    %3315 = vrot.lane.b32.xlu0 %v3109, 64
    %v3316 = vpop.permute.xlu0 %3315
    %3317 = vrot.lane.b32.xlu0 %v3112, 64
    %v3318 = vpop.permute.xlu0 %3317
    %3327 = vrot.lane.b32.xlu0 %v3277, 96
    %v3328 = vpop.permute.xlu0 %3327
    %3329 = vrot.lane.b32.xlu0 %v3280, 96
    %v3330 = vpop.permute.xlu0 %3329
    %3331 = vrot.lane.b32.xlu0 %v3285, 96
    %v3332 = vpop.permute.xlu0 %3331
    %3333 = vrot.lane.b32.xlu0 %v3288, 96
    %v3334 = vpop.permute.xlu0 %3333
    %v3339 = vsel %vm456, %v2743, %v3296
    %v3340 = vsel %vm456, %v2746, %v3298
    %v3341 = vsel %vm456, %v2751, %v3300
    %v3342 = vsel %vm456, %v2754, %v3302
    %v3343 = vsel %vm1207, %v3339, %v3312
    %v3344 = vsel %vm1207, %v3340, %v3314
    %v3345 = vsel %vm1207, %v3341, %v3316
    %v3346 = vsel %vm1207, %v3342, %v3318
    %v3347 = vsel %vm1212, %v3343, %v3328
    %v3348 = vsel %vm1212, %v3344, %v3330
    %v3349 = vsel %vm1212, %v3345, %v3332
    %v3350 = vsel %vm1212, %v3346, %v3334
    %v3351 = vpack.c.bf16 %v3348, %v3347
    %v3352 = vpack.c.bf16 %v3350, %v3349
    %v3369 = vunpack.c.l.b16 %v2572
    %v3370 = vunpack.c.l.b16 %v2573
    %v3371 = vunpack.c.l.b16 %v2574
    %v3372 = vunpack.c.l.b16 %v2575
    %v3373 = vunpack.c.l.b16 %v2576
    %v3374 = vunpack.c.l.b16 %v2577
    %v3375 = vunpack.c.l.b16 %v2578
    %v3376 = vunpack.c.l.b16 %v2579
    %v3377 = vunpack.c.l.b16 %v2580
    %v3378 = vunpack.c.l.b16 %v2581
    %v3379 = vunpack.c.l.b16 %v2582
    %v3380 = vunpack.c.l.b16 %v2583
    %v3381 = vunpack.c.l.b16 %v2584
    %v3382 = vunpack.c.l.b16 %v2585
    %v3383 = vunpack.c.l.b16 %v2586
    %v3384 = vunpack.c.l.b16 %v2587
    %v3385 = vpack.c.b16 %v3370, %v3369
    %v3386 = vpack.c.b16 %v3372, %v3371
    %v3387 = vpack.c.b16 %v3374, %v3373
    %v3388 = vpack.c.b16 %v3376, %v3375
    %v3389 = vpack.c.b16 %v3378, %v3377
    %v3390 = vpack.c.b16 %v3380, %v3379
    %v3391 = vpack.c.b16 %v3382, %v3381
    %v3392 = vpack.c.b16 %v3384, %v3383
    %3401 = vmatprep.subr.bf16.mxu0 0
    %3402 = vmatpush1.bf16.msra.mxu0 %v3392
    %3403 = vmatprep.subr.bf16.mxu0 0
    %3404 = vmatpush1.bf16.msra.mxu0 %v3391
    %3405 = vmatprep.subr.bf16.mxu0 0
    %3406 = vmatpush1.bf16.msra.mxu0 %v3390
    %3407 = vmatprep.subr.bf16.mxu0 0
    %3408 = vmatpush1.bf16.msra.mxu0 %v3389
    %3409 = vmatprep.subr.bf16.mxu0 0
    %3410 = vmatpush1.bf16.msra.mxu0 %v3388
    %3411 = vmatprep.subr.bf16.mxu0 0
    %3412 = vmatpush1.bf16.msra.mxu0 %v3387
    %3413 = vmatprep.subr.bf16.mxu0 0
    %3414 = vmatpush1.bf16.msra.mxu0 %v3386
    %3415 = vmatprep.subr.bf16.mxu0 0
    %3416 = vmatpush1.bf16.msra.mxu0 %v3385
    %3417 = vmatprep.subr.bf16.mxu0 0
    %3418 = vmatpush2.bf16.msra.mxu0 0
    %3419 = vmatprep.subr.bf16.mxu0 0
    %3420 = vmatpush2.bf16.msra.mxu0 0
    %3421 = vmatprep.subr.bf16.mxu0 0
    %3422 = vmatpush2.bf16.msra.mxu0 0
    %3423 = vmatprep.subr.bf16.mxu0 0
    %3424 = vmatpush2.bf16.msra.mxu0 0
    %3425 = vmatprep.subr.bf16.mxu0 0
    %3426 = vmatpush2.bf16.msra.mxu0 0
    %3427 = vmatprep.subr.bf16.mxu0 0
    %3428 = vmatpush2.bf16.msra.mxu0 0
    %3429 = vmatprep.subr.bf16.mxu0 0
    %3430 = vmatpush2.bf16.msra.mxu0 0
    %3431 = vmatprep.subr.bf16.mxu0 0
    %3432 = vmatpush2.bf16.msra.mxu0 0
    %3433 = vmatprep.mubr.bf16.mxu0 0
    %3434 = vmatmul.mubr.bf16.gmra.mxu0 %v3351
    %v3435 = vpop.f32.mrf.mxu0
    %v3436 = vadd.f32 %v2588, %v3435
    %v3437 = vpop.f32.mrf.mxu0
    %v3438 = vpop.f32.mrf.mxu0
    %v3439 = vadd.f32 %v2588, %v3438
    %v3440 = vpop.f32.mrf.mxu0
    %3441 = vmatprep.mubr.bf16.mxu0 0
    %3442 = vmatmul.mubr.bf16.gmra.mxu0 %v3352
    %v3443 = vpop.f32.mrf.mxu0
    %v3444 = vadd.f32 %v2588, %v3443
    %v3445 = vpop.f32.mrf.mxu0
    %v3446 = vpop.f32.mrf.mxu0
    %v3447 = vadd.f32 %v2588, %v3446
    %v3448 = vpop.f32.mrf.mxu0
    %3449 = vdwg.mxu0
    %v3450 = vld [vmem:[#allocation2 + $0x54] sm:$0xf]
    %v3451 = vld [vmem:[#allocation2 + $0xb0] sm:$0xf]
    %v3452 = vld [vmem:[#allocation2 + $0x10c] sm:$0xf]
    %v3453 = vld [vmem:[#allocation2 + $0x168] sm:$0xf]
    %v3454 = vld [vmem:[#allocation2 + $0x1c4] sm:$0xf]
    %v3455 = vld [vmem:[#allocation2 + $0x220] sm:$0xf]
    %v3456 = vld [vmem:[#allocation2 + $0x27c] sm:$0xf]
    %v3457 = vld [vmem:[#allocation2 + $0x2d8] sm:$0xf]
    %v3458 = vld [vmem:[#allocation2 + $0x334] sm:$0xf]
    %v3459 = vld [vmem:[#allocation2 + $0x390] sm:$0xf]
    %v3460 = vld [vmem:[#allocation2 + $0x3ec] sm:$0xf]
    %v3461 = vld [vmem:[#allocation2 + $0x448] sm:$0xf]
    %v3462 = vld [vmem:[#allocation2 + $0x4a4] sm:$0xf]
    %v3463 = vld [vmem:[#allocation2 + $0x500] sm:$0xf]
    %v3464 = vld [vmem:[#allocation2 + $0x55c] sm:$0xf]
    %v3465 = vld [vmem:[#allocation2 + $0x5b8] sm:$0xf]
    %v3466 = vpack.c.bf16 %v3439, %v3436
    %v3467 = vpack.c.bf16 %v3447, %v3444
    %v3468 = vld [vmem:[%s6 + $0x32] ss:$0 sm:$0xff]
    %v3485 = vunpack.c.l.b16 %v3450
    %v3486 = vunpack.c.l.b16 %v3451
    %v3487 = vunpack.c.l.b16 %v3452
    %v3488 = vunpack.c.l.b16 %v3453
    %v3489 = vunpack.c.l.b16 %v3454
    %v3490 = vunpack.c.l.b16 %v3455
    %v3491 = vunpack.c.l.b16 %v3456
    %v3492 = vunpack.c.l.b16 %v3457
    %v3493 = vunpack.c.l.b16 %v3458
    %v3494 = vunpack.c.l.b16 %v3459
    %v3495 = vunpack.c.l.b16 %v3460
    %v3496 = vunpack.c.l.b16 %v3461
    %v3497 = vunpack.c.l.b16 %v3462
    %v3498 = vunpack.c.l.b16 %v3463
    %v3499 = vunpack.c.l.b16 %v3464
    %v3500 = vunpack.c.l.b16 %v3465
    %v3501 = vpack.c.b16 %v3486, %v3485
    %v3502 = vpack.c.b16 %v3488, %v3487
    %v3503 = vpack.c.b16 %v3490, %v3489
    %v3504 = vpack.c.b16 %v3492, %v3491
    %v3505 = vpack.c.b16 %v3494, %v3493
    %v3506 = vpack.c.b16 %v3496, %v3495
    %v3507 = vpack.c.b16 %v3498, %v3497
    %v3508 = vpack.c.b16 %v3500, %v3499
    %3517 = vmatprep.subr.bf16.mxu0 0
    %3518 = vmatpush1.bf16.msra.mxu0 %v3508
    %3519 = vmatprep.subr.bf16.mxu0 0
    %3520 = vmatpush1.bf16.msra.mxu0 %v3507
    %3521 = vmatprep.subr.bf16.mxu0 0
    %3522 = vmatpush1.bf16.msra.mxu0 %v3506
    %3523 = vmatprep.subr.bf16.mxu0 0
    %3524 = vmatpush1.bf16.msra.mxu0 %v3505
    %3525 = vmatprep.subr.bf16.mxu0 0
    %3526 = vmatpush1.bf16.msra.mxu0 %v3504
    %3527 = vmatprep.subr.bf16.mxu0 0
    %3528 = vmatpush1.bf16.msra.mxu0 %v3503
    %3529 = vmatprep.subr.bf16.mxu0 0
    %3530 = vmatpush1.bf16.msra.mxu0 %v3502
    %3531 = vmatprep.subr.bf16.mxu0 0
    %3532 = vmatpush1.bf16.msra.mxu0 %v3501
    %3533 = vmatprep.subr.bf16.mxu0 0
    %3534 = vmatpush2.bf16.msra.mxu0 0
    %3535 = vmatprep.subr.bf16.mxu0 0
    %3536 = vmatpush2.bf16.msra.mxu0 0
    %3537 = vmatprep.subr.bf16.mxu0 0
    %3538 = vmatpush2.bf16.msra.mxu0 0
    %3539 = vmatprep.subr.bf16.mxu0 0
    %3540 = vmatpush2.bf16.msra.mxu0 0
    %3541 = vmatprep.subr.bf16.mxu0 0
    %3542 = vmatpush2.bf16.msra.mxu0 0
    %3543 = vmatprep.subr.bf16.mxu0 0
    %3544 = vmatpush2.bf16.msra.mxu0 0
    %3545 = vmatprep.subr.bf16.mxu0 0
    %3546 = vmatpush2.bf16.msra.mxu0 0
    %3547 = vmatprep.subr.bf16.mxu0 0
    %3548 = vmatpush2.bf16.msra.mxu0 0
    %3549 = vmatprep.mubr.bf16.mxu0 0
    %3550 = vmatmul.mubr.bf16.gmra.mxu0 %v3466
    %v3551 = vpop.f32.mrf.mxu0
    %v3552 = vadd.f32 %v3468, %v3551
    %v3553 = vpop.f32.mrf.mxu0
    %v3554 = vpop.f32.mrf.mxu0
    %v3555 = vadd.f32 %v3468, %v3554
    %v3556 = vpop.f32.mrf.mxu0
    %3557 = vmatprep.mubr.bf16.mxu0 0
    %3558 = vmatmul.mubr.bf16.gmra.mxu0 %v3467
    %v3559 = vpop.f32.mrf.mxu0
    %v3560 = vadd.f32 %v3468, %v3559
    %v3561 = vpop.f32.mrf.mxu0
    %v3562 = vpop.f32.mrf.mxu0
    %v3563 = vadd.f32 %v3468, %v3562
    %v3564 = vpop.f32.mrf.mxu0
    %3565 = vdwg.mxu0
    %v3566 = vmax.f32 %v3552, 0.0
    %v3567 = vmax.f32 %v3555, 0.0
    %v3568 = vmax.f32 %v3560, 0.0
    %v3569 = vmax.f32 %v3563, 0.0
    %v3570 = vld [vmem:[%s5 + $0x110] sm:$0xf]
    %v3571 = vpack.c.bf16 %v3567, %v3566
    %v3572 = vpack.c.bf16 %v3569, %v3568
    %v3574 = vsel %vm1439, %v3571, 0
    %v3577 = vsel %vm1439, %v3572, 0
    %v3580 = vsel %vm1446, %v3570, 0
    %3582 = vmatprep.subr.bf16.mxu0 0
    %3583 = vmatpush1.bf16.msra.mxu0 0
    %3584 = vmatprep.subr.bf16.mxu0 0
    %3585 = vmatpush1.bf16.msra.mxu0 0
    %3586 = vmatprep.subr.bf16.mxu0 0
    %3587 = vmatpush1.bf16.msra.mxu0 0
    %3588 = vmatprep.subr.bf16.mxu0 0
    %3589 = vmatpush1.bf16.msra.mxu0 0
    %3590 = vmatprep.subr.bf16.mxu0 0
    %3591 = vmatpush1.bf16.msra.mxu0 0
    %3592 = vmatprep.subr.bf16.mxu0 0
    %3593 = vmatpush1.bf16.msra.mxu0 0
    %3594 = vmatprep.subr.bf16.mxu0 0
    %3595 = vmatpush1.bf16.msra.mxu0 0
    %3596 = vmatprep.subr.bf16.mxu0 0
    %3597 = vmatpush1.bf16.msra.mxu0 %v3580
    %3598 = vmatprep.subr.bf16.mxu0 0
    %3599 = vmatpush2.bf16.msra.mxu0 0
    %3600 = vmatprep.subr.bf16.mxu0 0
    %3601 = vmatpush2.bf16.msra.mxu0 0
    %3602 = vmatprep.subr.bf16.mxu0 0
    %3603 = vmatpush2.bf16.msra.mxu0 0
    %3604 = vmatprep.subr.bf16.mxu0 0
    %3605 = vmatpush2.bf16.msra.mxu0 0
    %3606 = vmatprep.subr.bf16.mxu0 0
    %3607 = vmatpush2.bf16.msra.mxu0 0
    %3608 = vmatprep.subr.bf16.mxu0 0
    %3609 = vmatpush2.bf16.msra.mxu0 0
    %3610 = vmatprep.subr.bf16.mxu0 0
    %3611 = vmatpush2.bf16.msra.mxu0 0
    %3612 = vmatprep.subr.bf16.mxu0 0
    %3613 = vmatpush2.bf16.msra.mxu0 0
    %3614 = vmatprep.mubr.bf16.mxu0 0
    %3615 = vmatmul.mubr.bf16.gmra.mxu0 %v3574
    %v3616 = vpop.f32.mrf.mxu0
    %v3617 = vadd.f32 0.0, %v3616
    %v3618 = vpop.f32.mrf.mxu0
    %v3619 = vpop.f32.mrf.mxu0
    %v3620 = vadd.f32 0.0, %v3619
    %v3621 = vpop.f32.mrf.mxu0
    %3622 = vmatprep.mubr.bf16.mxu0 0
    %3623 = vmatmul.mubr.bf16.gmra.mxu0 %v3577
    %v3624 = vpop.f32.mrf.mxu0
    %v3625 = vadd.f32 0.0, %v3624
    %v3626 = vpop.f32.mrf.mxu0
    %v3627 = vpop.f32.mrf.mxu0
    %v3628 = vadd.f32 0.0, %v3627
    %v3629 = vpop.f32.mrf.mxu0
    %3630 = vdwg.mxu0
    %v3631 = vadd.f32 %v3436, %v3617
    %v3632 = vadd.f32 %v3439, %v3620
    %v3633 = vadd.f32 %v3444, %v3625
    %v3634 = vadd.f32 %v3447, %v3628
    %v3635 = vld [vmem:[%s6 + $0x33] ss:$0 sm:$0xff]
    %v3636 = vadd.f32 %v3631, %v3635
    %v3637 = vadd.f32 %v3632, %v3635
    %v3638 = vadd.f32 %v3633, %v3635
    %v3639 = vadd.f32 %v3634, %v3635
    %v3640 = vadd.f32 %v3636, %v2286
    %v3641 = vadd.f32 %v3637, %v2287
    %v3642 = vadd.f32 %v3638, %v2288
    %v3643 = vadd.f32 %v3639, %v2289
    %3644 = vadd.xlane.f32.xlu0 %v3640
    %v3645 = vpop.xlane.xlu0 %3644
    %3646 = vadd.xlane.f32.xlu0 %v3641
    %v3647 = vpop.xlane.xlu0 %3646
    %3648 = vadd.xlane.f32.xlu0 %v3642
    %v3649 = vpop.xlane.xlu0 %3648
    %3650 = vadd.xlane.f32.xlu0 %v3643
    %v3651 = vpop.xlane.xlu0 %3650
    %v3652 = vmul.f32 %v3645, %v106
    %v3653 = vmul.f32 %v3647, %v106
    %v3654 = vmul.f32 %v3649, %v106
    %v3655 = vmul.f32 %v3651, %v106
    %v3656 = vsub.f32 %v3640, %v3652
    %v3657 = vsub.f32 %v3641, %v3653
    %v3658 = vsub.f32 %v3642, %v3654
    %v3659 = vsub.f32 %v3643, %v3655
    %v3660 = vmul.f32 %v3656, %v3656
    %v3661 = vmul.f32 %v3657, %v3657
    %v3662 = vmul.f32 %v3658, %v3658
    %v3663 = vmul.f32 %v3659, %v3659
    %3664 = vadd.xlane.f32.xlu0 %v3660
    %v3665 = vpop.xlane.xlu0 %3664
    %3666 = vadd.xlane.f32.xlu0 %v3661
    %v3667 = vpop.xlane.xlu0 %3666
    %3668 = vadd.xlane.f32.xlu0 %v3662
    %v3669 = vpop.xlane.xlu0 %3668
    %3670 = vadd.xlane.f32.xlu0 %v3663
    %v3671 = vpop.xlane.xlu0 %3670
    %v3672 = vmul.f32 %v3665, %v106
    %v3673 = vmul.f32 %v3667, %v106
    %v3674 = vmul.f32 %v3669, %v106
    %v3675 = vmul.f32 %v3671, %v106
    %v3676 = vadd.f32 %v3672, 1e-05
    %v3677 = vadd.f32 %v3673, 1e-05
    %v3678 = vadd.f32 %v3674, 1e-05
    %v3679 = vadd.f32 %v3675, 1e-05
    %v3680 = vrsqrt.pop %v3676
    %v3681 = vrsqrt.pop %v3677
    %v3682 = vrsqrt.pop %v3678
    %v3683 = vrsqrt.pop %v3679
    %v3684 = vmul.f32 %v3656, %v3680
    %v3685 = vmul.f32 %v3657, %v3681
    %v3686 = vmul.f32 %v3658, %v3682
    %v3687 = vmul.f32 %v3659, %v3683
    %v3688 = vld [vmem:[%s6 + $0x34] ss:$0 sm:$0xff]
    %v3689 = vmul.f32 %v3684, %v3688
    %v3690 = vmul.f32 %v3685, %v3688
    %v3691 = vmul.f32 %v3686, %v3688
    %v3692 = vmul.f32 %v3687, %v3688
    %v3693 = vld [vmem:[%s6 + $0x35] ss:$0 sm:$0xff]
    %v3694 = vadd.f32 %v3689, %v3693
    %v3695 = vadd.f32 %v3690, %v3693
    %v3696 = vadd.f32 %v3691, %v3693
    %v3697 = vadd.f32 %v3692, %v3693
    %v3698 = vld [vmem:[#allocation2 + $0x28] sm:$0xf]
    %v3699 = vld [vmem:[#allocation2 + $0x84] sm:$0xf]
    %v3700 = vld [vmem:[#allocation2 + $0xe0] sm:$0xf]
    %v3701 = vld [vmem:[#allocation2 + $0x13c] sm:$0xf]
    %v3702 = vld [vmem:[#allocation2 + $0x198] sm:$0xf]
    %v3703 = vld [vmem:[#allocation2 + $0x1f4] sm:$0xf]
    %v3704 = vld [vmem:[#allocation2 + $0x250] sm:$0xf]
    %v3705 = vld [vmem:[#allocation2 + $0x2ac] sm:$0xf]
    %v3706 = vld [vmem:[#allocation2 + $0x308] sm:$0xf]
    %v3707 = vld [vmem:[#allocation2 + $0x364] sm:$0xf]
    %v3708 = vld [vmem:[#allocation2 + $0x3c0] sm:$0xf]
    %v3709 = vld [vmem:[#allocation2 + $0x41c] sm:$0xf]
    %v3710 = vld [vmem:[#allocation2 + $0x478] sm:$0xf]
    %v3711 = vld [vmem:[#allocation2 + $0x4d4] sm:$0xf]
    %v3712 = vld [vmem:[#allocation2 + $0x530] sm:$0xf]
    %v3713 = vld [vmem:[#allocation2 + $0x58c] sm:$0xf]
    %v3714 = vpack.c.bf16 %v3695, %v3694
    %v3715 = vpack.c.bf16 %v3697, %v3696
    %v3716 = vld [vmem:[%s6 + $0x36] ss:$0 sm:$0xff]
    %v3733 = vunpack.c.l.b16 %v3698
    %v3734 = vunpack.c.l.b16 %v3699
    %v3735 = vunpack.c.l.b16 %v3700
    %v3736 = vunpack.c.l.b16 %v3701
    %v3737 = vunpack.c.l.b16 %v3702
    %v3738 = vunpack.c.l.b16 %v3703
    %v3739 = vunpack.c.l.b16 %v3704
    %v3740 = vunpack.c.l.b16 %v3705
    %v3741 = vunpack.c.l.b16 %v3706
    %v3742 = vunpack.c.l.b16 %v3707
    %v3743 = vunpack.c.l.b16 %v3708
    %v3744 = vunpack.c.l.b16 %v3709
    %v3745 = vunpack.c.l.b16 %v3710
    %v3746 = vunpack.c.l.b16 %v3711
    %v3747 = vunpack.c.l.b16 %v3712
    %v3748 = vunpack.c.l.b16 %v3713
    %v3749 = vpack.c.b16 %v3734, %v3733
    %v3750 = vpack.c.b16 %v3736, %v3735
    %v3751 = vpack.c.b16 %v3738, %v3737
    %v3752 = vpack.c.b16 %v3740, %v3739
    %v3753 = vpack.c.b16 %v3742, %v3741
    %v3754 = vpack.c.b16 %v3744, %v3743
    %v3755 = vpack.c.b16 %v3746, %v3745
    %v3756 = vpack.c.b16 %v3748, %v3747
    %3765 = vmatprep.subr.bf16.mxu0 0
    %3766 = vmatpush1.bf16.msra.mxu0 %v3756
    %3767 = vmatprep.subr.bf16.mxu0 0
    %3768 = vmatpush1.bf16.msra.mxu0 %v3755
    %3769 = vmatprep.subr.bf16.mxu0 0
    %3770 = vmatpush1.bf16.msra.mxu0 %v3754
    %3771 = vmatprep.subr.bf16.mxu0 0
    %3772 = vmatpush1.bf16.msra.mxu0 %v3753
    %3773 = vmatprep.subr.bf16.mxu0 0
    %3774 = vmatpush1.bf16.msra.mxu0 %v3752
    %3775 = vmatprep.subr.bf16.mxu0 0
    %3776 = vmatpush1.bf16.msra.mxu0 %v3751
    %3777 = vmatprep.subr.bf16.mxu0 0
    %3778 = vmatpush1.bf16.msra.mxu0 %v3750
    %3779 = vmatprep.subr.bf16.mxu0 0
    %3780 = vmatpush1.bf16.msra.mxu0 %v3749
    %3781 = vmatprep.subr.bf16.mxu0 0
    %3782 = vmatpush2.bf16.msra.mxu0 0
    %3783 = vmatprep.subr.bf16.mxu0 0
    %3784 = vmatpush2.bf16.msra.mxu0 0
    %3785 = vmatprep.subr.bf16.mxu0 0
    %3786 = vmatpush2.bf16.msra.mxu0 0
    %3787 = vmatprep.subr.bf16.mxu0 0
    %3788 = vmatpush2.bf16.msra.mxu0 0
    %3789 = vmatprep.subr.bf16.mxu0 0
    %3790 = vmatpush2.bf16.msra.mxu0 0
    %3791 = vmatprep.subr.bf16.mxu0 0
    %3792 = vmatpush2.bf16.msra.mxu0 0
    %3793 = vmatprep.subr.bf16.mxu0 0
    %3794 = vmatpush2.bf16.msra.mxu0 0
    %3795 = vmatprep.subr.bf16.mxu0 0
    %3796 = vmatpush2.bf16.msra.mxu0 0
    %3797 = vmatprep.mubr.bf16.mxu0 0
    %3798 = vmatmul.mubr.bf16.gmra.mxu0 %v3714
    %v3799 = vpop.f32.mrf.mxu0
    %v3800 = vadd.f32 %v3716, %v3799
    %v3801 = vpop.f32.mrf.mxu0
    %v3802 = vpop.f32.mrf.mxu0
    %v3803 = vadd.f32 %v3716, %v3802
    %v3804 = vpop.f32.mrf.mxu0
    %3805 = vmatprep.mubr.bf16.mxu0 0
    %3806 = vmatmul.mubr.bf16.gmra.mxu0 %v3715
    %v3807 = vpop.f32.mrf.mxu0
    %v3808 = vadd.f32 %v3716, %v3807
    %v3809 = vpop.f32.mrf.mxu0
    %v3810 = vpop.f32.mrf.mxu0
    %v3811 = vadd.f32 %v3716, %v3810
    %v3812 = vpop.f32.mrf.mxu0
    %3813 = vdwg.mxu0
    %v3814 = vld [vmem:[#allocation2 + $0x2c] sm:$0xff]
    %v3815 = vld [vmem:[#allocation2 + $0x88] sm:$0xff]
    %v3816 = vld [vmem:[#allocation2 + $0xe4] sm:$0xff]
    %v3817 = vld [vmem:[#allocation2 + $0x140] sm:$0xff]
    %v3818 = vld [vmem:[#allocation2 + $0x19c] sm:$0xff]
    %v3819 = vld [vmem:[#allocation2 + $0x1f8] sm:$0xff]
    %v3820 = vld [vmem:[#allocation2 + $0x254] sm:$0xff]
    %v3821 = vld [vmem:[#allocation2 + $0x2b0] sm:$0xff]
    %v3822 = vld [vmem:[#allocation2 + $0x30c] sm:$0xff]
    %v3823 = vld [vmem:[#allocation2 + $0x368] sm:$0xff]
    %v3824 = vld [vmem:[#allocation2 + $0x3c4] sm:$0xff]
    %v3825 = vld [vmem:[#allocation2 + $0x420] sm:$0xff]
    %v3826 = vld [vmem:[#allocation2 + $0x47c] sm:$0xff]
    %v3827 = vld [vmem:[#allocation2 + $0x4d8] sm:$0xff]
    %v3828 = vld [vmem:[#allocation2 + $0x534] sm:$0xff]
    %v3829 = vld [vmem:[#allocation2 + $0x590] sm:$0xff]
    %v3830 = vpack.c.bf16 %v2229, %v2228
    %v3831 = vpack.c.bf16 %v2231, %v2230
    %s3832 = scalar_lea.vmem %s6, 55
    %v3833 = vld [vmem:[%s3832] ss:$8 sm:$0x3]
    %v3835 = vlaneseq
    %v3836 = vshrl.u32 %v3835, 7
    %v3837 = vsub.s32 0, %v3836
    %v3838 = vrot.slane %v3833, %v3837
    %v3839 = vlaneseq
    %v3840 = vshrl.u32 %v3839, 7
    %v3841 = vsub.s32 1, %v3840
    %v3842 = vrot.slane %v3833, %v3841
    %v3861 = vunpack.c.l.b16 %v3814
    %v3862 = vunpack.c.h.b16 %v3814
    %v3863 = vunpack.c.l.b16 %v3815
    %v3864 = vunpack.c.h.b16 %v3815
    %v3865 = vunpack.c.l.b16 %v3816
    %v3866 = vunpack.c.h.b16 %v3816
    %v3867 = vunpack.c.l.b16 %v3817
    %v3868 = vunpack.c.h.b16 %v3817
    %v3869 = vunpack.c.l.b16 %v3818
    %v3870 = vunpack.c.h.b16 %v3818
    %v3871 = vunpack.c.l.b16 %v3819
    %v3872 = vunpack.c.h.b16 %v3819
    %v3873 = vunpack.c.l.b16 %v3820
    %v3874 = vunpack.c.h.b16 %v3820
    %v3875 = vunpack.c.l.b16 %v3821
    %v3876 = vunpack.c.h.b16 %v3821
    %v3877 = vunpack.c.l.b16 %v3822
    %v3878 = vunpack.c.h.b16 %v3822
    %v3879 = vunpack.c.l.b16 %v3823
    %v3880 = vunpack.c.h.b16 %v3823
    %v3881 = vunpack.c.l.b16 %v3824
    %v3882 = vunpack.c.h.b16 %v3824
    %v3883 = vunpack.c.l.b16 %v3825
    %v3884 = vunpack.c.h.b16 %v3825
    %v3885 = vunpack.c.l.b16 %v3826
    %v3886 = vunpack.c.h.b16 %v3826
    %v3887 = vunpack.c.l.b16 %v3827
    %v3888 = vunpack.c.h.b16 %v3827
    %v3889 = vunpack.c.l.b16 %v3828
    %v3890 = vunpack.c.h.b16 %v3828
    %v3891 = vunpack.c.l.b16 %v3829
    %v3892 = vunpack.c.h.b16 %v3829
    %v3893 = vpack.c.b16 %v3863, %v3861
    %v3894 = vpack.c.b16 %v3864, %v3862
    %v3895 = vpack.c.b16 %v3867, %v3865
    %v3896 = vpack.c.b16 %v3868, %v3866
    %v3897 = vpack.c.b16 %v3871, %v3869
    %v3898 = vpack.c.b16 %v3872, %v3870
    %v3899 = vpack.c.b16 %v3875, %v3873
    %v3900 = vpack.c.b16 %v3876, %v3874
    %v3901 = vpack.c.b16 %v3879, %v3877
    %v3902 = vpack.c.b16 %v3880, %v3878
    %v3903 = vpack.c.b16 %v3883, %v3881
    %v3904 = vpack.c.b16 %v3884, %v3882
    %v3905 = vpack.c.b16 %v3887, %v3885
    %v3906 = vpack.c.b16 %v3888, %v3886
    %v3907 = vpack.c.b16 %v3891, %v3889
    %v3908 = vpack.c.b16 %v3892, %v3890
    %3925 = vmatprep.subr.bf16.mxu0 %v3908
    %3926 = vmatpush1.bf16.msra.mxu0 %v3907
    %3927 = vmatprep.subr.bf16.mxu0 %v3906
    %3928 = vmatpush1.bf16.msra.mxu0 %v3905
    %3929 = vmatprep.subr.bf16.mxu0 %v3904
    %3930 = vmatpush1.bf16.msra.mxu0 %v3903
    %3931 = vmatprep.subr.bf16.mxu0 %v3902
    %3932 = vmatpush1.bf16.msra.mxu0 %v3901
    %3933 = vmatprep.subr.bf16.mxu0 %v3900
    %3934 = vmatpush1.bf16.msra.mxu0 %v3899
    %3935 = vmatprep.subr.bf16.mxu0 %v3898
    %3936 = vmatpush1.bf16.msra.mxu0 %v3897
    %3937 = vmatprep.subr.bf16.mxu0 %v3896
    %3938 = vmatpush1.bf16.msra.mxu0 %v3895
    %3939 = vmatprep.subr.bf16.mxu0 %v3894
    %3940 = vmatpush1.bf16.msra.mxu0 %v3893
    %3941 = vmatprep.subr.bf16.mxu0 0
    %3942 = vmatpush2.bf16.msra.mxu0 0
    %3943 = vmatprep.subr.bf16.mxu0 0
    %3944 = vmatpush2.bf16.msra.mxu0 0
    %3945 = vmatprep.subr.bf16.mxu0 0
    %3946 = vmatpush2.bf16.msra.mxu0 0
    %3947 = vmatprep.subr.bf16.mxu0 0
    %3948 = vmatpush2.bf16.msra.mxu0 0
    %3949 = vmatprep.subr.bf16.mxu0 0
    %3950 = vmatpush2.bf16.msra.mxu0 0
    %3951 = vmatprep.subr.bf16.mxu0 0
    %3952 = vmatpush2.bf16.msra.mxu0 0
    %3953 = vmatprep.subr.bf16.mxu0 0
    %3954 = vmatpush2.bf16.msra.mxu0 0
    %3955 = vmatprep.subr.bf16.mxu0 0
    %3956 = vmatpush2.bf16.msra.mxu0 0
    %3957 = vmatprep.mubr.bf16.mxu0 0
    %3958 = vmatmul.mubr.bf16.gmra.mxu0 %v3830
    %v3959 = vpop.f32.mrf.mxu0
    %v3960 = vadd.f32 %v3838, %v3959
    %v3961 = vpop.f32.mrf.mxu0
    %v3962 = vadd.f32 %v3842, %v3961
    %v3963 = vpop.f32.mrf.mxu0
    %v3964 = vadd.f32 %v3838, %v3963
    %v3965 = vpop.f32.mrf.mxu0
    %v3966 = vadd.f32 %v3842, %v3965
    %3967 = vmatprep.mubr.bf16.mxu0 0
    %3968 = vmatmul.mubr.bf16.gmra.mxu0 %v3831
    %v3969 = vpop.f32.mrf.mxu0
    %v3970 = vadd.f32 %v3838, %v3969
    %v3971 = vpop.f32.mrf.mxu0
    %v3972 = vadd.f32 %v3842, %v3971
    %v3973 = vpop.f32.mrf.mxu0
    %v3974 = vadd.f32 %v3838, %v3973
    %v3975 = vpop.f32.mrf.mxu0
    %v3976 = vadd.f32 %v3842, %v3975
    %3977 = vdwg.mxu0
    %v3978 = vld [vmem:[#allocation2 + $0x34] sm:$0xf]
    %v3979 = vld [vmem:[#allocation2 + $0x90] sm:$0xf]
    %v3980 = vld [vmem:[#allocation2 + $0xec] sm:$0xf]
    %v3981 = vld [vmem:[#allocation2 + $0x148] sm:$0xf]
    %v3982 = vld [vmem:[#allocation2 + $0x1a4] sm:$0xf]
    %v3983 = vld [vmem:[#allocation2 + $0x200] sm:$0xf]
    %v3984 = vld [vmem:[#allocation2 + $0x25c] sm:$0xf]
    %v3985 = vld [vmem:[#allocation2 + $0x2b8] sm:$0xf]
    %v3986 = vld [vmem:[#allocation2 + $0x314] sm:$0xf]
    %v3987 = vld [vmem:[#allocation2 + $0x370] sm:$0xf]
    %v3988 = vld [vmem:[#allocation2 + $0x3cc] sm:$0xf]
    %v3989 = vld [vmem:[#allocation2 + $0x428] sm:$0xf]
    %v3990 = vld [vmem:[#allocation2 + $0x484] sm:$0xf]
    %v3991 = vld [vmem:[#allocation2 + $0x4e0] sm:$0xf]
    %v3992 = vld [vmem:[#allocation2 + $0x53c] sm:$0xf]
    %v3993 = vld [vmem:[#allocation2 + $0x598] sm:$0xf]
    %v3994 = vld [vmem:[%s6 + $0x48] ss:$0 sm:$0xff]
    %v3995 = vpack.c.bf16 %v3803, %v3800
    %v3996 = vpack.c.bf16 %v3811, %v3808
    %v3997 = vpack.c.bf16 %v3964, %v3960
    %v3998 = vpack.c.bf16 %v3974, %v3970
    %v4000 = vsel %vm456, %v3995, 0
    %v4003 = vsel %vm456, %v3996, 0
    %v4006 = vsel %vm456, %v3997, 0
    %v4009 = vsel %vm456, %v3998, 0
    %4011 = vmatprep.subr.bf16.mxu0 0
    %4012 = vmatpush1.bf16.xpose.msra.mxu0 0
    %4013 = vmatprep.subr.bf16.mxu0 0
    %4014 = vmatpush1.bf16.xpose.msra.mxu0 0
    %4015 = vmatprep.subr.bf16.mxu0 0
    %4016 = vmatpush1.bf16.xpose.msra.mxu0 0
    %4017 = vmatprep.subr.bf16.mxu0 0
    %4018 = vmatpush1.bf16.xpose.msra.mxu0 0
    %4019 = vmatprep.subr.bf16.mxu0 0
    %4020 = vmatpush1.bf16.xpose.msra.mxu0 0
    %4021 = vmatprep.subr.bf16.mxu0 0
    %4022 = vmatpush1.bf16.xpose.msra.mxu0 0
    %4023 = vmatprep.subr.bf16.mxu0 0
    %4024 = vmatpush1.bf16.xpose.msra.mxu0 %v4009
    %4025 = vmatprep.subr.bf16.mxu0 0
    %4026 = vmatpush1.bf16.xpose.msra.mxu0 %v4006
    %4027 = vmatprep.subr.bf16.mxu0 0
    %4028 = vmatpush2.bf16.xpose.msra.mxu0 0
    %4029 = vmatprep.subr.bf16.mxu0 0
    %4030 = vmatpush2.bf16.xpose.msra.mxu0 0
    %4031 = vmatprep.subr.bf16.mxu0 0
    %4032 = vmatpush2.bf16.xpose.msra.mxu0 0
    %4033 = vmatprep.subr.bf16.mxu0 0
    %4034 = vmatpush2.bf16.xpose.msra.mxu0 0
    %4035 = vmatprep.subr.bf16.mxu0 0
    %4036 = vmatpush2.bf16.xpose.msra.mxu0 0
    %4037 = vmatprep.subr.bf16.mxu0 0
    %4038 = vmatpush2.bf16.xpose.msra.mxu0 0
    %4039 = vmatprep.subr.bf16.mxu0 0
    %4040 = vmatpush2.bf16.xpose.msra.mxu0 0
    %4041 = vmatprep.subr.bf16.mxu0 0
    %4042 = vmatpush2.bf16.xpose.msra.mxu0 0
    %4043 = vmatprep.mubr.bf16.mxu0 0
    %4044 = vmatmul.mubr.bf16.gmra.mxu0 %v4000
    %v4045 = vpop.f32.mrf.mxu0
    %v4046 = vadd.f32 %v73, %v4045
    %v4047 = vpop.f32.mrf.mxu0
    %v4048 = vpop.f32.mrf.mxu0
    %v4049 = vadd.f32 %v74, %v4048
    %v4050 = vpop.f32.mrf.mxu0
    %4051 = vmatprep.mubr.bf16.mxu0 0
    %4052 = vmatmul.mubr.bf16.gmra.mxu0 %v4003
    %v4053 = vpop.f32.mrf.mxu0
    %v4054 = vadd.f32 %v75, %v4053
    %v4055 = vpop.f32.mrf.mxu0
    %v4056 = vpop.f32.mrf.mxu0
    %v4057 = vadd.f32 %v76, %v4056
    %v4058 = vpop.f32.mrf.mxu0
    %4059 = vdwg.mxu0
    %v4060 = vsel %vm456, %v4046, -inf
    %4061 = vmax.xlane.f32.xlu0 %v4060
    %v4062 = vpop.xlane.xlu0 %4061
    %v4063 = vsel %vm456, %v4049, -inf
    %4064 = vmax.xlane.f32.xlu0 %v4063
    %v4065 = vpop.xlane.xlu0 %4064
    %v4066 = vsel %vm456, %v4054, -inf
    %4067 = vmax.xlane.f32.xlu0 %v4066
    %v4068 = vpop.xlane.xlu0 %4067
    %v4069 = vsel %vm456, %v4057, -inf
    %4070 = vmax.xlane.f32.xlu0 %v4069
    %v4071 = vpop.xlane.xlu0 %4070
    %v4072 = vsub.f32 %v4046, %v4062
    %v4073 = vsub.f32 %v4049, %v4065
    %v4074 = vsub.f32 %v4054, %v4068
    %v4075 = vsub.f32 %v4057, %v4071
    %v4076 = vmul.f32 %v4072, 1.442695
    %v4077 = vpow.pop %v4076
    %v4078 = vmul.f32 %v4073, 1.442695
    %v4079 = vpow.pop %v4078
    %v4080 = vmul.f32 %v4074, 1.442695
    %v4081 = vpow.pop %v4080
    %v4082 = vmul.f32 %v4075, 1.442695
    %v4083 = vpow.pop %v4082
    %v4084 = vsel %vm456, %v4077, 0.0
    %4085 = vadd.xlane.f32.xlu0 %v4084
    %v4086 = vpop.xlane.xlu0 %4085
    %v4087 = vsel %vm456, %v4079, 0.0
    %4088 = vadd.xlane.f32.xlu0 %v4087
    %v4089 = vpop.xlane.xlu0 %4088
    %v4090 = vsel %vm456, %v4081, 0.0
    %4091 = vadd.xlane.f32.xlu0 %v4090
    %v4092 = vpop.xlane.xlu0 %4091
    %v4093 = vsel %vm456, %v4083, 0.0
    %4094 = vadd.xlane.f32.xlu0 %v4093
    %v4095 = vpop.xlane.xlu0 %4094
    %v4096 = vrcp.pop %v4086
    %v4097 = vmul.f32 %v4077, %v4096
    %v4098 = vrcp.pop %v4089
    %v4099 = vmul.f32 %v4079, %v4098
    %v4100 = vrcp.pop %v4092
    %v4101 = vmul.f32 %v4081, %v4100
    %v4102 = vrcp.pop %v4095
    %v4103 = vmul.f32 %v4083, %v4102
    %v4104 = vpack.c.bf16 %v4099, %v4097
    %v4105 = vpack.c.bf16 %v4103, %v4101
    %v4106 = vpack.c.bf16 %v3966, %v3962
    %v4107 = vpack.c.bf16 %v3976, %v3972
    %v4109 = vsel %vm456, %v4104, 0
    %v4112 = vsel %vm456, %v4105, 0
    %4114 = vmatprep.subr.bf16.mxu0 0
    %4115 = vmatpush1.bf16.msra.mxu0 0
    %4116 = vmatprep.subr.bf16.mxu0 0
    %4117 = vmatpush1.bf16.msra.mxu0 0
    %4118 = vmatprep.subr.bf16.mxu0 0
    %4119 = vmatpush1.bf16.msra.mxu0 0
    %4120 = vmatprep.subr.bf16.mxu0 0
    %4121 = vmatpush1.bf16.msra.mxu0 0
    %4122 = vmatprep.subr.bf16.mxu0 0
    %4123 = vmatpush1.bf16.msra.mxu0 0
    %4124 = vmatprep.subr.bf16.mxu0 0
    %4125 = vmatpush1.bf16.msra.mxu0 0
    %4126 = vmatprep.subr.bf16.mxu0 0
    %4127 = vmatpush1.bf16.msra.mxu0 %v4107
    %4128 = vmatprep.subr.bf16.mxu0 0
    %4129 = vmatpush1.bf16.msra.mxu0 %v4106
    %4130 = vmatprep.subr.bf16.mxu0 0
    %4131 = vmatpush2.bf16.msra.mxu0 0
    %4132 = vmatprep.subr.bf16.mxu0 0
    %4133 = vmatpush2.bf16.msra.mxu0 0
    %4134 = vmatprep.subr.bf16.mxu0 0
    %4135 = vmatpush2.bf16.msra.mxu0 0
    %4136 = vmatprep.subr.bf16.mxu0 0
    %4137 = vmatpush2.bf16.msra.mxu0 0
    %4138 = vmatprep.subr.bf16.mxu0 0
    %4139 = vmatpush2.bf16.msra.mxu0 0
    %4140 = vmatprep.subr.bf16.mxu0 0
    %4141 = vmatpush2.bf16.msra.mxu0 0
    %4142 = vmatprep.subr.bf16.mxu0 0
    %4143 = vmatpush2.bf16.msra.mxu0 0
    %4144 = vmatprep.subr.bf16.mxu0 0
    %4145 = vmatpush2.bf16.msra.mxu0 0
    %4146 = vmatprep.mubr.bf16.mxu0 0
    %4147 = vmatmul.mubr.bf16.gmra.mxu0 %v4109
    %v4148 = vpop.f32.mrf.mxu0
    %v4149 = vadd.f32 0.0, %v4148
    %v4150 = vpop.f32.mrf.mxu0
    %v4151 = vpop.f32.mrf.mxu0
    %v4152 = vadd.f32 0.0, %v4151
    %v4153 = vpop.f32.mrf.mxu0
    %4154 = vmatprep.mubr.bf16.mxu0 0
    %4155 = vmatmul.mubr.bf16.gmra.mxu0 %v4112
    %v4156 = vpop.f32.mrf.mxu0
    %v4157 = vadd.f32 0.0, %v4156
    %v4158 = vpop.f32.mrf.mxu0
    %v4159 = vpop.f32.mrf.mxu0
    %v4160 = vadd.f32 0.0, %v4159
    %v4161 = vpop.f32.mrf.mxu0
    %4162 = vdwg.mxu0
    %4165 = vrot.lane.b32.xlu0 %v3995, 96
    %v4166 = vpop.permute.xlu0 %4165
    %4167 = vrot.lane.b32.xlu0 %v3996, 96
    %v4168 = vpop.permute.xlu0 %4167
    %4171 = vrot.lane.b32.xlu0 %v3997, 96
    %v4172 = vpop.permute.xlu0 %4171
    %4173 = vrot.lane.b32.xlu0 %v3998, 96
    %v4174 = vpop.permute.xlu0 %4173
    %v4176 = vsel %vm456, %v4166, 0
    %v4179 = vsel %vm456, %v4168, 0
    %v4182 = vsel %vm456, %v4172, 0
    %v4185 = vsel %vm456, %v4174, 0
    %4187 = vmatprep.subr.bf16.mxu0 0
    %4188 = vmatpush1.bf16.xpose.msra.mxu0 0
    %4189 = vmatprep.subr.bf16.mxu0 0
    %4190 = vmatpush1.bf16.xpose.msra.mxu0 0
    %4191 = vmatprep.subr.bf16.mxu0 0
    %4192 = vmatpush1.bf16.xpose.msra.mxu0 0
    %4193 = vmatprep.subr.bf16.mxu0 0
    %4194 = vmatpush1.bf16.xpose.msra.mxu0 0
    %4195 = vmatprep.subr.bf16.mxu0 0
    %4196 = vmatpush1.bf16.xpose.msra.mxu0 0
    %4197 = vmatprep.subr.bf16.mxu0 0
    %4198 = vmatpush1.bf16.xpose.msra.mxu0 0
    %4199 = vmatprep.subr.bf16.mxu0 0
    %4200 = vmatpush1.bf16.xpose.msra.mxu0 %v4185
    %4201 = vmatprep.subr.bf16.mxu0 0
    %4202 = vmatpush1.bf16.xpose.msra.mxu0 %v4182
    %4203 = vmatprep.subr.bf16.mxu0 0
    %4204 = vmatpush2.bf16.xpose.msra.mxu0 0
    %4205 = vmatprep.subr.bf16.mxu0 0
    %4206 = vmatpush2.bf16.xpose.msra.mxu0 0
    %4207 = vmatprep.subr.bf16.mxu0 0
    %4208 = vmatpush2.bf16.xpose.msra.mxu0 0
    %4209 = vmatprep.subr.bf16.mxu0 0
    %4210 = vmatpush2.bf16.xpose.msra.mxu0 0
    %4211 = vmatprep.subr.bf16.mxu0 0
    %4212 = vmatpush2.bf16.xpose.msra.mxu0 0
    %4213 = vmatprep.subr.bf16.mxu0 0
    %4214 = vmatpush2.bf16.xpose.msra.mxu0 0
    %4215 = vmatprep.subr.bf16.mxu0 0
    %4216 = vmatpush2.bf16.xpose.msra.mxu0 0
    %4217 = vmatprep.subr.bf16.mxu0 0
    %4218 = vmatpush2.bf16.xpose.msra.mxu0 0
    %4219 = vmatprep.mubr.bf16.mxu0 0
    %4220 = vmatmul.mubr.bf16.gmra.mxu0 %v4176
    %v4221 = vpop.f32.mrf.mxu0
    %v4222 = vadd.f32 %v73, %v4221
    %v4223 = vpop.f32.mrf.mxu0
    %v4224 = vpop.f32.mrf.mxu0
    %v4225 = vadd.f32 %v74, %v4224
    %v4226 = vpop.f32.mrf.mxu0
    %4227 = vmatprep.mubr.bf16.mxu0 0
    %4228 = vmatmul.mubr.bf16.gmra.mxu0 %v4179
    %v4229 = vpop.f32.mrf.mxu0
    %v4230 = vadd.f32 %v75, %v4229
    %v4231 = vpop.f32.mrf.mxu0
    %v4232 = vpop.f32.mrf.mxu0
    %v4233 = vadd.f32 %v76, %v4232
    %v4234 = vpop.f32.mrf.mxu0
    %4235 = vdwg.mxu0
    %v4236 = vsel %vm456, %v4222, -inf
    %4237 = vmax.xlane.f32.xlu0 %v4236
    %v4238 = vpop.xlane.xlu0 %4237
    %v4239 = vsel %vm456, %v4225, -inf
    %4240 = vmax.xlane.f32.xlu0 %v4239
    %v4241 = vpop.xlane.xlu0 %4240
    %v4242 = vsel %vm456, %v4230, -inf
    %4243 = vmax.xlane.f32.xlu0 %v4242
    %v4244 = vpop.xlane.xlu0 %4243
    %v4245 = vsel %vm456, %v4233, -inf
    %4246 = vmax.xlane.f32.xlu0 %v4245
    %v4247 = vpop.xlane.xlu0 %4246
    %v4248 = vsub.f32 %v4222, %v4238
    %v4249 = vsub.f32 %v4225, %v4241
    %v4250 = vsub.f32 %v4230, %v4244
    %v4251 = vsub.f32 %v4233, %v4247
    %v4252 = vmul.f32 %v4248, 1.442695
    %v4253 = vpow.pop %v4252
    %v4254 = vmul.f32 %v4249, 1.442695
    %v4255 = vpow.pop %v4254
    %v4256 = vmul.f32 %v4250, 1.442695
    %v4257 = vpow.pop %v4256
    %v4258 = vmul.f32 %v4251, 1.442695
    %v4259 = vpow.pop %v4258
    %v4260 = vsel %vm456, %v4253, 0.0
    %4261 = vadd.xlane.f32.xlu0 %v4260
    %v4262 = vpop.xlane.xlu0 %4261
    %v4263 = vsel %vm456, %v4255, 0.0
    %4264 = vadd.xlane.f32.xlu0 %v4263
    %v4265 = vpop.xlane.xlu0 %4264
    %v4266 = vsel %vm456, %v4257, 0.0
    %4267 = vadd.xlane.f32.xlu0 %v4266
    %v4268 = vpop.xlane.xlu0 %4267
    %v4269 = vsel %vm456, %v4259, 0.0
    %4270 = vadd.xlane.f32.xlu0 %v4269
    %v4271 = vpop.xlane.xlu0 %4270
    %v4272 = vrcp.pop %v4262
    %v4273 = vmul.f32 %v4253, %v4272
    %v4274 = vrcp.pop %v4265
    %v4275 = vmul.f32 %v4255, %v4274
    %v4276 = vrcp.pop %v4268
    %v4277 = vmul.f32 %v4257, %v4276
    %v4278 = vrcp.pop %v4271
    %v4279 = vmul.f32 %v4259, %v4278
    %v4280 = vpack.c.bf16 %v4275, %v4273
    %v4281 = vpack.c.bf16 %v4279, %v4277
    %4284 = vrot.lane.b32.xlu0 %v4106, 96
    %v4285 = vpop.permute.xlu0 %4284
    %4286 = vrot.lane.b32.xlu0 %v4107, 96
    %v4287 = vpop.permute.xlu0 %4286
    %v4291 = vsel %vm456, %v4280, 0
    %v4294 = vsel %vm456, %v4281, 0
    %4296 = vmatprep.subr.bf16.mxu0 0
    %4297 = vmatpush1.bf16.msra.mxu0 0
    %4298 = vmatprep.subr.bf16.mxu0 0
    %4299 = vmatpush1.bf16.msra.mxu0 0
    %4300 = vmatprep.subr.bf16.mxu0 0
    %4301 = vmatpush1.bf16.msra.mxu0 0
    %4302 = vmatprep.subr.bf16.mxu0 0
    %4303 = vmatpush1.bf16.msra.mxu0 0
    %4304 = vmatprep.subr.bf16.mxu0 0
    %4305 = vmatpush1.bf16.msra.mxu0 0
    %4306 = vmatprep.subr.bf16.mxu0 0
    %4307 = vmatpush1.bf16.msra.mxu0 0
    %4308 = vmatprep.subr.bf16.mxu0 0
    %4309 = vmatpush1.bf16.msra.mxu0 %v4287
    %4310 = vmatprep.subr.bf16.mxu0 0
    %4311 = vmatpush1.bf16.msra.mxu0 %v4285
    %4312 = vmatprep.subr.bf16.mxu0 0
    %4313 = vmatpush2.bf16.msra.mxu0 0
    %4314 = vmatprep.subr.bf16.mxu0 0
    %4315 = vmatpush2.bf16.msra.mxu0 0
    %4316 = vmatprep.subr.bf16.mxu0 0
    %4317 = vmatpush2.bf16.msra.mxu0 0
    %4318 = vmatprep.subr.bf16.mxu0 0
    %4319 = vmatpush2.bf16.msra.mxu0 0
    %4320 = vmatprep.subr.bf16.mxu0 0
    %4321 = vmatpush2.bf16.msra.mxu0 0
    %4322 = vmatprep.subr.bf16.mxu0 0
    %4323 = vmatpush2.bf16.msra.mxu0 0
    %4324 = vmatprep.subr.bf16.mxu0 0
    %4325 = vmatpush2.bf16.msra.mxu0 0
    %4326 = vmatprep.subr.bf16.mxu0 0
    %4327 = vmatpush2.bf16.msra.mxu0 0
    %4328 = vmatprep.mubr.bf16.mxu0 0
    %4329 = vmatmul.mubr.bf16.gmra.mxu0 %v4291
    %v4330 = vpop.f32.mrf.mxu0
    %v4331 = vadd.f32 0.0, %v4330
    %v4332 = vpop.f32.mrf.mxu0
    %v4333 = vpop.f32.mrf.mxu0
    %v4334 = vadd.f32 0.0, %v4333
    %v4335 = vpop.f32.mrf.mxu0
    %4336 = vmatprep.mubr.bf16.mxu0 0
    %4337 = vmatmul.mubr.bf16.gmra.mxu0 %v4294
    %v4338 = vpop.f32.mrf.mxu0
    %v4339 = vadd.f32 0.0, %v4338
    %v4340 = vpop.f32.mrf.mxu0
    %v4341 = vpop.f32.mrf.mxu0
    %v4342 = vadd.f32 0.0, %v4341
    %v4343 = vpop.f32.mrf.mxu0
    %4344 = vdwg.mxu0
    %4345 = vrot.lane.b32.xlu0 %v3995, 64
    %v4346 = vpop.permute.xlu0 %4345
    %4347 = vrot.lane.b32.xlu0 %v3996, 64
    %v4348 = vpop.permute.xlu0 %4347
    %4349 = vrot.lane.b32.xlu0 %v3997, 64
    %v4350 = vpop.permute.xlu0 %4349
    %4351 = vrot.lane.b32.xlu0 %v3998, 64
    %v4352 = vpop.permute.xlu0 %4351
    %v4354 = vsel %vm456, %v4346, 0
    %v4357 = vsel %vm456, %v4348, 0
    %v4360 = vsel %vm456, %v4350, 0
    %v4363 = vsel %vm456, %v4352, 0
    %4365 = vmatprep.subr.bf16.mxu0 0
    %4366 = vmatpush1.bf16.xpose.msra.mxu0 0
    %4367 = vmatprep.subr.bf16.mxu0 0
    %4368 = vmatpush1.bf16.xpose.msra.mxu0 0
    %4369 = vmatprep.subr.bf16.mxu0 0
    %4370 = vmatpush1.bf16.xpose.msra.mxu0 0
    %4371 = vmatprep.subr.bf16.mxu0 0
    %4372 = vmatpush1.bf16.xpose.msra.mxu0 0
    %4373 = vmatprep.subr.bf16.mxu0 0
    %4374 = vmatpush1.bf16.xpose.msra.mxu0 0
    %4375 = vmatprep.subr.bf16.mxu0 0
    %4376 = vmatpush1.bf16.xpose.msra.mxu0 0
    %4377 = vmatprep.subr.bf16.mxu0 0
    %4378 = vmatpush1.bf16.xpose.msra.mxu0 %v4363
    %4379 = vmatprep.subr.bf16.mxu0 0
    %4380 = vmatpush1.bf16.xpose.msra.mxu0 %v4360
    %4381 = vmatprep.subr.bf16.mxu0 0
    %4382 = vmatpush2.bf16.xpose.msra.mxu0 0
    %4383 = vmatprep.subr.bf16.mxu0 0
    %4384 = vmatpush2.bf16.xpose.msra.mxu0 0
    %4385 = vmatprep.subr.bf16.mxu0 0
    %4386 = vmatpush2.bf16.xpose.msra.mxu0 0
    %4387 = vmatprep.subr.bf16.mxu0 0
    %4388 = vmatpush2.bf16.xpose.msra.mxu0 0
    %4389 = vmatprep.subr.bf16.mxu0 0
    %4390 = vmatpush2.bf16.xpose.msra.mxu0 0
    %4391 = vmatprep.subr.bf16.mxu0 0
    %4392 = vmatpush2.bf16.xpose.msra.mxu0 0
    %4393 = vmatprep.subr.bf16.mxu0 0
    %4394 = vmatpush2.bf16.xpose.msra.mxu0 0
    %4395 = vmatprep.subr.bf16.mxu0 0
    %4396 = vmatpush2.bf16.xpose.msra.mxu0 0
    %4397 = vmatprep.mubr.bf16.mxu0 0
    %4398 = vmatmul.mubr.bf16.gmra.mxu0 %v4354
    %v4399 = vpop.f32.mrf.mxu0
    %v4400 = vadd.f32 %v73, %v4399
    %v4401 = vpop.f32.mrf.mxu0
    %v4402 = vpop.f32.mrf.mxu0
    %v4403 = vadd.f32 %v74, %v4402
    %v4404 = vpop.f32.mrf.mxu0
    %4405 = vmatprep.mubr.bf16.mxu0 0
    %4406 = vmatmul.mubr.bf16.gmra.mxu0 %v4357
    %v4407 = vpop.f32.mrf.mxu0
    %v4408 = vadd.f32 %v75, %v4407
    %v4409 = vpop.f32.mrf.mxu0
    %v4410 = vpop.f32.mrf.mxu0
    %v4411 = vadd.f32 %v76, %v4410
    %v4412 = vpop.f32.mrf.mxu0
    %4413 = vdwg.mxu0
    %v4414 = vsel %vm456, %v4400, -inf
    %4415 = vmax.xlane.f32.xlu0 %v4414
    %v4416 = vpop.xlane.xlu0 %4415
    %v4417 = vsel %vm456, %v4403, -inf
    %4418 = vmax.xlane.f32.xlu0 %v4417
    %v4419 = vpop.xlane.xlu0 %4418
    %v4420 = vsel %vm456, %v4408, -inf
    %4421 = vmax.xlane.f32.xlu0 %v4420
    %v4422 = vpop.xlane.xlu0 %4421
    %v4423 = vsel %vm456, %v4411, -inf
    %4424 = vmax.xlane.f32.xlu0 %v4423
    %v4425 = vpop.xlane.xlu0 %4424
    %v4426 = vsub.f32 %v4400, %v4416
    %v4427 = vsub.f32 %v4403, %v4419
    %v4428 = vsub.f32 %v4408, %v4422
    %v4429 = vsub.f32 %v4411, %v4425
    %v4430 = vmul.f32 %v4426, 1.442695
    %v4431 = vpow.pop %v4430
    %v4432 = vmul.f32 %v4427, 1.442695
    %v4433 = vpow.pop %v4432
    %v4434 = vmul.f32 %v4428, 1.442695
    %v4435 = vpow.pop %v4434
    %v4436 = vmul.f32 %v4429, 1.442695
    %v4437 = vpow.pop %v4436
    %v4438 = vsel %vm456, %v4431, 0.0
    %4439 = vadd.xlane.f32.xlu0 %v4438
    %v4440 = vpop.xlane.xlu0 %4439
    %v4441 = vsel %vm456, %v4433, 0.0
    %4442 = vadd.xlane.f32.xlu0 %v4441
    %v4443 = vpop.xlane.xlu0 %4442
    %v4444 = vsel %vm456, %v4435, 0.0
    %4445 = vadd.xlane.f32.xlu0 %v4444
    %v4446 = vpop.xlane.xlu0 %4445
    %v4447 = vsel %vm456, %v4437, 0.0
    %4448 = vadd.xlane.f32.xlu0 %v4447
    %v4449 = vpop.xlane.xlu0 %4448
    %v4450 = vrcp.pop %v4440
    %v4451 = vmul.f32 %v4431, %v4450
    %v4452 = vrcp.pop %v4443
    %v4453 = vmul.f32 %v4433, %v4452
    %v4454 = vrcp.pop %v4446
    %v4455 = vmul.f32 %v4435, %v4454
    %v4456 = vrcp.pop %v4449
    %v4457 = vmul.f32 %v4437, %v4456
    %v4458 = vpack.c.bf16 %v4453, %v4451
    %v4459 = vpack.c.bf16 %v4457, %v4455
    %4460 = vrot.lane.b32.xlu0 %v4106, 64
    %v4461 = vpop.permute.xlu0 %4460
    %4462 = vrot.lane.b32.xlu0 %v4107, 64
    %v4463 = vpop.permute.xlu0 %4462
    %v4467 = vsel %vm456, %v4458, 0
    %v4470 = vsel %vm456, %v4459, 0
    %4472 = vmatprep.subr.bf16.mxu0 0
    %4473 = vmatpush1.bf16.msra.mxu0 0
    %4474 = vmatprep.subr.bf16.mxu0 0
    %4475 = vmatpush1.bf16.msra.mxu0 0
    %4476 = vmatprep.subr.bf16.mxu0 0
    %4477 = vmatpush1.bf16.msra.mxu0 0
    %4478 = vmatprep.subr.bf16.mxu0 0
    %4479 = vmatpush1.bf16.msra.mxu0 0
    %4480 = vmatprep.subr.bf16.mxu0 0
    %4481 = vmatpush1.bf16.msra.mxu0 0
    %4482 = vmatprep.subr.bf16.mxu0 0
    %4483 = vmatpush1.bf16.msra.mxu0 0
    %4484 = vmatprep.subr.bf16.mxu0 0
    %4485 = vmatpush1.bf16.msra.mxu0 %v4463
    %4486 = vmatprep.subr.bf16.mxu0 0
    %4487 = vmatpush1.bf16.msra.mxu0 %v4461
    %4488 = vmatprep.subr.bf16.mxu0 0
    %4489 = vmatpush2.bf16.msra.mxu0 0
    %4490 = vmatprep.subr.bf16.mxu0 0
    %4491 = vmatpush2.bf16.msra.mxu0 0
    %4492 = vmatprep.subr.bf16.mxu0 0
    %4493 = vmatpush2.bf16.msra.mxu0 0
    %4494 = vmatprep.subr.bf16.mxu0 0
    %4495 = vmatpush2.bf16.msra.mxu0 0
    %4496 = vmatprep.subr.bf16.mxu0 0
    %4497 = vmatpush2.bf16.msra.mxu0 0
    %4498 = vmatprep.subr.bf16.mxu0 0
    %4499 = vmatpush2.bf16.msra.mxu0 0
    %4500 = vmatprep.subr.bf16.mxu0 0
    %4501 = vmatpush2.bf16.msra.mxu0 0
    %4502 = vmatprep.subr.bf16.mxu0 0
    %4503 = vmatpush2.bf16.msra.mxu0 0
    %4504 = vmatprep.mubr.bf16.mxu0 0
    %4505 = vmatmul.mubr.bf16.gmra.mxu0 %v4467
    %v4506 = vpop.f32.mrf.mxu0
    %v4507 = vadd.f32 0.0, %v4506
    %v4508 = vpop.f32.mrf.mxu0
    %v4509 = vpop.f32.mrf.mxu0
    %v4510 = vadd.f32 0.0, %v4509
    %v4511 = vpop.f32.mrf.mxu0
    %4512 = vmatprep.mubr.bf16.mxu0 0
    %4513 = vmatmul.mubr.bf16.gmra.mxu0 %v4470
    %v4514 = vpop.f32.mrf.mxu0
    %v4515 = vadd.f32 0.0, %v4514
    %v4516 = vpop.f32.mrf.mxu0
    %v4517 = vpop.f32.mrf.mxu0
    %v4518 = vadd.f32 0.0, %v4517
    %v4519 = vpop.f32.mrf.mxu0
    %4520 = vdwg.mxu0
    %4521 = vrot.lane.b32.xlu0 %v3995, 32
    %v4522 = vpop.permute.xlu0 %4521
    %4523 = vrot.lane.b32.xlu0 %v3996, 32
    %v4524 = vpop.permute.xlu0 %4523
    %4525 = vrot.lane.b32.xlu0 %v3997, 32
    %v4526 = vpop.permute.xlu0 %4525
    %4527 = vrot.lane.b32.xlu0 %v3998, 32
    %v4528 = vpop.permute.xlu0 %4527
    %v4530 = vsel %vm456, %v4522, 0
    %v4533 = vsel %vm456, %v4524, 0
    %v4536 = vsel %vm456, %v4526, 0
    %v4539 = vsel %vm456, %v4528, 0
    %4541 = vmatprep.subr.bf16.mxu0 0
    %4542 = vmatpush1.bf16.xpose.msra.mxu0 0
    %4543 = vmatprep.subr.bf16.mxu0 0
    %4544 = vmatpush1.bf16.xpose.msra.mxu0 0
    %4545 = vmatprep.subr.bf16.mxu0 0
    %4546 = vmatpush1.bf16.xpose.msra.mxu0 0
    %4547 = vmatprep.subr.bf16.mxu0 0
    %4548 = vmatpush1.bf16.xpose.msra.mxu0 0
    %4549 = vmatprep.subr.bf16.mxu0 0
    %4550 = vmatpush1.bf16.xpose.msra.mxu0 0
    %4551 = vmatprep.subr.bf16.mxu0 0
    %4552 = vmatpush1.bf16.xpose.msra.mxu0 0
    %4553 = vmatprep.subr.bf16.mxu0 0
    %4554 = vmatpush1.bf16.xpose.msra.mxu0 %v4539
    %4555 = vmatprep.subr.bf16.mxu0 0
    %4556 = vmatpush1.bf16.xpose.msra.mxu0 %v4536
    %4557 = vmatprep.subr.bf16.mxu0 0
    %4558 = vmatpush2.bf16.xpose.msra.mxu0 0
    %4559 = vmatprep.subr.bf16.mxu0 0
    %4560 = vmatpush2.bf16.xpose.msra.mxu0 0
    %4561 = vmatprep.subr.bf16.mxu0 0
    %4562 = vmatpush2.bf16.xpose.msra.mxu0 0
    %4563 = vmatprep.subr.bf16.mxu0 0
    %4564 = vmatpush2.bf16.xpose.msra.mxu0 0
    %4565 = vmatprep.subr.bf16.mxu0 0
    %4566 = vmatpush2.bf16.xpose.msra.mxu0 0
    %4567 = vmatprep.subr.bf16.mxu0 0
    %4568 = vmatpush2.bf16.xpose.msra.mxu0 0
    %4569 = vmatprep.subr.bf16.mxu0 0
    %4570 = vmatpush2.bf16.xpose.msra.mxu0 0
    %4571 = vmatprep.subr.bf16.mxu0 0
    %4572 = vmatpush2.bf16.xpose.msra.mxu0 0
    %4573 = vmatprep.mubr.bf16.mxu0 0
    %4574 = vmatmul.mubr.bf16.gmra.mxu0 %v4530
    %v4575 = vpop.f32.mrf.mxu0
    %v4576 = vadd.f32 %v73, %v4575
    %v4577 = vpop.f32.mrf.mxu0
    %v4578 = vpop.f32.mrf.mxu0
    %v4579 = vadd.f32 %v74, %v4578
    %v4580 = vpop.f32.mrf.mxu0
    %4581 = vmatprep.mubr.bf16.mxu0 0
    %4582 = vmatmul.mubr.bf16.gmra.mxu0 %v4533
    %v4583 = vpop.f32.mrf.mxu0
    %v4584 = vadd.f32 %v75, %v4583
    %v4585 = vpop.f32.mrf.mxu0
    %v4586 = vpop.f32.mrf.mxu0
    %v4587 = vadd.f32 %v76, %v4586
    %v4588 = vpop.f32.mrf.mxu0
    %4589 = vdwg.mxu0
    %v4590 = vsel %vm456, %v4576, -inf
    %4591 = vmax.xlane.f32.xlu0 %v4590
    %v4592 = vpop.xlane.xlu0 %4591
    %v4593 = vsel %vm456, %v4579, -inf
    %4594 = vmax.xlane.f32.xlu0 %v4593
    %v4595 = vpop.xlane.xlu0 %4594
    %v4596 = vsel %vm456, %v4584, -inf
    %4597 = vmax.xlane.f32.xlu0 %v4596
    %v4598 = vpop.xlane.xlu0 %4597
    %v4599 = vsel %vm456, %v4587, -inf
    %4600 = vmax.xlane.f32.xlu0 %v4599
    %v4601 = vpop.xlane.xlu0 %4600
    %v4602 = vsub.f32 %v4576, %v4592
    %v4603 = vsub.f32 %v4579, %v4595
    %v4604 = vsub.f32 %v4584, %v4598
    %v4605 = vsub.f32 %v4587, %v4601
    %v4606 = vmul.f32 %v4602, 1.442695
    %v4607 = vpow.pop %v4606
    %v4608 = vmul.f32 %v4603, 1.442695
    %v4609 = vpow.pop %v4608
    %v4610 = vmul.f32 %v4604, 1.442695
    %v4611 = vpow.pop %v4610
    %v4612 = vmul.f32 %v4605, 1.442695
    %v4613 = vpow.pop %v4612
    %v4614 = vsel %vm456, %v4607, 0.0
    %4615 = vadd.xlane.f32.xlu0 %v4614
    %v4616 = vpop.xlane.xlu0 %4615
    %v4617 = vsel %vm456, %v4609, 0.0
    %4618 = vadd.xlane.f32.xlu0 %v4617
    %v4619 = vpop.xlane.xlu0 %4618
    %v4620 = vsel %vm456, %v4611, 0.0
    %4621 = vadd.xlane.f32.xlu0 %v4620
    %v4622 = vpop.xlane.xlu0 %4621
    %v4623 = vsel %vm456, %v4613, 0.0
    %4624 = vadd.xlane.f32.xlu0 %v4623
    %v4625 = vpop.xlane.xlu0 %4624
    %v4626 = vrcp.pop %v4616
    %v4627 = vmul.f32 %v4607, %v4626
    %v4628 = vrcp.pop %v4619
    %v4629 = vmul.f32 %v4609, %v4628
    %v4630 = vrcp.pop %v4622
    %v4631 = vmul.f32 %v4611, %v4630
    %v4632 = vrcp.pop %v4625
    %v4633 = vmul.f32 %v4613, %v4632
    %v4634 = vpack.c.bf16 %v4629, %v4627
    %v4635 = vpack.c.bf16 %v4633, %v4631
    %4636 = vrot.lane.b32.xlu0 %v4106, 32
    %v4637 = vpop.permute.xlu0 %4636
    %4638 = vrot.lane.b32.xlu0 %v4107, 32
    %v4639 = vpop.permute.xlu0 %4638
    %v4643 = vsel %vm456, %v4634, 0
    %v4646 = vsel %vm456, %v4635, 0
    %4648 = vmatprep.subr.bf16.mxu0 0
    %4649 = vmatpush1.bf16.msra.mxu0 0
    %4650 = vmatprep.subr.bf16.mxu0 0
    %4651 = vmatpush1.bf16.msra.mxu0 0
    %4652 = vmatprep.subr.bf16.mxu0 0
    %4653 = vmatpush1.bf16.msra.mxu0 0
    %4654 = vmatprep.subr.bf16.mxu0 0
    %4655 = vmatpush1.bf16.msra.mxu0 0
    %4656 = vmatprep.subr.bf16.mxu0 0
    %4657 = vmatpush1.bf16.msra.mxu0 0
    %4658 = vmatprep.subr.bf16.mxu0 0
    %4659 = vmatpush1.bf16.msra.mxu0 0
    %4660 = vmatprep.subr.bf16.mxu0 0
    %4661 = vmatpush1.bf16.msra.mxu0 %v4639
    %4662 = vmatprep.subr.bf16.mxu0 0
    %4663 = vmatpush1.bf16.msra.mxu0 %v4637
    %4664 = vmatprep.subr.bf16.mxu0 0
    %4665 = vmatpush2.bf16.msra.mxu0 0
    %4666 = vmatprep.subr.bf16.mxu0 0
    %4667 = vmatpush2.bf16.msra.mxu0 0
    %4668 = vmatprep.subr.bf16.mxu0 0
    %4669 = vmatpush2.bf16.msra.mxu0 0
    %4670 = vmatprep.subr.bf16.mxu0 0
    %4671 = vmatpush2.bf16.msra.mxu0 0
    %4672 = vmatprep.subr.bf16.mxu0 0
    %4673 = vmatpush2.bf16.msra.mxu0 0
    %4674 = vmatprep.subr.bf16.mxu0 0
    %4675 = vmatpush2.bf16.msra.mxu0 0
    %4676 = vmatprep.subr.bf16.mxu0 0
    %4677 = vmatpush2.bf16.msra.mxu0 0
    %4678 = vmatprep.subr.bf16.mxu0 0
    %4679 = vmatpush2.bf16.msra.mxu0 0
    %4680 = vmatprep.mubr.bf16.mxu0 0
    %4681 = vmatmul.mubr.bf16.gmra.mxu0 %v4643
    %v4682 = vpop.f32.mrf.mxu0
    %v4683 = vadd.f32 0.0, %v4682
    %v4684 = vpop.f32.mrf.mxu0
    %v4685 = vpop.f32.mrf.mxu0
    %v4686 = vadd.f32 0.0, %v4685
    %v4687 = vpop.f32.mrf.mxu0
    %4688 = vmatprep.mubr.bf16.mxu0 0
    %4689 = vmatmul.mubr.bf16.gmra.mxu0 %v4646
    %v4690 = vpop.f32.mrf.mxu0
    %v4691 = vadd.f32 0.0, %v4690
    %v4692 = vpop.f32.mrf.mxu0
    %v4693 = vpop.f32.mrf.mxu0
    %v4694 = vadd.f32 0.0, %v4693
    %v4695 = vpop.f32.mrf.mxu0
    %4696 = vdwg.mxu0
    %4701 = vrot.lane.b32.xlu0 %v4331, 32
    %v4702 = vpop.permute.xlu0 %4701
    %4703 = vrot.lane.b32.xlu0 %v4334, 32
    %v4704 = vpop.permute.xlu0 %4703
    %4705 = vrot.lane.b32.xlu0 %v4339, 32
    %v4706 = vpop.permute.xlu0 %4705
    %4707 = vrot.lane.b32.xlu0 %v4342, 32
    %v4708 = vpop.permute.xlu0 %4707
    %4717 = vrot.lane.b32.xlu0 %v4507, 64
    %v4718 = vpop.permute.xlu0 %4717
    %4719 = vrot.lane.b32.xlu0 %v4510, 64
    %v4720 = vpop.permute.xlu0 %4719
    %4721 = vrot.lane.b32.xlu0 %v4515, 64
    %v4722 = vpop.permute.xlu0 %4721
    %4723 = vrot.lane.b32.xlu0 %v4518, 64
    %v4724 = vpop.permute.xlu0 %4723
    %4733 = vrot.lane.b32.xlu0 %v4683, 96
    %v4734 = vpop.permute.xlu0 %4733
    %4735 = vrot.lane.b32.xlu0 %v4686, 96
    %v4736 = vpop.permute.xlu0 %4735
    %4737 = vrot.lane.b32.xlu0 %v4691, 96
    %v4738 = vpop.permute.xlu0 %4737
    %4739 = vrot.lane.b32.xlu0 %v4694, 96
    %v4740 = vpop.permute.xlu0 %4739
    %v4745 = vsel %vm456, %v4149, %v4702
    %v4746 = vsel %vm456, %v4152, %v4704
    %v4747 = vsel %vm456, %v4157, %v4706
    %v4748 = vsel %vm456, %v4160, %v4708
    %v4749 = vsel %vm1207, %v4745, %v4718
    %v4750 = vsel %vm1207, %v4746, %v4720
    %v4751 = vsel %vm1207, %v4747, %v4722
    %v4752 = vsel %vm1207, %v4748, %v4724
    %v4753 = vsel %vm1212, %v4749, %v4734
    %v4754 = vsel %vm1212, %v4750, %v4736
    %v4755 = vsel %vm1212, %v4751, %v4738
    %v4756 = vsel %vm1212, %v4752, %v4740
    %v4757 = vpack.c.bf16 %v4754, %v4753
    %v4758 = vpack.c.bf16 %v4756, %v4755
    %v4775 = vunpack.c.l.b16 %v3978
    %v4776 = vunpack.c.l.b16 %v3979
    %v4777 = vunpack.c.l.b16 %v3980
    %v4778 = vunpack.c.l.b16 %v3981
    %v4779 = vunpack.c.l.b16 %v3982
    %v4780 = vunpack.c.l.b16 %v3983
    %v4781 = vunpack.c.l.b16 %v3984
    %v4782 = vunpack.c.l.b16 %v3985
    %v4783 = vunpack.c.l.b16 %v3986
    %v4784 = vunpack.c.l.b16 %v3987
    %v4785 = vunpack.c.l.b16 %v3988
    %v4786 = vunpack.c.l.b16 %v3989
    %v4787 = vunpack.c.l.b16 %v3990
    %v4788 = vunpack.c.l.b16 %v3991
    %v4789 = vunpack.c.l.b16 %v3992
    %v4790 = vunpack.c.l.b16 %v3993
    %v4791 = vpack.c.b16 %v4776, %v4775
    %v4792 = vpack.c.b16 %v4778, %v4777
    %v4793 = vpack.c.b16 %v4780, %v4779
    %v4794 = vpack.c.b16 %v4782, %v4781
    %v4795 = vpack.c.b16 %v4784, %v4783
    %v4796 = vpack.c.b16 %v4786, %v4785
    %v4797 = vpack.c.b16 %v4788, %v4787
    %v4798 = vpack.c.b16 %v4790, %v4789
    %4807 = vmatprep.subr.bf16.mxu0 0
    %4808 = vmatpush1.bf16.msra.mxu0 %v4798
    %4809 = vmatprep.subr.bf16.mxu0 0
    %4810 = vmatpush1.bf16.msra.mxu0 %v4797
    %4811 = vmatprep.subr.bf16.mxu0 0
    %4812 = vmatpush1.bf16.msra.mxu0 %v4796
    %4813 = vmatprep.subr.bf16.mxu0 0
    %4814 = vmatpush1.bf16.msra.mxu0 %v4795
    %4815 = vmatprep.subr.bf16.mxu0 0
    %4816 = vmatpush1.bf16.msra.mxu0 %v4794
    %4817 = vmatprep.subr.bf16.mxu0 0
    %4818 = vmatpush1.bf16.msra.mxu0 %v4793
    %4819 = vmatprep.subr.bf16.mxu0 0
    %4820 = vmatpush1.bf16.msra.mxu0 %v4792
    %4821 = vmatprep.subr.bf16.mxu0 0
    %4822 = vmatpush1.bf16.msra.mxu0 %v4791
    %4823 = vmatprep.subr.bf16.mxu0 0
    %4824 = vmatpush2.bf16.msra.mxu0 0
    %4825 = vmatprep.subr.bf16.mxu0 0
    %4826 = vmatpush2.bf16.msra.mxu0 0
    %4827 = vmatprep.subr.bf16.mxu0 0
    %4828 = vmatpush2.bf16.msra.mxu0 0
    %4829 = vmatprep.subr.bf16.mxu0 0
    %4830 = vmatpush2.bf16.msra.mxu0 0
    %4831 = vmatprep.subr.bf16.mxu0 0
    %4832 = vmatpush2.bf16.msra.mxu0 0
    %4833 = vmatprep.subr.bf16.mxu0 0
    %4834 = vmatpush2.bf16.msra.mxu0 0
    %4835 = vmatprep.subr.bf16.mxu0 0
    %4836 = vmatpush2.bf16.msra.mxu0 0
    %4837 = vmatprep.subr.bf16.mxu0 0
    %4838 = vmatpush2.bf16.msra.mxu0 0
    %4839 = vmatprep.mubr.bf16.mxu0 0
    %4840 = vmatmul.mubr.bf16.gmra.mxu0 %v4757
    %v4841 = vpop.f32.mrf.mxu0
    %v4842 = vadd.f32 %v3994, %v4841
    %v4843 = vpop.f32.mrf.mxu0
    %v4844 = vpop.f32.mrf.mxu0
    %v4845 = vadd.f32 %v3994, %v4844
    %v4846 = vpop.f32.mrf.mxu0
    %4847 = vmatprep.mubr.bf16.mxu0 0
    %4848 = vmatmul.mubr.bf16.gmra.mxu0 %v4758
    %v4849 = vpop.f32.mrf.mxu0
    %v4850 = vadd.f32 %v3994, %v4849
    %v4851 = vpop.f32.mrf.mxu0
    %v4852 = vpop.f32.mrf.mxu0
    %v4853 = vadd.f32 %v3994, %v4852
    %v4854 = vpop.f32.mrf.mxu0
    %4855 = vdwg.mxu0
    %v4856 = vadd.f32 %v4842, %v3694
    %v4857 = vadd.f32 %v4845, %v3695
    %v4858 = vadd.f32 %v4850, %v3696
    %v4859 = vadd.f32 %v4853, %v3697
    %4860 = vadd.xlane.f32.xlu0 %v4856
    %v4861 = vpop.xlane.xlu0 %4860
    %4862 = vadd.xlane.f32.xlu0 %v4857
    %v4863 = vpop.xlane.xlu0 %4862
    %4864 = vadd.xlane.f32.xlu0 %v4858
    %v4865 = vpop.xlane.xlu0 %4864
    %4866 = vadd.xlane.f32.xlu0 %v4859
    %v4867 = vpop.xlane.xlu0 %4866
    %v4868 = vmul.f32 %v4861, %v106
    %v4869 = vmul.f32 %v4863, %v106
    %v4870 = vmul.f32 %v4865, %v106
    %v4871 = vmul.f32 %v4867, %v106
    %v4872 = vsub.f32 %v4856, %v4868
    %v4873 = vsub.f32 %v4857, %v4869
    %v4874 = vsub.f32 %v4858, %v4870
    %v4875 = vsub.f32 %v4859, %v4871
    %v4876 = vmul.f32 %v4872, %v4872
    %v4877 = vmul.f32 %v4873, %v4873
    %v4878 = vmul.f32 %v4874, %v4874
    %v4879 = vmul.f32 %v4875, %v4875
    %4880 = vadd.xlane.f32.xlu0 %v4876
    %v4881 = vpop.xlane.xlu0 %4880
    %4882 = vadd.xlane.f32.xlu0 %v4877
    %v4883 = vpop.xlane.xlu0 %4882
    %4884 = vadd.xlane.f32.xlu0 %v4878
    %v4885 = vpop.xlane.xlu0 %4884
    %4886 = vadd.xlane.f32.xlu0 %v4879
    %v4887 = vpop.xlane.xlu0 %4886
    %v4888 = vmul.f32 %v4881, %v106
    %v4889 = vmul.f32 %v4883, %v106
    %v4890 = vmul.f32 %v4885, %v106
    %v4891 = vmul.f32 %v4887, %v106
    %v4892 = vadd.f32 %v4888, 1e-05
    %v4893 = vadd.f32 %v4889, 1e-05
    %v4894 = vadd.f32 %v4890, 1e-05
    %v4895 = vadd.f32 %v4891, 1e-05
    %v4896 = vrsqrt.pop %v4892
    %v4897 = vrsqrt.pop %v4893
    %v4898 = vrsqrt.pop %v4894
    %v4899 = vrsqrt.pop %v4895
    %v4900 = vmul.f32 %v4872, %v4896
    %v4901 = vmul.f32 %v4873, %v4897
    %v4902 = vmul.f32 %v4874, %v4898
    %v4903 = vmul.f32 %v4875, %v4899
    %v4904 = vld [vmem:[%s6 + $0x49] ss:$0 sm:$0xff]
    %v4905 = vmul.f32 %v4900, %v4904
    %v4906 = vmul.f32 %v4901, %v4904
    %v4907 = vmul.f32 %v4902, %v4904
    %v4908 = vmul.f32 %v4903, %v4904
    %v4909 = vld [vmem:[%s6 + $0x4a] ss:$0 sm:$0xff]
    %v4910 = vadd.f32 %v4905, %v4909
    %v4911 = vadd.f32 %v4906, %v4909
    %v4912 = vadd.f32 %v4907, %v4909
    %v4913 = vadd.f32 %v4908, %v4909
    %v4914 = vld [vmem:[#allocation2 + $0x38] sm:$0xff]
    %v4915 = vld [vmem:[#allocation2 + $0x94] sm:$0xff]
    %v4916 = vld [vmem:[#allocation2 + $0xf0] sm:$0xff]
    %v4917 = vld [vmem:[#allocation2 + $0x14c] sm:$0xff]
    %v4918 = vld [vmem:[#allocation2 + $0x1a8] sm:$0xff]
    %v4919 = vld [vmem:[#allocation2 + $0x204] sm:$0xff]
    %v4920 = vld [vmem:[#allocation2 + $0x260] sm:$0xff]
    %v4921 = vld [vmem:[#allocation2 + $0x2bc] sm:$0xff]
    %v4922 = vld [vmem:[#allocation2 + $0x318] sm:$0xff]
    %v4923 = vld [vmem:[#allocation2 + $0x374] sm:$0xff]
    %v4924 = vld [vmem:[#allocation2 + $0x3d0] sm:$0xff]
    %v4925 = vld [vmem:[#allocation2 + $0x42c] sm:$0xff]
    %v4926 = vld [vmem:[#allocation2 + $0x488] sm:$0xff]
    %v4927 = vld [vmem:[#allocation2 + $0x4e4] sm:$0xff]
    %v4928 = vld [vmem:[#allocation2 + $0x540] sm:$0xff]
    %v4929 = vld [vmem:[#allocation2 + $0x59c] sm:$0xff]
    %v4930 = vpack.c.bf16 %v4911, %v4910
    %v4931 = vpack.c.bf16 %v4913, %v4912
    %s4932 = scalar_lea.vmem %s6, 75
    %v4933 = vld [vmem:[%s4932] ss:$8 sm:$0x3]
    %v4935 = vlaneseq
    %v4936 = vshrl.u32 %v4935, 7
    %v4937 = vsub.s32 0, %v4936
    %v4938 = vrot.slane %v4933, %v4937
    %v4939 = vlaneseq
    %v4940 = vshrl.u32 %v4939, 7
    %v4941 = vsub.s32 1, %v4940
    %v4942 = vrot.slane %v4933, %v4941
    %v4961 = vunpack.c.l.b16 %v4914
    %v4962 = vunpack.c.h.b16 %v4914
    %v4963 = vunpack.c.l.b16 %v4915
    %v4964 = vunpack.c.h.b16 %v4915
    %v4965 = vunpack.c.l.b16 %v4916
    %v4966 = vunpack.c.h.b16 %v4916
    %v4967 = vunpack.c.l.b16 %v4917
    %v4968 = vunpack.c.h.b16 %v4917
    %v4969 = vunpack.c.l.b16 %v4918
    %v4970 = vunpack.c.h.b16 %v4918
    %v4971 = vunpack.c.l.b16 %v4919
    %v4972 = vunpack.c.h.b16 %v4919
    %v4973 = vunpack.c.l.b16 %v4920
    %v4974 = vunpack.c.h.b16 %v4920
    %v4975 = vunpack.c.l.b16 %v4921
    %v4976 = vunpack.c.h.b16 %v4921
    %v4977 = vunpack.c.l.b16 %v4922
    %v4978 = vunpack.c.h.b16 %v4922
    %v4979 = vunpack.c.l.b16 %v4923
    %v4980 = vunpack.c.h.b16 %v4923
    %v4981 = vunpack.c.l.b16 %v4924
    %v4982 = vunpack.c.h.b16 %v4924
    %v4983 = vunpack.c.l.b16 %v4925
    %v4984 = vunpack.c.h.b16 %v4925
    %v4985 = vunpack.c.l.b16 %v4926
    %v4986 = vunpack.c.h.b16 %v4926
    %v4987 = vunpack.c.l.b16 %v4927
    %v4988 = vunpack.c.h.b16 %v4927
    %v4989 = vunpack.c.l.b16 %v4928
    %v4990 = vunpack.c.h.b16 %v4928
    %v4991 = vunpack.c.l.b16 %v4929
    %v4992 = vunpack.c.h.b16 %v4929
    %v4993 = vpack.c.b16 %v4963, %v4961
    %v4994 = vpack.c.b16 %v4964, %v4962
    %v4995 = vpack.c.b16 %v4967, %v4965
    %v4996 = vpack.c.b16 %v4968, %v4966
    %v4997 = vpack.c.b16 %v4971, %v4969
    %v4998 = vpack.c.b16 %v4972, %v4970
    %v4999 = vpack.c.b16 %v4975, %v4973
    %v5000 = vpack.c.b16 %v4976, %v4974
    %v5001 = vpack.c.b16 %v4979, %v4977
    %v5002 = vpack.c.b16 %v4980, %v4978
    %v5003 = vpack.c.b16 %v4983, %v4981
    %v5004 = vpack.c.b16 %v4984, %v4982
    %v5005 = vpack.c.b16 %v4987, %v4985
    %v5006 = vpack.c.b16 %v4988, %v4986
    %v5007 = vpack.c.b16 %v4991, %v4989
    %v5008 = vpack.c.b16 %v4992, %v4990
    %5025 = vmatprep.subr.bf16.mxu0 %v5008
    %5026 = vmatpush1.bf16.msra.mxu0 %v5007
    %5027 = vmatprep.subr.bf16.mxu0 %v5006
    %5028 = vmatpush1.bf16.msra.mxu0 %v5005
    %5029 = vmatprep.subr.bf16.mxu0 %v5004
    %5030 = vmatpush1.bf16.msra.mxu0 %v5003
    %5031 = vmatprep.subr.bf16.mxu0 %v5002
    %5032 = vmatpush1.bf16.msra.mxu0 %v5001
    %5033 = vmatprep.subr.bf16.mxu0 %v5000
    %5034 = vmatpush1.bf16.msra.mxu0 %v4999
    %5035 = vmatprep.subr.bf16.mxu0 %v4998
    %5036 = vmatpush1.bf16.msra.mxu0 %v4997
    %5037 = vmatprep.subr.bf16.mxu0 %v4996
    %5038 = vmatpush1.bf16.msra.mxu0 %v4995
    %5039 = vmatprep.subr.bf16.mxu0 %v4994
    %5040 = vmatpush1.bf16.msra.mxu0 %v4993
    %5041 = vmatprep.subr.bf16.mxu0 0
    %5042 = vmatpush2.bf16.msra.mxu0 0
    %5043 = vmatprep.subr.bf16.mxu0 0
    %5044 = vmatpush2.bf16.msra.mxu0 0
    %5045 = vmatprep.subr.bf16.mxu0 0
    %5046 = vmatpush2.bf16.msra.mxu0 0
    %5047 = vmatprep.subr.bf16.mxu0 0
    %5048 = vmatpush2.bf16.msra.mxu0 0
    %5049 = vmatprep.subr.bf16.mxu0 0
    %5050 = vmatpush2.bf16.msra.mxu0 0
    %5051 = vmatprep.subr.bf16.mxu0 0
    %5052 = vmatpush2.bf16.msra.mxu0 0
    %5053 = vmatprep.subr.bf16.mxu0 0
    %5054 = vmatpush2.bf16.msra.mxu0 0
    %5055 = vmatprep.subr.bf16.mxu0 0
    %5056 = vmatpush2.bf16.msra.mxu0 0
    %5057 = vmatprep.mubr.bf16.mxu0 0
    %5058 = vmatmul.mubr.bf16.gmra.mxu0 %v4930
    %v5059 = vpop.f32.mrf.mxu0
    %v5060 = vadd.f32 %v4938, %v5059
    %v5061 = vpop.f32.mrf.mxu0
    %v5062 = vadd.f32 %v4942, %v5061
    %v5063 = vpop.f32.mrf.mxu0
    %v5064 = vadd.f32 %v4938, %v5063
    %v5065 = vpop.f32.mrf.mxu0
    %v5066 = vadd.f32 %v4942, %v5065
    %5067 = vmatprep.mubr.bf16.mxu0 0
    %5068 = vmatmul.mubr.bf16.gmra.mxu0 %v4931
    %v5069 = vpop.f32.mrf.mxu0
    %v5070 = vadd.f32 %v4938, %v5069
    %v5071 = vpop.f32.mrf.mxu0
    %v5072 = vadd.f32 %v4942, %v5071
    %v5073 = vpop.f32.mrf.mxu0
    %v5074 = vadd.f32 %v4938, %v5073
    %v5075 = vpop.f32.mrf.mxu0
    %v5076 = vadd.f32 %v4942, %v5075
    %5077 = vdwg.mxu0
    %v5078 = vmul.f32 %v5060, 0.5
    %v5079 = vmul.f32 %v5062, 0.5
    %v5080 = vmul.f32 %v5064, 0.5
    %v5081 = vmul.f32 %v5066, 0.5
    %v5082 = vmul.f32 %v5070, 0.5
    %v5083 = vmul.f32 %v5072, 0.5
    %v5084 = vmul.f32 %v5074, 0.5
    %v5085 = vmul.f32 %v5076, 0.5
    %v5086 = vmul.f32 %v5060, 0.044715
    %v5087 = vmul.f32 %v5062, 0.044715
    %v5088 = vmul.f32 %v5064, 0.044715
    %v5089 = vmul.f32 %v5066, 0.044715
    %v5090 = vmul.f32 %v5070, 0.044715
    %v5091 = vmul.f32 %v5072, 0.044715
    %v5092 = vmul.f32 %v5074, 0.044715
    %v5093 = vmul.f32 %v5076, 0.044715
    %v5094 = vmul.f32 %v5086, %v5060
    %v5095 = vmul.f32 %v5087, %v5062
    %v5096 = vmul.f32 %v5088, %v5064
    %v5097 = vmul.f32 %v5089, %v5066
    %v5098 = vmul.f32 %v5090, %v5070
    %v5099 = vmul.f32 %v5091, %v5072
    %v5100 = vmul.f32 %v5092, %v5074
    %v5101 = vmul.f32 %v5093, %v5076
    %v5102 = vmul.f32 %v5094, %v5060
    %v5103 = vmul.f32 %v5095, %v5062
    %v5104 = vmul.f32 %v5096, %v5064
    %v5105 = vmul.f32 %v5097, %v5066
    %v5106 = vmul.f32 %v5098, %v5070
    %v5107 = vmul.f32 %v5099, %v5072
    %v5108 = vmul.f32 %v5100, %v5074
    %v5109 = vmul.f32 %v5101, %v5076
    %v5110 = vadd.f32 %v5060, %v5102
    %v5111 = vadd.f32 %v5062, %v5103
    %v5112 = vadd.f32 %v5064, %v5104
    %v5113 = vadd.f32 %v5066, %v5105
    %v5114 = vadd.f32 %v5070, %v5106
    %v5115 = vadd.f32 %v5072, %v5107
    %v5116 = vadd.f32 %v5074, %v5108
    %v5117 = vadd.f32 %v5076, %v5109
    %v5118 = vmul.f32 %v5110, 0.7978846
    %v5119 = vmul.f32 %v5111, 0.7978846
    %v5120 = vmul.f32 %v5112, 0.7978846
    %v5121 = vmul.f32 %v5113, 0.7978846
    %v5122 = vmul.f32 %v5114, 0.7978846
    %v5123 = vmul.f32 %v5115, 0.7978846
    %v5124 = vmul.f32 %v5116, 0.7978846
    %v5125 = vmul.f32 %v5117, 0.7978846
    %v5126 = vtanh.pop %v5118
    %v5127 = vtanh.pop %v5119
    %v5128 = vtanh.pop %v5120
    %v5129 = vtanh.pop %v5121
    %v5130 = vtanh.pop %v5122
    %v5131 = vtanh.pop %v5123
    %v5132 = vtanh.pop %v5124
    %v5133 = vtanh.pop %v5125
    %v5134 = vadd.f32 %v5126, 1.0
    %v5135 = vadd.f32 %v5127, 1.0
    %v5136 = vadd.f32 %v5128, 1.0
    %v5137 = vadd.f32 %v5129, 1.0
    %v5138 = vadd.f32 %v5130, 1.0
    %v5139 = vadd.f32 %v5131, 1.0
    %v5140 = vadd.f32 %v5132, 1.0
    %v5141 = vadd.f32 %v5133, 1.0
    %v5142 = vmul.f32 %v5078, %v5134
    %v5143 = vmul.f32 %v5079, %v5135
    %v5144 = vmul.f32 %v5080, %v5136
    %v5145 = vmul.f32 %v5081, %v5137
    %v5146 = vmul.f32 %v5082, %v5138
    %v5147 = vmul.f32 %v5083, %v5139
    %v5148 = vmul.f32 %v5084, %v5140
    %v5149 = vmul.f32 %v5085, %v5141
    %v5150 = vld [vmem:[%s5 + $0x80] sm:$0xf]
    %v5151 = vld [vmem:[%s5 + $0x84] sm:$0xf]
    %v5152 = vld [vmem:[%s5 + $0x88] sm:$0xf]
    %v5153 = vld [vmem:[%s5 + $0x8c] sm:$0xf]
    %v5154 = vld [vmem:[%s5 + $0x90] sm:$0xf]
    %v5155 = vld [vmem:[%s5 + $0x94] sm:$0xf]
    %v5156 = vld [vmem:[%s5 + $0x98] sm:$0xf]
    %v5157 = vld [vmem:[%s5 + $0x9c] sm:$0xf]
    %v5158 = vld [vmem:[%s5 + $0xa0] sm:$0xf]
    %v5159 = vld [vmem:[%s5 + $0xa4] sm:$0xf]
    %v5160 = vld [vmem:[%s5 + $0xa8] sm:$0xf]
    %v5161 = vld [vmem:[%s5 + $0xac] sm:$0xf]
    %v5162 = vld [vmem:[%s5 + $0xb0] sm:$0xf]
    %v5163 = vld [vmem:[%s5 + $0xb4] sm:$0xf]
    %v5164 = vld [vmem:[%s5 + $0xb8] sm:$0xf]
    %v5165 = vld [vmem:[%s5 + $0xbc] sm:$0xf]
    %v5166 = vld [vmem:[%s5 + $0xc0] sm:$0xf]
    %v5167 = vld [vmem:[%s5 + $0xc4] sm:$0xf]
    %v5168 = vld [vmem:[%s5 + $0xc8] sm:$0xf]
    %v5169 = vld [vmem:[%s5 + $0xcc] sm:$0xf]
    %v5170 = vld [vmem:[%s5 + $0xd0] sm:$0xf]
    %v5171 = vld [vmem:[%s5 + $0xd4] sm:$0xf]
    %v5172 = vld [vmem:[%s5 + $0xd8] sm:$0xf]
    %v5173 = vld [vmem:[%s5 + $0xdc] sm:$0xf]
    %v5174 = vld [vmem:[%s5 + $0xe0] sm:$0xf]
    %v5175 = vld [vmem:[%s5 + $0xe4] sm:$0xf]
    %v5176 = vld [vmem:[%s5 + $0xe8] sm:$0xf]
    %v5177 = vld [vmem:[%s5 + $0xec] sm:$0xf]
    %v5178 = vld [vmem:[%s5 + $0xf0] sm:$0xf]
    %v5179 = vld [vmem:[%s5 + $0xf4] sm:$0xf]
    %v5180 = vld [vmem:[%s5 + $0xf8] sm:$0xf]
    %v5181 = vld [vmem:[%s5 + $0xfc] sm:$0xf]
    %v5182 = vpack.c.bf16 %v5144, %v5142
    %v5183 = vpack.c.bf16 %v5145, %v5143
    %v5184 = vpack.c.bf16 %v5148, %v5146
    %v5185 = vpack.c.bf16 %v5149, %v5147
    %v5186 = vld [vmem:[%s6 + $0x4c] ss:$0 sm:$0xff]
    %v5219 = vunpack.c.l.b16 %v5150
    %v5220 = vunpack.c.l.b16 %v5151
    %v5221 = vunpack.c.l.b16 %v5152
    %v5222 = vunpack.c.l.b16 %v5153
    %v5223 = vunpack.c.l.b16 %v5154
    %v5224 = vunpack.c.l.b16 %v5155
    %v5225 = vunpack.c.l.b16 %v5156
    %v5226 = vunpack.c.l.b16 %v5157
    %v5227 = vunpack.c.l.b16 %v5158
    %v5228 = vunpack.c.l.b16 %v5159
    %v5229 = vunpack.c.l.b16 %v5160
    %v5230 = vunpack.c.l.b16 %v5161
    %v5231 = vunpack.c.l.b16 %v5162
    %v5232 = vunpack.c.l.b16 %v5163
    %v5233 = vunpack.c.l.b16 %v5164
    %v5234 = vunpack.c.l.b16 %v5165
    %v5235 = vunpack.c.l.b16 %v5166
    %v5236 = vunpack.c.l.b16 %v5167
    %v5237 = vunpack.c.l.b16 %v5168
    %v5238 = vunpack.c.l.b16 %v5169
    %v5239 = vunpack.c.l.b16 %v5170
    %v5240 = vunpack.c.l.b16 %v5171
    %v5241 = vunpack.c.l.b16 %v5172
    %v5242 = vunpack.c.l.b16 %v5173
    %v5243 = vunpack.c.l.b16 %v5174
    %v5244 = vunpack.c.l.b16 %v5175
    %v5245 = vunpack.c.l.b16 %v5176
    %v5246 = vunpack.c.l.b16 %v5177
    %v5247 = vunpack.c.l.b16 %v5178
    %v5248 = vunpack.c.l.b16 %v5179
    %v5249 = vunpack.c.l.b16 %v5180
    %v5250 = vunpack.c.l.b16 %v5181
    %v5251 = vpack.c.b16 %v5220, %v5219
    %v5252 = vpack.c.b16 %v5222, %v5221
    %v5253 = vpack.c.b16 %v5224, %v5223
    %v5254 = vpack.c.b16 %v5226, %v5225
    %v5255 = vpack.c.b16 %v5228, %v5227
    %v5256 = vpack.c.b16 %v5230, %v5229
    %v5257 = vpack.c.b16 %v5232, %v5231
    %v5258 = vpack.c.b16 %v5234, %v5233
    %v5259 = vpack.c.b16 %v5236, %v5235
    %v5260 = vpack.c.b16 %v5238, %v5237
    %v5261 = vpack.c.b16 %v5240, %v5239
    %v5262 = vpack.c.b16 %v5242, %v5241
    %v5263 = vpack.c.b16 %v5244, %v5243
    %v5264 = vpack.c.b16 %v5246, %v5245
    %v5265 = vpack.c.b16 %v5248, %v5247
    %v5266 = vpack.c.b16 %v5250, %v5249
    %5283 = vmatprep.subr.bf16.mxu0 0
    %5284 = vmatpush1.bf16.msra.mxu0 %v5258
    %5285 = vmatprep.subr.bf16.mxu0 0
    %5286 = vmatpush1.bf16.msra.mxu0 %v5257
    %5287 = vmatprep.subr.bf16.mxu0 0
    %5288 = vmatpush1.bf16.msra.mxu0 %v5256
    %5289 = vmatprep.subr.bf16.mxu0 0
    %5290 = vmatpush1.bf16.msra.mxu0 %v5255
    %5291 = vmatprep.subr.bf16.mxu0 0
    %5292 = vmatpush1.bf16.msra.mxu0 %v5254
    %5293 = vmatprep.subr.bf16.mxu0 0
    %5294 = vmatpush1.bf16.msra.mxu0 %v5253
    %5295 = vmatprep.subr.bf16.mxu0 0
    %5296 = vmatpush1.bf16.msra.mxu0 %v5252
    %5297 = vmatprep.subr.bf16.mxu0 0
    %5298 = vmatpush1.bf16.msra.mxu0 %v5251
    %5299 = vmatprep.subr.bf16.mxu0 0
    %5300 = vmatpush2.bf16.msra.mxu0 %v5266
    %5301 = vmatprep.subr.bf16.mxu0 0
    %5302 = vmatpush2.bf16.msra.mxu0 %v5265
    %5303 = vmatprep.subr.bf16.mxu0 0
    %5304 = vmatpush2.bf16.msra.mxu0 %v5264
    %5305 = vmatprep.subr.bf16.mxu0 0
    %5306 = vmatpush2.bf16.msra.mxu0 %v5263
    %5307 = vmatprep.subr.bf16.mxu0 0
    %5308 = vmatpush2.bf16.msra.mxu0 %v5262
    %5309 = vmatprep.subr.bf16.mxu0 0
    %5310 = vmatpush2.bf16.msra.mxu0 %v5261
    %5311 = vmatprep.subr.bf16.mxu0 0
    %5312 = vmatpush2.bf16.msra.mxu0 %v5260
    %5313 = vmatprep.subr.bf16.mxu0 0
    %5314 = vmatpush2.bf16.msra.mxu0 %v5259
    %5315 = vmatprep.mubr.bf16.mxu0 %v5183
    %5316 = vmatmul.mubr.bf16.gmra.mxu0 %v5182
    %v5317 = vpop.f32.mrf.mxu0
    %v5318 = vadd.f32 %v5186, %v5317
    %v5319 = vpop.f32.mrf.mxu0
    %v5320 = vpop.f32.mrf.mxu0
    %v5321 = vadd.f32 %v5186, %v5320
    %v5322 = vpop.f32.mrf.mxu0
    %5323 = vmatprep.mubr.bf16.mxu0 %v5185
    %5324 = vmatmul.mubr.bf16.gmra.mxu0 %v5184
    %v5325 = vpop.f32.mrf.mxu0
    %v5326 = vadd.f32 %v5186, %v5325
    %v5327 = vpop.f32.mrf.mxu0
    %v5328 = vpop.f32.mrf.mxu0
    %v5329 = vadd.f32 %v5186, %v5328
    %v5330 = vpop.f32.mrf.mxu0
    %5331 = vdwg.mxu0
    %v5332 = vld [vmem:[#allocation2 + $0x58] sm:$0xf]
    %v5333 = vld [vmem:[#allocation2 + $0xb4] sm:$0xf]
    %v5334 = vld [vmem:[#allocation2 + $0x110] sm:$0xf]
    %v5335 = vld [vmem:[#allocation2 + $0x16c] sm:$0xf]
    %v5336 = vld [vmem:[#allocation2 + $0x1c8] sm:$0xf]
    %v5337 = vld [vmem:[#allocation2 + $0x224] sm:$0xf]
    %v5338 = vld [vmem:[#allocation2 + $0x280] sm:$0xf]
    %v5339 = vld [vmem:[#allocation2 + $0x2dc] sm:$0xf]
    %v5340 = vld [vmem:[#allocation2 + $0x338] sm:$0xf]
    %v5341 = vld [vmem:[#allocation2 + $0x394] sm:$0xf]
    %v5342 = vld [vmem:[#allocation2 + $0x3f0] sm:$0xf]
    %v5343 = vld [vmem:[#allocation2 + $0x44c] sm:$0xf]
    %v5344 = vld [vmem:[#allocation2 + $0x4a8] sm:$0xf]
    %v5345 = vld [vmem:[#allocation2 + $0x504] sm:$0xf]
    %v5346 = vld [vmem:[#allocation2 + $0x560] sm:$0xf]
    %v5347 = vld [vmem:[#allocation2 + $0x5bc] sm:$0xf]
    %v5348 = vpack.c.bf16 %v5321, %v5318
    %v5349 = vpack.c.bf16 %v5329, %v5326
    %v5350 = vld [vmem:[%s6 + $0x4d] ss:$0 sm:$0xff]
    %v5367 = vunpack.c.l.b16 %v5332
    %v5368 = vunpack.c.l.b16 %v5333
    %v5369 = vunpack.c.l.b16 %v5334
    %v5370 = vunpack.c.l.b16 %v5335
    %v5371 = vunpack.c.l.b16 %v5336
    %v5372 = vunpack.c.l.b16 %v5337
    %v5373 = vunpack.c.l.b16 %v5338
    %v5374 = vunpack.c.l.b16 %v5339
    %v5375 = vunpack.c.l.b16 %v5340
    %v5376 = vunpack.c.l.b16 %v5341
    %v5377 = vunpack.c.l.b16 %v5342
    %v5378 = vunpack.c.l.b16 %v5343
    %v5379 = vunpack.c.l.b16 %v5344
    %v5380 = vunpack.c.l.b16 %v5345
    %v5381 = vunpack.c.l.b16 %v5346
    %v5382 = vunpack.c.l.b16 %v5347
    %v5383 = vpack.c.b16 %v5368, %v5367
    %v5384 = vpack.c.b16 %v5370, %v5369
    %v5385 = vpack.c.b16 %v5372, %v5371
    %v5386 = vpack.c.b16 %v5374, %v5373
    %v5387 = vpack.c.b16 %v5376, %v5375
    %v5388 = vpack.c.b16 %v5378, %v5377
    %v5389 = vpack.c.b16 %v5380, %v5379
    %v5390 = vpack.c.b16 %v5382, %v5381
    %5399 = vmatprep.subr.bf16.mxu0 0
    %5400 = vmatpush1.bf16.msra.mxu0 %v5390
    %5401 = vmatprep.subr.bf16.mxu0 0
    %5402 = vmatpush1.bf16.msra.mxu0 %v5389
    %5403 = vmatprep.subr.bf16.mxu0 0
    %5404 = vmatpush1.bf16.msra.mxu0 %v5388
    %5405 = vmatprep.subr.bf16.mxu0 0
    %5406 = vmatpush1.bf16.msra.mxu0 %v5387
    %5407 = vmatprep.subr.bf16.mxu0 0
    %5408 = vmatpush1.bf16.msra.mxu0 %v5386
    %5409 = vmatprep.subr.bf16.mxu0 0
    %5410 = vmatpush1.bf16.msra.mxu0 %v5385
    %5411 = vmatprep.subr.bf16.mxu0 0
    %5412 = vmatpush1.bf16.msra.mxu0 %v5384
    %5413 = vmatprep.subr.bf16.mxu0 0
    %5414 = vmatpush1.bf16.msra.mxu0 %v5383
    %5415 = vmatprep.subr.bf16.mxu0 0
    %5416 = vmatpush2.bf16.msra.mxu0 0
    %5417 = vmatprep.subr.bf16.mxu0 0
    %5418 = vmatpush2.bf16.msra.mxu0 0
    %5419 = vmatprep.subr.bf16.mxu0 0
    %5420 = vmatpush2.bf16.msra.mxu0 0
    %5421 = vmatprep.subr.bf16.mxu0 0
    %5422 = vmatpush2.bf16.msra.mxu0 0
    %5423 = vmatprep.subr.bf16.mxu0 0
    %5424 = vmatpush2.bf16.msra.mxu0 0
    %5425 = vmatprep.subr.bf16.mxu0 0
    %5426 = vmatpush2.bf16.msra.mxu0 0
    %5427 = vmatprep.subr.bf16.mxu0 0
    %5428 = vmatpush2.bf16.msra.mxu0 0
    %5429 = vmatprep.subr.bf16.mxu0 0
    %5430 = vmatpush2.bf16.msra.mxu0 0
    %5431 = vmatprep.mubr.bf16.mxu0 0
    %5432 = vmatmul.mubr.bf16.gmra.mxu0 %v5348
    %v5433 = vpop.f32.mrf.mxu0
    %v5434 = vadd.f32 %v5350, %v5433
    %v5435 = vpop.f32.mrf.mxu0
    %v5436 = vpop.f32.mrf.mxu0
    %v5437 = vadd.f32 %v5350, %v5436
    %v5438 = vpop.f32.mrf.mxu0
    %5439 = vmatprep.mubr.bf16.mxu0 0
    %5440 = vmatmul.mubr.bf16.gmra.mxu0 %v5349
    %v5441 = vpop.f32.mrf.mxu0
    %v5442 = vadd.f32 %v5350, %v5441
    %v5443 = vpop.f32.mrf.mxu0
    %v5444 = vpop.f32.mrf.mxu0
    %v5445 = vadd.f32 %v5350, %v5444
    %v5446 = vpop.f32.mrf.mxu0
    %5447 = vdwg.mxu0
    %v5448 = vmax.f32 %v5434, 0.0
    %v5449 = vmax.f32 %v5437, 0.0
    %v5450 = vmax.f32 %v5442, 0.0
    %v5451 = vmax.f32 %v5445, 0.0
    %v5452 = vld [vmem:[%s5 + $0x118] sm:$0xf]
    %v5453 = vpack.c.bf16 %v5449, %v5448
    %v5454 = vpack.c.bf16 %v5451, %v5450
    %v5456 = vsel %vm1439, %v5453, 0
    %v5459 = vsel %vm1439, %v5454, 0
    %v5462 = vsel %vm1446, %v5452, 0
    %5464 = vmatprep.subr.bf16.mxu0 0
    %5465 = vmatpush1.bf16.msra.mxu0 0
    %5466 = vmatprep.subr.bf16.mxu0 0
    %5467 = vmatpush1.bf16.msra.mxu0 0
    %5468 = vmatprep.subr.bf16.mxu0 0
    %5469 = vmatpush1.bf16.msra.mxu0 0
    %5470 = vmatprep.subr.bf16.mxu0 0
    %5471 = vmatpush1.bf16.msra.mxu0 0
    %5472 = vmatprep.subr.bf16.mxu0 0
    %5473 = vmatpush1.bf16.msra.mxu0 0
    %5474 = vmatprep.subr.bf16.mxu0 0
    %5475 = vmatpush1.bf16.msra.mxu0 0
    %5476 = vmatprep.subr.bf16.mxu0 0
    %5477 = vmatpush1.bf16.msra.mxu0 0
    %5478 = vmatprep.subr.bf16.mxu0 0
    %5479 = vmatpush1.bf16.msra.mxu0 %v5462
    %5480 = vmatprep.subr.bf16.mxu0 0
    %5481 = vmatpush2.bf16.msra.mxu0 0
    %5482 = vmatprep.subr.bf16.mxu0 0
    %5483 = vmatpush2.bf16.msra.mxu0 0
    %5484 = vmatprep.subr.bf16.mxu0 0
    %5485 = vmatpush2.bf16.msra.mxu0 0
    %5486 = vmatprep.subr.bf16.mxu0 0
    %5487 = vmatpush2.bf16.msra.mxu0 0
    %5488 = vmatprep.subr.bf16.mxu0 0
    %5489 = vmatpush2.bf16.msra.mxu0 0
    %5490 = vmatprep.subr.bf16.mxu0 0
    %5491 = vmatpush2.bf16.msra.mxu0 0
    %5492 = vmatprep.subr.bf16.mxu0 0
    %5493 = vmatpush2.bf16.msra.mxu0 0
    %5494 = vmatprep.subr.bf16.mxu0 0
    %5495 = vmatpush2.bf16.msra.mxu0 0
    %5496 = vmatprep.mubr.bf16.mxu0 0
    %5497 = vmatmul.mubr.bf16.gmra.mxu0 %v5456
    %v5498 = vpop.f32.mrf.mxu0
    %v5499 = vadd.f32 0.0, %v5498
    %v5500 = vpop.f32.mrf.mxu0
    %v5501 = vpop.f32.mrf.mxu0
    %v5502 = vadd.f32 0.0, %v5501
    %v5503 = vpop.f32.mrf.mxu0
    %5504 = vmatprep.mubr.bf16.mxu0 0
    %5505 = vmatmul.mubr.bf16.gmra.mxu0 %v5459
    %v5506 = vpop.f32.mrf.mxu0
    %v5507 = vadd.f32 0.0, %v5506
    %v5508 = vpop.f32.mrf.mxu0
    %v5509 = vpop.f32.mrf.mxu0
    %v5510 = vadd.f32 0.0, %v5509
    %v5511 = vpop.f32.mrf.mxu0
    %5512 = vdwg.mxu0
    %v5513 = vadd.f32 %v5318, %v5499
    %v5514 = vadd.f32 %v5321, %v5502
    %v5515 = vadd.f32 %v5326, %v5507
    %v5516 = vadd.f32 %v5329, %v5510
    %v5517 = vld [vmem:[%s6 + $0x4e] ss:$0 sm:$0xff]
    %v5518 = vadd.f32 %v5513, %v5517
    %v5519 = vadd.f32 %v5514, %v5517
    %v5520 = vadd.f32 %v5515, %v5517
    %v5521 = vadd.f32 %v5516, %v5517
    %v5522 = vadd.f32 %v5518, %v4910
    %v5523 = vadd.f32 %v5519, %v4911
    %v5524 = vadd.f32 %v5520, %v4912
    %v5525 = vadd.f32 %v5521, %v4913
    %5526 = vadd.xlane.f32.xlu0 %v5522
    %v5527 = vpop.xlane.xlu0 %5526
    %5528 = vadd.xlane.f32.xlu0 %v5523
    %v5529 = vpop.xlane.xlu0 %5528
    %5530 = vadd.xlane.f32.xlu0 %v5524
    %v5531 = vpop.xlane.xlu0 %5530
    %5532 = vadd.xlane.f32.xlu0 %v5525
    %v5533 = vpop.xlane.xlu0 %5532
    %v5534 = vmul.f32 %v5527, %v106
    %v5535 = vmul.f32 %v5529, %v106
    %v5536 = vmul.f32 %v5531, %v106
    %v5537 = vmul.f32 %v5533, %v106
    %v5538 = vsub.f32 %v5522, %v5534
    %v5539 = vsub.f32 %v5523, %v5535
    %v5540 = vsub.f32 %v5524, %v5536
    %v5541 = vsub.f32 %v5525, %v5537
    %v5542 = vmul.f32 %v5538, %v5538
    %v5543 = vmul.f32 %v5539, %v5539
    %v5544 = vmul.f32 %v5540, %v5540
    %v5545 = vmul.f32 %v5541, %v5541
    %5546 = vadd.xlane.f32.xlu0 %v5542
    %v5547 = vpop.xlane.xlu0 %5546
    %5548 = vadd.xlane.f32.xlu0 %v5543
    %v5549 = vpop.xlane.xlu0 %5548
    %5550 = vadd.xlane.f32.xlu0 %v5544
    %v5551 = vpop.xlane.xlu0 %5550
    %5552 = vadd.xlane.f32.xlu0 %v5545
    %v5553 = vpop.xlane.xlu0 %5552
    %v5554 = vmul.f32 %v5547, %v106
    %v5555 = vmul.f32 %v5549, %v106
    %v5556 = vmul.f32 %v5551, %v106
    %v5557 = vmul.f32 %v5553, %v106
    %v5558 = vadd.f32 %v5554, 1e-05
    %v5559 = vadd.f32 %v5555, 1e-05
    %v5560 = vadd.f32 %v5556, 1e-05
    %v5561 = vadd.f32 %v5557, 1e-05
    %v5562 = vrsqrt.pop %v5558
    %v5563 = vrsqrt.pop %v5559
    %v5564 = vrsqrt.pop %v5560
    %v5565 = vrsqrt.pop %v5561
    %v5566 = vmul.f32 %v5538, %v5562
    %v5567 = vmul.f32 %v5539, %v5563
    %v5568 = vmul.f32 %v5540, %v5564
    %v5569 = vmul.f32 %v5541, %v5565
    %v5570 = vld [vmem:[%s6 + $0x4f] ss:$0 sm:$0xff]
    %v5571 = vmul.f32 %v5566, %v5570
    %v5572 = vmul.f32 %v5567, %v5570
    %v5573 = vmul.f32 %v5568, %v5570
    %v5574 = vmul.f32 %v5569, %v5570
    %v5575 = vld [vmem:[%s6 + $0x60] ss:$0 sm:$0xff]
    %v5576 = vadd.f32 %v5571, %v5575
    %v5577 = vadd.f32 %v5572, %v5575
    %v5578 = vadd.f32 %v5573, %v5575
    %v5579 = vadd.f32 %v5574, %v5575
    %v5580 = vld [vmem:[#allocation2 + $0x40] sm:$0xff]
    %v5581 = vld [vmem:[#allocation2 + $0x48] sm:$0xf]
    %v5582 = vld [vmem:[#allocation2 + $0x9c] sm:$0xff]
    %v5583 = vld [vmem:[#allocation2 + $0xa4] sm:$0xf]
    %v5584 = vld [vmem:[#allocation2 + $0xf8] sm:$0xff]
    %v5585 = vld [vmem:[#allocation2 + $0x100] sm:$0xf]
    %v5586 = vld [vmem:[#allocation2 + $0x154] sm:$0xff]
    %v5587 = vld [vmem:[#allocation2 + $0x15c] sm:$0xf]
    %v5588 = vld [vmem:[#allocation2 + $0x1b0] sm:$0xff]
    %v5589 = vld [vmem:[#allocation2 + $0x1b8] sm:$0xf]
    %v5590 = vld [vmem:[#allocation2 + $0x20c] sm:$0xff]
    %v5591 = vld [vmem:[#allocation2 + $0x214] sm:$0xf]
    %v5592 = vld [vmem:[#allocation2 + $0x268] sm:$0xff]
    %v5593 = vld [vmem:[#allocation2 + $0x270] sm:$0xf]
    %v5594 = vld [vmem:[#allocation2 + $0x2c4] sm:$0xff]
    %v5595 = vld [vmem:[#allocation2 + $0x2cc] sm:$0xf]
    %v5596 = vld [vmem:[#allocation2 + $0x320] sm:$0xff]
    %v5597 = vld [vmem:[#allocation2 + $0x328] sm:$0xf]
    %v5598 = vld [vmem:[#allocation2 + $0x37c] sm:$0xff]
    %v5599 = vld [vmem:[#allocation2 + $0x384] sm:$0xf]
    %v5600 = vld [vmem:[#allocation2 + $0x3d8] sm:$0xff]
    %v5601 = vld [vmem:[#allocation2 + $0x3e0] sm:$0xf]
    %v5602 = vld [vmem:[#allocation2 + $0x434] sm:$0xff]
    %v5603 = vld [vmem:[#allocation2 + $0x43c] sm:$0xf]
    %v5604 = vld [vmem:[#allocation2 + $0x490] sm:$0xff]
    %v5605 = vld [vmem:[#allocation2 + $0x498] sm:$0xf]
    %v5606 = vld [vmem:[#allocation2 + $0x4ec] sm:$0xff]
    %v5607 = vld [vmem:[#allocation2 + $0x4f4] sm:$0xf]
    %v5608 = vld [vmem:[#allocation2 + $0x548] sm:$0xff]
    %v5609 = vld [vmem:[#allocation2 + $0x550] sm:$0xf]
    %v5610 = vld [vmem:[#allocation2 + $0x5a4] sm:$0xff]
    %v5611 = vld [vmem:[#allocation2 + $0x5ac] sm:$0xf]
    %v5612 = vpack.c.bf16 %v5577, %v5576
    %v5613 = vpack.c.bf16 %v5579, %v5578
    %s5614 = scalar_lea.vmem %s6, 97
    %v5615 = vld [vmem:[%s5614] ss:$8 sm:$0x7]
    %v5617 = vlaneseq
    %v5618 = vshrl.u32 %v5617, 7
    %v5619 = vsub.s32 0, %v5618
    %v5620 = vrot.slane %v5615, %v5619
    %v5621 = vlaneseq
    %v5622 = vshrl.u32 %v5621, 7
    %v5623 = vsub.s32 1, %v5622
    %v5624 = vrot.slane %v5615, %v5623
    %v5625 = vlaneseq
    %v5626 = vshrl.u32 %v5625, 7
    %v5627 = vsub.s32 2, %v5626
    %v5628 = vrot.slane %v5615, %v5627
    %v5664 = vunpack.c.l.b16 %v5580
    %v5665 = vunpack.c.h.b16 %v5580
    %v5666 = vunpack.c.l.b16 %v5581
    %v5667 = vunpack.c.l.b16 %v5582
    %v5668 = vunpack.c.h.b16 %v5582
    %v5669 = vunpack.c.l.b16 %v5583
    %v5670 = vunpack.c.l.b16 %v5584
    %v5671 = vunpack.c.h.b16 %v5584
    %v5672 = vunpack.c.l.b16 %v5585
    %v5673 = vunpack.c.l.b16 %v5586
    %v5674 = vunpack.c.h.b16 %v5586
    %v5675 = vunpack.c.l.b16 %v5587
    %v5676 = vunpack.c.l.b16 %v5588
    %v5677 = vunpack.c.h.b16 %v5588
    %v5678 = vunpack.c.l.b16 %v5589
    %v5679 = vunpack.c.l.b16 %v5590
    %v5680 = vunpack.c.h.b16 %v5590
    %v5681 = vunpack.c.l.b16 %v5591
    %v5682 = vunpack.c.l.b16 %v5592
    %v5683 = vunpack.c.h.b16 %v5592
    %v5684 = vunpack.c.l.b16 %v5593
    %v5685 = vunpack.c.l.b16 %v5594
    %v5686 = vunpack.c.h.b16 %v5594
    %v5687 = vunpack.c.l.b16 %v5595
    %v5688 = vunpack.c.l.b16 %v5596
    %v5689 = vunpack.c.h.b16 %v5596
    %v5690 = vunpack.c.l.b16 %v5597
    %v5691 = vunpack.c.l.b16 %v5598
    %v5692 = vunpack.c.h.b16 %v5598
    %v5693 = vunpack.c.l.b16 %v5599
    %v5694 = vunpack.c.l.b16 %v5600
    %v5695 = vunpack.c.h.b16 %v5600
    %v5696 = vunpack.c.l.b16 %v5601
    %v5697 = vunpack.c.l.b16 %v5602
    %v5698 = vunpack.c.h.b16 %v5602
    %v5699 = vunpack.c.l.b16 %v5603
    %v5700 = vunpack.c.l.b16 %v5604
    %v5701 = vunpack.c.h.b16 %v5604
    %v5702 = vunpack.c.l.b16 %v5605
    %v5703 = vunpack.c.l.b16 %v5606
    %v5704 = vunpack.c.h.b16 %v5606
    %v5705 = vunpack.c.l.b16 %v5607
    %v5706 = vunpack.c.l.b16 %v5608
    %v5707 = vunpack.c.h.b16 %v5608
    %v5708 = vunpack.c.l.b16 %v5609
    %v5709 = vunpack.c.l.b16 %v5610
    %v5710 = vunpack.c.h.b16 %v5610
    %v5711 = vunpack.c.l.b16 %v5611
    %v5712 = vpack.c.b16 %v5667, %v5664
    %v5713 = vpack.c.b16 %v5668, %v5665
    %v5714 = vpack.c.b16 %v5669, %v5666
    %v5715 = vpack.c.b16 %v5673, %v5670
    %v5716 = vpack.c.b16 %v5674, %v5671
    %v5717 = vpack.c.b16 %v5675, %v5672
    %v5718 = vpack.c.b16 %v5679, %v5676
    %v5719 = vpack.c.b16 %v5680, %v5677
    %v5720 = vpack.c.b16 %v5681, %v5678
    %v5721 = vpack.c.b16 %v5685, %v5682
    %v5722 = vpack.c.b16 %v5686, %v5683
    %v5723 = vpack.c.b16 %v5687, %v5684
    %v5724 = vpack.c.b16 %v5691, %v5688
    %v5725 = vpack.c.b16 %v5692, %v5689
    %v5726 = vpack.c.b16 %v5693, %v5690
    %v5727 = vpack.c.b16 %v5697, %v5694
    %v5728 = vpack.c.b16 %v5698, %v5695
    %v5729 = vpack.c.b16 %v5699, %v5696
    %v5730 = vpack.c.b16 %v5703, %v5700
    %v5731 = vpack.c.b16 %v5704, %v5701
    %v5732 = vpack.c.b16 %v5705, %v5702
    %v5733 = vpack.c.b16 %v5709, %v5706
    %v5734 = vpack.c.b16 %v5710, %v5707
    %v5735 = vpack.c.b16 %v5711, %v5708
    %5760 = vmatprep.subr.bf16.mxu0 %v5734
    %5761 = vmatpush1.bf16.msra.mxu0 %v5733
    %5762 = vmatprep.subr.bf16.mxu0 %v5731
    %5763 = vmatpush1.bf16.msra.mxu0 %v5730
    %5764 = vmatprep.subr.bf16.mxu0 %v5728
    %5765 = vmatpush1.bf16.msra.mxu0 %v5727
    %5766 = vmatprep.subr.bf16.mxu0 %v5725
    %5767 = vmatpush1.bf16.msra.mxu0 %v5724
    %5768 = vmatprep.subr.bf16.mxu0 %v5722
    %5769 = vmatpush1.bf16.msra.mxu0 %v5721
    %5770 = vmatprep.subr.bf16.mxu0 %v5719
    %5771 = vmatpush1.bf16.msra.mxu0 %v5718
    %5772 = vmatprep.subr.bf16.mxu0 %v5716
    %5773 = vmatpush1.bf16.msra.mxu0 %v5715
    %5774 = vmatprep.subr.bf16.mxu0 %v5713
    %5775 = vmatpush1.bf16.msra.mxu0 %v5712
    %5776 = vmatprep.subr.bf16.mxu0 0
    %5777 = vmatpush2.bf16.msra.mxu0 0
    %5778 = vmatprep.subr.bf16.mxu0 0
    %5779 = vmatpush2.bf16.msra.mxu0 0
    %5780 = vmatprep.subr.bf16.mxu0 0
    %5781 = vmatpush2.bf16.msra.mxu0 0
    %5782 = vmatprep.subr.bf16.mxu0 0
    %5783 = vmatpush2.bf16.msra.mxu0 0
    %5784 = vmatprep.subr.bf16.mxu0 0
    %5785 = vmatpush2.bf16.msra.mxu0 0
    %5786 = vmatprep.subr.bf16.mxu0 0
    %5787 = vmatpush2.bf16.msra.mxu0 0
    %5788 = vmatprep.subr.bf16.mxu0 0
    %5789 = vmatpush2.bf16.msra.mxu0 0
    %5790 = vmatprep.subr.bf16.mxu0 0
    %5791 = vmatpush2.bf16.msra.mxu0 0
    %5792 = vmatprep.mubr.bf16.mxu0 0
    %5793 = vmatmul.mubr.bf16.gmra.mxu0 %v5612
    %v5794 = vpop.f32.mrf.mxu0
    %v5795 = vadd.f32 %v5620, %v5794
    %v5796 = vpop.f32.mrf.mxu0
    %v5797 = vadd.f32 %v5624, %v5796
    %v5798 = vpop.f32.mrf.mxu0
    %v5799 = vadd.f32 %v5620, %v5798
    %v5800 = vpop.f32.mrf.mxu0
    %v5801 = vadd.f32 %v5624, %v5800
    %5802 = vmatprep.mubr.bf16.mxu0 0
    %5803 = vmatmul.mubr.bf16.gmra.mxu0 %v5613
    %v5804 = vpop.f32.mrf.mxu0
    %v5805 = vadd.f32 %v5620, %v5804
    %v5806 = vpop.f32.mrf.mxu0
    %v5807 = vadd.f32 %v5624, %v5806
    %v5808 = vpop.f32.mrf.mxu0
    %v5809 = vadd.f32 %v5620, %v5808
    %v5810 = vpop.f32.mrf.mxu0
    %v5811 = vadd.f32 %v5624, %v5810
    %5812 = vdwg.mxu0
    %5813 = vmatprep.subr.bf16.mxu0 0
    %5814 = vmatpush1.bf16.msra.mxu0 %v5735
    %5815 = vmatprep.subr.bf16.mxu0 0
    %5816 = vmatpush1.bf16.msra.mxu0 %v5732
    %5817 = vmatprep.subr.bf16.mxu0 0
    %5818 = vmatpush1.bf16.msra.mxu0 %v5729
    %5819 = vmatprep.subr.bf16.mxu0 0
    %5820 = vmatpush1.bf16.msra.mxu0 %v5726
    %5821 = vmatprep.subr.bf16.mxu0 0
    %5822 = vmatpush1.bf16.msra.mxu0 %v5723
    %5823 = vmatprep.subr.bf16.mxu0 0
    %5824 = vmatpush1.bf16.msra.mxu0 %v5720
    %5825 = vmatprep.subr.bf16.mxu0 0
    %5826 = vmatpush1.bf16.msra.mxu0 %v5717
    %5827 = vmatprep.subr.bf16.mxu0 0
    %5828 = vmatpush1.bf16.msra.mxu0 %v5714
    %5829 = vmatprep.subr.bf16.mxu0 0
    %5830 = vmatpush2.bf16.msra.mxu0 0
    %5831 = vmatprep.subr.bf16.mxu0 0
    %5832 = vmatpush2.bf16.msra.mxu0 0
    %5833 = vmatprep.subr.bf16.mxu0 0
    %5834 = vmatpush2.bf16.msra.mxu0 0
    %5835 = vmatprep.subr.bf16.mxu0 0
    %5836 = vmatpush2.bf16.msra.mxu0 0
    %5837 = vmatprep.subr.bf16.mxu0 0
    %5838 = vmatpush2.bf16.msra.mxu0 0
    %5839 = vmatprep.subr.bf16.mxu0 0
    %5840 = vmatpush2.bf16.msra.mxu0 0
    %5841 = vmatprep.subr.bf16.mxu0 0
    %5842 = vmatpush2.bf16.msra.mxu0 0
    %5843 = vmatprep.subr.bf16.mxu0 0
    %5844 = vmatpush2.bf16.msra.mxu0 0
    %5845 = vmatprep.mubr.bf16.mxu0 0
    %5846 = vmatmul.mubr.bf16.gmra.mxu0 %v5612
    %v5847 = vpop.f32.mrf.mxu0
    %v5848 = vadd.f32 %v5628, %v5847
    %v5849 = vpop.f32.mrf.mxu0
    %v5850 = vpop.f32.mrf.mxu0
    %v5851 = vadd.f32 %v5628, %v5850
    %v5852 = vpop.f32.mrf.mxu0
    %5853 = vmatprep.mubr.bf16.mxu0 0
    %5854 = vmatmul.mubr.bf16.gmra.mxu0 %v5613
    %v5855 = vpop.f32.mrf.mxu0
    %v5856 = vadd.f32 %v5628, %v5855
    %v5857 = vpop.f32.mrf.mxu0
    %v5858 = vpop.f32.mrf.mxu0
    %v5859 = vadd.f32 %v5628, %v5858
    %v5860 = vpop.f32.mrf.mxu0
    %5861 = vdwg.mxu0
    %5862 = vst [vmem:[#allocation6] sm:$0xff] %v5795
    %5863 = vst [vmem:[#allocation6 + $0x8] sm:$0xff] %v5797
    %5864 = vst [vmem:[#allocation6 + $0x10] sm:$0xff] %v5848
    %5865 = vst [vmem:[#allocation6 + $0x18] sm:$0xff] %v5799
    %5866 = vst [vmem:[#allocation6 + $0x20] sm:$0xff] %v5801
    %5867 = vst [vmem:[#allocation6 + $0x28] sm:$0xff] %v5851
    %5868 = vst [vmem:[#allocation6 + $0x30] sm:$0xff] %v5805
    %5869 = vst [vmem:[#allocation6 + $0x38] sm:$0xff] %v5807
    %5870 = vst [vmem:[#allocation6 + $0x40] sm:$0xff] %v5856
    %5871 = vst [vmem:[#allocation6 + $0x48] sm:$0xff] %v5809
    %5872 = vst [vmem:[#allocation6 + $0x50] sm:$0xff] %v5811
    %5873 = vst [vmem:[#allocation6 + $0x58] sm:$0xff] %v5859
    %v5874 = vld [vmem:[%s3] sm:$0x1]
    %v5875 = vcvt.s32.f32 %v5874
    %vm5876 = vcmp.eq.s32.totalorder %v48, %v53
    %vm5877 = vcmp.eq.s32.totalorder %v49, %v53
    %vm5878 = vcmp.eq.s32.totalorder %v50, %v53
    %vm5879 = vcmp.eq.s32.totalorder %v51, %v53
    %v5881 = vlaneseq
    %v5882 = vshrl.u32 %v5881, 7
    %v5883 = vsub.s32 0, %v5882
    %v5884 = vrot.slane %v5875, %v5883
    %v5886 = vsel %vm5876, %v5884, 0.0
    %v5887 = vsel %vm5877, %v5884, 0.0
    %v5888 = vsel %vm5878, %v5884, 0.0
    %v5889 = vsel %vm5879, %v5884, 0.0
    %v5890 = vsel %vm456, %v5886, 0.0
    %5891 = vadd.xlane.f32.xlu0 %v5890
    %v5892 = vpop.xlane.xlu0 %5891
    %v5893 = vsel %vm456, %v5887, 0.0
    %5894 = vadd.xlane.f32.xlu0 %v5893
    %v5895 = vpop.xlane.xlu0 %5894
    %v5896 = vsel %vm456, %v5888, 0.0
    %5897 = vadd.xlane.f32.xlu0 %v5896
    %v5898 = vpop.xlane.xlu0 %5897
    %v5899 = vsel %vm456, %v5889, 0.0
    %5900 = vadd.xlane.f32.xlu0 %v5899
    %v5901 = vpop.xlane.xlu0 %5900
    %vm5902 = vcmp.ne.f32.partialorder %v5892, -100.0
    %vm5903 = vcmp.ne.f32.partialorder %v5895, -100.0
    %vm5904 = vcmp.ne.f32.partialorder %v5898, -100.0
    %vm5905 = vcmp.ne.f32.partialorder %v5901, -100.0
    %v5906 = vsel %vm5902, 1, 0
    %v5907 = vsel %vm5903, 1, 0
    %v5908 = vsel %vm5904, 1, 0
    %v5909 = vsel %vm5905, 1, 0
    %v5910 = vcvt.s32.f32 %v5906
    %v5911 = vcvt.s32.f32 %v5907
    %v5912 = vcvt.s32.f32 %v5908
    %v5913 = vcvt.s32.f32 %v5909
    %v5914 = vadd.s32 %v53, 128
    %v5915 = vadd.s32 %v53, 256
    %v5916 = vcvt.s32.f32 %v53
    %v5917 = vcvt.s32.f32 %v5914
    %v5918 = vcvt.s32.f32 %v5915
    %vm5919 = vcmp.eq.f32.partialorder %v5916, %v5892
    %vm5920 = vcmp.eq.f32.partialorder %v5917, %v5892
    %vm5921 = vcmp.eq.f32.partialorder %v5918, %v5892
    %vm5922 = vcmp.eq.f32.partialorder %v5916, %v5895
    %vm5923 = vcmp.eq.f32.partialorder %v5917, %v5895
    %vm5924 = vcmp.eq.f32.partialorder %v5918, %v5895
    %vm5925 = vcmp.eq.f32.partialorder %v5916, %v5898
    %vm5926 = vcmp.eq.f32.partialorder %v5917, %v5898
    %vm5927 = vcmp.eq.f32.partialorder %v5918, %v5898
    %vm5928 = vcmp.eq.f32.partialorder %v5916, %v5901
    %vm5929 = vcmp.eq.f32.partialorder %v5917, %v5901
    %vm5930 = vcmp.eq.f32.partialorder %v5918, %v5901
    %v5931 = vsel %vm5919, 1, 0
    %v5932 = vsel %vm5920, 1, 0
    %v5933 = vsel %vm5921, 1, 0
    %v5934 = vsel %vm5922, 1, 0
    %v5935 = vsel %vm5923, 1, 0
    %v5936 = vsel %vm5924, 1, 0
    %v5937 = vsel %vm5925, 1, 0
    %v5938 = vsel %vm5926, 1, 0
    %v5939 = vsel %vm5927, 1, 0
    %v5940 = vsel %vm5928, 1, 0
    %v5941 = vsel %vm5929, 1, 0
    %v5942 = vsel %vm5930, 1, 0
    %v5943 = vcvt.s32.f32 %v5931
    %v5944 = vcvt.s32.f32 %v5932
    %v5945 = vcvt.s32.f32 %v5933
    %v5946 = vcvt.s32.f32 %v5934
    %v5947 = vcvt.s32.f32 %v5935
    %v5948 = vcvt.s32.f32 %v5936
    %v5949 = vcvt.s32.f32 %v5937
    %v5950 = vcvt.s32.f32 %v5938
    %v5951 = vcvt.s32.f32 %v5939
    %v5952 = vcvt.s32.f32 %v5940
    %v5953 = vcvt.s32.f32 %v5941
    %v5954 = vcvt.s32.f32 %v5942
    %v5955 = vmax.f32 %v5795, %v5797
    %v5956 = vmax.f32 %v5955, %v5848
    %5957 = vmax.xlane.f32.xlu0 %v5956
    %v5958 = vpop.xlane.xlu0 %5957
    %v5959 = vmax.f32 %v5799, %v5801
    %v5960 = vmax.f32 %v5959, %v5851
    %5961 = vmax.xlane.f32.xlu0 %v5960
    %v5962 = vpop.xlane.xlu0 %5961
    %v5963 = vmax.f32 %v5805, %v5807
    %v5964 = vmax.f32 %v5963, %v5856
    %5965 = vmax.xlane.f32.xlu0 %v5964
    %v5966 = vpop.xlane.xlu0 %5965
    %v5967 = vmax.f32 %v5809, %v5811
    %v5968 = vmax.f32 %v5967, %v5859
    %5969 = vmax.xlane.f32.xlu0 %v5968
    %v5970 = vpop.xlane.xlu0 %5969
    %v5971 = vsub.f32 %v5795, %v5958
    %v5972 = vsub.f32 %v5797, %v5958
    %v5973 = vsub.f32 %v5848, %v5958
    %v5974 = vsub.f32 %v5799, %v5962
    %v5975 = vsub.f32 %v5801, %v5962
    %v5976 = vsub.f32 %v5851, %v5962
    %v5977 = vsub.f32 %v5805, %v5966
    %v5978 = vsub.f32 %v5807, %v5966
    %v5979 = vsub.f32 %v5856, %v5966
    %v5980 = vsub.f32 %v5809, %v5970
    %v5981 = vsub.f32 %v5811, %v5970
    %v5982 = vsub.f32 %v5859, %v5970
    %v5983 = vmul.f32 %v5971, 1.442695
    %v5984 = vpow.pop %v5983
    %v5985 = vmul.f32 %v5972, 1.442695
    %v5986 = vpow.pop %v5985
    %v5987 = vmul.f32 %v5973, 1.442695
    %v5988 = vpow.pop %v5987
    %v5989 = vmul.f32 %v5974, 1.442695
    %v5990 = vpow.pop %v5989
    %v5991 = vmul.f32 %v5975, 1.442695
    %v5992 = vpow.pop %v5991
    %v5993 = vmul.f32 %v5976, 1.442695
    %v5994 = vpow.pop %v5993
    %v5995 = vmul.f32 %v5977, 1.442695
    %v5996 = vpow.pop %v5995
    %v5997 = vmul.f32 %v5978, 1.442695
    %v5998 = vpow.pop %v5997
    %v5999 = vmul.f32 %v5979, 1.442695
    %v6000 = vpow.pop %v5999
    %v6001 = vmul.f32 %v5980, 1.442695
    %v6002 = vpow.pop %v6001
    %v6003 = vmul.f32 %v5981, 1.442695
    %v6004 = vpow.pop %v6003
    %v6005 = vmul.f32 %v5982, 1.442695
    %v6006 = vpow.pop %v6005
    %v6007 = vadd.f32 %v5984, %v5986
    %v6008 = vadd.f32 %v6007, %v5988
    %6009 = vadd.xlane.f32.xlu0 %v6008
    %v6010 = vpop.xlane.xlu0 %6009
    %v6011 = vadd.f32 %v5990, %v5992
    %v6012 = vadd.f32 %v6011, %v5994
    %6013 = vadd.xlane.f32.xlu0 %v6012
    %v6014 = vpop.xlane.xlu0 %6013
    %v6015 = vadd.f32 %v5996, %v5998
    %v6016 = vadd.f32 %v6015, %v6000
    %6017 = vadd.xlane.f32.xlu0 %v6016
    %v6018 = vpop.xlane.xlu0 %6017
    %v6019 = vadd.f32 %v6002, %v6004
    %v6020 = vadd.f32 %v6019, %v6006
    %6021 = vadd.xlane.f32.xlu0 %v6020
    %v6022 = vpop.xlane.xlu0 %6021
    %v6023 = vlog2.pop %v6010
    %v6024 = vmul.f32 %v6023, 0.6931472
    %v6025 = vlog2.pop %v6014
    %v6026 = vmul.f32 %v6025, 0.6931472
    %v6027 = vlog2.pop %v6018
    %v6028 = vmul.f32 %v6027, 0.6931472
    %v6029 = vlog2.pop %v6022
    %v6030 = vmul.f32 %v6029, 0.6931472
    %v6031 = vadd.f32 %v5958, %v6024
    %v6032 = vadd.f32 %v5962, %v6026
    %v6033 = vadd.f32 %v5966, %v6028
    %v6034 = vadd.f32 %v5970, %v6030
    %v6035 = vmul.f32 %v5943, %v5795
    %v6036 = vmul.f32 %v5944, %v5797
    %v6037 = vmul.f32 %v5945, %v5848
    %v6038 = vmul.f32 %v5946, %v5799
    %v6039 = vmul.f32 %v5947, %v5801
    %v6040 = vmul.f32 %v5948, %v5851
    %v6041 = vmul.f32 %v5949, %v5805
    %v6042 = vmul.f32 %v5950, %v5807
    %v6043 = vmul.f32 %v5951, %v5856
    %v6044 = vmul.f32 %v5952, %v5809
    %v6045 = vmul.f32 %v5953, %v5811
    %v6046 = vmul.f32 %v5954, %v5859
    %v6047 = vadd.f32 %v6035, %v6036
    %v6048 = vadd.f32 %v6047, %v6037
    %6049 = vadd.xlane.f32.xlu0 %v6048
    %v6050 = vpop.xlane.xlu0 %6049
    %v6051 = vadd.f32 %v6038, %v6039
    %v6052 = vadd.f32 %v6051, %v6040
    %6053 = vadd.xlane.f32.xlu0 %v6052
    %v6054 = vpop.xlane.xlu0 %6053
    %v6055 = vadd.f32 %v6041, %v6042
    %v6056 = vadd.f32 %v6055, %v6043
    %6057 = vadd.xlane.f32.xlu0 %v6056
    %v6058 = vpop.xlane.xlu0 %6057
    %v6059 = vadd.f32 %v6044, %v6045
    %v6060 = vadd.f32 %v6059, %v6046
    %6061 = vadd.xlane.f32.xlu0 %v6060
    %v6062 = vpop.xlane.xlu0 %6061
    %v6063 = vsub.f32 %v6031, %v6050
    %v6064 = vsub.f32 %v6032, %v6054
    %v6065 = vsub.f32 %v6033, %v6058
    %v6066 = vsub.f32 %v6034, %v6062
    %v6067 = vmul.f32 %v6063, %v5910
    %v6068 = vmul.f32 %v6064, %v5911
    %v6069 = vmul.f32 %v6065, %v5912
    %v6070 = vmul.f32 %v6066, %v5913
    %v6071 = vadd.f32 %v5910, %v5911
    %v6072 = vadd.f32 %v6071, %v5912
    %v6073 = vadd.f32 %v6072, %v5913
    %v6074 = vrot.slane %v6073, 4
    %v6075 = vadd.f32 %v6073, %v6074
    %v6076 = vrot.slane %v6075, 2
    %v6077 = vadd.f32 %v6075, %v6076
    %v6078 = vrot.slane %v6077, 1
    %v6079 = vadd.f32 %v6077, %v6078
    %v6080 = vmax.f32 %v6079, 1.0
    %v6081 = vadd.f32 %v6067, %v6068
    %v6082 = vadd.f32 %v6081, %v6069
    %v6083 = vadd.f32 %v6082, %v6070
    %v6084 = vrot.slane %v6083, 4
    %v6085 = vadd.f32 %v6083, %v6084
    %v6086 = vrot.slane %v6085, 2
    %v6087 = vadd.f32 %v6085, %v6086
    %v6088 = vrot.slane %v6087, 1
    %v6089 = vadd.f32 %v6087, %v6088
    %v6090 = vrcp.pop %v6080
    %v6091 = vmul.f32 %v6089, %v6090
    %s6092 = vtos %v6091
    %s6093 = scalar_lea.smem [#allocation7], 0
    %6094 = sst [smem:[%s6093]] %s6092
    // Predicated region
    $region34: #{forward.1} parent=1 // pred_check
      _
    $region35: #{forward.1} parent=1 // pred_check_branch
      %6096 = sbr.rel (0) target = $region37
    $region36: #{forward.1} parent=1 // pred_region
      %s6098 = ssub.s32 1536, 1536
      %6099 = vsyncadd [#allocation4], %s6098
      %s6100 = sshll.u32 [#allocation6], 4
      %s6101 = int_to_ptr.vmem [resolvable:$true] %s6100
      %6106 = dma.vmem_to_hbm [thread:$0]  %s6101, 1536, %s7, [#allocation4], 384, 384, 24
    $region37: #{forward.1} parent=1 // pred_fallthru
      _
    // Predicated region
    $region38: #{forward.1} parent=1 // pred_check
      _
    $region39: #{forward.1} parent=1 // pred_check_branch
      %6108 = sbr.rel (0) target = $region41
    $region40: #{forward.1} parent=1 // pred_region
      %s6110 = ssub.s32 16, 16
      %6111 = vsyncadd [#allocation5], %s6110
      %6114 = dma.smem_to_hbm [#allocation7], 16, %s8, [#allocation5]
    $region41: #{forward.1} parent=1 // pred_fallthru
      _
    // Predicated region
    $region42: #{forward.1} parent=1 // pred_check
      _
    $region43: #{forward.1} parent=1 // pred_check_branch
      %6116 = sbr.rel (0) target = $region45
    $region44: #{forward.1} parent=1 // pred_region
      %6117 = dma.done [#allocation4], 1536
    $region45: #{forward.1} parent=1 // pred_fallthru
      _
    // Predicated region
    $region46: #{forward.1} parent=1 // pred_check
      _
    $region47: #{forward.1} parent=1 // pred_check_branch
      %6119 = sbr.rel (0) target = $region49
    $region48: #{forward.1} parent=1 // pred_region
      %6120 = dma.done [#allocation5], 16
    $region49: #{forward.1} parent=1 // pred_fallthru
      _
    %6121 = sfence
    %6122 = vsyncpa [#allocation3], 1
    %6123 = vsyncpa [#allocation4], 1
    %6124 = vsyncpa [#allocation5], 1

</llo_original>
